<compile_context>
chip_gen: v5e
topology: v5e:2x2
jax: 0.10.0
libtpu: 0.0.40
codegen_flags: <defaults>
</compile_context>

<pallas_src>
import functools

import jax
import jax.numpy as jnp
from jax.experimental import pallas as pl
from jax.experimental.pallas import tpu as pltpu

_LANE = 128

_ROLL_JNP = "jnp"      # pltpu.roll(x, s)[i] == x[(i - s) % N]  (jnp.roll semantics)
_ROLL_REV = "rev"      # pltpu.roll(x, s)[i] == x[(i + s) % N]
_ROLL_SLICE = "slice"  # roll unusable -> slice/concat fallback


def _round_up(v, m):
    return (v + m - 1) // m * m


def _gelu(x):
    # tanh-approximate GELU (EUP tanh instead of a VALU erf polynomial).
    c = 0.7978845608028654  # sqrt(2/pi)
    return 0.5 * x * (1.0 + jnp.tanh(c * (x + 0.044715 * x * x * x)))


# ----------------------------------------------------------------------------
# One-time capability probes (cached; tiny fixed shapes, off the hot path)
# ----------------------------------------------------------------------------
def _roll_probe_kernel(x_ref, o_ref, *, shift):
    o_ref[...] = pltpu.roll(x_ref[...], shift=shift, axis=0)


@functools.lru_cache(maxsize=None)
def _roll_mode():
    """Classify pltpu.roll sublane-roll direction once at a tiny fixed shape."""
    rows, cols = 16, _LANE
    try:
        x = jnp.broadcast_to(
            jnp.arange(rows, dtype=jnp.float32)[:, None], (rows, cols))
        y = pl.pallas_call(
            functools.partial(_roll_probe_kernel, shift=1),
            out_shape=jax.ShapeDtypeStruct((rows, cols), jnp.float32),
        )(x)
        if bool(jnp.array_equal(y, jnp.roll(x, 1, axis=0))):
            return _ROLL_JNP
        if bool(jnp.array_equal(y, jnp.roll(x, -1, axis=0))):
            return _ROLL_REV
    except Exception:
        pass
    return _ROLL_SLICE


@functools.lru_cache(maxsize=None)
def _conv_compute_dtype():
    """bf16 tap-MACs only where the VPU has native bf16 (v6e / v7x)."""
    try:
        kind = jax.devices()[0].device_kind.lower()
    except Exception:
        kind = ""
    if "v6" in kind or "v7" in kind:
        return jnp.bfloat16
    return jnp.float32


def _shift_rows(arr, off, n_rows, mode):
    """Return s with s[r] == arr[r + off]; wrapped rows land in the zero halo."""
    if off == 0:
        return arr
    if mode == _ROLL_JNP:
        return pltpu.roll(arr, shift=(-off) % n_rows, axis=0)
    if mode == _ROLL_REV:
        return pltpu.roll(arr, shift=off % n_rows, axis=0)
    # Fallback: slice + zero concat (correct, slower).
    c = arr.shape[1]
    if off > 0:
        z = jnp.zeros((off, c), dtype=arr.dtype)
        return jnp.concatenate([arr[off:], z], axis=0)
    z = jnp.zeros((-off, c), dtype=arr.dtype)
    return jnp.concatenate([z, arr[: n_rows + off]], axis=0)


# ----------------------------------------------------------------------------
# Kernel
# ----------------------------------------------------------------------------
def _focal_modulation_kernel(x_ref, wf_ref, bf_ref, wh_ref, bh_ref, wp_ref,
                             bp_ref, *rest, hw, cp, focal_level, kernel_sizes,
                             max_pad, normalize_modulator, conv_dtype,
                             roll_mode):
    L = focal_level
    focal_refs = rest[:L]
    out_ref = rest[L]
    slab_ref = rest[L + 1]          # persistent padded-ctx scratch (n_pad, cp)

    H, W = hw
    N = H * W
    f32 = jnp.float32
    bf16 = jnp.bfloat16
    hp = max_pad * W                # halo depth in flattened rows
    n_pad = N + 2 * hp

    xb = x_ref[...].astype(bf16)                               # (N, C) bf16

    # ---- fused f linear: one MXU pass; lane-aligned q / ctx / gates slices --
    fused = jnp.dot(xb, wf_ref[...], preferred_element_type=f32) + bf_ref[...]
    q = fused[:, 0:cp].astype(bf16)            # long-lived -> keep bf16
    ctx_f32 = fused[:, cp:2 * cp]              # (N, cp) f32
    gates = fused[:, 2 * cp:]                  # (N, gp) f32, cols 0..L real

    # ---- zero the halo rows of the scratch slab (interior written per level)
    if hp > 0:
        zero_halo = jnp.zeros((hp, cp), dtype=f32)
        slab_ref[pl.ds(0, hp), :] = zero_halo
        slab_ref[pl.ds(hp + N, hp), :] = zero_halo

    # ---- W-boundary masks, hoisted out of the level loop --------------------
    col = jax.lax.broadcasted_iota(jnp.int32, (n_pad, 1), 0) % W
    col_masks = {}
    for k in kernel_sizes:
        for dx in range(k):
            off = dx - k // 2
            if off > 0 and off not in col_masks:
                col_masks[off] = col < (W - off)
            elif off < 0 and off not in col_masks:
                col_masks[off] = col >= (-off)

    # ---- hierarchical focal contexts (depthwise conv + GELU, gated) --------
    ctx_all = jnp.zeros((N, cp), dtype=f32)
    for l in range(L):
        k = kernel_sizes[l]
        pad = k // 2
        w_l = focal_refs[l][...]                               # (k*k, cp)

        # write ctx into the slab interior (halos stay zero; no concat copy)
        slab_ref[pl.ds(hp, N), :] = ctx_f32
        slab = slab_ref[...]                                   # (n_pad, cp) f32

        acc = jnp.zeros((N, cp), dtype=f32)
        for dx in range(k):
            off = dx - pad
            s = _shift_rows(slab, off, n_pad, roll_mode)       # W shift (XLU)
            if off != 0:
                s = jnp.where(col_masks[off], s, 0.0)
            s = s.astype(conv_dtype)
            # per-dx partial sum in conv_dtype (bf16 MACs on v6e/v7x),
            # folded into the f32 accumulator once per dx.
            partial = jnp.zeros((N, cp), dtype=conv_dtype)
            for dy in range(k):
                tap = w_l[dy * k + dx: dy * k + dx + 1, :]     # (1, cp)
                row0 = hp + (dy - pad) * W                     # sublane-aligned
                partial = partial + s[row0:row0 + N, :] * tap
            acc = acc + partial.astype(f32)
        ctx_f32 = _gelu(acc)
        ctx_all = ctx_all + ctx_f32 * gates[:, l:l + 1]

    # ---- global context -----------------------------------------------------
    ctx_global = _gelu(jnp.mean(ctx_f32, axis=0, keepdims=True))   # (1, cp)
    ctx_all = ctx_all + ctx_global * gates[:, L:L + 1]

    if normalize_modulator:
        ctx_all = ctx_all * (1.0 / (L + 1))

    # ---- h (1x1 conv == per-pixel linear), modulate, project ----------------
    modulator = jnp.dot(ctx_all.astype(bf16), wh_ref[...],
                        preferred_element_type=f32) + bh_ref[...]
    x_out = (q * modulator).astype(bf16)
    out = jnp.dot(x_out, wp_ref[...],
                  preferred_element_type=f32) + bp_ref[...]
    out_ref[...] = out.astype(out_ref.dtype)


# ----------------------------------------------------------------------------
# Wrapper
# ----------------------------------------------------------------------------
def focal_modulation(x, params, *, focal_window=3, focal_level=2,
                     focal_factor=2, normalize_modulator=False):
    """x: (B, H, W, C) float32.  Returns (B, H, W, C) float32."""
    B, H, W, C = x.shape
    L = focal_level
    N = H * W
    kernel_sizes = tuple(focal_factor * l + focal_window for l in range(L))
    max_pad = max((k // 2 for k in kernel_sizes), default=0)
    # Invariant: roll-wrapped rows must land in the zero halo
    # (halo depth = max_pad*W flat rows >= largest W offset = max_pad).
    assert max_pad <= max_pad * W

    Cp = _round_up(C, _LANE)               # lane-dense channel width
    Gp = _round_up(L + 1, _LANE)           # padded gates width
    Fp = 2 * Cp + Gp                       # fused f output width

    roll_mode = _roll_mode()
    conv_dtype = _conv_compute_dtype()
    bf16, f32 = jnp.bfloat16, jnp.float32

    # ---- lane-dense (128-padded) weight / bias prep -------------------------
    # TODO(synk): cache the padded weights across calls instead of re-padding
    # per forward.
    wf = params["wf"].astype(f32)                              # (F, C)
    bfv = params["bf"].astype(f32)                             # (F,)
    w_fused = jnp.zeros((C, Fp), f32)
    w_fused = w_fused.at[:, 0:C].set(wf[:C, :].T)              # q
    w_fused = w_fused.at[:, Cp:Cp + C].set(wf[C:2 * C, :].T)   # ctx
    w_fused = w_fused.at[:, 2 * Cp:2 * Cp + (L + 1)].set(wf[2 * C:, :].T)
    w_fused = w_fused.astype(bf16)
    b_fused = jnp.zeros((1, Fp), f32)
    b_fused = b_fused.at[:, 0:C].set(bfv[:C][None, :])
    b_fused = b_fused.at[:, Cp:Cp + C].set(bfv[C:2 * C][None, :])
    b_fused = b_fused.at[:, 2 * Cp:2 * Cp + (L + 1)].set(bfv[2 * C:][None, :])

    def pad_sq(w):   # torch-layout (C_out, C_in) -> padded, transposed (Cp, Cp)
        return jnp.zeros((Cp, Cp), f32).at[:C, :C].set(
            w.astype(f32).T).astype(bf16)

    def pad_bias(b):
        return jnp.zeros((1, Cp), f32).at[:, :C].set(b.astype(f32)[None, :])

    wh_p, bh_p = pad_sq(params["wh"]), pad_bias(params["bh"])
    wp_p, bp_p = pad_sq(params["wp"]), pad_bias(params["bp"])
    focal_ws = []
    for l in range(L):
        k = kernel_sizes[l]
        w_l = params[f"focal_w{l}"].astype(f32).reshape(k * k, C)
        focal_ws.append(
            jnp.zeros((k * k, Cp), f32).at[:, :C].set(w_l).astype(conv_dtype))

    # x stays f32; the flatten reshape is contiguous (no extra HBM pass for a
    # bf16 copy) and the kernel casts to bf16 in VMEM.
    x2 = x.reshape(B, N, C)

    hp = max_pad * W
    n_pad = N + 2 * hp

    kernel = functools.partial(
        _focal_modulation_kernel,
        hw=(H, W), cp=Cp, focal_level=L, kernel_sizes=kernel_sizes,
        max_pad=max_pad, normalize_modulator=normalize_modulator,
        conv_dtype=conv_dtype, roll_mode=roll_mode)

    const = lambda b: (0, 0)
    # Constant index_maps -> weight blocks fetched once, reused across batch.
    in_specs = [
        pl.BlockSpec((None, N, C), lambda b: (b, 0, 0)),            # x
        pl.BlockSpec((C, Fp), const), pl.BlockSpec((1, Fp), const),   # fused f
        pl.BlockSpec((Cp, Cp), const), pl.BlockSpec((1, Cp), const),  # h
        pl.BlockSpec((Cp, Cp), const), pl.BlockSpec((1, Cp), const),  # proj
    ]
    for l in range(L):
        in_specs.append(pl.BlockSpec((kernel_sizes[l] ** 2, Cp), const))

    # ---- VMEM budget: double-buffered blocks + weights + live slabs ---------
    conv_b = 2 if conv_dtype == bf16 else 4
    est = (2 * N * C * 4                       # x blocks
           + 2 * N * Cp * 4                    # out blocks
           + 2 * (C * Fp * 2 + Fp * 4 + 2 * (Cp * Cp * 2 + Cp * 4))
           + 2 * sum(k * k * Cp * conv_b for k in kernel_sizes)
           + n_pad * Cp * 4                    # scratch slab
           + 12 * N * Cp * 4)                  # in-kernel live intermediates
    # Cap at 48 MiB so the same budget fits v7x's 64 MiB physical VMEM.
    vmem_limit = int(min(max(2 * est, 32 * 1024 * 1024), 48 * 1024 * 1024))

    out = pl.pallas_call(
        kernel,
        out_shape=jax.ShapeDtypeStruct((B, N, Cp), f32),
        grid=(B,),
        in_specs=in_specs,
        out_specs=pl.BlockSpec((None, N, Cp), lambda b: (b, 0, 0)),
        scratch_shapes=[pltpu.VMEM((n_pad, Cp), f32)],
        compiler_params=pltpu.CompilerParams(
            dimension_semantics=("parallel",),
            vmem_limit_bytes=vmem_limit),
    )(x2, w_fused, b_fused, wh_p, bh_p, wp_p, bp_p, *focal_ws)
    return out[:, :, :C].reshape(B, H, W, C)


# ----------------------------------------------------------------------------
# Pure-JAX reference (exact PyTorch math: f32, erf GELU) and synthetic params
# ----------------------------------------------------------------------------
def _gelu_exact(x):
    return 0.5 * x * (1.0 + jax.lax.erf(x * 0.7071067811865476))


def focal_modulation_reference(x, params, *, focal_window, focal_level,
                               focal_factor, normalize_modulator=False):
    B, H, W, C = x.shape
    L = focal_level
    xf = jnp.einsum("bhwc,fc->bhwf", x, params["wf"]) + params["bf"]
    q, ctx, gates = xf[..., :C], xf[..., C:2 * C], xf[..., 2 * C:]
    ctx_all = jnp.zeros_like(q)
    for l in range(L):
        k = focal_factor * l + focal_window
        pad = k // 2
        w_l = params[f"focal_w{l}"]                            # (k, k, C)
        ctx_p = jnp.pad(ctx, ((0, 0), (pad, pad), (pad, pad), (0, 0)))
        acc = jnp.zeros_like(ctx)
        for dy in range(k):
            for dx in range(k):
                acc = acc + ctx_p[:, dy:dy + H, dx:dx + W, :] * w_l[dy, dx]
        ctx = _gelu_exact(acc)
        ctx_all = ctx_all + ctx * gates[..., l:l + 1]
    ctx_global = _gelu_exact(jnp.mean(ctx, axis=(1, 2), keepdims=True))
    ctx_all = ctx_all + ctx_global * gates[..., L:L + 1]
    if normalize_modulator:
        ctx_all = ctx_all / (L + 1)
    modulator = jnp.einsum("bhwc,oc->bhwo", ctx_all, params["wh"]) + params["bh"]
    x_out = q * modulator
    return jnp.einsum("bhwc,oc->bhwo", x_out, params["wp"]) + params["bp"]


def init_params(key, dim, focal_window, focal_level, focal_factor):
    """Deterministic synthetic parameters matching FocalModulation.__init__ shapes."""
    F = 2 * dim + focal_level + 1
    keys = jax.random.split(key, 6 + focal_level)
    s = 0.25
    params = {
        # nn.Linear(dim, 2*dim + L + 1): weight (F, dim), bias (F,)
        "wf": jax.random.normal(keys[0], (F, dim), jnp.float32) * s,
        "bf": jax.random.normal(keys[1], (F,), jnp.float32) * s,
        # nn.Conv2d(dim, dim, 1): weight stored squeezed (dim, dim)
        "wh": jax.random.normal(keys[2], (dim, dim), jnp.float32) * s,
        "bh": jax.random.normal(keys[3], (dim,), jnp.float32) * s,
        # nn.Linear(dim, dim)
        "wp": jax.random.normal(keys[4], (dim, dim), jnp.float32) * s,
        "bp": jax.random.normal(keys[5], (dim,), jnp.float32) * s,
    }
    for l in range(focal_level):
        k = focal_factor * l + focal_window
        # depthwise Conv2d(dim, dim, k, groups=dim, bias=False): (k, k, dim)
        params[f"focal_w{l}"] = (
            jax.random.normal(keys[6 + l], (k, k, dim), jnp.float32) * s)
    return params


if __name__ == "__main__":
    key = jax.random.PRNGKey(0)
    kx, kp = jax.random.split(key)

    B, H, W, C = 2, 16, 16, 16
    focal_window, focal_level, focal_factor = 3, 2, 2

    x = jax.random.normal(kx, (B, H, W, C), jnp.float32)
    params = init_params(kp, C, focal_window, focal_level, focal_factor)

    out = focal_modulation(
        x, params,
        focal_window=focal_window,
        focal_level=focal_level,
        focal_factor=focal_factor,
        normalize_modulator=False,
    )
    out = jax.block_until_ready(out)
    assert out.shape == (B, H, W, C) and out.dtype == jnp.float32

    # Tolerance check vs exact (f32 / erf-GELU) PyTorch-equivalent math.
    # Slack covers bf16 matmul inputs, bf16 conv-tap MACs (v6e/v7x path) and
    # the tanh-approx GELU.
    ref = focal_modulation_reference(
        x, params,
        focal_window=focal_window,
        focal_level=focal_level,
        focal_factor=focal_factor,
        normalize_modulator=False,
    )
    ref = jax.block_until_ready(ref)
    err = float(jnp.max(jnp.abs(out - ref)))
    scale = float(jnp.max(jnp.abs(ref)))
    assert err <= 0.08 * scale + 1e-2, (
        f"kernel/reference mismatch: max_err={err:.5f} scale={scale:.5f}")

    print("KERNEL_OK")
</pallas_src>

<mosaic_0001>
module attributes {stable_mosaic.version = 11 : i64} {
  func.func @_roll_probe_kernel(%arg0: memref<16x128xf32, #tpu.memory_space<vmem>>, %arg1: memref<16x128xf32, #tpu.memory_space<vmem>>) attributes {dimension_semantics = [], scalar_prefetch = 0 : i64, scratch_operands = 0 : i64, tpu.core_type = #tpu.core_type<tc>} {
    %c0 = arith.constant 0 : index
    %c0_0 = arith.constant 0 : index
    %0 = vector.load %arg0[%c0, %c0_0] : memref<16x128xf32, #tpu.memory_space<vmem>>, vector<16x128xf32>
    %c1_i32 = arith.constant 1 : i32
    %1 = tpu.dynamic_rotate %0 by %c1_i32 dim 0 : vector<16x128xf32>, i32 -> vector<16x128xf32>
    %c0_1 = arith.constant 0 : index
    %c0_2 = arith.constant 0 : index
    %2 = vector.load %arg1[%c0_1, %c0_2] : memref<16x128xf32, #tpu.memory_space<vmem>>, vector<16x128xf32>
    tpu.vector_store %arg1[%c0_1, %c0_2], %1 {strides = array<i32>} : memref<16x128xf32, #tpu.memory_space<vmem>>, vector<16x128xf32>,
    return
  }
}

module attributes {stable_mosaic.version = 11 : i64} {
  func.func @_focal_modulation_kernel(%arg0: i32, %arg1: memref<1x256x16xf32, #tpu.memory_space<vmem>>, %arg2: memref<16x384xbf16, #tpu.memory_space<vmem>>, %arg3: memref<1x384xf32, #tpu.memory_space<vmem>>, %arg4: memref<128x128xbf16, #tpu.memory_space<vmem>>, %arg5: memref<1x128xf32, #tpu.memory_space<vmem>>, %arg6: memref<128x128xbf16, #tpu.memory_space<vmem>>, %arg7: memref<1x128xf32, #tpu.memory_space<vmem>>, %arg8: memref<9x128xf32, #tpu.memory_space<vmem>>, %arg9: memref<25x128xf32, #tpu.memory_space<vmem>>, %arg10: memref<1x256x128xf32, #tpu.memory_space<vmem>>, %arg11: memref<320x128xf32, #tpu.memory_space<vmem>>) attributes {dimension_semantics = [#tpu.dimension_semantics<parallel>], iteration_bounds = array<i64: 2>, scalar_prefetch = 0 : i64, scratch_operands = 1 : i64, tpu.core_type = #tpu.core_type<tc>, window_params = [{transform_indices = @transform_0, window_bounds = array<i64: 1, 256, 16>}, {pipeline_mode = #tpu.pipeline_mode<synchronous>, transform_indices = @transform_1, window_bounds = array<i64: 16, 384>}, {pipeline_mode = #tpu.pipeline_mode<synchronous>, transform_indices = @transform_2, window_bounds = array<i64: 1, 384>}, {pipeline_mode = #tpu.pipeline_mode<synchronous>, transform_indices = @transform_3, window_bounds = array<i64: 128, 128>}, {pipeline_mode = #tpu.pipeline_mode<synchronous>, transform_indices = @transform_4, window_bounds = array<i64: 1, 128>}, {pipeline_mode = #tpu.pipeline_mode<synchronous>, transform_indices = @transform_5, window_bounds = array<i64: 128, 128>}, {pipeline_mode = #tpu.pipeline_mode<synchronous>, transform_indices = @transform_6, window_bounds = array<i64: 1, 128>}, {pipeline_mode = #tpu.pipeline_mode<synchronous>, transform_indices = @transform_7, window_bounds = array<i64: 9, 128>}, {pipeline_mode = #tpu.pipeline_mode<synchronous>, transform_indices = @transform_8, window_bounds = array<i64: 25, 128>}, {transform_indices = @transform_9, window_bounds = array<i64: 1, 256, 128>}]} {
    %c0 = arith.constant 0 : index
    %c0_0 = arith.constant 0 : index
    %c0_1 = arith.constant 0 : index
    %0 = vector.load %arg1[%c0, %c0_0, %c0_1] : memref<1x256x16xf32, #tpu.memory_space<vmem>>, vector<1x256x16xf32>
    %1 = vector.shape_cast %0 : vector<1x256x16xf32> to vector<256x16xf32>
    %2 = arith.truncf %1 : vector<256x16xf32> to vector<256x16xbf16>
    %c0_2 = arith.constant 0 : index
    %c0_3 = arith.constant 0 : index
    %3 = vector.load %arg2[%c0_2, %c0_3] : memref<16x384xbf16, #tpu.memory_space<vmem>>, vector<16x384xbf16>
    %cst = arith.constant dense<0.000000e+00> : vector<256x384xf32>
    %4 = tpu.matmul %2, %3, %cst {dimension_numbers = #tpu.dot_dimension_numbers<[1], [0], [0], [1], [0, 0, 1, 1], [], []>} : vector<256x16xbf16>, vector<16x384xbf16>, vector<256x384xf32> -> vector<256x384xf32>
    %c0_4 = arith.constant 0 : index
    %c0_5 = arith.constant 0 : index
    %5 = vector.load %arg3[%c0_4, %c0_5] : memref<1x384xf32, #tpu.memory_space<vmem>>, vector<1x384xf32>
    %6 = vector.broadcast %5 : vector<1x384xf32> to vector<256x384xf32>
    %7 = arith.addf %4, %6 : vector<256x384xf32>
    %8 = vector.extract_strided_slice %7 {offsets = [0, 0], sizes = [256, 128], strides = [1, 1]} : vector<256x384xf32> to vector<256x128xf32>
    %9 = arith.truncf %8 : vector<256x128xf32> to vector<256x128xbf16>
    %10 = vector.extract_strided_slice %7 {offsets = [0, 128], sizes = [256, 128], strides = [1, 1]} : vector<256x384xf32> to vector<256x128xf32>
    %11 = vector.extract_strided_slice %7 {offsets = [0, 256], sizes = [256, 128], strides = [1, 1]} : vector<256x384xf32> to vector<256x128xf32>
    %cst_6 = arith.constant 0.000000e+00 : f32
    %12 = vector.broadcast %cst_6 : f32 to vector<32x128xf32>
    %c0_7 = arith.constant 0 : index
    %c0_8 = arith.constant 0 : index
    %13 = vector.load %arg11[%c0_7, %c0_8] : memref<320x128xf32, #tpu.memory_space<vmem>>, vector<32x128xf32>
    tpu.vector_store %arg11[%c0_7, %c0_8], %12 {strides = array<i32>} : memref<320x128xf32, #tpu.memory_space<vmem>>, vector<32x128xf32>,
    %c288 = arith.constant 288 : index
    %c0_9 = arith.constant 0 : index
    %14 = vector.load %arg11[%c288, %c0_9] : memref<320x128xf32, #tpu.memory_space<vmem>>, vector<32x128xf32>
    tpu.vector_store %arg11[%c288, %c0_9], %12 {strides = array<i32>} : memref<320x128xf32, #tpu.memory_space<vmem>>, vector<32x128xf32>,
    %15 = tpu.iota {dimensions = array<i32: 0>} : vector<320x1xi32>
    %c16_i32 = arith.constant 16 : i32
    %c0_i32 = arith.constant 0 : i32
    %16 = arith.cmpi eq, %c16_i32, %c0_i32 : i32
    %c1_i32 = arith.constant 1 : i32
    %17 = arith.select %16, %c1_i32, %c16_i32 : i32
    %18 = vector.broadcast %17 : i32 to vector<320x1xi32>
    %19 = arith.remsi %15, %18 : vector<320x1xi32>
    %c0_i32_10 = arith.constant 0 : i32
    %20 = vector.broadcast %c0_i32_10 : i32 to vector<320x1xi32>
    %21 = arith.cmpi ne, %19, %20 : vector<320x1xi32>
    %c0_i32_11 = arith.constant 0 : i32
    %22 = vector.broadcast %c0_i32_11 : i32 to vector<320x1xi32>
    %23 = arith.cmpi slt, %19, %22 : vector<320x1xi32>
    %c0_i32_12 = arith.constant 0 : i32
    %24 = arith.cmpi slt, %17, %c0_i32_12 : i32
    %25 = vector.broadcast %24 : i1 to vector<320x1xi1>
    %26 = vector.broadcast %25 : vector<320x1xi1> to vector<320x1xi1>
    %27 = arith.xori %23, %26 : vector<320x1xi1>
    %28 = arith.andi %27, %21 : vector<320x1xi1>
    %29 = vector.broadcast %17 : i32 to vector<320x1xi32>
    %30 = arith.addi %19, %29 : vector<320x1xi32>
    %31 = arith.select %28, %30, %19 : vector<320x1xi1>, vector<320x1xi32>
    %c1_i32_13 = arith.constant 1 : i32
    %32 = vector.broadcast %c1_i32_13 : i32 to vector<320x1xi32>
    %33 = arith.cmpi sge, %31, %32 : vector<320x1xi32>
    %c15_i32 = arith.constant 15 : i32
    %34 = vector.broadcast %c15_i32 : i32 to vector<320x1xi32>
    %35 = arith.cmpi slt, %31, %34 : vector<320x1xi32>
    %c2_i32 = arith.constant 2 : i32
    %36 = vector.broadcast %c2_i32 : i32 to vector<320x1xi32>
    %37 = arith.cmpi sge, %31, %36 : vector<320x1xi32>
    %c14_i32 = arith.constant 14 : i32
    %38 = vector.broadcast %c14_i32 : i32 to vector<320x1xi32>
    %39 = arith.cmpi slt, %31, %38 : vector<320x1xi32>
    %cst_14 = arith.constant 0.000000e+00 : f32
    %40 = vector.broadcast %cst_14 : f32 to vector<256x128xf32>
    %c0_15 = arith.constant 0 : index
    %c0_16 = arith.constant 0 : index
    %41 = vector.load %arg8[%c0_15, %c0_16] : memref<9x128xf32, #tpu.memory_space<vmem>>, vector<9x128xf32>
    %c32 = arith.constant 32 : index
    %c0_17 = arith.constant 0 : index
    %42 = vector.load %arg11[%c32, %c0_17] : memref<320x128xf32, #tpu.memory_space<vmem>>, vector<256x128xf32>
    tpu.vector_store %arg11[%c32, %c0_17], %10 {strides = array<i32>} : memref<320x128xf32, #tpu.memory_space<vmem>>, vector<256x128xf32>,
    %c0_18 = arith.constant 0 : index
    %c0_19 = arith.constant 0 : index
    %43 = vector.load %arg11[%c0_18, %c0_19] : memref<320x128xf32, #tpu.memory_space<vmem>>, vector<320x128xf32>
    %cst_20 = arith.constant 0.000000e+00 : f32
    %44 = vector.broadcast %cst_20 : f32 to vector<256x128xf32>
    %cst_21 = arith.constant 0.000000e+00 : f32
    %45 = vector.broadcast %cst_21 : f32 to vector<1x128xf32>
    %46 = vector.extract_strided_slice %43 {offsets = [0, 0], sizes = [319, 128], strides = [1, 1]} : vector<320x128xf32> to vector<319x128xf32>
    %47 = tpu.concatenate %45, %46 in 0 : vector<1x128xf32>, vector<319x128xf32> -> vector<320x128xf32>
    %cst_22 = arith.constant 0.000000e+00 : f32
    %48 = vector.shape_cast %33 : vector<320x1xi1> to vector<320x1xi1>
    %49 = vector.broadcast %48 : vector<320x1xi1> to vector<320x128xi1>
    %50 = vector.broadcast %cst_22 : f32 to vector<320x128xf32>
    %51 = arith.select %49, %47, %50 : vector<320x128xi1>, vector<320x128xf32>
    %cst_23 = arith.constant 0.000000e+00 : f32
    %52 = vector.broadcast %cst_23 : f32 to vector<256x128xf32>
    %53 = vector.extract_strided_slice %41 {offsets = [0, 0], sizes = [1, 128], strides = [1, 1]} : vector<9x128xf32> to vector<1x128xf32>
    %54 = vector.extract_strided_slice %51 {offsets = [16, 0], sizes = [256, 128], strides = [1, 1]} : vector<320x128xf32> to vector<256x128xf32>
    %55 = vector.broadcast %53 : vector<1x128xf32> to vector<256x128xf32>
    %56 = arith.mulf %54, %55 : vector<256x128xf32>
    %57 = arith.addf %52, %56 : vector<256x128xf32>
    %58 = vector.extract_strided_slice %41 {offsets = [3, 0], sizes = [1, 128], strides = [1, 1]} : vector<9x128xf32> to vector<1x128xf32>
    %59 = vector.extract_strided_slice %51 {offsets = [32, 0], sizes = [256, 128], strides = [1, 1]} : vector<320x128xf32> to vector<256x128xf32>
    %60 = vector.broadcast %58 : vector<1x128xf32> to vector<256x128xf32>
    %61 = arith.mulf %59, %60 : vector<256x128xf32>
    %62 = arith.addf %57, %61 : vector<256x128xf32>
    %63 = vector.extract_strided_slice %41 {offsets = [6, 0], sizes = [1, 128], strides = [1, 1]} : vector<9x128xf32> to vector<1x128xf32>
    %64 = vector.extract_strided_slice %51 {offsets = [48, 0], sizes = [256, 128], strides = [1, 1]} : vector<320x128xf32> to vector<256x128xf32>
    %65 = vector.broadcast %63 : vector<1x128xf32> to vector<256x128xf32>
    %66 = arith.mulf %64, %65 : vector<256x128xf32>
    %67 = arith.addf %62, %66 : vector<256x128xf32>
    %68 = arith.addf %44, %67 : vector<256x128xf32>
    %cst_24 = arith.constant 0.000000e+00 : f32
    %69 = vector.broadcast %cst_24 : f32 to vector<256x128xf32>
    %70 = vector.extract_strided_slice %41 {offsets = [1, 0], sizes = [1, 128], strides = [1, 1]} : vector<9x128xf32> to vector<1x128xf32>
    %71 = vector.extract_strided_slice %43 {offsets = [16, 0], sizes = [256, 128], strides = [1, 1]} : vector<320x128xf32> to vector<256x128xf32>
    %72 = vector.broadcast %70 : vector<1x128xf32> to vector<256x128xf32>
    %73 = arith.mulf %71, %72 : vector<256x128xf32>
    %74 = arith.addf %69, %73 : vector<256x128xf32>
    %75 = vector.extract_strided_slice %41 {offsets = [4, 0], sizes = [1, 128], strides = [1, 1]} : vector<9x128xf32> to vector<1x128xf32>
    %76 = vector.extract_strided_slice %43 {offsets = [32, 0], sizes = [256, 128], strides = [1, 1]} : vector<320x128xf32> to vector<256x128xf32>
    %77 = vector.broadcast %75 : vector<1x128xf32> to vector<256x128xf32>
    %78 = arith.mulf %76, %77 : vector<256x128xf32>
    %79 = arith.addf %74, %78 : vector<256x128xf32>
    %80 = vector.extract_strided_slice %41 {offsets = [7, 0], sizes = [1, 128], strides = [1, 1]} : vector<9x128xf32> to vector<1x128xf32>
    %81 = vector.extract_strided_slice %43 {offsets = [48, 0], sizes = [256, 128], strides = [1, 1]} : vector<320x128xf32> to vector<256x128xf32>
    %82 = vector.broadcast %80 : vector<1x128xf32> to vector<256x128xf32>
    %83 = arith.mulf %81, %82 : vector<256x128xf32>
    %84 = arith.addf %79, %83 : vector<256x128xf32>
    %85 = arith.addf %68, %84 : vector<256x128xf32>
    %cst_25 = arith.constant 0.000000e+00 : f32
    %86 = vector.broadcast %cst_25 : f32 to vector<1x128xf32>
    %87 = vector.extract_strided_slice %43 {offsets = [1, 0], sizes = [319, 128], strides = [1, 1]} : vector<320x128xf32> to vector<319x128xf32>
    %88 = tpu.concatenate %87, %86 in 0 : vector<319x128xf32>, vector<1x128xf32> -> vector<320x128xf32>
    %cst_26 = arith.constant 0.000000e+00 : f32
    %89 = vector.shape_cast %35 : vector<320x1xi1> to vector<320x1xi1>
    %90 = vector.broadcast %89 : vector<320x1xi1> to vector<320x128xi1>
    %91 = vector.broadcast %cst_26 : f32 to vector<320x128xf32>
    %92 = arith.select %90, %88, %91 : vector<320x128xi1>, vector<320x128xf32>
    %cst_27 = arith.constant 0.000000e+00 : f32
    %93 = vector.broadcast %cst_27 : f32 to vector<256x128xf32>
    %94 = vector.extract_strided_slice %41 {offsets = [2, 0], sizes = [1, 128], strides = [1, 1]} : vector<9x128xf32> to vector<1x128xf32>
    %95 = vector.extract_strided_slice %92 {offsets = [16, 0], sizes = [256, 128], strides = [1, 1]} : vector<320x128xf32> to vector<256x128xf32>
    %96 = vector.broadcast %94 : vector<1x128xf32> to vector<256x128xf32>
    %97 = arith.mulf %95, %96 : vector<256x128xf32>
    %98 = arith.addf %93, %97 : vector<256x128xf32>
    %99 = vector.extract_strided_slice %41 {offsets = [5, 0], sizes = [1, 128], strides = [1, 1]} : vector<9x128xf32> to vector<1x128xf32>
    %100 = vector.extract_strided_slice %92 {offsets = [32, 0], sizes = [256, 128], strides = [1, 1]} : vector<320x128xf32> to vector<256x128xf32>
    %101 = vector.broadcast %99 : vector<1x128xf32> to vector<256x128xf32>
    %102 = arith.mulf %100, %101 : vector<256x128xf32>
    %103 = arith.addf %98, %102 : vector<256x128xf32>
    %104 = vector.extract_strided_slice %41 {offsets = [8, 0], sizes = [1, 128], strides = [1, 1]} : vector<9x128xf32> to vector<1x128xf32>
    %105 = vector.extract_strided_slice %92 {offsets = [48, 0], sizes = [256, 128], strides = [1, 1]} : vector<320x128xf32> to vector<256x128xf32>
    %106 = vector.broadcast %104 : vector<1x128xf32> to vector<256x128xf32>
    %107 = arith.mulf %105, %106 : vector<256x128xf32>
    %108 = arith.addf %103, %107 : vector<256x128xf32>
    %109 = arith.addf %85, %108 : vector<256x128xf32>
    %cst_28 = arith.constant 5.000000e-01 : f32
    %110 = vector.broadcast %cst_28 : f32 to vector<256x128xf32>
    %111 = arith.mulf %110, %109 : vector<256x128xf32>
    %cst_29 = arith.constant 4.471500e-02 : f32
    %112 = vector.broadcast %cst_29 : f32 to vector<256x128xf32>
    %113 = arith.mulf %112, %109 : vector<256x128xf32>
    %114 = arith.mulf %113, %109 : vector<256x128xf32>
    %115 = arith.mulf %114, %109 : vector<256x128xf32>
    %116 = arith.addf %109, %115 : vector<256x128xf32>
    %cst_30 = arith.constant 0.797884583 : f32
    %117 = vector.broadcast %cst_30 : f32 to vector<256x128xf32>
    %118 = arith.mulf %117, %116 : vector<256x128xf32>
    %119 = math.tanh %118 : vector<256x128xf32>
    %cst_31 = arith.constant 1.000000e+00 : f32
    %120 = vector.broadcast %cst_31 : f32 to vector<256x128xf32>
    %121 = arith.addf %120, %119 : vector<256x128xf32>
    %122 = arith.mulf %111, %121 : vector<256x128xf32>
    %123 = vector.extract_strided_slice %11 {offsets = [0, 0], sizes = [256, 1], strides = [1, 1]} : vector<256x128xf32> to vector<256x1xf32>
    %124 = vector.broadcast %123 : vector<256x1xf32> to vector<256x128xf32>
    %125 = arith.mulf %122, %124 : vector<256x128xf32>
    %126 = arith.addf %40, %125 : vector<256x128xf32>
    %c0_32 = arith.constant 0 : index
    %c0_33 = arith.constant 0 : index
    %127 = vector.load %arg9[%c0_32, %c0_33] : memref<25x128xf32, #tpu.memory_space<vmem>>, vector<25x128xf32>
    %c32_34 = arith.constant 32 : index
    %c0_35 = arith.constant 0 : index
    %128 = vector.load %arg11[%c32_34, %c0_35] : memref<320x128xf32, #tpu.memory_space<vmem>>, vector<256x128xf32>
    tpu.vector_store %arg11[%c32_34, %c0_35], %122 {strides = array<i32>} : memref<320x128xf32, #tpu.memory_space<vmem>>, vector<256x128xf32>,
    %c0_36 = arith.constant 0 : index
    %c0_37 = arith.constant 0 : index
    %129 = vector.load %arg11[%c0_36, %c0_37] : memref<320x128xf32, #tpu.memory_space<vmem>>, vector<320x128xf32>
    %cst_38 = arith.constant 0.000000e+00 : f32
    %130 = vector.broadcast %cst_38 : f32 to vector<256x128xf32>
    %cst_39 = arith.constant 0.000000e+00 : f32
    %131 = vector.broadcast %cst_39 : f32 to vector<2x128xf32>
    %132 = vector.extract_strided_slice %129 {offsets = [0, 0], sizes = [318, 128], strides = [1, 1]} : vector<320x128xf32> to vector<318x128xf32>
    %133 = tpu.concatenate %131, %132 in 0 : vector<2x128xf32>, vector<318x128xf32> -> vector<320x128xf32>
    %cst_40 = arith.constant 0.000000e+00 : f32
    %134 = vector.shape_cast %37 : vector<320x1xi1> to vector<320x1xi1>
    %135 = vector.broadcast %134 : vector<320x1xi1> to vector<320x128xi1>
    %136 = vector.broadcast %cst_40 : f32 to vector<320x128xf32>
    %137 = arith.select %135, %133, %136 : vector<320x128xi1>, vector<320x128xf32>
    %cst_41 = arith.constant 0.000000e+00 : f32
    %138 = vector.broadcast %cst_41 : f32 to vector<256x128xf32>
    %139 = vector.extract_strided_slice %127 {offsets = [0, 0], sizes = [1, 128], strides = [1, 1]} : vector<25x128xf32> to vector<1x128xf32>
    %140 = vector.extract_strided_slice %137 {offsets = [0, 0], sizes = [256, 128], strides = [1, 1]} : vector<320x128xf32> to vector<256x128xf32>
    %141 = vector.broadcast %139 : vector<1x128xf32> to vector<256x128xf32>
    %142 = arith.mulf %140, %141 : vector<256x128xf32>
    %143 = arith.addf %138, %142 : vector<256x128xf32>
    %144 = vector.extract_strided_slice %127 {offsets = [5, 0], sizes = [1, 128], strides = [1, 1]} : vector<25x128xf32> to vector<1x128xf32>
    %145 = vector.extract_strided_slice %137 {offsets = [16, 0], sizes = [256, 128], strides = [1, 1]} : vector<320x128xf32> to vector<256x128xf32>
    %146 = vector.broadcast %144 : vector<1x128xf32> to vector<256x128xf32>
    %147 = arith.mulf %145, %146 : vector<256x128xf32>
    %148 = arith.addf %143, %147 : vector<256x128xf32>
    %149 = vector.extract_strided_slice %127 {offsets = [10, 0], sizes = [1, 128], strides = [1, 1]} : vector<25x128xf32> to vector<1x128xf32>
    %150 = vector.extract_strided_slice %137 {offsets = [32, 0], sizes = [256, 128], strides = [1, 1]} : vector<320x128xf32> to vector<256x128xf32>
    %151 = vector.broadcast %149 : vector<1x128xf32> to vector<256x128xf32>
    %152 = arith.mulf %150, %151 : vector<256x128xf32>
    %153 = arith.addf %148, %152 : vector<256x128xf32>
    %154 = vector.extract_strided_slice %127 {offsets = [15, 0], sizes = [1, 128], strides = [1, 1]} : vector<25x128xf32> to vector<1x128xf32>
    %155 = vector.extract_strided_slice %137 {offsets = [48, 0], sizes = [256, 128], strides = [1, 1]} : vector<320x128xf32> to vector<256x128xf32>
    %156 = vector.broadcast %154 : vector<1x128xf32> to vector<256x128xf32>
    %157 = arith.mulf %155, %156 : vector<256x128xf32>
    %158 = arith.addf %153, %157 : vector<256x128xf32>
    %159 = vector.extract_strided_slice %127 {offsets = [20, 0], sizes = [1, 128], strides = [1, 1]} : vector<25x128xf32> to vector<1x128xf32>
    %160 = vector.extract_strided_slice %137 {offsets = [64, 0], sizes = [256, 128], strides = [1, 1]} : vector<320x128xf32> to vector<256x128xf32>
    %161 = vector.broadcast %159 : vector<1x128xf32> to vector<256x128xf32>
    %162 = arith.mulf %160, %161 : vector<256x128xf32>
    %163 = arith.addf %158, %162 : vector<256x128xf32>
    %164 = arith.addf %130, %163 : vector<256x128xf32>
    %cst_42 = arith.constant 0.000000e+00 : f32
    %165 = vector.broadcast %cst_42 : f32 to vector<1x128xf32>
    %166 = vector.extract_strided_slice %129 {offsets = [0, 0], sizes = [319, 128], strides = [1, 1]} : vector<320x128xf32> to vector<319x128xf32>
    %167 = tpu.concatenate %165, %166 in 0 : vector<1x128xf32>, vector<319x128xf32> -> vector<320x128xf32>
    %cst_43 = arith.constant 0.000000e+00 : f32
    %168 = vector.shape_cast %33 : vector<320x1xi1> to vector<320x1xi1>
    %169 = vector.broadcast %168 : vector<320x1xi1> to vector<320x128xi1>
    %170 = vector.broadcast %cst_43 : f32 to vector<320x128xf32>
    %171 = arith.select %169, %167, %170 : vector<320x128xi1>, vector<320x128xf32>
    %cst_44 = arith.constant 0.000000e+00 : f32
    %172 = vector.broadcast %cst_44 : f32 to vector<256x128xf32>
    %173 = vector.extract_strided_slice %127 {offsets = [1, 0], sizes = [1, 128], strides = [1, 1]} : vector<25x128xf32> to vector<1x128xf32>
    %174 = vector.extract_strided_slice %171 {offsets = [0, 0], sizes = [256, 128], strides = [1, 1]} : vector<320x128xf32> to vector<256x128xf32>
    %175 = vector.broadcast %173 : vector<1x128xf32> to vector<256x128xf32>
    %176 = arith.mulf %174, %175 : vector<256x128xf32>
    %177 = arith.addf %172, %176 : vector<256x128xf32>
    %178 = vector.extract_strided_slice %127 {offsets = [6, 0], sizes = [1, 128], strides = [1, 1]} : vector<25x128xf32> to vector<1x128xf32>
    %179 = vector.extract_strided_slice %171 {offsets = [16, 0], sizes = [256, 128], strides = [1, 1]} : vector<320x128xf32> to vector<256x128xf32>
    %180 = vector.broadcast %178 : vector<1x128xf32> to vector<256x128xf32>
    %181 = arith.mulf %179, %180 : vector<256x128xf32>
    %182 = arith.addf %177, %181 : vector<256x128xf32>
    %183 = vector.extract_strided_slice %127 {offsets = [11, 0], sizes = [1, 128], strides = [1, 1]} : vector<25x128xf32> to vector<1x128xf32>
    %184 = vector.extract_strided_slice %171 {offsets = [32, 0], sizes = [256, 128], strides = [1, 1]} : vector<320x128xf32> to vector<256x128xf32>
    %185 = vector.broadcast %183 : vector<1x128xf32> to vector<256x128xf32>
    %186 = arith.mulf %184, %185 : vector<256x128xf32>
    %187 = arith.addf %182, %186 : vector<256x128xf32>
    %188 = vector.extract_strided_slice %127 {offsets = [16, 0], sizes = [1, 128], strides = [1, 1]} : vector<25x128xf32> to vector<1x128xf32>
    %189 = vector.extract_strided_slice %171 {offsets = [48, 0], sizes = [256, 128], strides = [1, 1]} : vector<320x128xf32> to vector<256x128xf32>
    %190 = vector.broadcast %188 : vector<1x128xf32> to vector<256x128xf32>
    %191 = arith.mulf %189, %190 : vector<256x128xf32>
    %192 = arith.addf %187, %191 : vector<256x128xf32>
    %193 = vector.extract_strided_slice %127 {offsets = [21, 0], sizes = [1, 128], strides = [1, 1]} : vector<25x128xf32> to vector<1x128xf32>
    %194 = vector.extract_strided_slice %171 {offsets = [64, 0], sizes = [256, 128], strides = [1, 1]} : vector<320x128xf32> to vector<256x128xf32>
    %195 = vector.broadcast %193 : vector<1x128xf32> to vector<256x128xf32>
    %196 = arith.mulf %194, %195 : vector<256x128xf32>
    %197 = arith.addf %192, %196 : vector<256x128xf32>
    %198 = arith.addf %164, %197 : vector<256x128xf32>
    %cst_45 = arith.constant 0.000000e+00 : f32
    %199 = vector.broadcast %cst_45 : f32 to vector<256x128xf32>
    %200 = vector.extract_strided_slice %127 {offsets = [2, 0], sizes = [1, 128], strides = [1, 1]} : vector<25x128xf32> to vector<1x128xf32>
    %201 = vector.extract_strided_slice %129 {offsets = [0, 0], sizes = [256, 128], strides = [1, 1]} : vector<320x128xf32> to vector<256x128xf32>
    %202 = vector.broadcast %200 : vector<1x128xf32> to vector<256x128xf32>
    %203 = arith.mulf %201, %202 : vector<256x128xf32>
    %204 = arith.addf %199, %203 : vector<256x128xf32>
    %205 = vector.extract_strided_slice %127 {offsets = [7, 0], sizes = [1, 128], strides = [1, 1]} : vector<25x128xf32> to vector<1x128xf32>
    %206 = vector.extract_strided_slice %129 {offsets = [16, 0], sizes = [256, 128], strides = [1, 1]} : vector<320x128xf32> to vector<256x128xf32>
    %207 = vector.broadcast %205 : vector<1x128xf32> to vector<256x128xf32>
    %208 = arith.mulf %206, %207 : vector<256x128xf32>
    %209 = arith.addf %204, %208 : vector<256x128xf32>
    %210 = vector.extract_strided_slice %127 {offsets = [12, 0], sizes = [1, 128], strides = [1, 1]} : vector<25x128xf32> to vector<1x128xf32>
    %211 = vector.extract_strided_slice %129 {offsets = [32, 0], sizes = [256, 128], strides = [1, 1]} : vector<320x128xf32> to vector<256x128xf32>
    %212 = vector.broadcast %210 : vector<1x128xf32> to vector<256x128xf32>
    %213 = arith.mulf %211, %212 : vector<256x128xf32>
    %214 = arith.addf %209, %213 : vector<256x128xf32>
    %215 = vector.extract_strided_slice %127 {offsets = [17, 0], sizes = [1, 128], strides = [1, 1]} : vector<25x128xf32> to vector<1x128xf32>
    %216 = vector.extract_strided_slice %129 {offsets = [48, 0], sizes = [256, 128], strides = [1, 1]} : vector<320x128xf32> to vector<256x128xf32>
    %217 = vector.broadcast %215 : vector<1x128xf32> to vector<256x128xf32>
    %218 = arith.mulf %216, %217 : vector<256x128xf32>
    %219 = arith.addf %214, %218 : vector<256x128xf32>
    %220 = vector.extract_strided_slice %127 {offsets = [22, 0], sizes = [1, 128], strides = [1, 1]} : vector<25x128xf32> to vector<1x128xf32>
    %221 = vector.extract_strided_slice %129 {offsets = [64, 0], sizes = [256, 128], strides = [1, 1]} : vector<320x128xf32> to vector<256x128xf32>
    %222 = vector.broadcast %220 : vector<1x128xf32> to vector<256x128xf32>
    %223 = arith.mulf %221, %222 : vector<256x128xf32>
    %224 = arith.addf %219, %223 : vector<256x128xf32>
    %225 = arith.addf %198, %224 : vector<256x128xf32>
    %cst_46 = arith.constant 0.000000e+00 : f32
    %226 = vector.broadcast %cst_46 : f32 to vector<1x128xf32>
    %227 = vector.extract_strided_slice %129 {offsets = [1, 0], sizes = [319, 128], strides = [1, 1]} : vector<320x128xf32> to vector<319x128xf32>
    %228 = tpu.concatenate %227, %226 in 0 : vector<319x128xf32>, vector<1x128xf32> -> vector<320x128xf32>
    %cst_47 = arith.constant 0.000000e+00 : f32
    %229 = vector.shape_cast %35 : vector<320x1xi1> to vector<320x1xi1>
    %230 = vector.broadcast %229 : vector<320x1xi1> to vector<320x128xi1>
    %231 = vector.broadcast %cst_47 : f32 to vector<320x128xf32>
    %232 = arith.select %230, %228, %231 : vector<320x128xi1>, vector<320x128xf32>
    %cst_48 = arith.constant 0.000000e+00 : f32
    %233 = vector.broadcast %cst_48 : f32 to vector<256x128xf32>
    %234 = vector.extract_strided_slice %127 {offsets = [3, 0], sizes = [1, 128], strides = [1, 1]} : vector<25x128xf32> to vector<1x128xf32>
    %235 = vector.extract_strided_slice %232 {offsets = [0, 0], sizes = [256, 128], strides = [1, 1]} : vector<320x128xf32> to vector<256x128xf32>
    %236 = vector.broadcast %234 : vector<1x128xf32> to vector<256x128xf32>
    %237 = arith.mulf %235, %236 : vector<256x128xf32>
    %238 = arith.addf %233, %237 : vector<256x128xf32>
    %239 = vector.extract_strided_slice %127 {offsets = [8, 0], sizes = [1, 128], strides = [1, 1]} : vector<25x128xf32> to vector<1x128xf32>
    %240 = vector.extract_strided_slice %232 {offsets = [16, 0], sizes = [256, 128], strides = [1, 1]} : vector<320x128xf32> to vector<256x128xf32>
    %241 = vector.broadcast %239 : vector<1x128xf32> to vector<256x128xf32>
    %242 = arith.mulf %240, %241 : vector<256x128xf32>
    %243 = arith.addf %238, %242 : vector<256x128xf32>
    %244 = vector.extract_strided_slice %127 {offsets = [13, 0], sizes = [1, 128], strides = [1, 1]} : vector<25x128xf32> to vector<1x128xf32>
    %245 = vector.extract_strided_slice %232 {offsets = [32, 0], sizes = [256, 128], strides = [1, 1]} : vector<320x128xf32> to vector<256x128xf32>
    %246 = vector.broadcast %244 : vector<1x128xf32> to vector<256x128xf32>
    %247 = arith.mulf %245, %246 : vector<256x128xf32>
    %248 = arith.addf %243, %247 : vector<256x128xf32>
    %249 = vector.extract_strided_slice %127 {offsets = [18, 0], sizes = [1, 128], strides = [1, 1]} : vector<25x128xf32> to vector<1x128xf32>
    %250 = vector.extract_strided_slice %232 {offsets = [48, 0], sizes = [256, 128], strides = [1, 1]} : vector<320x128xf32> to vector<256x128xf32>
    %251 = vector.broadcast %249 : vector<1x128xf32> to vector<256x128xf32>
    %252 = arith.mulf %250, %251 : vector<256x128xf32>
    %253 = arith.addf %248, %252 : vector<256x128xf32>
    %254 = vector.extract_strided_slice %127 {offsets = [23, 0], sizes = [1, 128], strides = [1, 1]} : vector<25x128xf32> to vector<1x128xf32>
    %255 = vector.extract_strided_slice %232 {offsets = [64, 0], sizes = [256, 128], strides = [1, 1]} : vector<320x128xf32> to vector<256x128xf32>
    %256 = vector.broadcast %254 : vector<1x128xf32> to vector<256x128xf32>
    %257 = arith.mulf %255, %256 : vector<256x128xf32>
    %258 = arith.addf %253, %257 : vector<256x128xf32>
    %259 = arith.addf %225, %258 : vector<256x128xf32>
    %cst_49 = arith.constant 0.000000e+00 : f32
    %260 = vector.broadcast %cst_49 : f32 to vector<2x128xf32>
    %261 = vector.extract_strided_slice %129 {offsets = [2, 0], sizes = [318, 128], strides = [1, 1]} : vector<320x128xf32> to vector<318x128xf32>
    %262 = tpu.concatenate %261, %260 in 0 : vector<318x128xf32>, vector<2x128xf32> -> vector<320x128xf32>
    %cst_50 = arith.constant 0.000000e+00 : f32
    %263 = vector.shape_cast %39 : vector<320x1xi1> to vector<320x1xi1>
    %264 = vector.broadcast %263 : vector<320x1xi1> to vector<320x128xi1>
    %265 = vector.broadcast %cst_50 : f32 to vector<320x128xf32>
    %266 = arith.select %264, %262, %265 : vector<320x128xi1>, vector<320x128xf32>
    %cst_51 = arith.constant 0.000000e+00 : f32
    %267 = vector.broadcast %cst_51 : f32 to vector<256x128xf32>
    %268 = vector.extract_strided_slice %127 {offsets = [4, 0], sizes = [1, 128], strides = [1, 1]} : vector<25x128xf32> to vector<1x128xf32>
    %269 = vector.extract_strided_slice %266 {offsets = [0, 0], sizes = [256, 128], strides = [1, 1]} : vector<320x128xf32> to vector<256x128xf32>
    %270 = vector.broadcast %268 : vector<1x128xf32> to vector<256x128xf32>
    %271 = arith.mulf %269, %270 : vector<256x128xf32>
    %272 = arith.addf %267, %271 : vector<256x128xf32>
    %273 = vector.extract_strided_slice %127 {offsets = [9, 0], sizes = [1, 128], strides = [1, 1]} : vector<25x128xf32> to vector<1x128xf32>
    %274 = vector.extract_strided_slice %266 {offsets = [16, 0], sizes = [256, 128], strides = [1, 1]} : vector<320x128xf32> to vector<256x128xf32>
    %275 = vector.broadcast %273 : vector<1x128xf32> to vector<256x128xf32>
    %276 = arith.mulf %274, %275 : vector<256x128xf32>
    %277 = arith.addf %272, %276 : vector<256x128xf32>
    %278 = vector.extract_strided_slice %127 {offsets = [14, 0], sizes = [1, 128], strides = [1, 1]} : vector<25x128xf32> to vector<1x128xf32>
    %279 = vector.extract_strided_slice %266 {offsets = [32, 0], sizes = [256, 128], strides = [1, 1]} : vector<320x128xf32> to vector<256x128xf32>
    %280 = vector.broadcast %278 : vector<1x128xf32> to vector<256x128xf32>
    %281 = arith.mulf %279, %280 : vector<256x128xf32>
    %282 = arith.addf %277, %281 : vector<256x128xf32>
    %283 = vector.extract_strided_slice %127 {offsets = [19, 0], sizes = [1, 128], strides = [1, 1]} : vector<25x128xf32> to vector<1x128xf32>
    %284 = vector.extract_strided_slice %266 {offsets = [48, 0], sizes = [256, 128], strides = [1, 1]} : vector<320x128xf32> to vector<256x128xf32>
    %285 = vector.broadcast %283 : vector<1x128xf32> to vector<256x128xf32>
    %286 = arith.mulf %284, %285 : vector<256x128xf32>
    %287 = arith.addf %282, %286 : vector<256x128xf32>
    %288 = vector.extract_strided_slice %127 {offsets = [24, 0], sizes = [1, 128], strides = [1, 1]} : vector<25x128xf32> to vector<1x128xf32>
    %289 = vector.extract_strided_slice %266 {offsets = [64, 0], sizes = [256, 128], strides = [1, 1]} : vector<320x128xf32> to vector<256x128xf32>
    %290 = vector.broadcast %288 : vector<1x128xf32> to vector<256x128xf32>
    %291 = arith.mulf %289, %290 : vector<256x128xf32>
    %292 = arith.addf %287, %291 : vector<256x128xf32>
    %293 = arith.addf %259, %292 : vector<256x128xf32>
    %cst_52 = arith.constant 5.000000e-01 : f32
    %294 = vector.broadcast %cst_52 : f32 to vector<256x128xf32>
    %295 = arith.mulf %294, %293 : vector<256x128xf32>
    %cst_53 = arith.constant 4.471500e-02 : f32
    %296 = vector.broadcast %cst_53 : f32 to vector<256x128xf32>
    %297 = arith.mulf %296, %293 : vector<256x128xf32>
    %298 = arith.mulf %297, %293 : vector<256x128xf32>
    %299 = arith.mulf %298, %293 : vector<256x128xf32>
    %300 = arith.addf %293, %299 : vector<256x128xf32>
    %cst_54 = arith.constant 0.797884583 : f32
    %301 = vector.broadcast %cst_54 : f32 to vector<256x128xf32>
    %302 = arith.mulf %301, %300 : vector<256x128xf32>
    %303 = math.tanh %302 : vector<256x128xf32>
    %cst_55 = arith.constant 1.000000e+00 : f32
    %304 = vector.broadcast %cst_55 : f32 to vector<256x128xf32>
    %305 = arith.addf %304, %303 : vector<256x128xf32>
    %306 = arith.mulf %295, %305 : vector<256x128xf32>
    %307 = vector.extract_strided_slice %11 {offsets = [0, 1], sizes = [256, 1], strides = [1, 1]} : vector<256x128xf32> to vector<256x1xf32>
    %308 = vector.broadcast %307 : vector<256x1xf32> to vector<256x128xf32>
    %309 = arith.mulf %306, %308 : vector<256x128xf32>
    %310 = arith.addf %126, %309 : vector<256x128xf32>
    %cst_56 = arith.constant dense<0.000000e+00> : vector<128xf32>
    %311 = vector.multi_reduction <add>, %306, %cst_56 [0] : vector<256x128xf32> to vector<128xf32>
    %312 = vector.shape_cast %311 : vector<128xf32> to vector<1x128xf32>
    %cst_57 = arith.constant 2.560000e+02 : f32
    %313 = vector.broadcast %cst_57 : f32 to vector<1x128xf32>
    %314 = arith.divf %312, %313 : vector<1x128xf32>
    %cst_58 = arith.constant 5.000000e-01 : f32
    %315 = vector.broadcast %cst_58 : f32 to vector<1x128xf32>
    %316 = arith.mulf %315, %314 : vector<1x128xf32>
    %cst_59 = arith.constant 4.471500e-02 : f32
    %317 = vector.broadcast %cst_59 : f32 to vector<1x128xf32>
    %318 = arith.mulf %317, %314 : vector<1x128xf32>
    %319 = arith.mulf %318, %314 : vector<1x128xf32>
    %320 = arith.mulf %319, %314 : vector<1x128xf32>
    %321 = arith.addf %314, %320 : vector<1x128xf32>
    %cst_60 = arith.constant 0.797884583 : f32
    %322 = vector.broadcast %cst_60 : f32 to vector<1x128xf32>
    %323 = arith.mulf %322, %321 : vector<1x128xf32>
    %324 = math.tanh %323 : vector<1x128xf32>
    %cst_61 = arith.constant 1.000000e+00 : f32
    %325 = vector.broadcast %cst_61 : f32 to vector<1x128xf32>
    %326 = arith.addf %325, %324 : vector<1x128xf32>
    %327 = arith.mulf %316, %326 : vector<1x128xf32>
    %328 = vector.extract_strided_slice %11 {offsets = [0, 2], sizes = [256, 1], strides = [1, 1]} : vector<256x128xf32> to vector<256x1xf32>
    %329 = vector.broadcast %327 : vector<1x128xf32> to vector<256x128xf32>
    %330 = vector.broadcast %328 : vector<256x1xf32> to vector<256x128xf32>
    %331 = arith.mulf %329, %330 : vector<256x128xf32>
    %332 = arith.addf %310, %331 : vector<256x128xf32>
    %333 = arith.truncf %332 : vector<256x128xf32> to vector<256x128xbf16>
    %c0_62 = arith.constant 0 : index
    %c0_63 = arith.constant 0 : index
    %334 = vector.load %arg4[%c0_62, %c0_63] : memref<128x128xbf16, #tpu.memory_space<vmem>>, vector<128x128xbf16>
    %cst_64 = arith.constant dense<0.000000e+00> : vector<256x128xf32>
    %335 = tpu.matmul %333, %334, %cst_64 {dimension_numbers = #tpu.dot_dimension_numbers<[1], [0], [0], [1], [0, 0, 1, 1], [], []>} : vector<256x128xbf16>, vector<128x128xbf16>, vector<256x128xf32> -> vector<256x128xf32>
    %c0_65 = arith.constant 0 : index
    %c0_66 = arith.constant 0 : index
    %336 = vector.load %arg5[%c0_65, %c0_66] : memref<1x128xf32, #tpu.memory_space<vmem>>, vector<1x128xf32>
    %337 = vector.broadcast %336 : vector<1x128xf32> to vector<256x128xf32>
    %338 = arith.addf %335, %337 : vector<256x128xf32>
    %339 = arith.extf %9 : vector<256x128xbf16> to vector<256x128xf32>
    %340 = arith.mulf %339, %338 : vector<256x128xf32>
    %341 = arith.truncf %340 : vector<256x128xf32> to vector<256x128xbf16>
    %c0_67 = arith.constant 0 : index
    %c0_68 = arith.constant 0 : index
    %342 = vector.load %arg6[%c0_67, %c0_68] : memref<128x128xbf16, #tpu.memory_space<vmem>>, vector<128x128xbf16>
    %cst_69 = arith.constant dense<0.000000e+00> : vector<256x128xf32>
    %343 = tpu.matmul %341, %342, %cst_69 {dimension_numbers = #tpu.dot_dimension_numbers<[1], [0], [0], [1], [0, 0, 1, 1], [], []>} : vector<256x128xbf16>, vector<128x128xbf16>, vector<256x128xf32> -> vector<256x128xf32>
    %c0_70 = arith.constant 0 : index
    %c0_71 = arith.constant 0 : index
    %344 = vector.load %arg7[%c0_70, %c0_71] : memref<1x128xf32, #tpu.memory_space<vmem>>, vector<1x128xf32>
    %345 = vector.broadcast %344 : vector<1x128xf32> to vector<256x128xf32>
    %346 = arith.addf %343, %345 : vector<256x128xf32>
    %c0_72 = arith.constant 0 : index
    %c0_73 = arith.constant 0 : index
    %c0_74 = arith.constant 0 : index
    %347 = vector.load %arg10[%c0_72, %c0_73, %c0_74] : memref<1x256x128xf32, #tpu.memory_space<vmem>>, vector<1x256x128xf32>
    %348 = vector.shape_cast %347 : vector<1x256x128xf32> to vector<256x128xf32>
    %349 = vector.shape_cast %346 : vector<256x128xf32> to vector<1x256x128xf32>
    tpu.vector_store %arg10[%c0_72, %c0_73, %c0_74], %349 {strides = array<i32>} : memref<1x256x128xf32, #tpu.memory_space<vmem>>, vector<1x256x128xf32>,
    return
  }
  func.func @transform_0(%arg0: i32) -> (i32, i32, i32) {
    %c0_i32 = arith.constant 0 : i32
    %c0_i32_0 = arith.constant 0 : i32
    %c0_i32_1 = arith.constant 0 : i32
    return %arg0, %c0_i32, %c0_i32_0 : i32, i32, i32
  }
  func.func @transform_1(%arg0: i32) -> (i32, i32) {
    %c0_i32 = arith.constant 0 : i32
    %c0_i32_0 = arith.constant 0 : i32
    %c0_i32_1 = arith.constant 0 : i32
    return %c0_i32, %c0_i32_0 : i32, i32
  }
  func.func @transform_2(%arg0: i32) -> (i32, i32) {
    %c0_i32 = arith.constant 0 : i32
    %c0_i32_0 = arith.constant 0 : i32
    %c0_i32_1 = arith.constant 0 : i32
    return %c0_i32, %c0_i32_0 : i32, i32
  }
  func.func @transform_3(%arg0: i32) -> (i32, i32) {
    %c0_i32 = arith.constant 0 : i32
    %c0_i32_0 = arith.constant 0 : i32
    %c0_i32_1 = arith.constant 0 : i32
    return %c0_i32, %c0_i32_0 : i32, i32
  }
  func.func @transform_4(%arg0: i32) -> (i32, i32) {
    %c0_i32 = arith.constant 0 : i32
    %c0_i32_0 = arith.constant 0 : i32
    %c0_i32_1 = arith.constant 0 : i32
    return %c0_i32, %c0_i32_0 : i32, i32
  }
  func.func @transform_5(%arg0: i32) -> (i32, i32) {
    %c0_i32 = arith.constant 0 : i32
    %c0_i32_0 = arith.constant 0 : i32
    %c0_i32_1 = arith.constant 0 : i32
    return %c0_i32, %c0_i32_0 : i32, i32
  }
  func.func @transform_6(%arg0: i32) -> (i32, i32) {
    %c0_i32 = arith.constant 0 : i32
    %c0_i32_0 = arith.constant 0 : i32
    %c0_i32_1 = arith.constant 0 : i32
    return %c0_i32, %c0_i32_0 : i32, i32
  }
  func.func @transform_7(%arg0: i32) -> (i32, i32) {
    %c0_i32 = arith.constant 0 : i32
    %c0_i32_0 = arith.constant 0 : i32
    %c0_i32_1 = arith.constant 0 : i32
    return %c0_i32, %c0_i32_0 : i32, i32
  }
  func.func @transform_8(%arg0: i32) -> (i32, i32) {
    %c0_i32 = arith.constant 0 : i32
    %c0_i32_0 = arith.constant 0 : i32
    %c0_i32_1 = arith.constant 0 : i32
    return %c0_i32, %c0_i32_0 : i32, i32
  }
  func.func @transform_9(%arg0: i32) -> (i32, i32, i32) {
    %c0_i32 = arith.constant 0 : i32
    %c0_i32_0 = arith.constant 0 : i32
    %c0_i32_1 = arith.constant 0 : i32
    return %arg0, %c0_i32, %c0_i32_0 : i32, i32, i32
  }
}

</mosaic_0001>

<llo_original>
// kernel: tpu_custom_call.1
$region0: #{tpu_custom_call.1}
  #allocation0 [shape = 'u32[]', space=smem, size = 0x4, offset = 0x4, fixed_abs, tag = 'smem constant byte address 0x4 - core index']
  #allocation1 [shape = 'u32[72,128]{1,0:T(1,128)}', space=vmem, size = 0x9000, scoped, tag = 'internal scratch']
  %s0 = inlined_call_operand.hbm [shape: f32[16,128], index: 0, kind: input, shape index: {}]
  %s1 = inlined_call_operand.hbm [shape: f32[16,128], index: 1, kind: output, shape index: {}]
  %s2 = sld [smem:[#allocation0]]
  $region18: #{tpu_custom_call.1} parent=0
    _
  %s4 = ssub.s32 1, %s2
  %s5 = scalar_select 0, %s4, %s2
  $region1: #{tpu_custom_call.1} parent=0
    #allocation2 [shape = 'u8[8192]{0}', space=vmem, size = 0x2000, scoped, tag = 'input window, operand 0, single buffered']
    #allocation3 [shape = 's32[1]{0}', space=sflag, size = 0x4, scoped, tag = 'scoped memory for tpu_custom_call.1']
    #allocation4 [shape = 's32[1]{0}', space=sflag, size = 0x4, scoped, tag = 'scoped memory for tpu_custom_call.1']
    #allocation5 [shape = 'u8[8192]{0}', space=vmem, size = 0x2000, scoped, tag = 'output window, operand 0, single buffered']
    %6 = vsyncpa [#allocation3], 0
    %7 = vsyncpa [#allocation4], 0
    // Predicated region
    $region2: #{tpu_custom_call.1} parent=1 // pred_check
      _
    $region3: #{tpu_custom_call.1} parent=1 // pred_check_branch
      %9 = sbr.rel (0) target = $region5
    $region4: #{tpu_custom_call.1} parent=1 // pred_region
      %11 = vsyncadd [#allocation3], 0
      %s12 = sshll.u32 %s0, 4
      %s13 = int_to_ptr.hbm [resolvable:$true] %s12
      %s14 = sshll.u32 [#allocation2], 4
      %s15 = int_to_ptr.vmem [resolvable:$true] %s14
      %20 = dma.hbm_to_vmem [thread:$0]  %s13, 256, %s15, [#allocation3], 128, 128, 8
    $region5: #{tpu_custom_call.1} parent=1 // pred_fallthru
      _
    // Predicated region
    $region6: #{tpu_custom_call.1} parent=1 // pred_check
      _
    $region7: #{tpu_custom_call.1} parent=1 // pred_check_branch
      %22 = sbr.rel (0) target = $region9
    $region8: #{tpu_custom_call.1} parent=1 // pred_region
      %24 = dma.done [#allocation3], 256
    $region9: #{tpu_custom_call.1} parent=1 // pred_fallthru
      _
    %v25 = vld [vmem:[#allocation2] sm:$0xff]
    %v26 = vld [vmem:[#allocation2 + $0x8] sm:$0xff]
    %v27 = vrot.slane %v25, 7
    %v28 = vrot.slane %v26, 7
    %v29 = vlaneseq
    %v30 = vshrl.u32 %v29, 7
    %vm31 = vcmp.lt.s32.totalorder %v30, 1
    %v32 = vsel %vm31, %v27, %v28
    %v33 = vsel %vm31, %v28, %v27
    %34 = vst [vmem:[#allocation5] sm:$0xff] %v33
    %35 = vst [vmem:[#allocation5 + $0x8] sm:$0xff] %v32
    // Predicated region
    $region10: #{tpu_custom_call.1} parent=1 // pred_check
      _
    $region11: #{tpu_custom_call.1} parent=1 // pred_check_branch
      %37 = sbr.rel (0) target = $region13
    $region12: #{tpu_custom_call.1} parent=1 // pred_region
      %39 = vsyncadd [#allocation4], 0
      %s40 = sshll.u32 [#allocation5], 4
      %s41 = int_to_ptr.vmem [resolvable:$true] %s40
      %s42 = sshll.u32 %s1, 4
      %s43 = int_to_ptr.hbm [resolvable:$true] %s42
      %48 = dma.vmem_to_hbm [thread:$0]  %s41, 256, %s43, [#allocation4], 128, 128, 8
    $region13: #{tpu_custom_call.1} parent=1 // pred_fallthru
      _
    // Predicated region
    $region14: #{tpu_custom_call.1} parent=1 // pred_check
      _
    $region15: #{tpu_custom_call.1} parent=1 // pred_check_branch
      %50 = sbr.rel (0) target = $region17
    $region16: #{tpu_custom_call.1} parent=1 // pred_region
      %52 = dma.done [#allocation4], 256
    $region17: #{tpu_custom_call.1} parent=1 // pred_fallthru
      _
    %53 = vsyncpa [#allocation3], 1
    %54 = vsyncpa [#allocation4], 1

// kernel: tpu_custom_call.1
$region0: #{tpu_custom_call.1}
  #allocation0 [shape = 'u32[]', space=smem, size = 0x4, offset = 0x4, fixed_abs, tag = 'smem constant byte address 0x4 - core index']
  #allocation1 [shape = 'u32[72,128]{1,0:T(1,128)}', space=vmem, size = 0x9000, scoped, tag = 'internal scratch']
  #allocation2 [shape = 'f32[320,128]{1,0:T(8,128)}', space=vmem, size = 0x28000, scoped, tag = 'scratch operand']
  %s0 = inlined_call_operand.vmem [shape: f32[2,256,16], index: 0, kind: input, shape index: {}]
  %s1 = inlined_call_operand.vmem [shape: bf16[16,384], index: 1, kind: input, shape index: {}]
  %s2 = inlined_call_operand.vmem [shape: f32[1,384], index: 2, kind: input, shape index: {}]
  %s3 = inlined_call_operand.vmem [shape: bf16[128,128], index: 3, kind: input, shape index: {}]
  %s4 = inlined_call_operand.vmem [shape: f32[1,128], index: 4, kind: input, shape index: {}]
  %s5 = inlined_call_operand.vmem [shape: bf16[128,128], index: 5, kind: input, shape index: {}]
  %s6 = inlined_call_operand.vmem [shape: f32[1,128], index: 6, kind: input, shape index: {}]
  %s7 = inlined_call_operand.vmem [shape: f32[9,128], index: 7, kind: input, shape index: {}]
  %s8 = inlined_call_operand.vmem [shape: f32[25,128], index: 8, kind: input, shape index: {}]
  %s9 = inlined_call_operand.hbm [shape: f32[2,256,128], index: 9, kind: output, shape index: {}]
  %s10 = sld [smem:[#allocation0]]
  $region69: #{tpu_custom_call.1} parent=0
    _
  %s12 = ssub.s32 1, %s10
  %s13 = scalar_select 0, %s12, %s10
  $region1: #{tpu_custom_call.1} parent=0
    #allocation3 [shape = 'u8[262144]{0}', space=vmem, size = 0x40000, scoped, tag = 'output window, operand 0']
    #allocation4 [shape = 's32[2]{0}', space=sflag, size = 0x8, scoped, tag = 'scoped memory for tpu_custom_call.1']
    %14 = vsyncpa [#allocation4], 0
    %s15 = scalar_lea.sflag [#allocation4], 1
    %16 = vsyncpa %s15, 0
    loop: start=0, step=1, limit=4
    $region2: #{tpu_custom_call.1} parent=1 // loop_pre_header
      _
    $region3: #{tpu_custom_call.1} parent=1 // loop_header
      %s18 = sphi 0, %s22
      %p19 = scmp.ge.s32.totalorder %s18, 4
      %s28 = sphi 0, %s30
      %s31 = sphi 0, %s28
      %s32 = sphi 0, %s31
      %s48 = sphi 0, %s32
      %s52 = sphi 0, %s52
      %s54 = sphi 0, %s52
      %s55 = sphi 0, %s54
      %s69 = sphi 0, %s55
      %s73 = sphi 0, %s73
      %s75 = sphi 0, %s73
      %s76 = sphi 0, %s75
      %s90 = sphi 0, %s76
      %s94 = sphi 0, %s94
      %s96 = sphi 0, %s94
      %s97 = sphi 0, %s96
      %s111 = sphi 0, %s97
      %s115 = sphi 0, %s115
      %s117 = sphi 0, %s115
      %s118 = sphi 0, %s117
      %s132 = sphi 0, %s118
      %s136 = sphi 0, %s136
      %s138 = sphi 0, %s136
      %s139 = sphi 0, %s138
      %s153 = sphi 0, %s139
      %s157 = sphi 0, %s157
      %s159 = sphi 0, %s157
      %s160 = sphi 0, %s159
      %s174 = sphi 0, %s160
      %s178 = sphi 0, %s178
      %s180 = sphi 0, %s178
      %s181 = sphi 0, %s180
      %s195 = sphi 0, %s181
      %s199 = sphi 0, %s199
      %s201 = sphi 0, %s199
      %s202 = sphi 0, %s201
      %s216 = sphi 0, %s202
      %s222 = sphi 0, %s224
      %s225 = sphi 0, %s222
      %s226 = sphi 0, %s225
      %s242 = sphi 0, %s226
    $region4: #{tpu_custom_call.1} parent=1 // loop_header_branch
      %21 = sbr.rel (%p19) target = $region8
    $region5: #{tpu_custom_call.1} parent=1 // loop_body
      %s23 = ssub.s32 %s18, 1
      %s24 = ssub.s32 %s18, 2
      %s25 = sadd.s32 %s18, 1
      %s26 = ssub.s32 %s18, %s25
      %p27 = scmp.eq.s32.totalorder %s26, 0
      %s29 = sadd.s32 %s28, 1
      %s30 = scalar_select %p27, %s28, %s29
      %p33 = pneg %p27
      %p34 = scmp.eq.s32.totalorder %s18, 1
      %p35 = por %p33, %p34
      %p36 = scmp.ne.s32.totalorder %s28, %s31
      %p37 = scmp.eq.s32.totalorder %s18, 0
      %p38 = por %p36, %p37
      %p39 = scmp.ne.s32.totalorder %s28, %s31
      %p40 = scmp.eq.s32.totalorder %s23, 1
      %p41 = por %p39, %p40
      %p42 = scmp.ne.s32.totalorder %s31, %s32
      %p43 = scmp.eq.s32.totalorder %s23, 0
      %p44 = por %p42, %p43
      %p45 = scmp.ne.s32.totalorder %s31, %s32
      %p46 = scmp.eq.s32.totalorder %s24, 1
      %p47 = por %p45, %p46
      %p49 = scmp.ne.s32.totalorder %s32, %s48
      %p50 = scmp.eq.s32.totalorder %s24, 0
      %p51 = por %p49, %p50
      %s53 = sadd.s32 %s52, 1
      %p56 = scmp.eq.s32.totalorder %s18, 1
      %p57 = scmp.ne.s32.totalorder %s52, %s54
      %p58 = scmp.eq.s32.totalorder %s18, 0
      %p59 = por %p57, %p58
      %p60 = scmp.ne.s32.totalorder %s52, %s54
      %p61 = scmp.eq.s32.totalorder %s23, 1
      %p62 = por %p60, %p61
      %p63 = scmp.ne.s32.totalorder %s54, %s55
      %p64 = scmp.eq.s32.totalorder %s23, 0
      %p65 = por %p63, %p64
      %p66 = scmp.ne.s32.totalorder %s54, %s55
      %p67 = scmp.eq.s32.totalorder %s24, 1
      %p68 = por %p66, %p67
      %p70 = scmp.ne.s32.totalorder %s55, %s69
      %p71 = scmp.eq.s32.totalorder %s24, 0
      %p72 = por %p70, %p71
      %s74 = sadd.s32 %s73, 1
      %p77 = scmp.eq.s32.totalorder %s18, 1
      %p78 = scmp.ne.s32.totalorder %s73, %s75
      %p79 = scmp.eq.s32.totalorder %s18, 0
      %p80 = por %p78, %p79
      %p81 = scmp.ne.s32.totalorder %s73, %s75
      %p82 = scmp.eq.s32.totalorder %s23, 1
      %p83 = por %p81, %p82
      %p84 = scmp.ne.s32.totalorder %s75, %s76
      %p85 = scmp.eq.s32.totalorder %s23, 0
      %p86 = por %p84, %p85
      %p87 = scmp.ne.s32.totalorder %s75, %s76
      %p88 = scmp.eq.s32.totalorder %s24, 1
      %p89 = por %p87, %p88
      %p91 = scmp.ne.s32.totalorder %s76, %s90
      %p92 = scmp.eq.s32.totalorder %s24, 0
      %p93 = por %p91, %p92
      %s95 = sadd.s32 %s94, 1
      %p98 = scmp.eq.s32.totalorder %s18, 1
      %p99 = scmp.ne.s32.totalorder %s94, %s96
      %p100 = scmp.eq.s32.totalorder %s18, 0
      %p101 = por %p99, %p100
      %p102 = scmp.ne.s32.totalorder %s94, %s96
      %p103 = scmp.eq.s32.totalorder %s23, 1
      %p104 = por %p102, %p103
      %p105 = scmp.ne.s32.totalorder %s96, %s97
      %p106 = scmp.eq.s32.totalorder %s23, 0
      %p107 = por %p105, %p106
      %p108 = scmp.ne.s32.totalorder %s96, %s97
      %p109 = scmp.eq.s32.totalorder %s24, 1
      %p110 = por %p108, %p109
      %p112 = scmp.ne.s32.totalorder %s97, %s111
      %p113 = scmp.eq.s32.totalorder %s24, 0
      %p114 = por %p112, %p113
      %s116 = sadd.s32 %s115, 1
      %p119 = scmp.eq.s32.totalorder %s18, 1
      %p120 = scmp.ne.s32.totalorder %s115, %s117
      %p121 = scmp.eq.s32.totalorder %s18, 0
      %p122 = por %p120, %p121
      %p123 = scmp.ne.s32.totalorder %s115, %s117
      %p124 = scmp.eq.s32.totalorder %s23, 1
      %p125 = por %p123, %p124
      %p126 = scmp.ne.s32.totalorder %s117, %s118
      %p127 = scmp.eq.s32.totalorder %s23, 0
      %p128 = por %p126, %p127
      %p129 = scmp.ne.s32.totalorder %s117, %s118
      %p130 = scmp.eq.s32.totalorder %s24, 1
      %p131 = por %p129, %p130
      %p133 = scmp.ne.s32.totalorder %s118, %s132
      %p134 = scmp.eq.s32.totalorder %s24, 0
      %p135 = por %p133, %p134
      %s137 = sadd.s32 %s136, 1
      %p140 = scmp.eq.s32.totalorder %s18, 1
      %p141 = scmp.ne.s32.totalorder %s136, %s138
      %p142 = scmp.eq.s32.totalorder %s18, 0
      %p143 = por %p141, %p142
      %p144 = scmp.ne.s32.totalorder %s136, %s138
      %p145 = scmp.eq.s32.totalorder %s23, 1
      %p146 = por %p144, %p145
      %p147 = scmp.ne.s32.totalorder %s138, %s139
      %p148 = scmp.eq.s32.totalorder %s23, 0
      %p149 = por %p147, %p148
      %p150 = scmp.ne.s32.totalorder %s138, %s139
      %p151 = scmp.eq.s32.totalorder %s24, 1
      %p152 = por %p150, %p151
      %p154 = scmp.ne.s32.totalorder %s139, %s153
      %p155 = scmp.eq.s32.totalorder %s24, 0
      %p156 = por %p154, %p155
      %s158 = sadd.s32 %s157, 1
      %p161 = scmp.eq.s32.totalorder %s18, 1
      %p162 = scmp.ne.s32.totalorder %s157, %s159
      %p163 = scmp.eq.s32.totalorder %s18, 0
      %p164 = por %p162, %p163
      %p165 = scmp.ne.s32.totalorder %s157, %s159
      %p166 = scmp.eq.s32.totalorder %s23, 1
      %p167 = por %p165, %p166
      %p168 = scmp.ne.s32.totalorder %s159, %s160
      %p169 = scmp.eq.s32.totalorder %s23, 0
      %p170 = por %p168, %p169
      %p171 = scmp.ne.s32.totalorder %s159, %s160
      %p172 = scmp.eq.s32.totalorder %s24, 1
      %p173 = por %p171, %p172
      %p175 = scmp.ne.s32.totalorder %s160, %s174
      %p176 = scmp.eq.s32.totalorder %s24, 0
      %p177 = por %p175, %p176
      %s179 = sadd.s32 %s178, 1
      %p182 = scmp.eq.s32.totalorder %s18, 1
      %p183 = scmp.ne.s32.totalorder %s178, %s180
      %p184 = scmp.eq.s32.totalorder %s18, 0
      %p185 = por %p183, %p184
      %p186 = scmp.ne.s32.totalorder %s178, %s180
      %p187 = scmp.eq.s32.totalorder %s23, 1
      %p188 = por %p186, %p187
      %p189 = scmp.ne.s32.totalorder %s180, %s181
      %p190 = scmp.eq.s32.totalorder %s23, 0
      %p191 = por %p189, %p190
      %p192 = scmp.ne.s32.totalorder %s180, %s181
      %p193 = scmp.eq.s32.totalorder %s24, 1
      %p194 = por %p192, %p193
      %p196 = scmp.ne.s32.totalorder %s181, %s195
      %p197 = scmp.eq.s32.totalorder %s24, 0
      %p198 = por %p196, %p197
      %s200 = sadd.s32 %s199, 1
      %p203 = scmp.eq.s32.totalorder %s18, 1
      %p204 = scmp.ne.s32.totalorder %s199, %s201
      %p205 = scmp.eq.s32.totalorder %s18, 0
      %p206 = por %p204, %p205
      %p207 = scmp.ne.s32.totalorder %s199, %s201
      %p208 = scmp.eq.s32.totalorder %s23, 1
      %p209 = por %p207, %p208
      %p210 = scmp.ne.s32.totalorder %s201, %s202
      %p211 = scmp.eq.s32.totalorder %s23, 0
      %p212 = por %p210, %p211
      %p213 = scmp.ne.s32.totalorder %s201, %s202
      %p214 = scmp.eq.s32.totalorder %s24, 1
      %p215 = por %p213, %p214
      %p217 = scmp.ne.s32.totalorder %s202, %s216
      %p218 = scmp.eq.s32.totalorder %s24, 0
      %p219 = por %p217, %p218
      %s220 = ssub.s32 %s18, %s25
      %p221 = scmp.eq.s32.totalorder %s220, 0
      %s223 = sadd.s32 %s222, 1
      %s224 = scalar_select %p221, %s222, %s223
      %p227 = pneg %p221
      %p228 = scmp.eq.s32.totalorder %s18, 1
      %p229 = por %p227, %p228
      %p230 = scmp.ne.s32.totalorder %s222, %s225
      %p231 = scmp.eq.s32.totalorder %s18, 0
      %p232 = por %p230, %p231
      %p233 = scmp.ne.s32.totalorder %s222, %s225
      %p234 = scmp.eq.s32.totalorder %s23, 1
      %p235 = por %p233, %p234
      %p236 = scmp.ne.s32.totalorder %s225, %s226
      %p237 = scmp.eq.s32.totalorder %s23, 0
      %p238 = por %p236, %p237
      %p239 = scmp.ne.s32.totalorder %s225, %s226
      %p240 = scmp.eq.s32.totalorder %s24, 1
      %p241 = por %p239, %p240
      %p243 = scmp.ne.s32.totalorder %s226, %s242
      %p244 = scmp.eq.s32.totalorder %s24, 0
      %p245 = por %p243, %p244
      %p246 = scmp.le.s32.totalorder 1, %s18
      %p247 = scmp.lt.s32.totalorder %s18, 3
      %p248 = pnand %p246, %p247
      %p249 = pneg %p248
      // Predicated region
      $region9: #{tpu_custom_call.1} parent=5 // pred_check
        _
      $region10: #{tpu_custom_call.1} parent=5 // pred_check_branch
        %251 = sbr.rel (%p248) target = $region12
      $region11: #{tpu_custom_call.1} parent=5 // pred_region
        %s252 = ssub.s32 %s18, 1
        // Predicated region
        $region13: #{tpu_custom_call.1} parent=11 // pred_check
          %p253 = pneg %p65
        $region14: #{tpu_custom_call.1} parent=11 // pred_check_branch
          %255 = sbr.rel (%p253) target = $region16
        $region15: #{tpu_custom_call.1} parent=11 // pred_region
          _
        $region16: #{tpu_custom_call.1} parent=11 // pred_fallthru
          _
        // Predicated region
        $region17: #{tpu_custom_call.1} parent=11 // pred_check
          %p256 = pneg %p86
        $region18: #{tpu_custom_call.1} parent=11 // pred_check_branch
          %258 = sbr.rel (%p256) target = $region20
        $region19: #{tpu_custom_call.1} parent=11 // pred_region
          _
        $region20: #{tpu_custom_call.1} parent=11 // pred_fallthru
          _
        // Predicated region
        $region21: #{tpu_custom_call.1} parent=11 // pred_check
          %p259 = pneg %p107
        $region22: #{tpu_custom_call.1} parent=11 // pred_check_branch
          %261 = sbr.rel (%p259) target = $region24
        $region23: #{tpu_custom_call.1} parent=11 // pred_region
          _
        $region24: #{tpu_custom_call.1} parent=11 // pred_fallthru
          _
        // Predicated region
        $region25: #{tpu_custom_call.1} parent=11 // pred_check
          %p262 = pneg %p128
        $region26: #{tpu_custom_call.1} parent=11 // pred_check_branch
          %264 = sbr.rel (%p262) target = $region28
        $region27: #{tpu_custom_call.1} parent=11 // pred_region
          _
        $region28: #{tpu_custom_call.1} parent=11 // pred_fallthru
          _
        // Predicated region
        $region29: #{tpu_custom_call.1} parent=11 // pred_check
          %p265 = pneg %p149
        $region30: #{tpu_custom_call.1} parent=11 // pred_check_branch
          %267 = sbr.rel (%p265) target = $region32
        $region31: #{tpu_custom_call.1} parent=11 // pred_region
          _
        $region32: #{tpu_custom_call.1} parent=11 // pred_fallthru
          _
        // Predicated region
        $region33: #{tpu_custom_call.1} parent=11 // pred_check
          %p268 = pneg %p170
        $region34: #{tpu_custom_call.1} parent=11 // pred_check_branch
          %270 = sbr.rel (%p268) target = $region36
        $region35: #{tpu_custom_call.1} parent=11 // pred_region
          _
        $region36: #{tpu_custom_call.1} parent=11 // pred_fallthru
          _
        // Predicated region
        $region37: #{tpu_custom_call.1} parent=11 // pred_check
          %p271 = pneg %p191
        $region38: #{tpu_custom_call.1} parent=11 // pred_check_branch
          %273 = sbr.rel (%p271) target = $region40
        $region39: #{tpu_custom_call.1} parent=11 // pred_region
          _
        $region40: #{tpu_custom_call.1} parent=11 // pred_fallthru
          _
        // Predicated region
        $region41: #{tpu_custom_call.1} parent=11 // pred_check
          %p274 = pneg %p212
        $region42: #{tpu_custom_call.1} parent=11 // pred_check_branch
          %276 = sbr.rel (%p274) target = $region44
        $region43: #{tpu_custom_call.1} parent=11 // pred_region
          _
        $region44: #{tpu_custom_call.1} parent=11 // pred_fallthru
          _
      $region12: #{tpu_custom_call.1} parent=5 // pred_fallthru
        _
      %p277 = scmp.lt.s32.totalorder %s18, 2
      // Predicated region
      $region45: #{tpu_custom_call.1} parent=5 // pred_check
        %p278 = pneg %p277
      $region46: #{tpu_custom_call.1} parent=5 // pred_check_branch
        %280 = sbr.rel (%p278) target = $region48
      $region47: #{tpu_custom_call.1} parent=5 // pred_region
        // Predicated region
        $region49: #{tpu_custom_call.1} parent=47 // pred_check
          %p281 = pneg %p38
        $region50: #{tpu_custom_call.1} parent=47 // pred_check_branch
          %283 = sbr.rel (%p281) target = $region52
        $region51: #{tpu_custom_call.1} parent=47 // pred_region
          %p284 = scmp.lt.s32.totalorder %s18, 1
          %s285 = scalar_select %p284, %s18, 1
          %s286 = smul.addr %s285, 32
          %s287 = smul.addr %s286, 8
          %s288 = scalar_lea.vmem %s0, %s287
        $region52: #{tpu_custom_call.1} parent=47 // pred_fallthru
          _
      $region48: #{tpu_custom_call.1} parent=5 // pred_fallthru
        _
      %p289 = scmp.le.s32.totalorder 1, %s18
      %p290 = scmp.lt.s32.totalorder %s18, 3
      %p291 = pnand %p289, %p290
      %p292 = pneg %p291
      // Predicated region
      $region53: #{tpu_custom_call.1} parent=5 // pred_check
        _
      $region54: #{tpu_custom_call.1} parent=5 // pred_check_branch
        %294 = sbr.rel (%p291) target = $region56
      $region55: #{tpu_custom_call.1} parent=5 // pred_region
        %s295 = ssub.s32 %s18, 1
        %p296 = scmp.lt.s32.totalorder %s23, 1
        %s297 = scalar_select %p296, %s23, 1
        %s298 = smul.addr %s297, 32
        %s299 = smul.addr %s298, 8
        %s300 = scalar_lea.vmem %s0, %s299
        %p301 = pneg %p44
        %p302 = pneg %p41
        %p303 = pneg %p65
        %p304 = pneg %p62
        %p305 = pneg %p86
        %p306 = pneg %p83
        %p307 = pneg %p107
        %p308 = pneg %p104
        %p309 = pneg %p128
        %p310 = pneg %p125
        %p311 = pneg %p149
        %p312 = pneg %p146
        %p313 = pneg %p170
        %p314 = pneg %p167
        %p315 = pneg %p191
        %p316 = pneg %p188
        %p317 = pneg %p212
        %p318 = pneg %p209
        %p319 = pneg %p238
        %p320 = pneg %p235
        %s321 = sand.u32 %s225, 1
        %s322 = scalar_lea.sflag [#allocation4], %s321
        %s323 = sand.u32 %s225, 1
        %s324 = smul.addr %s323, 256
        %s325 = scalar_lea.vmem [#allocation3], %s324
        %p326 = scmp.lt.s32.totalorder %s23, 1
        %s327 = scalar_select %p326, %s23, 1
        %s328 = smul.addr %s327, 32
        %s329 = smul.addr %s328, 8
        %s330 = scalar_lea.vmem %s0, %s329
        %v332 = vld [vmem:[%s330] sm:$0xff]
        %v333 = vld [vmem:[%s330 + $0x8] sm:$0xff]
        %v334 = vld [vmem:[%s330 + $0x10] sm:$0xff]
        %v335 = vld [vmem:[%s330 + $0x18] sm:$0xff]
        %v336 = vld [vmem:[%s330 + $0x20] sm:$0xff]
        %v337 = vld [vmem:[%s330 + $0x28] sm:$0xff]
        %v338 = vld [vmem:[%s330 + $0x30] sm:$0xff]
        %v339 = vld [vmem:[%s330 + $0x38] sm:$0xff]
        %v340 = vld [vmem:[%s330 + $0x40] sm:$0xff]
        %v341 = vld [vmem:[%s330 + $0x48] sm:$0xff]
        %v342 = vld [vmem:[%s330 + $0x50] sm:$0xff]
        %v343 = vld [vmem:[%s330 + $0x58] sm:$0xff]
        %v344 = vld [vmem:[%s330 + $0x60] sm:$0xff]
        %v345 = vld [vmem:[%s330 + $0x68] sm:$0xff]
        %v346 = vld [vmem:[%s330 + $0x70] sm:$0xff]
        %v347 = vld [vmem:[%s330 + $0x78] sm:$0xff]
        %v348 = vld [vmem:[%s330 + $0x80] sm:$0xff]
        %v349 = vld [vmem:[%s330 + $0x88] sm:$0xff]
        %v350 = vld [vmem:[%s330 + $0x90] sm:$0xff]
        %v351 = vld [vmem:[%s330 + $0x98] sm:$0xff]
        %v352 = vld [vmem:[%s330 + $0xa0] sm:$0xff]
        %v353 = vld [vmem:[%s330 + $0xa8] sm:$0xff]
        %v354 = vld [vmem:[%s330 + $0xb0] sm:$0xff]
        %v355 = vld [vmem:[%s330 + $0xb8] sm:$0xff]
        %v356 = vld [vmem:[%s330 + $0xc0] sm:$0xff]
        %v357 = vld [vmem:[%s330 + $0xc8] sm:$0xff]
        %v358 = vld [vmem:[%s330 + $0xd0] sm:$0xff]
        %v359 = vld [vmem:[%s330 + $0xd8] sm:$0xff]
        %v360 = vld [vmem:[%s330 + $0xe0] sm:$0xff]
        %v361 = vld [vmem:[%s330 + $0xe8] sm:$0xff]
        %v362 = vld [vmem:[%s330 + $0xf0] sm:$0xff]
        %v363 = vld [vmem:[%s330 + $0xf8] sm:$0xff]
        %v364 = vpack.c.bf16 %v333, %v332
        %v365 = vpack.c.bf16 %v335, %v334
        %v366 = vpack.c.bf16 %v337, %v336
        %v367 = vpack.c.bf16 %v339, %v338
        %v368 = vpack.c.bf16 %v341, %v340
        %v369 = vpack.c.bf16 %v343, %v342
        %v370 = vpack.c.bf16 %v345, %v344
        %v371 = vpack.c.bf16 %v347, %v346
        %v372 = vpack.c.bf16 %v349, %v348
        %v373 = vpack.c.bf16 %v351, %v350
        %v374 = vpack.c.bf16 %v353, %v352
        %v375 = vpack.c.bf16 %v355, %v354
        %v376 = vpack.c.bf16 %v357, %v356
        %v377 = vpack.c.bf16 %v359, %v358
        %v378 = vpack.c.bf16 %v361, %v360
        %v379 = vpack.c.bf16 %v363, %v362
        %v380 = vld [vmem:[%s1] sm:$0xff]
        %v381 = vld [vmem:[%s1 + $0x8] sm:$0xf]
        %v382 = vld [vmem:[%s1 + $0xc] sm:$0xff]
        %v383 = vld [vmem:[%s1 + $0x14] sm:$0xf]
        %v384 = vld [vmem:[%s2] sm:$0x7]
        %v386 = vperm.slane %v384, 0
        %v387 = vperm.slane %v384, 1
        %v388 = vperm.slane %v384, 2
        %v396 = vunpack.c.l.b16 %v380
        %v397 = vunpack.c.h.b16 %v380
        %v398 = vunpack.c.l.b16 %v381
        %v399 = vunpack.c.l.b16 %v382
        %v400 = vunpack.c.h.b16 %v382
        %v401 = vunpack.c.l.b16 %v383
        %v402 = vpack.c.b16 %v399, %v396
        %v403 = vpack.c.b16 %v400, %v397
        %v404 = vpack.c.b16 %v401, %v398
        %vm408 = vcmask 130048
        %v410 = vsel %vm408, %v364, 0
        %v413 = vsel %vm408, %v365, 0
        %v416 = vsel %vm408, %v366, 0
        %v419 = vsel %vm408, %v367, 0
        %v422 = vsel %vm408, %v368, 0
        %v425 = vsel %vm408, %v369, 0
        %v428 = vsel %vm408, %v370, 0
        %v431 = vsel %vm408, %v371, 0
        %v434 = vsel %vm408, %v372, 0
        %v437 = vsel %vm408, %v373, 0
        %v440 = vsel %vm408, %v374, 0
        %v443 = vsel %vm408, %v375, 0
        %v446 = vsel %vm408, %v376, 0
        %v449 = vsel %vm408, %v377, 0
        %v452 = vsel %vm408, %v378, 0
        %v455 = vsel %vm408, %v379, 0
        %457 = vmatpush.bf16.msra.mxu0 0
        %458 = vmatpush.bf16.msra.mxu0 0
        %459 = vmatpush.bf16.msra.mxu0 0
        %460 = vmatpush.bf16.msra.mxu0 0
        %461 = vmatpush.bf16.msra.mxu0 0
        %462 = vmatpush.bf16.msra.mxu0 0
        %463 = vmatpush.bf16.msra.mxu0 0
        %464 = vmatpush.bf16.msra.mxu0 %v402
        %465 = vmatmul.bf16.gmra.mxu0 %v410
        %v466 = vpop.f32.mrf.mxu0
        %v467 = vadd.f32 %v386, %v466
        %v468 = vpop.f32.mrf.mxu0
        %v469 = vadd.f32 %v386, %v468
        %470 = vmatmul.bf16.gmra.mxu0 %v413
        %v471 = vpop.f32.mrf.mxu0
        %v472 = vadd.f32 %v386, %v471
        %v473 = vpop.f32.mrf.mxu0
        %v474 = vadd.f32 %v386, %v473
        %475 = vmatmul.bf16.gmra.mxu0 %v416
        %v476 = vpop.f32.mrf.mxu0
        %v477 = vadd.f32 %v386, %v476
        %v478 = vpop.f32.mrf.mxu0
        %v479 = vadd.f32 %v386, %v478
        %480 = vmatmul.bf16.gmra.mxu0 %v419
        %v481 = vpop.f32.mrf.mxu0
        %v482 = vadd.f32 %v386, %v481
        %v483 = vpop.f32.mrf.mxu0
        %v484 = vadd.f32 %v386, %v483
        %485 = vmatmul.bf16.gmra.mxu0 %v422
        %v486 = vpop.f32.mrf.mxu0
        %v487 = vadd.f32 %v386, %v486
        %v488 = vpop.f32.mrf.mxu0
        %v489 = vadd.f32 %v386, %v488
        %490 = vmatmul.bf16.gmra.mxu0 %v425
        %v491 = vpop.f32.mrf.mxu0
        %v492 = vadd.f32 %v386, %v491
        %v493 = vpop.f32.mrf.mxu0
        %v494 = vadd.f32 %v386, %v493
        %495 = vmatmul.bf16.gmra.mxu0 %v428
        %v496 = vpop.f32.mrf.mxu0
        %v497 = vadd.f32 %v386, %v496
        %v498 = vpop.f32.mrf.mxu0
        %v499 = vadd.f32 %v386, %v498
        %500 = vmatmul.bf16.gmra.mxu0 %v431
        %v501 = vpop.f32.mrf.mxu0
        %v502 = vadd.f32 %v386, %v501
        %v503 = vpop.f32.mrf.mxu0
        %v504 = vadd.f32 %v386, %v503
        %505 = vmatmul.bf16.gmra.mxu0 %v434
        %v506 = vpop.f32.mrf.mxu0
        %v507 = vadd.f32 %v386, %v506
        %v508 = vpop.f32.mrf.mxu0
        %v509 = vadd.f32 %v386, %v508
        %510 = vmatmul.bf16.gmra.mxu0 %v437
        %v511 = vpop.f32.mrf.mxu0
        %v512 = vadd.f32 %v386, %v511
        %v513 = vpop.f32.mrf.mxu0
        %v514 = vadd.f32 %v386, %v513
        %515 = vmatmul.bf16.gmra.mxu0 %v440
        %v516 = vpop.f32.mrf.mxu0
        %v517 = vadd.f32 %v386, %v516
        %v518 = vpop.f32.mrf.mxu0
        %v519 = vadd.f32 %v386, %v518
        %520 = vmatmul.bf16.gmra.mxu0 %v443
        %v521 = vpop.f32.mrf.mxu0
        %v522 = vadd.f32 %v386, %v521
        %v523 = vpop.f32.mrf.mxu0
        %v524 = vadd.f32 %v386, %v523
        %525 = vmatmul.bf16.gmra.mxu0 %v446
        %v526 = vpop.f32.mrf.mxu0
        %v527 = vadd.f32 %v386, %v526
        %v528 = vpop.f32.mrf.mxu0
        %v529 = vadd.f32 %v386, %v528
        %530 = vmatmul.bf16.gmra.mxu0 %v449
        %v531 = vpop.f32.mrf.mxu0
        %v532 = vadd.f32 %v386, %v531
        %v533 = vpop.f32.mrf.mxu0
        %v534 = vadd.f32 %v386, %v533
        %535 = vmatmul.bf16.gmra.mxu0 %v452
        %v536 = vpop.f32.mrf.mxu0
        %v537 = vadd.f32 %v386, %v536
        %v538 = vpop.f32.mrf.mxu0
        %v539 = vadd.f32 %v386, %v538
        %540 = vmatmul.bf16.gmra.mxu0 %v455
        %v541 = vpop.f32.mrf.mxu0
        %v542 = vadd.f32 %v386, %v541
        %v543 = vpop.f32.mrf.mxu0
        %v544 = vadd.f32 %v386, %v543
        %545 = vdwg.mxu0
        %546 = vmatpush.bf16.msra.mxu0 0
        %547 = vmatpush.bf16.msra.mxu0 0
        %548 = vmatpush.bf16.msra.mxu0 0
        %549 = vmatpush.bf16.msra.mxu0 0
        %550 = vmatpush.bf16.msra.mxu0 0
        %551 = vmatpush.bf16.msra.mxu0 0
        %552 = vmatpush.bf16.msra.mxu0 0
        %553 = vmatpush.bf16.msra.mxu0 %v403
        %554 = vmatmul.bf16.gmra.mxu0 %v410
        %v555 = vpop.f32.mrf.mxu0
        %v556 = vadd.f32 %v387, %v555
        %v557 = vpop.f32.mrf.mxu0
        %v558 = vadd.f32 %v387, %v557
        %559 = vmatmul.bf16.gmra.mxu0 %v413
        %v560 = vpop.f32.mrf.mxu0
        %v561 = vadd.f32 %v387, %v560
        %v562 = vpop.f32.mrf.mxu0
        %v563 = vadd.f32 %v387, %v562
        %564 = vmatmul.bf16.gmra.mxu0 %v416
        %v565 = vpop.f32.mrf.mxu0
        %v566 = vadd.f32 %v387, %v565
        %v567 = vpop.f32.mrf.mxu0
        %v568 = vadd.f32 %v387, %v567
        %569 = vmatmul.bf16.gmra.mxu0 %v419
        %v570 = vpop.f32.mrf.mxu0
        %v571 = vadd.f32 %v387, %v570
        %v572 = vpop.f32.mrf.mxu0
        %v573 = vadd.f32 %v387, %v572
        %574 = vmatmul.bf16.gmra.mxu0 %v422
        %v575 = vpop.f32.mrf.mxu0
        %v576 = vadd.f32 %v387, %v575
        %v577 = vpop.f32.mrf.mxu0
        %v578 = vadd.f32 %v387, %v577
        %579 = vmatmul.bf16.gmra.mxu0 %v425
        %v580 = vpop.f32.mrf.mxu0
        %v581 = vadd.f32 %v387, %v580
        %v582 = vpop.f32.mrf.mxu0
        %v583 = vadd.f32 %v387, %v582
        %584 = vmatmul.bf16.gmra.mxu0 %v428
        %v585 = vpop.f32.mrf.mxu0
        %v586 = vadd.f32 %v387, %v585
        %v587 = vpop.f32.mrf.mxu0
        %v588 = vadd.f32 %v387, %v587
        %589 = vmatmul.bf16.gmra.mxu0 %v431
        %v590 = vpop.f32.mrf.mxu0
        %v591 = vadd.f32 %v387, %v590
        %v592 = vpop.f32.mrf.mxu0
        %v593 = vadd.f32 %v387, %v592
        %594 = vmatmul.bf16.gmra.mxu0 %v434
        %v595 = vpop.f32.mrf.mxu0
        %v596 = vadd.f32 %v387, %v595
        %v597 = vpop.f32.mrf.mxu0
        %v598 = vadd.f32 %v387, %v597
        %599 = vmatmul.bf16.gmra.mxu0 %v437
        %v600 = vpop.f32.mrf.mxu0
        %v601 = vadd.f32 %v387, %v600
        %v602 = vpop.f32.mrf.mxu0
        %v603 = vadd.f32 %v387, %v602
        %604 = vmatmul.bf16.gmra.mxu0 %v440
        %v605 = vpop.f32.mrf.mxu0
        %v606 = vadd.f32 %v387, %v605
        %v607 = vpop.f32.mrf.mxu0
        %v608 = vadd.f32 %v387, %v607
        %609 = vmatmul.bf16.gmra.mxu0 %v443
        %v610 = vpop.f32.mrf.mxu0
        %v611 = vadd.f32 %v387, %v610
        %v612 = vpop.f32.mrf.mxu0
        %v613 = vadd.f32 %v387, %v612
        %614 = vmatmul.bf16.gmra.mxu0 %v446
        %v615 = vpop.f32.mrf.mxu0
        %v616 = vadd.f32 %v387, %v615
        %v617 = vpop.f32.mrf.mxu0
        %v618 = vadd.f32 %v387, %v617
        %619 = vmatmul.bf16.gmra.mxu0 %v449
        %v620 = vpop.f32.mrf.mxu0
        %v621 = vadd.f32 %v387, %v620
        %v622 = vpop.f32.mrf.mxu0
        %v623 = vadd.f32 %v387, %v622
        %624 = vmatmul.bf16.gmra.mxu0 %v452
        %v625 = vpop.f32.mrf.mxu0
        %v626 = vadd.f32 %v387, %v625
        %v627 = vpop.f32.mrf.mxu0
        %v628 = vadd.f32 %v387, %v627
        %629 = vmatmul.bf16.gmra.mxu0 %v455
        %v630 = vpop.f32.mrf.mxu0
        %v631 = vadd.f32 %v387, %v630
        %v632 = vpop.f32.mrf.mxu0
        %v633 = vadd.f32 %v387, %v632
        %634 = vdwg.mxu0
        %635 = vmatpush.bf16.msra.mxu0 0
        %636 = vmatpush.bf16.msra.mxu0 0
        %637 = vmatpush.bf16.msra.mxu0 0
        %638 = vmatpush.bf16.msra.mxu0 0
        %639 = vmatpush.bf16.msra.mxu0 0
        %640 = vmatpush.bf16.msra.mxu0 0
        %641 = vmatpush.bf16.msra.mxu0 0
        %642 = vmatpush.bf16.msra.mxu0 %v404
        %643 = vmatmul.bf16.gmra.mxu0 %v410
        %v644 = vpop.f32.mrf.mxu0
        %v645 = vadd.f32 %v388, %v644
        %v646 = vpop.f32.mrf.mxu0
        %v647 = vadd.f32 %v388, %v646
        %648 = vmatmul.bf16.gmra.mxu0 %v413
        %v649 = vpop.f32.mrf.mxu0
        %v650 = vadd.f32 %v388, %v649
        %v651 = vpop.f32.mrf.mxu0
        %v652 = vadd.f32 %v388, %v651
        %653 = vmatmul.bf16.gmra.mxu0 %v416
        %v654 = vpop.f32.mrf.mxu0
        %v655 = vadd.f32 %v388, %v654
        %v656 = vpop.f32.mrf.mxu0
        %v657 = vadd.f32 %v388, %v656
        %658 = vmatmul.bf16.gmra.mxu0 %v419
        %v659 = vpop.f32.mrf.mxu0
        %v660 = vadd.f32 %v388, %v659
        %v661 = vpop.f32.mrf.mxu0
        %v662 = vadd.f32 %v388, %v661
        %663 = vmatmul.bf16.gmra.mxu0 %v422
        %v664 = vpop.f32.mrf.mxu0
        %v665 = vadd.f32 %v388, %v664
        %v666 = vpop.f32.mrf.mxu0
        %v667 = vadd.f32 %v388, %v666
        %668 = vmatmul.bf16.gmra.mxu0 %v425
        %v669 = vpop.f32.mrf.mxu0
        %v670 = vadd.f32 %v388, %v669
        %v671 = vpop.f32.mrf.mxu0
        %v672 = vadd.f32 %v388, %v671
        %673 = vmatmul.bf16.gmra.mxu0 %v428
        %v674 = vpop.f32.mrf.mxu0
        %v675 = vadd.f32 %v388, %v674
        %v676 = vpop.f32.mrf.mxu0
        %v677 = vadd.f32 %v388, %v676
        %678 = vmatmul.bf16.gmra.mxu0 %v431
        %v679 = vpop.f32.mrf.mxu0
        %v680 = vadd.f32 %v388, %v679
        %v681 = vpop.f32.mrf.mxu0
        %v682 = vadd.f32 %v388, %v681
        %683 = vmatmul.bf16.gmra.mxu0 %v434
        %v684 = vpop.f32.mrf.mxu0
        %v685 = vadd.f32 %v388, %v684
        %v686 = vpop.f32.mrf.mxu0
        %v687 = vadd.f32 %v388, %v686
        %688 = vmatmul.bf16.gmra.mxu0 %v437
        %v689 = vpop.f32.mrf.mxu0
        %v690 = vadd.f32 %v388, %v689
        %v691 = vpop.f32.mrf.mxu0
        %v692 = vadd.f32 %v388, %v691
        %693 = vmatmul.bf16.gmra.mxu0 %v440
        %v694 = vpop.f32.mrf.mxu0
        %v695 = vadd.f32 %v388, %v694
        %v696 = vpop.f32.mrf.mxu0
        %v697 = vadd.f32 %v388, %v696
        %698 = vmatmul.bf16.gmra.mxu0 %v443
        %v699 = vpop.f32.mrf.mxu0
        %v700 = vadd.f32 %v388, %v699
        %v701 = vpop.f32.mrf.mxu0
        %v702 = vadd.f32 %v388, %v701
        %703 = vmatmul.bf16.gmra.mxu0 %v446
        %v704 = vpop.f32.mrf.mxu0
        %v705 = vadd.f32 %v388, %v704
        %v706 = vpop.f32.mrf.mxu0
        %v707 = vadd.f32 %v388, %v706
        %708 = vmatmul.bf16.gmra.mxu0 %v449
        %v709 = vpop.f32.mrf.mxu0
        %v710 = vadd.f32 %v388, %v709
        %v711 = vpop.f32.mrf.mxu0
        %v712 = vadd.f32 %v388, %v711
        %713 = vmatmul.bf16.gmra.mxu0 %v452
        %v714 = vpop.f32.mrf.mxu0
        %v715 = vadd.f32 %v388, %v714
        %v716 = vpop.f32.mrf.mxu0
        %v717 = vadd.f32 %v388, %v716
        %718 = vmatmul.bf16.gmra.mxu0 %v455
        %v719 = vpop.f32.mrf.mxu0
        %v720 = vadd.f32 %v388, %v719
        %v721 = vpop.f32.mrf.mxu0
        %v722 = vadd.f32 %v388, %v721
        %723 = vdwg.mxu0
        %v724 = vpack.c.bf16 %v467, %v467
        %v725 = vpack.c.bf16 %v469, %v469
        %v726 = vpack.c.bf16 %v472, %v472
        %v727 = vpack.c.bf16 %v474, %v474
        %v728 = vpack.c.bf16 %v477, %v477
        %v729 = vpack.c.bf16 %v479, %v479
        %v730 = vpack.c.bf16 %v482, %v482
        %v731 = vpack.c.bf16 %v484, %v484
        %v732 = vpack.c.bf16 %v487, %v487
        %v733 = vpack.c.bf16 %v489, %v489
        %v734 = vpack.c.bf16 %v492, %v492
        %v735 = vpack.c.bf16 %v494, %v494
        %v736 = vpack.c.bf16 %v497, %v497
        %v737 = vpack.c.bf16 %v499, %v499
        %v738 = vpack.c.bf16 %v502, %v502
        %v739 = vpack.c.bf16 %v504, %v504
        %v740 = vpack.c.bf16 %v507, %v507
        %v741 = vpack.c.bf16 %v509, %v509
        %v742 = vpack.c.bf16 %v512, %v512
        %v743 = vpack.c.bf16 %v514, %v514
        %v744 = vpack.c.bf16 %v517, %v517
        %v745 = vpack.c.bf16 %v519, %v519
        %v746 = vpack.c.bf16 %v522, %v522
        %v747 = vpack.c.bf16 %v524, %v524
        %v748 = vpack.c.bf16 %v527, %v527
        %v749 = vpack.c.bf16 %v529, %v529
        %v750 = vpack.c.bf16 %v532, %v532
        %v751 = vpack.c.bf16 %v534, %v534
        %v752 = vpack.c.bf16 %v537, %v537
        %v753 = vpack.c.bf16 %v539, %v539
        %v754 = vpack.c.bf16 %v542, %v542
        %v755 = vpack.c.bf16 %v544, %v544
        %756 = vst [vmem:[#allocation2] sm:$0xff] 0.0
        %757 = vst [vmem:[#allocation2 + $0x8] sm:$0xff] 0.0
        %758 = vst [vmem:[#allocation2 + $0x10] sm:$0xff] 0.0
        %759 = vst [vmem:[#allocation2 + $0x18] sm:$0xff] 0.0
        %760 = vst [vmem:[#allocation2 + $0x120] sm:$0xff] 0.0
        %761 = vst [vmem:[#allocation2 + $0x128] sm:$0xff] 0.0
        %762 = vst [vmem:[#allocation2 + $0x130] sm:$0xff] 0.0
        %763 = vst [vmem:[#allocation2 + $0x138] sm:$0xff] 0.0
        %v764 = vlaneseq
        %v765 = vshrl.u32 %v764, 7
        %v766 = vadd.s32 %v765, 8
        %v767 = vadd.s32 %v765, 16
        %v768 = vadd.s32 %v765, 24
        %v769 = vadd.s32 %v765, 32
        %v770 = vadd.s32 %v765, 40
        %v771 = vadd.s32 %v765, 48
        %v772 = vadd.s32 %v765, 56
        %v773 = vadd.s32 %v765, 64
        %v774 = vadd.s32 %v765, 72
        %v775 = vadd.s32 %v765, 80
        %v776 = vadd.s32 %v765, 88
        %v777 = vadd.s32 %v765, 96
        %v778 = vadd.s32 %v765, 104
        %v779 = vadd.s32 %v765, 112
        %v780 = vadd.s32 %v765, 120
        %v781 = vadd.s32 %v765, 128
        %v782 = vadd.s32 %v765, 136
        %v783 = vadd.s32 %v765, 144
        %v784 = vadd.s32 %v765, 152
        %v785 = vadd.s32 %v765, 160
        %v786 = vadd.s32 %v765, 168
        %v787 = vadd.s32 %v765, 176
        %v788 = vadd.s32 %v765, 184
        %v789 = vadd.s32 %v765, 192
        %v790 = vadd.s32 %v765, 200
        %v791 = vadd.s32 %v765, 208
        %v792 = vadd.s32 %v765, 216
        %v793 = vadd.s32 %v765, 224
        %v794 = vadd.s32 %v765, 232
        %v795 = vadd.s32 %v765, 240
        %v796 = vadd.s32 %v765, 248
        %v797 = vadd.s32 %v765, 256
        %v798 = vadd.s32 %v765, 264
        %v799 = vadd.s32 %v765, 272
        %v800 = vadd.s32 %v765, 280
        %v801 = vadd.s32 %v765, 288
        %v802 = vadd.s32 %v765, 296
        %v803 = vadd.s32 %v765, 304
        %v804 = vadd.s32 %v765, 312
        %vm805 = vcmp.lt.s32.totalorder %v765, 0
        %v806 = vsub.s32 0, %v765
        %v807 = vsel %vm805, %v806, %v765
        %v808 = vshrl.u32 %v807, 4
        %v809 = vand.u32 %v807, 15
        %v810 = vsub.s32 0, %v809
        %v811 = vsel %vm805, %v810, %v809
        %vm812 = vcmp.lt.s32.totalorder %v766, 0
        %v813 = vsub.s32 0, %v766
        %v814 = vsel %vm812, %v813, %v766
        %v815 = vshrl.u32 %v814, 4
        %v816 = vand.u32 %v814, 15
        %v817 = vsub.s32 0, %v816
        %v818 = vsel %vm812, %v817, %v816
        %vm819 = vcmp.lt.s32.totalorder %v767, 0
        %v820 = vsub.s32 0, %v767
        %v821 = vsel %vm819, %v820, %v767
        %v822 = vshrl.u32 %v821, 4
        %v823 = vand.u32 %v821, 15
        %v824 = vsub.s32 0, %v823
        %v825 = vsel %vm819, %v824, %v823
        %vm826 = vcmp.lt.s32.totalorder %v768, 0
        %v827 = vsub.s32 0, %v768
        %v828 = vsel %vm826, %v827, %v768
        %v829 = vshrl.u32 %v828, 4
        %v830 = vand.u32 %v828, 15
        %v831 = vsub.s32 0, %v830
        %v832 = vsel %vm826, %v831, %v830
        %vm833 = vcmp.lt.s32.totalorder %v769, 0
        %v834 = vsub.s32 0, %v769
        %v835 = vsel %vm833, %v834, %v769
        %v836 = vshrl.u32 %v835, 4
        %v837 = vand.u32 %v835, 15
        %v838 = vsub.s32 0, %v837
        %v839 = vsel %vm833, %v838, %v837
        %vm840 = vcmp.lt.s32.totalorder %v770, 0
        %v841 = vsub.s32 0, %v770
        %v842 = vsel %vm840, %v841, %v770
        %v843 = vshrl.u32 %v842, 4
        %v844 = vand.u32 %v842, 15
        %v845 = vsub.s32 0, %v844
        %v846 = vsel %vm840, %v845, %v844
        %vm847 = vcmp.lt.s32.totalorder %v771, 0
        %v848 = vsub.s32 0, %v771
        %v849 = vsel %vm847, %v848, %v771
        %v850 = vshrl.u32 %v849, 4
        %v851 = vand.u32 %v849, 15
        %v852 = vsub.s32 0, %v851
        %v853 = vsel %vm847, %v852, %v851
        %vm854 = vcmp.lt.s32.totalorder %v772, 0
        %v855 = vsub.s32 0, %v772
        %v856 = vsel %vm854, %v855, %v772
        %v857 = vshrl.u32 %v856, 4
        %v858 = vand.u32 %v856, 15
        %v859 = vsub.s32 0, %v858
        %v860 = vsel %vm854, %v859, %v858
        %vm861 = vcmp.lt.s32.totalorder %v773, 0
        %v862 = vsub.s32 0, %v773
        %v863 = vsel %vm861, %v862, %v773
        %v864 = vshrl.u32 %v863, 4
        %v865 = vand.u32 %v863, 15
        %v866 = vsub.s32 0, %v865
        %v867 = vsel %vm861, %v866, %v865
        %vm868 = vcmp.lt.s32.totalorder %v774, 0
        %v869 = vsub.s32 0, %v774
        %v870 = vsel %vm868, %v869, %v774
        %v871 = vshrl.u32 %v870, 4
        %v872 = vand.u32 %v870, 15
        %v873 = vsub.s32 0, %v872
        %v874 = vsel %vm868, %v873, %v872
        %vm875 = vcmp.lt.s32.totalorder %v775, 0
        %v876 = vsub.s32 0, %v775
        %v877 = vsel %vm875, %v876, %v775
        %v878 = vshrl.u32 %v877, 4
        %v879 = vand.u32 %v877, 15
        %v880 = vsub.s32 0, %v879
        %v881 = vsel %vm875, %v880, %v879
        %vm882 = vcmp.lt.s32.totalorder %v776, 0
        %v883 = vsub.s32 0, %v776
        %v884 = vsel %vm882, %v883, %v776
        %v885 = vshrl.u32 %v884, 4
        %v886 = vand.u32 %v884, 15
        %v887 = vsub.s32 0, %v886
        %v888 = vsel %vm882, %v887, %v886
        %vm889 = vcmp.lt.s32.totalorder %v777, 0
        %v890 = vsub.s32 0, %v777
        %v891 = vsel %vm889, %v890, %v777
        %v892 = vshrl.u32 %v891, 4
        %v893 = vand.u32 %v891, 15
        %v894 = vsub.s32 0, %v893
        %v895 = vsel %vm889, %v894, %v893
        %vm896 = vcmp.lt.s32.totalorder %v778, 0
        %v897 = vsub.s32 0, %v778
        %v898 = vsel %vm896, %v897, %v778
        %v899 = vshrl.u32 %v898, 4
        %v900 = vand.u32 %v898, 15
        %v901 = vsub.s32 0, %v900
        %v902 = vsel %vm896, %v901, %v900
        %vm903 = vcmp.lt.s32.totalorder %v779, 0
        %v904 = vsub.s32 0, %v779
        %v905 = vsel %vm903, %v904, %v779
        %v906 = vshrl.u32 %v905, 4
        %v907 = vand.u32 %v905, 15
        %v908 = vsub.s32 0, %v907
        %v909 = vsel %vm903, %v908, %v907
        %vm910 = vcmp.lt.s32.totalorder %v780, 0
        %v911 = vsub.s32 0, %v780
        %v912 = vsel %vm910, %v911, %v780
        %v913 = vshrl.u32 %v912, 4
        %v914 = vand.u32 %v912, 15
        %v915 = vsub.s32 0, %v914
        %v916 = vsel %vm910, %v915, %v914
        %vm917 = vcmp.lt.s32.totalorder %v781, 0
        %v918 = vsub.s32 0, %v781
        %v919 = vsel %vm917, %v918, %v781
        %v920 = vshrl.u32 %v919, 4
        %v921 = vand.u32 %v919, 15
        %v922 = vsub.s32 0, %v921
        %v923 = vsel %vm917, %v922, %v921
        %vm924 = vcmp.lt.s32.totalorder %v782, 0
        %v925 = vsub.s32 0, %v782
        %v926 = vsel %vm924, %v925, %v782
        %v927 = vshrl.u32 %v926, 4
        %v928 = vand.u32 %v926, 15
        %v929 = vsub.s32 0, %v928
        %v930 = vsel %vm924, %v929, %v928
        %vm931 = vcmp.lt.s32.totalorder %v783, 0
        %v932 = vsub.s32 0, %v783
        %v933 = vsel %vm931, %v932, %v783
        %v934 = vshrl.u32 %v933, 4
        %v935 = vand.u32 %v933, 15
        %v936 = vsub.s32 0, %v935
        %v937 = vsel %vm931, %v936, %v935
        %vm938 = vcmp.lt.s32.totalorder %v784, 0
        %v939 = vsub.s32 0, %v784
        %v940 = vsel %vm938, %v939, %v784
        %v941 = vshrl.u32 %v940, 4
        %v942 = vand.u32 %v940, 15
        %v943 = vsub.s32 0, %v942
        %v944 = vsel %vm938, %v943, %v942
        %vm945 = vcmp.lt.s32.totalorder %v785, 0
        %v946 = vsub.s32 0, %v785
        %v947 = vsel %vm945, %v946, %v785
        %v948 = vshrl.u32 %v947, 4
        %v949 = vand.u32 %v947, 15
        %v950 = vsub.s32 0, %v949
        %v951 = vsel %vm945, %v950, %v949
        %vm952 = vcmp.lt.s32.totalorder %v786, 0
        %v953 = vsub.s32 0, %v786
        %v954 = vsel %vm952, %v953, %v786
        %v955 = vshrl.u32 %v954, 4
        %v956 = vand.u32 %v954, 15
        %v957 = vsub.s32 0, %v956
        %v958 = vsel %vm952, %v957, %v956
        %vm959 = vcmp.lt.s32.totalorder %v787, 0
        %v960 = vsub.s32 0, %v787
        %v961 = vsel %vm959, %v960, %v787
        %v962 = vshrl.u32 %v961, 4
        %v963 = vand.u32 %v961, 15
        %v964 = vsub.s32 0, %v963
        %v965 = vsel %vm959, %v964, %v963
        %vm966 = vcmp.lt.s32.totalorder %v788, 0
        %v967 = vsub.s32 0, %v788
        %v968 = vsel %vm966, %v967, %v788
        %v969 = vshrl.u32 %v968, 4
        %v970 = vand.u32 %v968, 15
        %v971 = vsub.s32 0, %v970
        %v972 = vsel %vm966, %v971, %v970
        %vm973 = vcmp.lt.s32.totalorder %v789, 0
        %v974 = vsub.s32 0, %v789
        %v975 = vsel %vm973, %v974, %v789
        %v976 = vshrl.u32 %v975, 4
        %v977 = vand.u32 %v975, 15
        %v978 = vsub.s32 0, %v977
        %v979 = vsel %vm973, %v978, %v977
        %vm980 = vcmp.lt.s32.totalorder %v790, 0
        %v981 = vsub.s32 0, %v790
        %v982 = vsel %vm980, %v981, %v790
        %v983 = vshrl.u32 %v982, 4
        %v984 = vand.u32 %v982, 15
        %v985 = vsub.s32 0, %v984
        %v986 = vsel %vm980, %v985, %v984
        %vm987 = vcmp.lt.s32.totalorder %v791, 0
        %v988 = vsub.s32 0, %v791
        %v989 = vsel %vm987, %v988, %v791
        %v990 = vshrl.u32 %v989, 4
        %v991 = vand.u32 %v989, 15
        %v992 = vsub.s32 0, %v991
        %v993 = vsel %vm987, %v992, %v991
        %vm994 = vcmp.lt.s32.totalorder %v792, 0
        %v995 = vsub.s32 0, %v792
        %v996 = vsel %vm994, %v995, %v792
        %v997 = vshrl.u32 %v996, 4
        %v998 = vand.u32 %v996, 15
        %v999 = vsub.s32 0, %v998
        %v1000 = vsel %vm994, %v999, %v998
        %vm1001 = vcmp.lt.s32.totalorder %v793, 0
        %v1002 = vsub.s32 0, %v793
        %v1003 = vsel %vm1001, %v1002, %v793
        %v1004 = vshrl.u32 %v1003, 4
        %v1005 = vand.u32 %v1003, 15
        %v1006 = vsub.s32 0, %v1005
        %v1007 = vsel %vm1001, %v1006, %v1005
        %vm1008 = vcmp.lt.s32.totalorder %v794, 0
        %v1009 = vsub.s32 0, %v794
        %v1010 = vsel %vm1008, %v1009, %v794
        %v1011 = vshrl.u32 %v1010, 4
        %v1012 = vand.u32 %v1010, 15
        %v1013 = vsub.s32 0, %v1012
        %v1014 = vsel %vm1008, %v1013, %v1012
        %vm1015 = vcmp.lt.s32.totalorder %v795, 0
        %v1016 = vsub.s32 0, %v795
        %v1017 = vsel %vm1015, %v1016, %v795
        %v1018 = vshrl.u32 %v1017, 4
        %v1019 = vand.u32 %v1017, 15
        %v1020 = vsub.s32 0, %v1019
        %v1021 = vsel %vm1015, %v1020, %v1019
        %vm1022 = vcmp.lt.s32.totalorder %v796, 0
        %v1023 = vsub.s32 0, %v796
        %v1024 = vsel %vm1022, %v1023, %v796
        %v1025 = vshrl.u32 %v1024, 4
        %v1026 = vand.u32 %v1024, 15
        %v1027 = vsub.s32 0, %v1026
        %v1028 = vsel %vm1022, %v1027, %v1026
        %vm1029 = vcmp.lt.s32.totalorder %v797, 0
        %v1030 = vsub.s32 0, %v797
        %v1031 = vsel %vm1029, %v1030, %v797
        %v1032 = vshrl.u32 %v1031, 4
        %v1033 = vand.u32 %v1031, 15
        %v1034 = vsub.s32 0, %v1033
        %v1035 = vsel %vm1029, %v1034, %v1033
        %vm1036 = vcmp.lt.s32.totalorder %v798, 0
        %v1037 = vsub.s32 0, %v798
        %v1038 = vsel %vm1036, %v1037, %v798
        %v1039 = vshrl.u32 %v1038, 4
        %v1040 = vand.u32 %v1038, 15
        %v1041 = vsub.s32 0, %v1040
        %v1042 = vsel %vm1036, %v1041, %v1040
        %vm1043 = vcmp.lt.s32.totalorder %v799, 0
        %v1044 = vsub.s32 0, %v799
        %v1045 = vsel %vm1043, %v1044, %v799
        %v1046 = vshrl.u32 %v1045, 4
        %v1047 = vand.u32 %v1045, 15
        %v1048 = vsub.s32 0, %v1047
        %v1049 = vsel %vm1043, %v1048, %v1047
        %vm1050 = vcmp.lt.s32.totalorder %v800, 0
        %v1051 = vsub.s32 0, %v800
        %v1052 = vsel %vm1050, %v1051, %v800
        %v1053 = vshrl.u32 %v1052, 4
        %v1054 = vand.u32 %v1052, 15
        %v1055 = vsub.s32 0, %v1054
        %v1056 = vsel %vm1050, %v1055, %v1054
        %vm1057 = vcmp.lt.s32.totalorder %v801, 0
        %v1058 = vsub.s32 0, %v801
        %v1059 = vsel %vm1057, %v1058, %v801
        %v1060 = vshrl.u32 %v1059, 4
        %v1061 = vand.u32 %v1059, 15
        %v1062 = vsub.s32 0, %v1061
        %v1063 = vsel %vm1057, %v1062, %v1061
        %vm1064 = vcmp.lt.s32.totalorder %v802, 0
        %v1065 = vsub.s32 0, %v802
        %v1066 = vsel %vm1064, %v1065, %v802
        %v1067 = vshrl.u32 %v1066, 4
        %v1068 = vand.u32 %v1066, 15
        %v1069 = vsub.s32 0, %v1068
        %v1070 = vsel %vm1064, %v1069, %v1068
        %vm1071 = vcmp.lt.s32.totalorder %v803, 0
        %v1072 = vsub.s32 0, %v803
        %v1073 = vsel %vm1071, %v1072, %v803
        %v1074 = vshrl.u32 %v1073, 4
        %v1075 = vand.u32 %v1073, 15
        %v1076 = vsub.s32 0, %v1075
        %v1077 = vsel %vm1071, %v1076, %v1075
        %vm1078 = vcmp.lt.s32.totalorder %v804, 0
        %v1079 = vsub.s32 0, %v804
        %v1080 = vsel %vm1078, %v1079, %v804
        %v1081 = vshrl.u32 %v1080, 4
        %v1082 = vand.u32 %v1080, 15
        %v1083 = vsub.s32 0, %v1082
        %v1084 = vsel %vm1078, %v1083, %v1082
        %vm1085 = vcmp.ne.s32.totalorder %v811, 0
        %vm1086 = vcmp.ne.s32.totalorder %v818, 0
        %vm1087 = vcmp.ne.s32.totalorder %v825, 0
        %vm1088 = vcmp.ne.s32.totalorder %v832, 0
        %vm1089 = vcmp.ne.s32.totalorder %v839, 0
        %vm1090 = vcmp.ne.s32.totalorder %v846, 0
        %vm1091 = vcmp.ne.s32.totalorder %v853, 0
        %vm1092 = vcmp.ne.s32.totalorder %v860, 0
        %vm1093 = vcmp.ne.s32.totalorder %v867, 0
        %vm1094 = vcmp.ne.s32.totalorder %v874, 0
        %vm1095 = vcmp.ne.s32.totalorder %v881, 0
        %vm1096 = vcmp.ne.s32.totalorder %v888, 0
        %vm1097 = vcmp.ne.s32.totalorder %v895, 0
        %vm1098 = vcmp.ne.s32.totalorder %v902, 0
        %vm1099 = vcmp.ne.s32.totalorder %v909, 0
        %vm1100 = vcmp.ne.s32.totalorder %v916, 0
        %vm1101 = vcmp.ne.s32.totalorder %v923, 0
        %vm1102 = vcmp.ne.s32.totalorder %v930, 0
        %vm1103 = vcmp.ne.s32.totalorder %v937, 0
        %vm1104 = vcmp.ne.s32.totalorder %v944, 0
        %vm1105 = vcmp.ne.s32.totalorder %v951, 0
        %vm1106 = vcmp.ne.s32.totalorder %v958, 0
        %vm1107 = vcmp.ne.s32.totalorder %v965, 0
        %vm1108 = vcmp.ne.s32.totalorder %v972, 0
        %vm1109 = vcmp.ne.s32.totalorder %v979, 0
        %vm1110 = vcmp.ne.s32.totalorder %v986, 0
        %vm1111 = vcmp.ne.s32.totalorder %v993, 0
        %vm1112 = vcmp.ne.s32.totalorder %v1000, 0
        %vm1113 = vcmp.ne.s32.totalorder %v1007, 0
        %vm1114 = vcmp.ne.s32.totalorder %v1014, 0
        %vm1115 = vcmp.ne.s32.totalorder %v1021, 0
        %vm1116 = vcmp.ne.s32.totalorder %v1028, 0
        %vm1117 = vcmp.ne.s32.totalorder %v1035, 0
        %vm1118 = vcmp.ne.s32.totalorder %v1042, 0
        %vm1119 = vcmp.ne.s32.totalorder %v1049, 0
        %vm1120 = vcmp.ne.s32.totalorder %v1056, 0
        %vm1121 = vcmp.ne.s32.totalorder %v1063, 0
        %vm1122 = vcmp.ne.s32.totalorder %v1070, 0
        %vm1123 = vcmp.ne.s32.totalorder %v1077, 0
        %vm1124 = vcmp.ne.s32.totalorder %v1084, 0
        %vm1125 = vcmp.lt.s32.totalorder %v811, 0
        %vm1126 = vcmp.lt.s32.totalorder %v818, 0
        %vm1127 = vcmp.lt.s32.totalorder %v825, 0
        %vm1128 = vcmp.lt.s32.totalorder %v832, 0
        %vm1129 = vcmp.lt.s32.totalorder %v839, 0
        %vm1130 = vcmp.lt.s32.totalorder %v846, 0
        %vm1131 = vcmp.lt.s32.totalorder %v853, 0
        %vm1132 = vcmp.lt.s32.totalorder %v860, 0
        %vm1133 = vcmp.lt.s32.totalorder %v867, 0
        %vm1134 = vcmp.lt.s32.totalorder %v874, 0
        %vm1135 = vcmp.lt.s32.totalorder %v881, 0
        %vm1136 = vcmp.lt.s32.totalorder %v888, 0
        %vm1137 = vcmp.lt.s32.totalorder %v895, 0
        %vm1138 = vcmp.lt.s32.totalorder %v902, 0
        %vm1139 = vcmp.lt.s32.totalorder %v909, 0
        %vm1140 = vcmp.lt.s32.totalorder %v916, 0
        %vm1141 = vcmp.lt.s32.totalorder %v923, 0
        %vm1142 = vcmp.lt.s32.totalorder %v930, 0
        %vm1143 = vcmp.lt.s32.totalorder %v937, 0
        %vm1144 = vcmp.lt.s32.totalorder %v944, 0
        %vm1145 = vcmp.lt.s32.totalorder %v951, 0
        %vm1146 = vcmp.lt.s32.totalorder %v958, 0
        %vm1147 = vcmp.lt.s32.totalorder %v965, 0
        %vm1148 = vcmp.lt.s32.totalorder %v972, 0
        %vm1149 = vcmp.lt.s32.totalorder %v979, 0
        %vm1150 = vcmp.lt.s32.totalorder %v986, 0
        %vm1151 = vcmp.lt.s32.totalorder %v993, 0
        %vm1152 = vcmp.lt.s32.totalorder %v1000, 0
        %vm1153 = vcmp.lt.s32.totalorder %v1007, 0
        %vm1154 = vcmp.lt.s32.totalorder %v1014, 0
        %vm1155 = vcmp.lt.s32.totalorder %v1021, 0
        %vm1156 = vcmp.lt.s32.totalorder %v1028, 0
        %vm1157 = vcmp.lt.s32.totalorder %v1035, 0
        %vm1158 = vcmp.lt.s32.totalorder %v1042, 0
        %vm1159 = vcmp.lt.s32.totalorder %v1049, 0
        %vm1160 = vcmp.lt.s32.totalorder %v1056, 0
        %vm1161 = vcmp.lt.s32.totalorder %v1063, 0
        %vm1162 = vcmp.lt.s32.totalorder %v1070, 0
        %vm1163 = vcmp.lt.s32.totalorder %v1077, 0
        %vm1164 = vcmp.lt.s32.totalorder %v1084, 0
        %vm1165 = vmand %vm1125, %vm1085
        %vm1166 = vmand %vm1126, %vm1086
        %vm1167 = vmand %vm1127, %vm1087
        %vm1168 = vmand %vm1128, %vm1088
        %vm1169 = vmand %vm1129, %vm1089
        %vm1170 = vmand %vm1130, %vm1090
        %vm1171 = vmand %vm1131, %vm1091
        %vm1172 = vmand %vm1132, %vm1092
        %vm1173 = vmand %vm1133, %vm1093
        %vm1174 = vmand %vm1134, %vm1094
        %vm1175 = vmand %vm1135, %vm1095
        %vm1176 = vmand %vm1136, %vm1096
        %vm1177 = vmand %vm1137, %vm1097
        %vm1178 = vmand %vm1138, %vm1098
        %vm1179 = vmand %vm1139, %vm1099
        %vm1180 = vmand %vm1140, %vm1100
        %vm1181 = vmand %vm1141, %vm1101
        %vm1182 = vmand %vm1142, %vm1102
        %vm1183 = vmand %vm1143, %vm1103
        %vm1184 = vmand %vm1144, %vm1104
        %vm1185 = vmand %vm1145, %vm1105
        %vm1186 = vmand %vm1146, %vm1106
        %vm1187 = vmand %vm1147, %vm1107
        %vm1188 = vmand %vm1148, %vm1108
        %vm1189 = vmand %vm1149, %vm1109
        %vm1190 = vmand %vm1150, %vm1110
        %vm1191 = vmand %vm1151, %vm1111
        %vm1192 = vmand %vm1152, %vm1112
        %vm1193 = vmand %vm1153, %vm1113
        %vm1194 = vmand %vm1154, %vm1114
        %vm1195 = vmand %vm1155, %vm1115
        %vm1196 = vmand %vm1156, %vm1116
        %vm1197 = vmand %vm1157, %vm1117
        %vm1198 = vmand %vm1158, %vm1118
        %vm1199 = vmand %vm1159, %vm1119
        %vm1200 = vmand %vm1160, %vm1120
        %vm1201 = vmand %vm1161, %vm1121
        %vm1202 = vmand %vm1162, %vm1122
        %vm1203 = vmand %vm1163, %vm1123
        %vm1204 = vmand %vm1164, %vm1124
        %v1205 = vadd.s32 %v811, 16
        %v1206 = vadd.s32 %v818, 16
        %v1207 = vadd.s32 %v825, 16
        %v1208 = vadd.s32 %v832, 16
        %v1209 = vadd.s32 %v839, 16
        %v1210 = vadd.s32 %v846, 16
        %v1211 = vadd.s32 %v853, 16
        %v1212 = vadd.s32 %v860, 16
        %v1213 = vadd.s32 %v867, 16
        %v1214 = vadd.s32 %v874, 16
        %v1215 = vadd.s32 %v881, 16
        %v1216 = vadd.s32 %v888, 16
        %v1217 = vadd.s32 %v895, 16
        %v1218 = vadd.s32 %v902, 16
        %v1219 = vadd.s32 %v909, 16
        %v1220 = vadd.s32 %v916, 16
        %v1221 = vadd.s32 %v923, 16
        %v1222 = vadd.s32 %v930, 16
        %v1223 = vadd.s32 %v937, 16
        %v1224 = vadd.s32 %v944, 16
        %v1225 = vadd.s32 %v951, 16
        %v1226 = vadd.s32 %v958, 16
        %v1227 = vadd.s32 %v965, 16
        %v1228 = vadd.s32 %v972, 16
        %v1229 = vadd.s32 %v979, 16
        %v1230 = vadd.s32 %v986, 16
        %v1231 = vadd.s32 %v993, 16
        %v1232 = vadd.s32 %v1000, 16
        %v1233 = vadd.s32 %v1007, 16
        %v1234 = vadd.s32 %v1014, 16
        %v1235 = vadd.s32 %v1021, 16
        %v1236 = vadd.s32 %v1028, 16
        %v1237 = vadd.s32 %v1035, 16
        %v1238 = vadd.s32 %v1042, 16
        %v1239 = vadd.s32 %v1049, 16
        %v1240 = vadd.s32 %v1056, 16
        %v1241 = vadd.s32 %v1063, 16
        %v1242 = vadd.s32 %v1070, 16
        %v1243 = vadd.s32 %v1077, 16
        %v1244 = vadd.s32 %v1084, 16
        %v1245 = vsel %vm1165, %v1205, %v811
        %v1246 = vsel %vm1166, %v1206, %v818
        %v1247 = vsel %vm1167, %v1207, %v825
        %v1248 = vsel %vm1168, %v1208, %v832
        %v1249 = vsel %vm1169, %v1209, %v839
        %v1250 = vsel %vm1170, %v1210, %v846
        %v1251 = vsel %vm1171, %v1211, %v853
        %v1252 = vsel %vm1172, %v1212, %v860
        %v1253 = vsel %vm1173, %v1213, %v867
        %v1254 = vsel %vm1174, %v1214, %v874
        %v1255 = vsel %vm1175, %v1215, %v881
        %v1256 = vsel %vm1176, %v1216, %v888
        %v1257 = vsel %vm1177, %v1217, %v895
        %v1258 = vsel %vm1178, %v1218, %v902
        %v1259 = vsel %vm1179, %v1219, %v909
        %v1260 = vsel %vm1180, %v1220, %v916
        %v1261 = vsel %vm1181, %v1221, %v923
        %v1262 = vsel %vm1182, %v1222, %v930
        %v1263 = vsel %vm1183, %v1223, %v937
        %v1264 = vsel %vm1184, %v1224, %v944
        %v1265 = vsel %vm1185, %v1225, %v951
        %v1266 = vsel %vm1186, %v1226, %v958
        %v1267 = vsel %vm1187, %v1227, %v965
        %v1268 = vsel %vm1188, %v1228, %v972
        %v1269 = vsel %vm1189, %v1229, %v979
        %v1270 = vsel %vm1190, %v1230, %v986
        %v1271 = vsel %vm1191, %v1231, %v993
        %v1272 = vsel %vm1192, %v1232, %v1000
        %v1273 = vsel %vm1193, %v1233, %v1007
        %v1274 = vsel %vm1194, %v1234, %v1014
        %v1275 = vsel %vm1195, %v1235, %v1021
        %v1276 = vsel %vm1196, %v1236, %v1028
        %v1277 = vsel %vm1197, %v1237, %v1035
        %v1278 = vsel %vm1198, %v1238, %v1042
        %v1279 = vsel %vm1199, %v1239, %v1049
        %v1280 = vsel %vm1200, %v1240, %v1056
        %v1281 = vsel %vm1201, %v1241, %v1063
        %v1282 = vsel %vm1202, %v1242, %v1070
        %v1283 = vsel %vm1203, %v1243, %v1077
        %v1284 = vsel %vm1204, %v1244, %v1084
        %vm1285 = vcmp.ge.s32.totalorder %v1245, 1
        %vm1286 = vcmp.ge.s32.totalorder %v1246, 1
        %vm1287 = vcmp.ge.s32.totalorder %v1247, 1
        %vm1288 = vcmp.ge.s32.totalorder %v1248, 1
        %vm1289 = vcmp.ge.s32.totalorder %v1249, 1
        %vm1290 = vcmp.ge.s32.totalorder %v1250, 1
        %vm1291 = vcmp.ge.s32.totalorder %v1251, 1
        %vm1292 = vcmp.ge.s32.totalorder %v1252, 1
        %vm1293 = vcmp.ge.s32.totalorder %v1253, 1
        %vm1294 = vcmp.ge.s32.totalorder %v1254, 1
        %vm1295 = vcmp.ge.s32.totalorder %v1255, 1
        %vm1296 = vcmp.ge.s32.totalorder %v1256, 1
        %vm1297 = vcmp.ge.s32.totalorder %v1257, 1
        %vm1298 = vcmp.ge.s32.totalorder %v1258, 1
        %vm1299 = vcmp.ge.s32.totalorder %v1259, 1
        %vm1300 = vcmp.ge.s32.totalorder %v1260, 1
        %vm1301 = vcmp.ge.s32.totalorder %v1261, 1
        %vm1302 = vcmp.ge.s32.totalorder %v1262, 1
        %vm1303 = vcmp.ge.s32.totalorder %v1263, 1
        %vm1304 = vcmp.ge.s32.totalorder %v1264, 1
        %vm1305 = vcmp.ge.s32.totalorder %v1265, 1
        %vm1306 = vcmp.ge.s32.totalorder %v1266, 1
        %vm1307 = vcmp.ge.s32.totalorder %v1267, 1
        %vm1308 = vcmp.ge.s32.totalorder %v1268, 1
        %vm1309 = vcmp.ge.s32.totalorder %v1269, 1
        %vm1310 = vcmp.ge.s32.totalorder %v1270, 1
        %vm1311 = vcmp.ge.s32.totalorder %v1271, 1
        %vm1312 = vcmp.ge.s32.totalorder %v1272, 1
        %vm1313 = vcmp.ge.s32.totalorder %v1273, 1
        %vm1314 = vcmp.ge.s32.totalorder %v1274, 1
        %vm1315 = vcmp.ge.s32.totalorder %v1275, 1
        %vm1316 = vcmp.ge.s32.totalorder %v1276, 1
        %vm1317 = vcmp.ge.s32.totalorder %v1277, 1
        %vm1318 = vcmp.ge.s32.totalorder %v1278, 1
        %vm1319 = vcmp.ge.s32.totalorder %v1279, 1
        %vm1320 = vcmp.ge.s32.totalorder %v1280, 1
        %vm1321 = vcmp.ge.s32.totalorder %v1281, 1
        %vm1322 = vcmp.ge.s32.totalorder %v1282, 1
        %vm1323 = vcmp.ge.s32.totalorder %v1283, 1
        %vm1324 = vcmp.ge.s32.totalorder %v1284, 1
        %vm1325 = vcmp.lt.s32.totalorder %v1245, 15
        %vm1326 = vcmp.lt.s32.totalorder %v1246, 15
        %vm1327 = vcmp.lt.s32.totalorder %v1247, 15
        %vm1328 = vcmp.lt.s32.totalorder %v1248, 15
        %vm1329 = vcmp.lt.s32.totalorder %v1249, 15
        %vm1330 = vcmp.lt.s32.totalorder %v1250, 15
        %vm1331 = vcmp.lt.s32.totalorder %v1251, 15
        %vm1332 = vcmp.lt.s32.totalorder %v1252, 15
        %vm1333 = vcmp.lt.s32.totalorder %v1253, 15
        %vm1334 = vcmp.lt.s32.totalorder %v1254, 15
        %vm1335 = vcmp.lt.s32.totalorder %v1255, 15
        %vm1336 = vcmp.lt.s32.totalorder %v1256, 15
        %vm1337 = vcmp.lt.s32.totalorder %v1257, 15
        %vm1338 = vcmp.lt.s32.totalorder %v1258, 15
        %vm1339 = vcmp.lt.s32.totalorder %v1259, 15
        %vm1340 = vcmp.lt.s32.totalorder %v1260, 15
        %vm1341 = vcmp.lt.s32.totalorder %v1261, 15
        %vm1342 = vcmp.lt.s32.totalorder %v1262, 15
        %vm1343 = vcmp.lt.s32.totalorder %v1263, 15
        %vm1344 = vcmp.lt.s32.totalorder %v1264, 15
        %vm1345 = vcmp.lt.s32.totalorder %v1265, 15
        %vm1346 = vcmp.lt.s32.totalorder %v1266, 15
        %vm1347 = vcmp.lt.s32.totalorder %v1267, 15
        %vm1348 = vcmp.lt.s32.totalorder %v1268, 15
        %vm1349 = vcmp.lt.s32.totalorder %v1269, 15
        %vm1350 = vcmp.lt.s32.totalorder %v1270, 15
        %vm1351 = vcmp.lt.s32.totalorder %v1271, 15
        %vm1352 = vcmp.lt.s32.totalorder %v1272, 15
        %vm1353 = vcmp.lt.s32.totalorder %v1273, 15
        %vm1354 = vcmp.lt.s32.totalorder %v1274, 15
        %vm1355 = vcmp.lt.s32.totalorder %v1275, 15
        %vm1356 = vcmp.lt.s32.totalorder %v1276, 15
        %vm1357 = vcmp.lt.s32.totalorder %v1277, 15
        %vm1358 = vcmp.lt.s32.totalorder %v1278, 15
        %vm1359 = vcmp.lt.s32.totalorder %v1279, 15
        %vm1360 = vcmp.lt.s32.totalorder %v1280, 15
        %vm1361 = vcmp.lt.s32.totalorder %v1281, 15
        %vm1362 = vcmp.lt.s32.totalorder %v1282, 15
        %vm1363 = vcmp.lt.s32.totalorder %v1283, 15
        %vm1364 = vcmp.lt.s32.totalorder %v1284, 15
        %vm1365 = vcmp.ge.s32.totalorder %v1245, 2
        %vm1366 = vcmp.ge.s32.totalorder %v1246, 2
        %vm1367 = vcmp.ge.s32.totalorder %v1247, 2
        %vm1368 = vcmp.ge.s32.totalorder %v1248, 2
        %vm1369 = vcmp.ge.s32.totalorder %v1249, 2
        %vm1370 = vcmp.ge.s32.totalorder %v1250, 2
        %vm1371 = vcmp.ge.s32.totalorder %v1251, 2
        %vm1372 = vcmp.ge.s32.totalorder %v1252, 2
        %vm1373 = vcmp.ge.s32.totalorder %v1253, 2
        %vm1374 = vcmp.ge.s32.totalorder %v1254, 2
        %vm1375 = vcmp.ge.s32.totalorder %v1255, 2
        %vm1376 = vcmp.ge.s32.totalorder %v1256, 2
        %vm1377 = vcmp.ge.s32.totalorder %v1257, 2
        %vm1378 = vcmp.ge.s32.totalorder %v1258, 2
        %vm1379 = vcmp.ge.s32.totalorder %v1259, 2
        %vm1380 = vcmp.ge.s32.totalorder %v1260, 2
        %vm1381 = vcmp.ge.s32.totalorder %v1261, 2
        %vm1382 = vcmp.ge.s32.totalorder %v1262, 2
        %vm1383 = vcmp.ge.s32.totalorder %v1263, 2
        %vm1384 = vcmp.ge.s32.totalorder %v1264, 2
        %vm1385 = vcmp.ge.s32.totalorder %v1265, 2
        %vm1386 = vcmp.ge.s32.totalorder %v1266, 2
        %vm1387 = vcmp.ge.s32.totalorder %v1267, 2
        %vm1388 = vcmp.ge.s32.totalorder %v1268, 2
        %vm1389 = vcmp.ge.s32.totalorder %v1269, 2
        %vm1390 = vcmp.ge.s32.totalorder %v1270, 2
        %vm1391 = vcmp.ge.s32.totalorder %v1271, 2
        %vm1392 = vcmp.ge.s32.totalorder %v1272, 2
        %vm1393 = vcmp.ge.s32.totalorder %v1273, 2
        %vm1394 = vcmp.ge.s32.totalorder %v1274, 2
        %vm1395 = vcmp.ge.s32.totalorder %v1275, 2
        %vm1396 = vcmp.ge.s32.totalorder %v1276, 2
        %vm1397 = vcmp.ge.s32.totalorder %v1277, 2
        %vm1398 = vcmp.ge.s32.totalorder %v1278, 2
        %vm1399 = vcmp.ge.s32.totalorder %v1279, 2
        %vm1400 = vcmp.ge.s32.totalorder %v1280, 2
        %vm1401 = vcmp.ge.s32.totalorder %v1281, 2
        %vm1402 = vcmp.ge.s32.totalorder %v1282, 2
        %vm1403 = vcmp.ge.s32.totalorder %v1283, 2
        %vm1404 = vcmp.ge.s32.totalorder %v1284, 2
        %vm1405 = vcmp.lt.s32.totalorder %v1245, 14
        %vm1406 = vcmp.lt.s32.totalorder %v1246, 14
        %vm1407 = vcmp.lt.s32.totalorder %v1247, 14
        %vm1408 = vcmp.lt.s32.totalorder %v1248, 14
        %vm1409 = vcmp.lt.s32.totalorder %v1249, 14
        %vm1410 = vcmp.lt.s32.totalorder %v1250, 14
        %vm1411 = vcmp.lt.s32.totalorder %v1251, 14
        %vm1412 = vcmp.lt.s32.totalorder %v1252, 14
        %vm1413 = vcmp.lt.s32.totalorder %v1253, 14
        %vm1414 = vcmp.lt.s32.totalorder %v1254, 14
        %vm1415 = vcmp.lt.s32.totalorder %v1255, 14
        %vm1416 = vcmp.lt.s32.totalorder %v1256, 14
        %vm1417 = vcmp.lt.s32.totalorder %v1257, 14
        %vm1418 = vcmp.lt.s32.totalorder %v1258, 14
        %vm1419 = vcmp.lt.s32.totalorder %v1259, 14
        %vm1420 = vcmp.lt.s32.totalorder %v1260, 14
        %vm1421 = vcmp.lt.s32.totalorder %v1261, 14
        %vm1422 = vcmp.lt.s32.totalorder %v1262, 14
        %vm1423 = vcmp.lt.s32.totalorder %v1263, 14
        %vm1424 = vcmp.lt.s32.totalorder %v1264, 14
        %vm1425 = vcmp.lt.s32.totalorder %v1265, 14
        %vm1426 = vcmp.lt.s32.totalorder %v1266, 14
        %vm1427 = vcmp.lt.s32.totalorder %v1267, 14
        %vm1428 = vcmp.lt.s32.totalorder %v1268, 14
        %vm1429 = vcmp.lt.s32.totalorder %v1269, 14
        %vm1430 = vcmp.lt.s32.totalorder %v1270, 14
        %vm1431 = vcmp.lt.s32.totalorder %v1271, 14
        %vm1432 = vcmp.lt.s32.totalorder %v1272, 14
        %vm1433 = vcmp.lt.s32.totalorder %v1273, 14
        %vm1434 = vcmp.lt.s32.totalorder %v1274, 14
        %vm1435 = vcmp.lt.s32.totalorder %v1275, 14
        %vm1436 = vcmp.lt.s32.totalorder %v1276, 14
        %vm1437 = vcmp.lt.s32.totalorder %v1277, 14
        %vm1438 = vcmp.lt.s32.totalorder %v1278, 14
        %vm1439 = vcmp.lt.s32.totalorder %v1279, 14
        %vm1440 = vcmp.lt.s32.totalorder %v1280, 14
        %vm1441 = vcmp.lt.s32.totalorder %v1281, 14
        %vm1442 = vcmp.lt.s32.totalorder %v1282, 14
        %vm1443 = vcmp.lt.s32.totalorder %v1283, 14
        %vm1444 = vcmp.lt.s32.totalorder %v1284, 14
        %v1445 = vld [vmem:[%s7] sm:$0xff]
        %v1446 = vld [vmem:[%s7 + $0x8] sm:$0x1]
        %1447 = vst [vmem:[#allocation2 + $0x20] sm:$0xff] %v556
        %1448 = vst [vmem:[#allocation2 + $0x28] sm:$0xff] %v558
        %1449 = vst [vmem:[#allocation2 + $0x30] sm:$0xff] %v561
        %1450 = vst [vmem:[#allocation2 + $0x38] sm:$0xff] %v563
        %1451 = vst [vmem:[#allocation2 + $0x40] sm:$0xff] %v566
        %1452 = vst [vmem:[#allocation2 + $0x48] sm:$0xff] %v568
        %1453 = vst [vmem:[#allocation2 + $0x50] sm:$0xff] %v571
        %1454 = vst [vmem:[#allocation2 + $0x58] sm:$0xff] %v573
        %1455 = vst [vmem:[#allocation2 + $0x60] sm:$0xff] %v576
        %1456 = vst [vmem:[#allocation2 + $0x68] sm:$0xff] %v578
        %1457 = vst [vmem:[#allocation2 + $0x70] sm:$0xff] %v581
        %1458 = vst [vmem:[#allocation2 + $0x78] sm:$0xff] %v583
        %1459 = vst [vmem:[#allocation2 + $0x80] sm:$0xff] %v586
        %1460 = vst [vmem:[#allocation2 + $0x88] sm:$0xff] %v588
        %1461 = vst [vmem:[#allocation2 + $0x90] sm:$0xff] %v591
        %1462 = vst [vmem:[#allocation2 + $0x98] sm:$0xff] %v593
        %1463 = vst [vmem:[#allocation2 + $0xa0] sm:$0xff] %v596
        %1464 = vst [vmem:[#allocation2 + $0xa8] sm:$0xff] %v598
        %1465 = vst [vmem:[#allocation2 + $0xb0] sm:$0xff] %v601
        %1466 = vst [vmem:[#allocation2 + $0xb8] sm:$0xff] %v603
        %1467 = vst [vmem:[#allocation2 + $0xc0] sm:$0xff] %v606
        %1468 = vst [vmem:[#allocation2 + $0xc8] sm:$0xff] %v608
        %1469 = vst [vmem:[#allocation2 + $0xd0] sm:$0xff] %v611
        %1470 = vst [vmem:[#allocation2 + $0xd8] sm:$0xff] %v613
        %1471 = vst [vmem:[#allocation2 + $0xe0] sm:$0xff] %v616
        %1472 = vst [vmem:[#allocation2 + $0xe8] sm:$0xff] %v618
        %1473 = vst [vmem:[#allocation2 + $0xf0] sm:$0xff] %v621
        %1474 = vst [vmem:[#allocation2 + $0xf8] sm:$0xff] %v623
        %1475 = vst [vmem:[#allocation2 + $0x100] sm:$0xff] %v626
        %1476 = vst [vmem:[#allocation2 + $0x108] sm:$0xff] %v628
        %1477 = vst [vmem:[#allocation2 + $0x110] sm:$0xff] %v631
        %1478 = vst [vmem:[#allocation2 + $0x118] sm:$0xff] %v633
        %v1479 = vld [vmem:[#allocation2 + $0x8] sm:$0xff]
        %v1480 = vld [vmem:[#allocation2 + $0x10] sm:$0xff]
        %v1481 = vld [vmem:[#allocation2 + $0x18] sm:$0xff]
        %v1482 = vld [vmem:[#allocation2 + $0x20] sm:$0xff]
        %v1483 = vld [vmem:[#allocation2 + $0x28] sm:$0xff]
        %v1484 = vld [vmem:[#allocation2 + $0x30] sm:$0xff]
        %v1485 = vld [vmem:[#allocation2 + $0x38] sm:$0xff]
        %v1486 = vld [vmem:[#allocation2 + $0x40] sm:$0xff]
        %v1487 = vld [vmem:[#allocation2 + $0x48] sm:$0xff]
        %v1488 = vld [vmem:[#allocation2 + $0x50] sm:$0xff]
        %v1489 = vld [vmem:[#allocation2 + $0x58] sm:$0xff]
        %v1490 = vld [vmem:[#allocation2 + $0x60] sm:$0xff]
        %v1491 = vld [vmem:[#allocation2 + $0x68] sm:$0xff]
        %v1492 = vld [vmem:[#allocation2 + $0x70] sm:$0xff]
        %v1493 = vld [vmem:[#allocation2 + $0x78] sm:$0xff]
        %v1494 = vld [vmem:[#allocation2 + $0x80] sm:$0xff]
        %v1495 = vld [vmem:[#allocation2 + $0x88] sm:$0xff]
        %v1496 = vld [vmem:[#allocation2 + $0x90] sm:$0xff]
        %v1497 = vld [vmem:[#allocation2 + $0x98] sm:$0xff]
        %v1498 = vld [vmem:[#allocation2 + $0xa0] sm:$0xff]
        %v1499 = vld [vmem:[#allocation2 + $0xa8] sm:$0xff]
        %v1500 = vld [vmem:[#allocation2 + $0xb0] sm:$0xff]
        %v1501 = vld [vmem:[#allocation2 + $0xb8] sm:$0xff]
        %v1502 = vld [vmem:[#allocation2 + $0xc0] sm:$0xff]
        %v1503 = vld [vmem:[#allocation2 + $0xc8] sm:$0xff]
        %v1504 = vld [vmem:[#allocation2 + $0xd0] sm:$0xff]
        %v1505 = vld [vmem:[#allocation2 + $0xd8] sm:$0xff]
        %v1506 = vld [vmem:[#allocation2 + $0xe0] sm:$0xff]
        %v1507 = vld [vmem:[#allocation2 + $0xe8] sm:$0xff]
        %v1508 = vld [vmem:[#allocation2 + $0xf0] sm:$0xff]
        %v1509 = vld [vmem:[#allocation2 + $0xf8] sm:$0xff]
        %v1510 = vld [vmem:[#allocation2 + $0x100] sm:$0xff]
        %v1511 = vld [vmem:[#allocation2 + $0x108] sm:$0xff]
        %v1512 = vld [vmem:[#allocation2 + $0x110] sm:$0xff]
        %v1513 = vld [vmem:[#allocation2 + $0x118] sm:$0xff]
        %v1514 = vld [vmem:[#allocation2 + $0x120] sm:$0xff]
        %v1515 = vld [vmem:[#allocation2 + $0x128] sm:$0xff]
        %v1516 = vld [vmem:[#allocation2 + $0x130] sm:$0xff]
        %vm1554 = vcmask 1040384
        %v1555 = vrot.slane %v1479, 7
        %v1556 = vrot.slane %v1480, 7
        %v1557 = vsel %vm1554, %v1555, %v1556
        %v1558 = vrot.slane %v1481, 7
        %v1559 = vsel %vm1554, %v1556, %v1558
        %v1560 = vrot.slane %v1482, 7
        %v1561 = vsel %vm1554, %v1558, %v1560
        %v1562 = vrot.slane %v1483, 7
        %v1563 = vsel %vm1554, %v1560, %v1562
        %v1564 = vrot.slane %v1484, 7
        %v1565 = vsel %vm1554, %v1562, %v1564
        %v1566 = vrot.slane %v1485, 7
        %v1567 = vsel %vm1554, %v1564, %v1566
        %v1568 = vrot.slane %v1486, 7
        %v1569 = vsel %vm1554, %v1566, %v1568
        %v1570 = vrot.slane %v1487, 7
        %v1571 = vsel %vm1554, %v1568, %v1570
        %v1572 = vrot.slane %v1488, 7
        %v1573 = vsel %vm1554, %v1570, %v1572
        %v1574 = vrot.slane %v1489, 7
        %v1575 = vsel %vm1554, %v1572, %v1574
        %v1576 = vrot.slane %v1490, 7
        %v1577 = vsel %vm1554, %v1574, %v1576
        %v1578 = vrot.slane %v1491, 7
        %v1579 = vsel %vm1554, %v1576, %v1578
        %v1580 = vrot.slane %v1492, 7
        %v1581 = vsel %vm1554, %v1578, %v1580
        %v1582 = vrot.slane %v1493, 7
        %v1583 = vsel %vm1554, %v1580, %v1582
        %v1584 = vrot.slane %v1494, 7
        %v1585 = vsel %vm1554, %v1582, %v1584
        %v1586 = vrot.slane %v1495, 7
        %v1587 = vsel %vm1554, %v1584, %v1586
        %v1588 = vrot.slane %v1496, 7
        %v1589 = vsel %vm1554, %v1586, %v1588
        %v1590 = vrot.slane %v1497, 7
        %v1591 = vsel %vm1554, %v1588, %v1590
        %v1592 = vrot.slane %v1498, 7
        %v1593 = vsel %vm1554, %v1590, %v1592
        %v1594 = vrot.slane %v1499, 7
        %v1595 = vsel %vm1554, %v1592, %v1594
        %v1596 = vrot.slane %v1500, 7
        %v1597 = vsel %vm1554, %v1594, %v1596
        %v1598 = vrot.slane %v1501, 7
        %v1599 = vsel %vm1554, %v1596, %v1598
        %v1600 = vrot.slane %v1502, 7
        %v1601 = vsel %vm1554, %v1598, %v1600
        %v1602 = vrot.slane %v1503, 7
        %v1603 = vsel %vm1554, %v1600, %v1602
        %v1604 = vrot.slane %v1504, 7
        %v1605 = vsel %vm1554, %v1602, %v1604
        %v1606 = vrot.slane %v1505, 7
        %v1607 = vsel %vm1554, %v1604, %v1606
        %v1608 = vrot.slane %v1506, 7
        %v1609 = vsel %vm1554, %v1606, %v1608
        %v1610 = vrot.slane %v1507, 7
        %v1611 = vsel %vm1554, %v1608, %v1610
        %v1612 = vrot.slane %v1508, 7
        %v1613 = vsel %vm1554, %v1610, %v1612
        %v1614 = vrot.slane %v1509, 7
        %v1615 = vsel %vm1554, %v1612, %v1614
        %v1616 = vrot.slane %v1510, 7
        %v1617 = vsel %vm1554, %v1614, %v1616
        %v1618 = vrot.slane %v1511, 7
        %v1619 = vsel %vm1554, %v1616, %v1618
        %v1620 = vrot.slane %v1512, 7
        %v1621 = vsel %vm1554, %v1618, %v1620
        %v1622 = vrot.slane %v1513, 7
        %v1623 = vsel %vm1554, %v1620, %v1622
        %v1624 = vrot.slane %v1514, 7
        %v1625 = vsel %vm1554, %v1622, %v1624
        %v1626 = vrot.slane %v1515, 7
        %v1627 = vsel %vm1554, %v1624, %v1626
        %v1664 = vsel %vm1285, 1, 0
        %v1665 = vsel %vm1286, 1, 0
        %v1666 = vsel %vm1287, 1, 0
        %v1667 = vsel %vm1288, 1, 0
        %v1668 = vsel %vm1289, 1, 0
        %v1669 = vsel %vm1290, 1, 0
        %v1670 = vsel %vm1291, 1, 0
        %v1671 = vsel %vm1292, 1, 0
        %v1672 = vsel %vm1293, 1, 0
        %v1673 = vsel %vm1294, 1, 0
        %v1674 = vsel %vm1295, 1, 0
        %v1675 = vsel %vm1296, 1, 0
        %v1676 = vsel %vm1297, 1, 0
        %v1677 = vsel %vm1298, 1, 0
        %v1678 = vsel %vm1299, 1, 0
        %v1679 = vsel %vm1300, 1, 0
        %v1680 = vsel %vm1301, 1, 0
        %v1681 = vsel %vm1302, 1, 0
        %v1682 = vsel %vm1303, 1, 0
        %v1683 = vsel %vm1304, 1, 0
        %v1684 = vsel %vm1305, 1, 0
        %v1685 = vsel %vm1306, 1, 0
        %v1686 = vsel %vm1307, 1, 0
        %v1687 = vsel %vm1308, 1, 0
        %v1688 = vsel %vm1309, 1, 0
        %v1689 = vsel %vm1310, 1, 0
        %v1690 = vsel %vm1311, 1, 0
        %v1691 = vsel %vm1312, 1, 0
        %v1692 = vsel %vm1313, 1, 0
        %v1693 = vsel %vm1314, 1, 0
        %v1694 = vsel %vm1315, 1, 0
        %v1695 = vsel %vm1316, 1, 0
        %v1696 = vsel %vm1317, 1, 0
        %v1697 = vsel %vm1318, 1, 0
        %v1698 = vsel %vm1319, 1, 0
        %v1699 = vsel %vm1320, 1, 0
        %v1700 = vsel %vm1321, 1, 0
        %v1701 = vsel %vm1322, 1, 0
        %v1702 = vsel %vm1323, 1, 0
        %v1703 = vsel %vm1324, 1, 0
        %vm1704 = vcmp.eq.s32.totalorder %v1664, 1
        %vm1705 = vcmp.eq.s32.totalorder %v1665, 1
        %vm1706 = vcmp.eq.s32.totalorder %v1666, 1
        %vm1707 = vcmp.eq.s32.totalorder %v1667, 1
        %vm1708 = vcmp.eq.s32.totalorder %v1668, 1
        %vm1709 = vcmp.eq.s32.totalorder %v1669, 1
        %vm1710 = vcmp.eq.s32.totalorder %v1670, 1
        %vm1711 = vcmp.eq.s32.totalorder %v1671, 1
        %vm1712 = vcmp.eq.s32.totalorder %v1672, 1
        %vm1713 = vcmp.eq.s32.totalorder %v1673, 1
        %vm1714 = vcmp.eq.s32.totalorder %v1674, 1
        %vm1715 = vcmp.eq.s32.totalorder %v1675, 1
        %vm1716 = vcmp.eq.s32.totalorder %v1676, 1
        %vm1717 = vcmp.eq.s32.totalorder %v1677, 1
        %vm1718 = vcmp.eq.s32.totalorder %v1678, 1
        %vm1719 = vcmp.eq.s32.totalorder %v1679, 1
        %vm1720 = vcmp.eq.s32.totalorder %v1680, 1
        %vm1721 = vcmp.eq.s32.totalorder %v1681, 1
        %vm1722 = vcmp.eq.s32.totalorder %v1682, 1
        %vm1723 = vcmp.eq.s32.totalorder %v1683, 1
        %vm1724 = vcmp.eq.s32.totalorder %v1684, 1
        %vm1725 = vcmp.eq.s32.totalorder %v1685, 1
        %vm1726 = vcmp.eq.s32.totalorder %v1686, 1
        %vm1727 = vcmp.eq.s32.totalorder %v1687, 1
        %vm1728 = vcmp.eq.s32.totalorder %v1688, 1
        %vm1729 = vcmp.eq.s32.totalorder %v1689, 1
        %vm1730 = vcmp.eq.s32.totalorder %v1690, 1
        %vm1731 = vcmp.eq.s32.totalorder %v1691, 1
        %vm1732 = vcmp.eq.s32.totalorder %v1692, 1
        %vm1733 = vcmp.eq.s32.totalorder %v1693, 1
        %vm1734 = vcmp.eq.s32.totalorder %v1694, 1
        %vm1735 = vcmp.eq.s32.totalorder %v1695, 1
        %vm1736 = vcmp.eq.s32.totalorder %v1696, 1
        %vm1737 = vcmp.eq.s32.totalorder %v1697, 1
        %vm1738 = vcmp.eq.s32.totalorder %v1698, 1
        %vm1739 = vcmp.eq.s32.totalorder %v1699, 1
        %vm1740 = vcmp.eq.s32.totalorder %v1700, 1
        %vm1741 = vcmp.eq.s32.totalorder %v1701, 1
        %vm1742 = vcmp.eq.s32.totalorder %v1702, 1
        %vm1743 = vcmp.eq.s32.totalorder %v1703, 1
        %v1744 = vsel %vm1706, %v1557, 0.0
        %v1745 = vsel %vm1707, %v1559, 0.0
        %v1746 = vsel %vm1708, %v1561, 0.0
        %v1747 = vsel %vm1709, %v1563, 0.0
        %v1748 = vsel %vm1710, %v1565, 0.0
        %v1749 = vsel %vm1711, %v1567, 0.0
        %v1750 = vsel %vm1712, %v1569, 0.0
        %v1751 = vsel %vm1713, %v1571, 0.0
        %v1752 = vsel %vm1714, %v1573, 0.0
        %v1753 = vsel %vm1715, %v1575, 0.0
        %v1754 = vsel %vm1716, %v1577, 0.0
        %v1755 = vsel %vm1717, %v1579, 0.0
        %v1756 = vsel %vm1718, %v1581, 0.0
        %v1757 = vsel %vm1719, %v1583, 0.0
        %v1758 = vsel %vm1720, %v1585, 0.0
        %v1759 = vsel %vm1721, %v1587, 0.0
        %v1760 = vsel %vm1722, %v1589, 0.0
        %v1761 = vsel %vm1723, %v1591, 0.0
        %v1762 = vsel %vm1724, %v1593, 0.0
        %v1763 = vsel %vm1725, %v1595, 0.0
        %v1764 = vsel %vm1726, %v1597, 0.0
        %v1765 = vsel %vm1727, %v1599, 0.0
        %v1766 = vsel %vm1728, %v1601, 0.0
        %v1767 = vsel %vm1729, %v1603, 0.0
        %v1768 = vsel %vm1730, %v1605, 0.0
        %v1769 = vsel %vm1731, %v1607, 0.0
        %v1770 = vsel %vm1732, %v1609, 0.0
        %v1771 = vsel %vm1733, %v1611, 0.0
        %v1772 = vsel %vm1734, %v1613, 0.0
        %v1773 = vsel %vm1735, %v1615, 0.0
        %v1774 = vsel %vm1736, %v1617, 0.0
        %v1775 = vsel %vm1737, %v1619, 0.0
        %v1776 = vsel %vm1738, %v1621, 0.0
        %v1777 = vsel %vm1739, %v1623, 0.0
        %v1778 = vsel %vm1740, %v1625, 0.0
        %v1779 = vsel %vm1741, %v1627, 0.0
        %v1780 = vperm.slane %v1445, 0
        %v1781 = vmul.f32 %v1744, %v1780
        %v1782 = vmul.f32 %v1745, %v1780
        %v1783 = vmul.f32 %v1746, %v1780
        %v1784 = vmul.f32 %v1747, %v1780
        %v1785 = vmul.f32 %v1748, %v1780
        %v1786 = vmul.f32 %v1749, %v1780
        %v1787 = vmul.f32 %v1750, %v1780
        %v1788 = vmul.f32 %v1751, %v1780
        %v1789 = vmul.f32 %v1752, %v1780
        %v1790 = vmul.f32 %v1753, %v1780
        %v1791 = vmul.f32 %v1754, %v1780
        %v1792 = vmul.f32 %v1755, %v1780
        %v1793 = vmul.f32 %v1756, %v1780
        %v1794 = vmul.f32 %v1757, %v1780
        %v1795 = vmul.f32 %v1758, %v1780
        %v1796 = vmul.f32 %v1759, %v1780
        %v1797 = vmul.f32 %v1760, %v1780
        %v1798 = vmul.f32 %v1761, %v1780
        %v1799 = vmul.f32 %v1762, %v1780
        %v1800 = vmul.f32 %v1763, %v1780
        %v1801 = vmul.f32 %v1764, %v1780
        %v1802 = vmul.f32 %v1765, %v1780
        %v1803 = vmul.f32 %v1766, %v1780
        %v1804 = vmul.f32 %v1767, %v1780
        %v1805 = vmul.f32 %v1768, %v1780
        %v1806 = vmul.f32 %v1769, %v1780
        %v1807 = vmul.f32 %v1770, %v1780
        %v1808 = vmul.f32 %v1771, %v1780
        %v1809 = vmul.f32 %v1772, %v1780
        %v1810 = vmul.f32 %v1773, %v1780
        %v1811 = vmul.f32 %v1774, %v1780
        %v1812 = vmul.f32 %v1775, %v1780
        %v1813 = vadd.f32 %v1781, 0.0
        %v1814 = vadd.f32 %v1782, 0.0
        %v1815 = vadd.f32 %v1783, 0.0
        %v1816 = vadd.f32 %v1784, 0.0
        %v1817 = vadd.f32 %v1785, 0.0
        %v1818 = vadd.f32 %v1786, 0.0
        %v1819 = vadd.f32 %v1787, 0.0
        %v1820 = vadd.f32 %v1788, 0.0
        %v1821 = vadd.f32 %v1789, 0.0
        %v1822 = vadd.f32 %v1790, 0.0
        %v1823 = vadd.f32 %v1791, 0.0
        %v1824 = vadd.f32 %v1792, 0.0
        %v1825 = vadd.f32 %v1793, 0.0
        %v1826 = vadd.f32 %v1794, 0.0
        %v1827 = vadd.f32 %v1795, 0.0
        %v1828 = vadd.f32 %v1796, 0.0
        %v1829 = vadd.f32 %v1797, 0.0
        %v1830 = vadd.f32 %v1798, 0.0
        %v1831 = vadd.f32 %v1799, 0.0
        %v1832 = vadd.f32 %v1800, 0.0
        %v1833 = vadd.f32 %v1801, 0.0
        %v1834 = vadd.f32 %v1802, 0.0
        %v1835 = vadd.f32 %v1803, 0.0
        %v1836 = vadd.f32 %v1804, 0.0
        %v1837 = vadd.f32 %v1805, 0.0
        %v1838 = vadd.f32 %v1806, 0.0
        %v1839 = vadd.f32 %v1807, 0.0
        %v1840 = vadd.f32 %v1808, 0.0
        %v1841 = vadd.f32 %v1809, 0.0
        %v1842 = vadd.f32 %v1810, 0.0
        %v1843 = vadd.f32 %v1811, 0.0
        %v1844 = vadd.f32 %v1812, 0.0
        %v1845 = vperm.slane %v1445, 3
        %v1846 = vmul.f32 %v1746, %v1845
        %v1847 = vmul.f32 %v1747, %v1845
        %v1848 = vmul.f32 %v1748, %v1845
        %v1849 = vmul.f32 %v1749, %v1845
        %v1850 = vmul.f32 %v1750, %v1845
        %v1851 = vmul.f32 %v1751, %v1845
        %v1852 = vmul.f32 %v1752, %v1845
        %v1853 = vmul.f32 %v1753, %v1845
        %v1854 = vmul.f32 %v1754, %v1845
        %v1855 = vmul.f32 %v1755, %v1845
        %v1856 = vmul.f32 %v1756, %v1845
        %v1857 = vmul.f32 %v1757, %v1845
        %v1858 = vmul.f32 %v1758, %v1845
        %v1859 = vmul.f32 %v1759, %v1845
        %v1860 = vmul.f32 %v1760, %v1845
        %v1861 = vmul.f32 %v1761, %v1845
        %v1862 = vmul.f32 %v1762, %v1845
        %v1863 = vmul.f32 %v1763, %v1845
        %v1864 = vmul.f32 %v1764, %v1845
        %v1865 = vmul.f32 %v1765, %v1845
        %v1866 = vmul.f32 %v1766, %v1845
        %v1867 = vmul.f32 %v1767, %v1845
        %v1868 = vmul.f32 %v1768, %v1845
        %v1869 = vmul.f32 %v1769, %v1845
        %v1870 = vmul.f32 %v1770, %v1845
        %v1871 = vmul.f32 %v1771, %v1845
        %v1872 = vmul.f32 %v1772, %v1845
        %v1873 = vmul.f32 %v1773, %v1845
        %v1874 = vmul.f32 %v1774, %v1845
        %v1875 = vmul.f32 %v1775, %v1845
        %v1876 = vmul.f32 %v1776, %v1845
        %v1877 = vmul.f32 %v1777, %v1845
        %v1878 = vadd.f32 %v1813, %v1846
        %v1879 = vadd.f32 %v1814, %v1847
        %v1880 = vadd.f32 %v1815, %v1848
        %v1881 = vadd.f32 %v1816, %v1849
        %v1882 = vadd.f32 %v1817, %v1850
        %v1883 = vadd.f32 %v1818, %v1851
        %v1884 = vadd.f32 %v1819, %v1852
        %v1885 = vadd.f32 %v1820, %v1853
        %v1886 = vadd.f32 %v1821, %v1854
        %v1887 = vadd.f32 %v1822, %v1855
        %v1888 = vadd.f32 %v1823, %v1856
        %v1889 = vadd.f32 %v1824, %v1857
        %v1890 = vadd.f32 %v1825, %v1858
        %v1891 = vadd.f32 %v1826, %v1859
        %v1892 = vadd.f32 %v1827, %v1860
        %v1893 = vadd.f32 %v1828, %v1861
        %v1894 = vadd.f32 %v1829, %v1862
        %v1895 = vadd.f32 %v1830, %v1863
        %v1896 = vadd.f32 %v1831, %v1864
        %v1897 = vadd.f32 %v1832, %v1865
        %v1898 = vadd.f32 %v1833, %v1866
        %v1899 = vadd.f32 %v1834, %v1867
        %v1900 = vadd.f32 %v1835, %v1868
        %v1901 = vadd.f32 %v1836, %v1869
        %v1902 = vadd.f32 %v1837, %v1870
        %v1903 = vadd.f32 %v1838, %v1871
        %v1904 = vadd.f32 %v1839, %v1872
        %v1905 = vadd.f32 %v1840, %v1873
        %v1906 = vadd.f32 %v1841, %v1874
        %v1907 = vadd.f32 %v1842, %v1875
        %v1908 = vadd.f32 %v1843, %v1876
        %v1909 = vadd.f32 %v1844, %v1877
        %v1910 = vperm.slane %v1445, 6
        %v1911 = vmul.f32 %v1748, %v1910
        %v1912 = vmul.f32 %v1749, %v1910
        %v1913 = vmul.f32 %v1750, %v1910
        %v1914 = vmul.f32 %v1751, %v1910
        %v1915 = vmul.f32 %v1752, %v1910
        %v1916 = vmul.f32 %v1753, %v1910
        %v1917 = vmul.f32 %v1754, %v1910
        %v1918 = vmul.f32 %v1755, %v1910
        %v1919 = vmul.f32 %v1756, %v1910
        %v1920 = vmul.f32 %v1757, %v1910
        %v1921 = vmul.f32 %v1758, %v1910
        %v1922 = vmul.f32 %v1759, %v1910
        %v1923 = vmul.f32 %v1760, %v1910
        %v1924 = vmul.f32 %v1761, %v1910
        %v1925 = vmul.f32 %v1762, %v1910
        %v1926 = vmul.f32 %v1763, %v1910
        %v1927 = vmul.f32 %v1764, %v1910
        %v1928 = vmul.f32 %v1765, %v1910
        %v1929 = vmul.f32 %v1766, %v1910
        %v1930 = vmul.f32 %v1767, %v1910
        %v1931 = vmul.f32 %v1768, %v1910
        %v1932 = vmul.f32 %v1769, %v1910
        %v1933 = vmul.f32 %v1770, %v1910
        %v1934 = vmul.f32 %v1771, %v1910
        %v1935 = vmul.f32 %v1772, %v1910
        %v1936 = vmul.f32 %v1773, %v1910
        %v1937 = vmul.f32 %v1774, %v1910
        %v1938 = vmul.f32 %v1775, %v1910
        %v1939 = vmul.f32 %v1776, %v1910
        %v1940 = vmul.f32 %v1777, %v1910
        %v1941 = vmul.f32 %v1778, %v1910
        %v1942 = vmul.f32 %v1779, %v1910
        %v1943 = vadd.f32 %v1878, %v1911
        %v1944 = vadd.f32 %v1879, %v1912
        %v1945 = vadd.f32 %v1880, %v1913
        %v1946 = vadd.f32 %v1881, %v1914
        %v1947 = vadd.f32 %v1882, %v1915
        %v1948 = vadd.f32 %v1883, %v1916
        %v1949 = vadd.f32 %v1884, %v1917
        %v1950 = vadd.f32 %v1885, %v1918
        %v1951 = vadd.f32 %v1886, %v1919
        %v1952 = vadd.f32 %v1887, %v1920
        %v1953 = vadd.f32 %v1888, %v1921
        %v1954 = vadd.f32 %v1889, %v1922
        %v1955 = vadd.f32 %v1890, %v1923
        %v1956 = vadd.f32 %v1891, %v1924
        %v1957 = vadd.f32 %v1892, %v1925
        %v1958 = vadd.f32 %v1893, %v1926
        %v1959 = vadd.f32 %v1894, %v1927
        %v1960 = vadd.f32 %v1895, %v1928
        %v1961 = vadd.f32 %v1896, %v1929
        %v1962 = vadd.f32 %v1897, %v1930
        %v1963 = vadd.f32 %v1898, %v1931
        %v1964 = vadd.f32 %v1899, %v1932
        %v1965 = vadd.f32 %v1900, %v1933
        %v1966 = vadd.f32 %v1901, %v1934
        %v1967 = vadd.f32 %v1902, %v1935
        %v1968 = vadd.f32 %v1903, %v1936
        %v1969 = vadd.f32 %v1904, %v1937
        %v1970 = vadd.f32 %v1905, %v1938
        %v1971 = vadd.f32 %v1906, %v1939
        %v1972 = vadd.f32 %v1907, %v1940
        %v1973 = vadd.f32 %v1908, %v1941
        %v1974 = vadd.f32 %v1909, %v1942
        %v1975 = vadd.f32 %v1943, 0.0
        %v1976 = vadd.f32 %v1944, 0.0
        %v1977 = vadd.f32 %v1945, 0.0
        %v1978 = vadd.f32 %v1946, 0.0
        %v1979 = vadd.f32 %v1947, 0.0
        %v1980 = vadd.f32 %v1948, 0.0
        %v1981 = vadd.f32 %v1949, 0.0
        %v1982 = vadd.f32 %v1950, 0.0
        %v1983 = vadd.f32 %v1951, 0.0
        %v1984 = vadd.f32 %v1952, 0.0
        %v1985 = vadd.f32 %v1953, 0.0
        %v1986 = vadd.f32 %v1954, 0.0
        %v1987 = vadd.f32 %v1955, 0.0
        %v1988 = vadd.f32 %v1956, 0.0
        %v1989 = vadd.f32 %v1957, 0.0
        %v1990 = vadd.f32 %v1958, 0.0
        %v1991 = vadd.f32 %v1959, 0.0
        %v1992 = vadd.f32 %v1960, 0.0
        %v1993 = vadd.f32 %v1961, 0.0
        %v1994 = vadd.f32 %v1962, 0.0
        %v1995 = vadd.f32 %v1963, 0.0
        %v1996 = vadd.f32 %v1964, 0.0
        %v1997 = vadd.f32 %v1965, 0.0
        %v1998 = vadd.f32 %v1966, 0.0
        %v1999 = vadd.f32 %v1967, 0.0
        %v2000 = vadd.f32 %v1968, 0.0
        %v2001 = vadd.f32 %v1969, 0.0
        %v2002 = vadd.f32 %v1970, 0.0
        %v2003 = vadd.f32 %v1971, 0.0
        %v2004 = vadd.f32 %v1972, 0.0
        %v2005 = vadd.f32 %v1973, 0.0
        %v2006 = vadd.f32 %v1974, 0.0
        %v2007 = vperm.slane %v1445, 1
        %v2008 = vmul.f32 %v1480, %v2007
        %v2009 = vmul.f32 %v1481, %v2007
        %v2010 = vmul.f32 %v1482, %v2007
        %v2011 = vmul.f32 %v1483, %v2007
        %v2012 = vmul.f32 %v1484, %v2007
        %v2013 = vmul.f32 %v1485, %v2007
        %v2014 = vmul.f32 %v1486, %v2007
        %v2015 = vmul.f32 %v1487, %v2007
        %v2016 = vmul.f32 %v1488, %v2007
        %v2017 = vmul.f32 %v1489, %v2007
        %v2018 = vmul.f32 %v1490, %v2007
        %v2019 = vmul.f32 %v1491, %v2007
        %v2020 = vmul.f32 %v1492, %v2007
        %v2021 = vmul.f32 %v1493, %v2007
        %v2022 = vmul.f32 %v1494, %v2007
        %v2023 = vmul.f32 %v1495, %v2007
        %v2024 = vmul.f32 %v1496, %v2007
        %v2025 = vmul.f32 %v1497, %v2007
        %v2026 = vmul.f32 %v1498, %v2007
        %v2027 = vmul.f32 %v1499, %v2007
        %v2028 = vmul.f32 %v1500, %v2007
        %v2029 = vmul.f32 %v1501, %v2007
        %v2030 = vmul.f32 %v1502, %v2007
        %v2031 = vmul.f32 %v1503, %v2007
        %v2032 = vmul.f32 %v1504, %v2007
        %v2033 = vmul.f32 %v1505, %v2007
        %v2034 = vmul.f32 %v1506, %v2007
        %v2035 = vmul.f32 %v1507, %v2007
        %v2036 = vmul.f32 %v1508, %v2007
        %v2037 = vmul.f32 %v1509, %v2007
        %v2038 = vmul.f32 %v1510, %v2007
        %v2039 = vmul.f32 %v1511, %v2007
        %v2040 = vadd.f32 %v2008, 0.0
        %v2041 = vadd.f32 %v2009, 0.0
        %v2042 = vadd.f32 %v2010, 0.0
        %v2043 = vadd.f32 %v2011, 0.0
        %v2044 = vadd.f32 %v2012, 0.0
        %v2045 = vadd.f32 %v2013, 0.0
        %v2046 = vadd.f32 %v2014, 0.0
        %v2047 = vadd.f32 %v2015, 0.0
        %v2048 = vadd.f32 %v2016, 0.0
        %v2049 = vadd.f32 %v2017, 0.0
        %v2050 = vadd.f32 %v2018, 0.0
        %v2051 = vadd.f32 %v2019, 0.0
        %v2052 = vadd.f32 %v2020, 0.0
        %v2053 = vadd.f32 %v2021, 0.0
        %v2054 = vadd.f32 %v2022, 0.0
        %v2055 = vadd.f32 %v2023, 0.0
        %v2056 = vadd.f32 %v2024, 0.0
        %v2057 = vadd.f32 %v2025, 0.0
        %v2058 = vadd.f32 %v2026, 0.0
        %v2059 = vadd.f32 %v2027, 0.0
        %v2060 = vadd.f32 %v2028, 0.0
        %v2061 = vadd.f32 %v2029, 0.0
        %v2062 = vadd.f32 %v2030, 0.0
        %v2063 = vadd.f32 %v2031, 0.0
        %v2064 = vadd.f32 %v2032, 0.0
        %v2065 = vadd.f32 %v2033, 0.0
        %v2066 = vadd.f32 %v2034, 0.0
        %v2067 = vadd.f32 %v2035, 0.0
        %v2068 = vadd.f32 %v2036, 0.0
        %v2069 = vadd.f32 %v2037, 0.0
        %v2070 = vadd.f32 %v2038, 0.0
        %v2071 = vadd.f32 %v2039, 0.0
        %v2072 = vperm.slane %v1445, 4
        %v2073 = vmul.f32 %v1482, %v2072
        %v2074 = vmul.f32 %v1483, %v2072
        %v2075 = vmul.f32 %v1484, %v2072
        %v2076 = vmul.f32 %v1485, %v2072
        %v2077 = vmul.f32 %v1486, %v2072
        %v2078 = vmul.f32 %v1487, %v2072
        %v2079 = vmul.f32 %v1488, %v2072
        %v2080 = vmul.f32 %v1489, %v2072
        %v2081 = vmul.f32 %v1490, %v2072
        %v2082 = vmul.f32 %v1491, %v2072
        %v2083 = vmul.f32 %v1492, %v2072
        %v2084 = vmul.f32 %v1493, %v2072
        %v2085 = vmul.f32 %v1494, %v2072
        %v2086 = vmul.f32 %v1495, %v2072
        %v2087 = vmul.f32 %v1496, %v2072
        %v2088 = vmul.f32 %v1497, %v2072
        %v2089 = vmul.f32 %v1498, %v2072
        %v2090 = vmul.f32 %v1499, %v2072
        %v2091 = vmul.f32 %v1500, %v2072
        %v2092 = vmul.f32 %v1501, %v2072
        %v2093 = vmul.f32 %v1502, %v2072
        %v2094 = vmul.f32 %v1503, %v2072
        %v2095 = vmul.f32 %v1504, %v2072
        %v2096 = vmul.f32 %v1505, %v2072
        %v2097 = vmul.f32 %v1506, %v2072
        %v2098 = vmul.f32 %v1507, %v2072
        %v2099 = vmul.f32 %v1508, %v2072
        %v2100 = vmul.f32 %v1509, %v2072
        %v2101 = vmul.f32 %v1510, %v2072
        %v2102 = vmul.f32 %v1511, %v2072
        %v2103 = vmul.f32 %v1512, %v2072
        %v2104 = vmul.f32 %v1513, %v2072
        %v2105 = vadd.f32 %v2040, %v2073
        %v2106 = vadd.f32 %v2041, %v2074
        %v2107 = vadd.f32 %v2042, %v2075
        %v2108 = vadd.f32 %v2043, %v2076
        %v2109 = vadd.f32 %v2044, %v2077
        %v2110 = vadd.f32 %v2045, %v2078
        %v2111 = vadd.f32 %v2046, %v2079
        %v2112 = vadd.f32 %v2047, %v2080
        %v2113 = vadd.f32 %v2048, %v2081
        %v2114 = vadd.f32 %v2049, %v2082
        %v2115 = vadd.f32 %v2050, %v2083
        %v2116 = vadd.f32 %v2051, %v2084
        %v2117 = vadd.f32 %v2052, %v2085
        %v2118 = vadd.f32 %v2053, %v2086
        %v2119 = vadd.f32 %v2054, %v2087
        %v2120 = vadd.f32 %v2055, %v2088
        %v2121 = vadd.f32 %v2056, %v2089
        %v2122 = vadd.f32 %v2057, %v2090
        %v2123 = vadd.f32 %v2058, %v2091
        %v2124 = vadd.f32 %v2059, %v2092
        %v2125 = vadd.f32 %v2060, %v2093
        %v2126 = vadd.f32 %v2061, %v2094
        %v2127 = vadd.f32 %v2062, %v2095
        %v2128 = vadd.f32 %v2063, %v2096
        %v2129 = vadd.f32 %v2064, %v2097
        %v2130 = vadd.f32 %v2065, %v2098
        %v2131 = vadd.f32 %v2066, %v2099
        %v2132 = vadd.f32 %v2067, %v2100
        %v2133 = vadd.f32 %v2068, %v2101
        %v2134 = vadd.f32 %v2069, %v2102
        %v2135 = vadd.f32 %v2070, %v2103
        %v2136 = vadd.f32 %v2071, %v2104
        %v2137 = vperm.slane %v1445, 7
        %v2138 = vmul.f32 %v1484, %v2137
        %v2139 = vmul.f32 %v1485, %v2137
        %v2140 = vmul.f32 %v1486, %v2137
        %v2141 = vmul.f32 %v1487, %v2137
        %v2142 = vmul.f32 %v1488, %v2137
        %v2143 = vmul.f32 %v1489, %v2137
        %v2144 = vmul.f32 %v1490, %v2137
        %v2145 = vmul.f32 %v1491, %v2137
        %v2146 = vmul.f32 %v1492, %v2137
        %v2147 = vmul.f32 %v1493, %v2137
        %v2148 = vmul.f32 %v1494, %v2137
        %v2149 = vmul.f32 %v1495, %v2137
        %v2150 = vmul.f32 %v1496, %v2137
        %v2151 = vmul.f32 %v1497, %v2137
        %v2152 = vmul.f32 %v1498, %v2137
        %v2153 = vmul.f32 %v1499, %v2137
        %v2154 = vmul.f32 %v1500, %v2137
        %v2155 = vmul.f32 %v1501, %v2137
        %v2156 = vmul.f32 %v1502, %v2137
        %v2157 = vmul.f32 %v1503, %v2137
        %v2158 = vmul.f32 %v1504, %v2137
        %v2159 = vmul.f32 %v1505, %v2137
        %v2160 = vmul.f32 %v1506, %v2137
        %v2161 = vmul.f32 %v1507, %v2137
        %v2162 = vmul.f32 %v1508, %v2137
        %v2163 = vmul.f32 %v1509, %v2137
        %v2164 = vmul.f32 %v1510, %v2137
        %v2165 = vmul.f32 %v1511, %v2137
        %v2166 = vmul.f32 %v1512, %v2137
        %v2167 = vmul.f32 %v1513, %v2137
        %v2168 = vmul.f32 %v1514, %v2137
        %v2169 = vmul.f32 %v1515, %v2137
        %v2170 = vadd.f32 %v2105, %v2138
        %v2171 = vadd.f32 %v2106, %v2139
        %v2172 = vadd.f32 %v2107, %v2140
        %v2173 = vadd.f32 %v2108, %v2141
        %v2174 = vadd.f32 %v2109, %v2142
        %v2175 = vadd.f32 %v2110, %v2143
        %v2176 = vadd.f32 %v2111, %v2144
        %v2177 = vadd.f32 %v2112, %v2145
        %v2178 = vadd.f32 %v2113, %v2146
        %v2179 = vadd.f32 %v2114, %v2147
        %v2180 = vadd.f32 %v2115, %v2148
        %v2181 = vadd.f32 %v2116, %v2149
        %v2182 = vadd.f32 %v2117, %v2150
        %v2183 = vadd.f32 %v2118, %v2151
        %v2184 = vadd.f32 %v2119, %v2152
        %v2185 = vadd.f32 %v2120, %v2153
        %v2186 = vadd.f32 %v2121, %v2154
        %v2187 = vadd.f32 %v2122, %v2155
        %v2188 = vadd.f32 %v2123, %v2156
        %v2189 = vadd.f32 %v2124, %v2157
        %v2190 = vadd.f32 %v2125, %v2158
        %v2191 = vadd.f32 %v2126, %v2159
        %v2192 = vadd.f32 %v2127, %v2160
        %v2193 = vadd.f32 %v2128, %v2161
        %v2194 = vadd.f32 %v2129, %v2162
        %v2195 = vadd.f32 %v2130, %v2163
        %v2196 = vadd.f32 %v2131, %v2164
        %v2197 = vadd.f32 %v2132, %v2165
        %v2198 = vadd.f32 %v2133, %v2166
        %v2199 = vadd.f32 %v2134, %v2167
        %v2200 = vadd.f32 %v2135, %v2168
        %v2201 = vadd.f32 %v2136, %v2169
        %v2202 = vadd.f32 %v1975, %v2170
        %v2203 = vadd.f32 %v1976, %v2171
        %v2204 = vadd.f32 %v1977, %v2172
        %v2205 = vadd.f32 %v1978, %v2173
        %v2206 = vadd.f32 %v1979, %v2174
        %v2207 = vadd.f32 %v1980, %v2175
        %v2208 = vadd.f32 %v1981, %v2176
        %v2209 = vadd.f32 %v1982, %v2177
        %v2210 = vadd.f32 %v1983, %v2178
        %v2211 = vadd.f32 %v1984, %v2179
        %v2212 = vadd.f32 %v1985, %v2180
        %v2213 = vadd.f32 %v1986, %v2181
        %v2214 = vadd.f32 %v1987, %v2182
        %v2215 = vadd.f32 %v1988, %v2183
        %v2216 = vadd.f32 %v1989, %v2184
        %v2217 = vadd.f32 %v1990, %v2185
        %v2218 = vadd.f32 %v1991, %v2186
        %v2219 = vadd.f32 %v1992, %v2187
        %v2220 = vadd.f32 %v1993, %v2188
        %v2221 = vadd.f32 %v1994, %v2189
        %v2222 = vadd.f32 %v1995, %v2190
        %v2223 = vadd.f32 %v1996, %v2191
        %v2224 = vadd.f32 %v1997, %v2192
        %v2225 = vadd.f32 %v1998, %v2193
        %v2226 = vadd.f32 %v1999, %v2194
        %v2227 = vadd.f32 %v2000, %v2195
        %v2228 = vadd.f32 %v2001, %v2196
        %v2229 = vadd.f32 %v2002, %v2197
        %v2230 = vadd.f32 %v2003, %v2198
        %v2231 = vadd.f32 %v2004, %v2199
        %v2232 = vadd.f32 %v2005, %v2200
        %v2233 = vadd.f32 %v2006, %v2201
        %vm2235 = vcmask 1046528
        %v2236 = vrot.slane %v1480, 1
        %v2237 = vrot.slane %v1481, 1
        %v2238 = vsel %vm2235, %v2236, %v2237
        %v2239 = vrot.slane %v1482, 1
        %v2240 = vsel %vm2235, %v2237, %v2239
        %v2241 = vrot.slane %v1483, 1
        %v2242 = vsel %vm2235, %v2239, %v2241
        %v2243 = vrot.slane %v1484, 1
        %v2244 = vsel %vm2235, %v2241, %v2243
        %v2245 = vrot.slane %v1485, 1
        %v2246 = vsel %vm2235, %v2243, %v2245
        %v2247 = vrot.slane %v1486, 1
        %v2248 = vsel %vm2235, %v2245, %v2247
        %v2249 = vrot.slane %v1487, 1
        %v2250 = vsel %vm2235, %v2247, %v2249
        %v2251 = vrot.slane %v1488, 1
        %v2252 = vsel %vm2235, %v2249, %v2251
        %v2253 = vrot.slane %v1489, 1
        %v2254 = vsel %vm2235, %v2251, %v2253
        %v2255 = vrot.slane %v1490, 1
        %v2256 = vsel %vm2235, %v2253, %v2255
        %v2257 = vrot.slane %v1491, 1
        %v2258 = vsel %vm2235, %v2255, %v2257
        %v2259 = vrot.slane %v1492, 1
        %v2260 = vsel %vm2235, %v2257, %v2259
        %v2261 = vrot.slane %v1493, 1
        %v2262 = vsel %vm2235, %v2259, %v2261
        %v2263 = vrot.slane %v1494, 1
        %v2264 = vsel %vm2235, %v2261, %v2263
        %v2265 = vrot.slane %v1495, 1
        %v2266 = vsel %vm2235, %v2263, %v2265
        %v2267 = vrot.slane %v1496, 1
        %v2268 = vsel %vm2235, %v2265, %v2267
        %v2269 = vrot.slane %v1497, 1
        %v2270 = vsel %vm2235, %v2267, %v2269
        %v2271 = vrot.slane %v1498, 1
        %v2272 = vsel %vm2235, %v2269, %v2271
        %v2273 = vrot.slane %v1499, 1
        %v2274 = vsel %vm2235, %v2271, %v2273
        %v2275 = vrot.slane %v1500, 1
        %v2276 = vsel %vm2235, %v2273, %v2275
        %v2277 = vrot.slane %v1501, 1
        %v2278 = vsel %vm2235, %v2275, %v2277
        %v2279 = vrot.slane %v1502, 1
        %v2280 = vsel %vm2235, %v2277, %v2279
        %v2281 = vrot.slane %v1503, 1
        %v2282 = vsel %vm2235, %v2279, %v2281
        %v2283 = vrot.slane %v1504, 1
        %v2284 = vsel %vm2235, %v2281, %v2283
        %v2285 = vrot.slane %v1505, 1
        %v2286 = vsel %vm2235, %v2283, %v2285
        %v2287 = vrot.slane %v1506, 1
        %v2288 = vsel %vm2235, %v2285, %v2287
        %v2289 = vrot.slane %v1507, 1
        %v2290 = vsel %vm2235, %v2287, %v2289
        %v2291 = vrot.slane %v1508, 1
        %v2292 = vsel %vm2235, %v2289, %v2291
        %v2293 = vrot.slane %v1509, 1
        %v2294 = vsel %vm2235, %v2291, %v2293
        %v2295 = vrot.slane %v1510, 1
        %v2296 = vsel %vm2235, %v2293, %v2295
        %v2297 = vrot.slane %v1511, 1
        %v2298 = vsel %vm2235, %v2295, %v2297
        %v2299 = vrot.slane %v1512, 1
        %v2300 = vsel %vm2235, %v2297, %v2299
        %v2301 = vrot.slane %v1513, 1
        %v2302 = vsel %vm2235, %v2299, %v2301
        %v2303 = vrot.slane %v1514, 1
        %v2304 = vsel %vm2235, %v2301, %v2303
        %v2305 = vrot.slane %v1515, 1
        %v2306 = vsel %vm2235, %v2303, %v2305
        %v2307 = vrot.slane %v1516, 1
        %v2308 = vsel %vm2235, %v2305, %v2307
        %v2345 = vsel %vm1325, 1, 0
        %v2346 = vsel %vm1326, 1, 0
        %v2347 = vsel %vm1327, 1, 0
        %v2348 = vsel %vm1328, 1, 0
        %v2349 = vsel %vm1329, 1, 0
        %v2350 = vsel %vm1330, 1, 0
        %v2351 = vsel %vm1331, 1, 0
        %v2352 = vsel %vm1332, 1, 0
        %v2353 = vsel %vm1333, 1, 0
        %v2354 = vsel %vm1334, 1, 0
        %v2355 = vsel %vm1335, 1, 0
        %v2356 = vsel %vm1336, 1, 0
        %v2357 = vsel %vm1337, 1, 0
        %v2358 = vsel %vm1338, 1, 0
        %v2359 = vsel %vm1339, 1, 0
        %v2360 = vsel %vm1340, 1, 0
        %v2361 = vsel %vm1341, 1, 0
        %v2362 = vsel %vm1342, 1, 0
        %v2363 = vsel %vm1343, 1, 0
        %v2364 = vsel %vm1344, 1, 0
        %v2365 = vsel %vm1345, 1, 0
        %v2366 = vsel %vm1346, 1, 0
        %v2367 = vsel %vm1347, 1, 0
        %v2368 = vsel %vm1348, 1, 0
        %v2369 = vsel %vm1349, 1, 0
        %v2370 = vsel %vm1350, 1, 0
        %v2371 = vsel %vm1351, 1, 0
        %v2372 = vsel %vm1352, 1, 0
        %v2373 = vsel %vm1353, 1, 0
        %v2374 = vsel %vm1354, 1, 0
        %v2375 = vsel %vm1355, 1, 0
        %v2376 = vsel %vm1356, 1, 0
        %v2377 = vsel %vm1357, 1, 0
        %v2378 = vsel %vm1358, 1, 0
        %v2379 = vsel %vm1359, 1, 0
        %v2380 = vsel %vm1360, 1, 0
        %v2381 = vsel %vm1361, 1, 0
        %v2382 = vsel %vm1362, 1, 0
        %v2383 = vsel %vm1363, 1, 0
        %v2384 = vsel %vm1364, 1, 0
        %vm2385 = vcmp.eq.s32.totalorder %v2345, 1
        %vm2386 = vcmp.eq.s32.totalorder %v2346, 1
        %vm2387 = vcmp.eq.s32.totalorder %v2347, 1
        %vm2388 = vcmp.eq.s32.totalorder %v2348, 1
        %vm2389 = vcmp.eq.s32.totalorder %v2349, 1
        %vm2390 = vcmp.eq.s32.totalorder %v2350, 1
        %vm2391 = vcmp.eq.s32.totalorder %v2351, 1
        %vm2392 = vcmp.eq.s32.totalorder %v2352, 1
        %vm2393 = vcmp.eq.s32.totalorder %v2353, 1
        %vm2394 = vcmp.eq.s32.totalorder %v2354, 1
        %vm2395 = vcmp.eq.s32.totalorder %v2355, 1
        %vm2396 = vcmp.eq.s32.totalorder %v2356, 1
        %vm2397 = vcmp.eq.s32.totalorder %v2357, 1
        %vm2398 = vcmp.eq.s32.totalorder %v2358, 1
        %vm2399 = vcmp.eq.s32.totalorder %v2359, 1
        %vm2400 = vcmp.eq.s32.totalorder %v2360, 1
        %vm2401 = vcmp.eq.s32.totalorder %v2361, 1
        %vm2402 = vcmp.eq.s32.totalorder %v2362, 1
        %vm2403 = vcmp.eq.s32.totalorder %v2363, 1
        %vm2404 = vcmp.eq.s32.totalorder %v2364, 1
        %vm2405 = vcmp.eq.s32.totalorder %v2365, 1
        %vm2406 = vcmp.eq.s32.totalorder %v2366, 1
        %vm2407 = vcmp.eq.s32.totalorder %v2367, 1
        %vm2408 = vcmp.eq.s32.totalorder %v2368, 1
        %vm2409 = vcmp.eq.s32.totalorder %v2369, 1
        %vm2410 = vcmp.eq.s32.totalorder %v2370, 1
        %vm2411 = vcmp.eq.s32.totalorder %v2371, 1
        %vm2412 = vcmp.eq.s32.totalorder %v2372, 1
        %vm2413 = vcmp.eq.s32.totalorder %v2373, 1
        %vm2414 = vcmp.eq.s32.totalorder %v2374, 1
        %vm2415 = vcmp.eq.s32.totalorder %v2375, 1
        %vm2416 = vcmp.eq.s32.totalorder %v2376, 1
        %vm2417 = vcmp.eq.s32.totalorder %v2377, 1
        %vm2418 = vcmp.eq.s32.totalorder %v2378, 1
        %vm2419 = vcmp.eq.s32.totalorder %v2379, 1
        %vm2420 = vcmp.eq.s32.totalorder %v2380, 1
        %vm2421 = vcmp.eq.s32.totalorder %v2381, 1
        %vm2422 = vcmp.eq.s32.totalorder %v2382, 1
        %vm2423 = vcmp.eq.s32.totalorder %v2383, 1
        %vm2424 = vcmp.eq.s32.totalorder %v2384, 1
        %v2425 = vsel %vm2387, %v2238, 0.0
        %v2426 = vsel %vm2388, %v2240, 0.0
        %v2427 = vsel %vm2389, %v2242, 0.0
        %v2428 = vsel %vm2390, %v2244, 0.0
        %v2429 = vsel %vm2391, %v2246, 0.0
        %v2430 = vsel %vm2392, %v2248, 0.0
        %v2431 = vsel %vm2393, %v2250, 0.0
        %v2432 = vsel %vm2394, %v2252, 0.0
        %v2433 = vsel %vm2395, %v2254, 0.0
        %v2434 = vsel %vm2396, %v2256, 0.0
        %v2435 = vsel %vm2397, %v2258, 0.0
        %v2436 = vsel %vm2398, %v2260, 0.0
        %v2437 = vsel %vm2399, %v2262, 0.0
        %v2438 = vsel %vm2400, %v2264, 0.0
        %v2439 = vsel %vm2401, %v2266, 0.0
        %v2440 = vsel %vm2402, %v2268, 0.0
        %v2441 = vsel %vm2403, %v2270, 0.0
        %v2442 = vsel %vm2404, %v2272, 0.0
        %v2443 = vsel %vm2405, %v2274, 0.0
        %v2444 = vsel %vm2406, %v2276, 0.0
        %v2445 = vsel %vm2407, %v2278, 0.0
        %v2446 = vsel %vm2408, %v2280, 0.0
        %v2447 = vsel %vm2409, %v2282, 0.0
        %v2448 = vsel %vm2410, %v2284, 0.0
        %v2449 = vsel %vm2411, %v2286, 0.0
        %v2450 = vsel %vm2412, %v2288, 0.0
        %v2451 = vsel %vm2413, %v2290, 0.0
        %v2452 = vsel %vm2414, %v2292, 0.0
        %v2453 = vsel %vm2415, %v2294, 0.0
        %v2454 = vsel %vm2416, %v2296, 0.0
        %v2455 = vsel %vm2417, %v2298, 0.0
        %v2456 = vsel %vm2418, %v2300, 0.0
        %v2457 = vsel %vm2419, %v2302, 0.0
        %v2458 = vsel %vm2420, %v2304, 0.0
        %v2459 = vsel %vm2421, %v2306, 0.0
        %v2460 = vsel %vm2422, %v2308, 0.0
        %v2461 = vperm.slane %v1445, 2
        %v2462 = vmul.f32 %v2425, %v2461
        %v2463 = vmul.f32 %v2426, %v2461
        %v2464 = vmul.f32 %v2427, %v2461
        %v2465 = vmul.f32 %v2428, %v2461
        %v2466 = vmul.f32 %v2429, %v2461
        %v2467 = vmul.f32 %v2430, %v2461
        %v2468 = vmul.f32 %v2431, %v2461
        %v2469 = vmul.f32 %v2432, %v2461
        %v2470 = vmul.f32 %v2433, %v2461
        %v2471 = vmul.f32 %v2434, %v2461
        %v2472 = vmul.f32 %v2435, %v2461
        %v2473 = vmul.f32 %v2436, %v2461
        %v2474 = vmul.f32 %v2437, %v2461
        %v2475 = vmul.f32 %v2438, %v2461
        %v2476 = vmul.f32 %v2439, %v2461
        %v2477 = vmul.f32 %v2440, %v2461
        %v2478 = vmul.f32 %v2441, %v2461
        %v2479 = vmul.f32 %v2442, %v2461
        %v2480 = vmul.f32 %v2443, %v2461
        %v2481 = vmul.f32 %v2444, %v2461
        %v2482 = vmul.f32 %v2445, %v2461
        %v2483 = vmul.f32 %v2446, %v2461
        %v2484 = vmul.f32 %v2447, %v2461
        %v2485 = vmul.f32 %v2448, %v2461
        %v2486 = vmul.f32 %v2449, %v2461
        %v2487 = vmul.f32 %v2450, %v2461
        %v2488 = vmul.f32 %v2451, %v2461
        %v2489 = vmul.f32 %v2452, %v2461
        %v2490 = vmul.f32 %v2453, %v2461
        %v2491 = vmul.f32 %v2454, %v2461
        %v2492 = vmul.f32 %v2455, %v2461
        %v2493 = vmul.f32 %v2456, %v2461
        %v2494 = vadd.f32 %v2462, 0.0
        %v2495 = vadd.f32 %v2463, 0.0
        %v2496 = vadd.f32 %v2464, 0.0
        %v2497 = vadd.f32 %v2465, 0.0
        %v2498 = vadd.f32 %v2466, 0.0
        %v2499 = vadd.f32 %v2467, 0.0
        %v2500 = vadd.f32 %v2468, 0.0
        %v2501 = vadd.f32 %v2469, 0.0
        %v2502 = vadd.f32 %v2470, 0.0
        %v2503 = vadd.f32 %v2471, 0.0
        %v2504 = vadd.f32 %v2472, 0.0
        %v2505 = vadd.f32 %v2473, 0.0
        %v2506 = vadd.f32 %v2474, 0.0
        %v2507 = vadd.f32 %v2475, 0.0
        %v2508 = vadd.f32 %v2476, 0.0
        %v2509 = vadd.f32 %v2477, 0.0
        %v2510 = vadd.f32 %v2478, 0.0
        %v2511 = vadd.f32 %v2479, 0.0
        %v2512 = vadd.f32 %v2480, 0.0
        %v2513 = vadd.f32 %v2481, 0.0
        %v2514 = vadd.f32 %v2482, 0.0
        %v2515 = vadd.f32 %v2483, 0.0
        %v2516 = vadd.f32 %v2484, 0.0
        %v2517 = vadd.f32 %v2485, 0.0
        %v2518 = vadd.f32 %v2486, 0.0
        %v2519 = vadd.f32 %v2487, 0.0
        %v2520 = vadd.f32 %v2488, 0.0
        %v2521 = vadd.f32 %v2489, 0.0
        %v2522 = vadd.f32 %v2490, 0.0
        %v2523 = vadd.f32 %v2491, 0.0
        %v2524 = vadd.f32 %v2492, 0.0
        %v2525 = vadd.f32 %v2493, 0.0
        %v2526 = vperm.slane %v1445, 5
        %v2527 = vmul.f32 %v2427, %v2526
        %v2528 = vmul.f32 %v2428, %v2526
        %v2529 = vmul.f32 %v2429, %v2526
        %v2530 = vmul.f32 %v2430, %v2526
        %v2531 = vmul.f32 %v2431, %v2526
        %v2532 = vmul.f32 %v2432, %v2526
        %v2533 = vmul.f32 %v2433, %v2526
        %v2534 = vmul.f32 %v2434, %v2526
        %v2535 = vmul.f32 %v2435, %v2526
        %v2536 = vmul.f32 %v2436, %v2526
        %v2537 = vmul.f32 %v2437, %v2526
        %v2538 = vmul.f32 %v2438, %v2526
        %v2539 = vmul.f32 %v2439, %v2526
        %v2540 = vmul.f32 %v2440, %v2526
        %v2541 = vmul.f32 %v2441, %v2526
        %v2542 = vmul.f32 %v2442, %v2526
        %v2543 = vmul.f32 %v2443, %v2526
        %v2544 = vmul.f32 %v2444, %v2526
        %v2545 = vmul.f32 %v2445, %v2526
        %v2546 = vmul.f32 %v2446, %v2526
        %v2547 = vmul.f32 %v2447, %v2526
        %v2548 = vmul.f32 %v2448, %v2526
        %v2549 = vmul.f32 %v2449, %v2526
        %v2550 = vmul.f32 %v2450, %v2526
        %v2551 = vmul.f32 %v2451, %v2526
        %v2552 = vmul.f32 %v2452, %v2526
        %v2553 = vmul.f32 %v2453, %v2526
        %v2554 = vmul.f32 %v2454, %v2526
        %v2555 = vmul.f32 %v2455, %v2526
        %v2556 = vmul.f32 %v2456, %v2526
        %v2557 = vmul.f32 %v2457, %v2526
        %v2558 = vmul.f32 %v2458, %v2526
        %v2559 = vadd.f32 %v2494, %v2527
        %v2560 = vadd.f32 %v2495, %v2528
        %v2561 = vadd.f32 %v2496, %v2529
        %v2562 = vadd.f32 %v2497, %v2530
        %v2563 = vadd.f32 %v2498, %v2531
        %v2564 = vadd.f32 %v2499, %v2532
        %v2565 = vadd.f32 %v2500, %v2533
        %v2566 = vadd.f32 %v2501, %v2534
        %v2567 = vadd.f32 %v2502, %v2535
        %v2568 = vadd.f32 %v2503, %v2536
        %v2569 = vadd.f32 %v2504, %v2537
        %v2570 = vadd.f32 %v2505, %v2538
        %v2571 = vadd.f32 %v2506, %v2539
        %v2572 = vadd.f32 %v2507, %v2540
        %v2573 = vadd.f32 %v2508, %v2541
        %v2574 = vadd.f32 %v2509, %v2542
        %v2575 = vadd.f32 %v2510, %v2543
        %v2576 = vadd.f32 %v2511, %v2544
        %v2577 = vadd.f32 %v2512, %v2545
        %v2578 = vadd.f32 %v2513, %v2546
        %v2579 = vadd.f32 %v2514, %v2547
        %v2580 = vadd.f32 %v2515, %v2548
        %v2581 = vadd.f32 %v2516, %v2549
        %v2582 = vadd.f32 %v2517, %v2550
        %v2583 = vadd.f32 %v2518, %v2551
        %v2584 = vadd.f32 %v2519, %v2552
        %v2585 = vadd.f32 %v2520, %v2553
        %v2586 = vadd.f32 %v2521, %v2554
        %v2587 = vadd.f32 %v2522, %v2555
        %v2588 = vadd.f32 %v2523, %v2556
        %v2589 = vadd.f32 %v2524, %v2557
        %v2590 = vadd.f32 %v2525, %v2558
        %v2591 = vperm.slane %v1446, 0
        %v2592 = vmul.f32 %v2429, %v2591
        %v2593 = vmul.f32 %v2430, %v2591
        %v2594 = vmul.f32 %v2431, %v2591
        %v2595 = vmul.f32 %v2432, %v2591
        %v2596 = vmul.f32 %v2433, %v2591
        %v2597 = vmul.f32 %v2434, %v2591
        %v2598 = vmul.f32 %v2435, %v2591
        %v2599 = vmul.f32 %v2436, %v2591
        %v2600 = vmul.f32 %v2437, %v2591
        %v2601 = vmul.f32 %v2438, %v2591
        %v2602 = vmul.f32 %v2439, %v2591
        %v2603 = vmul.f32 %v2440, %v2591
        %v2604 = vmul.f32 %v2441, %v2591
        %v2605 = vmul.f32 %v2442, %v2591
        %v2606 = vmul.f32 %v2443, %v2591
        %v2607 = vmul.f32 %v2444, %v2591
        %v2608 = vmul.f32 %v2445, %v2591
        %v2609 = vmul.f32 %v2446, %v2591
        %v2610 = vmul.f32 %v2447, %v2591
        %v2611 = vmul.f32 %v2448, %v2591
        %v2612 = vmul.f32 %v2449, %v2591
        %v2613 = vmul.f32 %v2450, %v2591
        %v2614 = vmul.f32 %v2451, %v2591
        %v2615 = vmul.f32 %v2452, %v2591
        %v2616 = vmul.f32 %v2453, %v2591
        %v2617 = vmul.f32 %v2454, %v2591
        %v2618 = vmul.f32 %v2455, %v2591
        %v2619 = vmul.f32 %v2456, %v2591
        %v2620 = vmul.f32 %v2457, %v2591
        %v2621 = vmul.f32 %v2458, %v2591
        %v2622 = vmul.f32 %v2459, %v2591
        %v2623 = vmul.f32 %v2460, %v2591
        %v2624 = vadd.f32 %v2559, %v2592
        %v2625 = vadd.f32 %v2560, %v2593
        %v2626 = vadd.f32 %v2561, %v2594
        %v2627 = vadd.f32 %v2562, %v2595
        %v2628 = vadd.f32 %v2563, %v2596
        %v2629 = vadd.f32 %v2564, %v2597
        %v2630 = vadd.f32 %v2565, %v2598
        %v2631 = vadd.f32 %v2566, %v2599
        %v2632 = vadd.f32 %v2567, %v2600
        %v2633 = vadd.f32 %v2568, %v2601
        %v2634 = vadd.f32 %v2569, %v2602
        %v2635 = vadd.f32 %v2570, %v2603
        %v2636 = vadd.f32 %v2571, %v2604
        %v2637 = vadd.f32 %v2572, %v2605
        %v2638 = vadd.f32 %v2573, %v2606
        %v2639 = vadd.f32 %v2574, %v2607
        %v2640 = vadd.f32 %v2575, %v2608
        %v2641 = vadd.f32 %v2576, %v2609
        %v2642 = vadd.f32 %v2577, %v2610
        %v2643 = vadd.f32 %v2578, %v2611
        %v2644 = vadd.f32 %v2579, %v2612
        %v2645 = vadd.f32 %v2580, %v2613
        %v2646 = vadd.f32 %v2581, %v2614
        %v2647 = vadd.f32 %v2582, %v2615
        %v2648 = vadd.f32 %v2583, %v2616
        %v2649 = vadd.f32 %v2584, %v2617
        %v2650 = vadd.f32 %v2585, %v2618
        %v2651 = vadd.f32 %v2586, %v2619
        %v2652 = vadd.f32 %v2587, %v2620
        %v2653 = vadd.f32 %v2588, %v2621
        %v2654 = vadd.f32 %v2589, %v2622
        %v2655 = vadd.f32 %v2590, %v2623
        %v2656 = vadd.f32 %v2202, %v2624
        %v2657 = vadd.f32 %v2203, %v2625
        %v2658 = vadd.f32 %v2204, %v2626
        %v2659 = vadd.f32 %v2205, %v2627
        %v2660 = vadd.f32 %v2206, %v2628
        %v2661 = vadd.f32 %v2207, %v2629
        %v2662 = vadd.f32 %v2208, %v2630
        %v2663 = vadd.f32 %v2209, %v2631
        %v2664 = vadd.f32 %v2210, %v2632
        %v2665 = vadd.f32 %v2211, %v2633
        %v2666 = vadd.f32 %v2212, %v2634
        %v2667 = vadd.f32 %v2213, %v2635
        %v2668 = vadd.f32 %v2214, %v2636
        %v2669 = vadd.f32 %v2215, %v2637
        %v2670 = vadd.f32 %v2216, %v2638
        %v2671 = vadd.f32 %v2217, %v2639
        %v2672 = vadd.f32 %v2218, %v2640
        %v2673 = vadd.f32 %v2219, %v2641
        %v2674 = vadd.f32 %v2220, %v2642
        %v2675 = vadd.f32 %v2221, %v2643
        %v2676 = vadd.f32 %v2222, %v2644
        %v2677 = vadd.f32 %v2223, %v2645
        %v2678 = vadd.f32 %v2224, %v2646
        %v2679 = vadd.f32 %v2225, %v2647
        %v2680 = vadd.f32 %v2226, %v2648
        %v2681 = vadd.f32 %v2227, %v2649
        %v2682 = vadd.f32 %v2228, %v2650
        %v2683 = vadd.f32 %v2229, %v2651
        %v2684 = vadd.f32 %v2230, %v2652
        %v2685 = vadd.f32 %v2231, %v2653
        %v2686 = vadd.f32 %v2232, %v2654
        %v2687 = vadd.f32 %v2233, %v2655
        %v2688 = vmul.f32 %v2656, 0.5
        %v2689 = vmul.f32 %v2657, 0.5
        %v2690 = vmul.f32 %v2658, 0.5
        %v2691 = vmul.f32 %v2659, 0.5
        %v2692 = vmul.f32 %v2660, 0.5
        %v2693 = vmul.f32 %v2661, 0.5
        %v2694 = vmul.f32 %v2662, 0.5
        %v2695 = vmul.f32 %v2663, 0.5
        %v2696 = vmul.f32 %v2664, 0.5
        %v2697 = vmul.f32 %v2665, 0.5
        %v2698 = vmul.f32 %v2666, 0.5
        %v2699 = vmul.f32 %v2667, 0.5
        %v2700 = vmul.f32 %v2668, 0.5
        %v2701 = vmul.f32 %v2669, 0.5
        %v2702 = vmul.f32 %v2670, 0.5
        %v2703 = vmul.f32 %v2671, 0.5
        %v2704 = vmul.f32 %v2672, 0.5
        %v2705 = vmul.f32 %v2673, 0.5
        %v2706 = vmul.f32 %v2674, 0.5
        %v2707 = vmul.f32 %v2675, 0.5
        %v2708 = vmul.f32 %v2676, 0.5
        %v2709 = vmul.f32 %v2677, 0.5
        %v2710 = vmul.f32 %v2678, 0.5
        %v2711 = vmul.f32 %v2679, 0.5
        %v2712 = vmul.f32 %v2680, 0.5
        %v2713 = vmul.f32 %v2681, 0.5
        %v2714 = vmul.f32 %v2682, 0.5
        %v2715 = vmul.f32 %v2683, 0.5
        %v2716 = vmul.f32 %v2684, 0.5
        %v2717 = vmul.f32 %v2685, 0.5
        %v2718 = vmul.f32 %v2686, 0.5
        %v2719 = vmul.f32 %v2687, 0.5
        %v2720 = vmul.f32 %v2656, 0.044715
        %v2721 = vmul.f32 %v2657, 0.044715
        %v2722 = vmul.f32 %v2658, 0.044715
        %v2723 = vmul.f32 %v2659, 0.044715
        %v2724 = vmul.f32 %v2660, 0.044715
        %v2725 = vmul.f32 %v2661, 0.044715
        %v2726 = vmul.f32 %v2662, 0.044715
        %v2727 = vmul.f32 %v2663, 0.044715
        %v2728 = vmul.f32 %v2664, 0.044715
        %v2729 = vmul.f32 %v2665, 0.044715
        %v2730 = vmul.f32 %v2666, 0.044715
        %v2731 = vmul.f32 %v2667, 0.044715
        %v2732 = vmul.f32 %v2668, 0.044715
        %v2733 = vmul.f32 %v2669, 0.044715
        %v2734 = vmul.f32 %v2670, 0.044715
        %v2735 = vmul.f32 %v2671, 0.044715
        %v2736 = vmul.f32 %v2672, 0.044715
        %v2737 = vmul.f32 %v2673, 0.044715
        %v2738 = vmul.f32 %v2674, 0.044715
        %v2739 = vmul.f32 %v2675, 0.044715
        %v2740 = vmul.f32 %v2676, 0.044715
        %v2741 = vmul.f32 %v2677, 0.044715
        %v2742 = vmul.f32 %v2678, 0.044715
        %v2743 = vmul.f32 %v2679, 0.044715
        %v2744 = vmul.f32 %v2680, 0.044715
        %v2745 = vmul.f32 %v2681, 0.044715
        %v2746 = vmul.f32 %v2682, 0.044715
        %v2747 = vmul.f32 %v2683, 0.044715
        %v2748 = vmul.f32 %v2684, 0.044715
        %v2749 = vmul.f32 %v2685, 0.044715
        %v2750 = vmul.f32 %v2686, 0.044715
        %v2751 = vmul.f32 %v2687, 0.044715
        %v2752 = vmul.f32 %v2720, %v2656
        %v2753 = vmul.f32 %v2721, %v2657
        %v2754 = vmul.f32 %v2722, %v2658
        %v2755 = vmul.f32 %v2723, %v2659
        %v2756 = vmul.f32 %v2724, %v2660
        %v2757 = vmul.f32 %v2725, %v2661
        %v2758 = vmul.f32 %v2726, %v2662
        %v2759 = vmul.f32 %v2727, %v2663
        %v2760 = vmul.f32 %v2728, %v2664
        %v2761 = vmul.f32 %v2729, %v2665
        %v2762 = vmul.f32 %v2730, %v2666
        %v2763 = vmul.f32 %v2731, %v2667
        %v2764 = vmul.f32 %v2732, %v2668
        %v2765 = vmul.f32 %v2733, %v2669
        %v2766 = vmul.f32 %v2734, %v2670
        %v2767 = vmul.f32 %v2735, %v2671
        %v2768 = vmul.f32 %v2736, %v2672
        %v2769 = vmul.f32 %v2737, %v2673
        %v2770 = vmul.f32 %v2738, %v2674
        %v2771 = vmul.f32 %v2739, %v2675
        %v2772 = vmul.f32 %v2740, %v2676
        %v2773 = vmul.f32 %v2741, %v2677
        %v2774 = vmul.f32 %v2742, %v2678
        %v2775 = vmul.f32 %v2743, %v2679
        %v2776 = vmul.f32 %v2744, %v2680
        %v2777 = vmul.f32 %v2745, %v2681
        %v2778 = vmul.f32 %v2746, %v2682
        %v2779 = vmul.f32 %v2747, %v2683
        %v2780 = vmul.f32 %v2748, %v2684
        %v2781 = vmul.f32 %v2749, %v2685
        %v2782 = vmul.f32 %v2750, %v2686
        %v2783 = vmul.f32 %v2751, %v2687
        %v2784 = vmul.f32 %v2752, %v2656
        %v2785 = vmul.f32 %v2753, %v2657
        %v2786 = vmul.f32 %v2754, %v2658
        %v2787 = vmul.f32 %v2755, %v2659
        %v2788 = vmul.f32 %v2756, %v2660
        %v2789 = vmul.f32 %v2757, %v2661
        %v2790 = vmul.f32 %v2758, %v2662
        %v2791 = vmul.f32 %v2759, %v2663
        %v2792 = vmul.f32 %v2760, %v2664
        %v2793 = vmul.f32 %v2761, %v2665
        %v2794 = vmul.f32 %v2762, %v2666
        %v2795 = vmul.f32 %v2763, %v2667
        %v2796 = vmul.f32 %v2764, %v2668
        %v2797 = vmul.f32 %v2765, %v2669
        %v2798 = vmul.f32 %v2766, %v2670
        %v2799 = vmul.f32 %v2767, %v2671
        %v2800 = vmul.f32 %v2768, %v2672
        %v2801 = vmul.f32 %v2769, %v2673
        %v2802 = vmul.f32 %v2770, %v2674
        %v2803 = vmul.f32 %v2771, %v2675
        %v2804 = vmul.f32 %v2772, %v2676
        %v2805 = vmul.f32 %v2773, %v2677
        %v2806 = vmul.f32 %v2774, %v2678
        %v2807 = vmul.f32 %v2775, %v2679
        %v2808 = vmul.f32 %v2776, %v2680
        %v2809 = vmul.f32 %v2777, %v2681
        %v2810 = vmul.f32 %v2778, %v2682
        %v2811 = vmul.f32 %v2779, %v2683
        %v2812 = vmul.f32 %v2780, %v2684
        %v2813 = vmul.f32 %v2781, %v2685
        %v2814 = vmul.f32 %v2782, %v2686
        %v2815 = vmul.f32 %v2783, %v2687
        %v2816 = vadd.f32 %v2656, %v2784
        %v2817 = vadd.f32 %v2657, %v2785
        %v2818 = vadd.f32 %v2658, %v2786
        %v2819 = vadd.f32 %v2659, %v2787
        %v2820 = vadd.f32 %v2660, %v2788
        %v2821 = vadd.f32 %v2661, %v2789
        %v2822 = vadd.f32 %v2662, %v2790
        %v2823 = vadd.f32 %v2663, %v2791
        %v2824 = vadd.f32 %v2664, %v2792
        %v2825 = vadd.f32 %v2665, %v2793
        %v2826 = vadd.f32 %v2666, %v2794
        %v2827 = vadd.f32 %v2667, %v2795
        %v2828 = vadd.f32 %v2668, %v2796
        %v2829 = vadd.f32 %v2669, %v2797
        %v2830 = vadd.f32 %v2670, %v2798
        %v2831 = vadd.f32 %v2671, %v2799
        %v2832 = vadd.f32 %v2672, %v2800
        %v2833 = vadd.f32 %v2673, %v2801
        %v2834 = vadd.f32 %v2674, %v2802
        %v2835 = vadd.f32 %v2675, %v2803
        %v2836 = vadd.f32 %v2676, %v2804
        %v2837 = vadd.f32 %v2677, %v2805
        %v2838 = vadd.f32 %v2678, %v2806
        %v2839 = vadd.f32 %v2679, %v2807
        %v2840 = vadd.f32 %v2680, %v2808
        %v2841 = vadd.f32 %v2681, %v2809
        %v2842 = vadd.f32 %v2682, %v2810
        %v2843 = vadd.f32 %v2683, %v2811
        %v2844 = vadd.f32 %v2684, %v2812
        %v2845 = vadd.f32 %v2685, %v2813
        %v2846 = vadd.f32 %v2686, %v2814
        %v2847 = vadd.f32 %v2687, %v2815
        %v2848 = vmul.f32 %v2816, 0.7978846
        %v2849 = vmul.f32 %v2817, 0.7978846
        %v2850 = vmul.f32 %v2818, 0.7978846
        %v2851 = vmul.f32 %v2819, 0.7978846
        %v2852 = vmul.f32 %v2820, 0.7978846
        %v2853 = vmul.f32 %v2821, 0.7978846
        %v2854 = vmul.f32 %v2822, 0.7978846
        %v2855 = vmul.f32 %v2823, 0.7978846
        %v2856 = vmul.f32 %v2824, 0.7978846
        %v2857 = vmul.f32 %v2825, 0.7978846
        %v2858 = vmul.f32 %v2826, 0.7978846
        %v2859 = vmul.f32 %v2827, 0.7978846
        %v2860 = vmul.f32 %v2828, 0.7978846
        %v2861 = vmul.f32 %v2829, 0.7978846
        %v2862 = vmul.f32 %v2830, 0.7978846
        %v2863 = vmul.f32 %v2831, 0.7978846
        %v2864 = vmul.f32 %v2832, 0.7978846
        %v2865 = vmul.f32 %v2833, 0.7978846
        %v2866 = vmul.f32 %v2834, 0.7978846
        %v2867 = vmul.f32 %v2835, 0.7978846
        %v2868 = vmul.f32 %v2836, 0.7978846
        %v2869 = vmul.f32 %v2837, 0.7978846
        %v2870 = vmul.f32 %v2838, 0.7978846
        %v2871 = vmul.f32 %v2839, 0.7978846
        %v2872 = vmul.f32 %v2840, 0.7978846
        %v2873 = vmul.f32 %v2841, 0.7978846
        %v2874 = vmul.f32 %v2842, 0.7978846
        %v2875 = vmul.f32 %v2843, 0.7978846
        %v2876 = vmul.f32 %v2844, 0.7978846
        %v2877 = vmul.f32 %v2845, 0.7978846
        %v2878 = vmul.f32 %v2846, 0.7978846
        %v2879 = vmul.f32 %v2847, 0.7978846
        %v2880 = vtanh.pop %v2848
        %v2881 = vtanh.pop %v2849
        %v2882 = vtanh.pop %v2850
        %v2883 = vtanh.pop %v2851
        %v2884 = vtanh.pop %v2852
        %v2885 = vtanh.pop %v2853
        %v2886 = vtanh.pop %v2854
        %v2887 = vtanh.pop %v2855
        %v2888 = vtanh.pop %v2856
        %v2889 = vtanh.pop %v2857
        %v2890 = vtanh.pop %v2858
        %v2891 = vtanh.pop %v2859
        %v2892 = vtanh.pop %v2860
        %v2893 = vtanh.pop %v2861
        %v2894 = vtanh.pop %v2862
        %v2895 = vtanh.pop %v2863
        %v2896 = vtanh.pop %v2864
        %v2897 = vtanh.pop %v2865
        %v2898 = vtanh.pop %v2866
        %v2899 = vtanh.pop %v2867
        %v2900 = vtanh.pop %v2868
        %v2901 = vtanh.pop %v2869
        %v2902 = vtanh.pop %v2870
        %v2903 = vtanh.pop %v2871
        %v2904 = vtanh.pop %v2872
        %v2905 = vtanh.pop %v2873
        %v2906 = vtanh.pop %v2874
        %v2907 = vtanh.pop %v2875
        %v2908 = vtanh.pop %v2876
        %v2909 = vtanh.pop %v2877
        %v2910 = vtanh.pop %v2878
        %v2911 = vtanh.pop %v2879
        %v2912 = vadd.f32 %v2880, 1.0
        %v2913 = vadd.f32 %v2881, 1.0
        %v2914 = vadd.f32 %v2882, 1.0
        %v2915 = vadd.f32 %v2883, 1.0
        %v2916 = vadd.f32 %v2884, 1.0
        %v2917 = vadd.f32 %v2885, 1.0
        %v2918 = vadd.f32 %v2886, 1.0
        %v2919 = vadd.f32 %v2887, 1.0
        %v2920 = vadd.f32 %v2888, 1.0
        %v2921 = vadd.f32 %v2889, 1.0
        %v2922 = vadd.f32 %v2890, 1.0
        %v2923 = vadd.f32 %v2891, 1.0
        %v2924 = vadd.f32 %v2892, 1.0
        %v2925 = vadd.f32 %v2893, 1.0
        %v2926 = vadd.f32 %v2894, 1.0
        %v2927 = vadd.f32 %v2895, 1.0
        %v2928 = vadd.f32 %v2896, 1.0
        %v2929 = vadd.f32 %v2897, 1.0
        %v2930 = vadd.f32 %v2898, 1.0
        %v2931 = vadd.f32 %v2899, 1.0
        %v2932 = vadd.f32 %v2900, 1.0
        %v2933 = vadd.f32 %v2901, 1.0
        %v2934 = vadd.f32 %v2902, 1.0
        %v2935 = vadd.f32 %v2903, 1.0
        %v2936 = vadd.f32 %v2904, 1.0
        %v2937 = vadd.f32 %v2905, 1.0
        %v2938 = vadd.f32 %v2906, 1.0
        %v2939 = vadd.f32 %v2907, 1.0
        %v2940 = vadd.f32 %v2908, 1.0
        %v2941 = vadd.f32 %v2909, 1.0
        %v2942 = vadd.f32 %v2910, 1.0
        %v2943 = vadd.f32 %v2911, 1.0
        %v2944 = vmul.f32 %v2688, %v2912
        %v2945 = vmul.f32 %v2689, %v2913
        %v2946 = vmul.f32 %v2690, %v2914
        %v2947 = vmul.f32 %v2691, %v2915
        %v2948 = vmul.f32 %v2692, %v2916
        %v2949 = vmul.f32 %v2693, %v2917
        %v2950 = vmul.f32 %v2694, %v2918
        %v2951 = vmul.f32 %v2695, %v2919
        %v2952 = vmul.f32 %v2696, %v2920
        %v2953 = vmul.f32 %v2697, %v2921
        %v2954 = vmul.f32 %v2698, %v2922
        %v2955 = vmul.f32 %v2699, %v2923
        %v2956 = vmul.f32 %v2700, %v2924
        %v2957 = vmul.f32 %v2701, %v2925
        %v2958 = vmul.f32 %v2702, %v2926
        %v2959 = vmul.f32 %v2703, %v2927
        %v2960 = vmul.f32 %v2704, %v2928
        %v2961 = vmul.f32 %v2705, %v2929
        %v2962 = vmul.f32 %v2706, %v2930
        %v2963 = vmul.f32 %v2707, %v2931
        %v2964 = vmul.f32 %v2708, %v2932
        %v2965 = vmul.f32 %v2709, %v2933
        %v2966 = vmul.f32 %v2710, %v2934
        %v2967 = vmul.f32 %v2711, %v2935
        %v2968 = vmul.f32 %v2712, %v2936
        %v2969 = vmul.f32 %v2713, %v2937
        %v2970 = vmul.f32 %v2714, %v2938
        %v2971 = vmul.f32 %v2715, %v2939
        %v2972 = vmul.f32 %v2716, %v2940
        %v2973 = vmul.f32 %v2717, %v2941
        %v2974 = vmul.f32 %v2718, %v2942
        %v2975 = vmul.f32 %v2719, %v2943
        %2977 = vset.pattern.permute.xlu0 0
        %2978 = vperm.xlu0 %2977, %v645
        %v2979 = vpop.permute.xlu0 %2978
        %2982 = vset.pattern.permute.xlu0 0
        %2983 = vperm.xlu0 %2982, %v647
        %v2984 = vpop.permute.xlu0 %2983
        %2987 = vset.pattern.permute.xlu0 0
        %2988 = vperm.xlu0 %2987, %v650
        %v2989 = vpop.permute.xlu0 %2988
        %2992 = vset.pattern.permute.xlu0 0
        %2993 = vperm.xlu0 %2992, %v652
        %v2994 = vpop.permute.xlu0 %2993
        %2997 = vset.pattern.permute.xlu0 0
        %2998 = vperm.xlu0 %2997, %v655
        %v2999 = vpop.permute.xlu0 %2998
        %3002 = vset.pattern.permute.xlu0 0
        %3003 = vperm.xlu0 %3002, %v657
        %v3004 = vpop.permute.xlu0 %3003
        %3007 = vset.pattern.permute.xlu0 0
        %3008 = vperm.xlu0 %3007, %v660
        %v3009 = vpop.permute.xlu0 %3008
        %3012 = vset.pattern.permute.xlu0 0
        %3013 = vperm.xlu0 %3012, %v662
        %v3014 = vpop.permute.xlu0 %3013
        %3017 = vset.pattern.permute.xlu0 0
        %3018 = vperm.xlu0 %3017, %v665
        %v3019 = vpop.permute.xlu0 %3018
        %3022 = vset.pattern.permute.xlu0 0
        %3023 = vperm.xlu0 %3022, %v667
        %v3024 = vpop.permute.xlu0 %3023
        %3027 = vset.pattern.permute.xlu0 0
        %3028 = vperm.xlu0 %3027, %v670
        %v3029 = vpop.permute.xlu0 %3028
        %3032 = vset.pattern.permute.xlu0 0
        %3033 = vperm.xlu0 %3032, %v672
        %v3034 = vpop.permute.xlu0 %3033
        %3037 = vset.pattern.permute.xlu0 0
        %3038 = vperm.xlu0 %3037, %v675
        %v3039 = vpop.permute.xlu0 %3038
        %3042 = vset.pattern.permute.xlu0 0
        %3043 = vperm.xlu0 %3042, %v677
        %v3044 = vpop.permute.xlu0 %3043
        %3047 = vset.pattern.permute.xlu0 0
        %3048 = vperm.xlu0 %3047, %v680
        %v3049 = vpop.permute.xlu0 %3048
        %3052 = vset.pattern.permute.xlu0 0
        %3053 = vperm.xlu0 %3052, %v682
        %v3054 = vpop.permute.xlu0 %3053
        %3057 = vset.pattern.permute.xlu0 0
        %3058 = vperm.xlu0 %3057, %v685
        %v3059 = vpop.permute.xlu0 %3058
        %3062 = vset.pattern.permute.xlu0 0
        %3063 = vperm.xlu0 %3062, %v687
        %v3064 = vpop.permute.xlu0 %3063
        %3067 = vset.pattern.permute.xlu0 0
        %3068 = vperm.xlu0 %3067, %v690
        %v3069 = vpop.permute.xlu0 %3068
        %3072 = vset.pattern.permute.xlu0 0
        %3073 = vperm.xlu0 %3072, %v692
        %v3074 = vpop.permute.xlu0 %3073
        %3077 = vset.pattern.permute.xlu0 0
        %3078 = vperm.xlu0 %3077, %v695
        %v3079 = vpop.permute.xlu0 %3078
        %3082 = vset.pattern.permute.xlu0 0
        %3083 = vperm.xlu0 %3082, %v697
        %v3084 = vpop.permute.xlu0 %3083
        %3087 = vset.pattern.permute.xlu0 0
        %3088 = vperm.xlu0 %3087, %v700
        %v3089 = vpop.permute.xlu0 %3088
        %3092 = vset.pattern.permute.xlu0 0
        %3093 = vperm.xlu0 %3092, %v702
        %v3094 = vpop.permute.xlu0 %3093
        %3097 = vset.pattern.permute.xlu0 0
        %3098 = vperm.xlu0 %3097, %v705
        %v3099 = vpop.permute.xlu0 %3098
        %3102 = vset.pattern.permute.xlu0 0
        %3103 = vperm.xlu0 %3102, %v707
        %v3104 = vpop.permute.xlu0 %3103
        %3107 = vset.pattern.permute.xlu0 0
        %3108 = vperm.xlu0 %3107, %v710
        %v3109 = vpop.permute.xlu0 %3108
        %3112 = vset.pattern.permute.xlu0 0
        %3113 = vperm.xlu0 %3112, %v712
        %v3114 = vpop.permute.xlu0 %3113
        %3117 = vset.pattern.permute.xlu0 0
        %3118 = vperm.xlu0 %3117, %v715
        %v3119 = vpop.permute.xlu0 %3118
        %3122 = vset.pattern.permute.xlu0 0
        %3123 = vperm.xlu0 %3122, %v717
        %v3124 = vpop.permute.xlu0 %3123
        %3127 = vset.pattern.permute.xlu0 0
        %3128 = vperm.xlu0 %3127, %v720
        %v3129 = vpop.permute.xlu0 %3128
        %3132 = vset.pattern.permute.xlu0 0
        %3133 = vperm.xlu0 %3132, %v722
        %v3134 = vpop.permute.xlu0 %3133
        %v3136 = vmul.f32 %v2944, %v2979
        %v3137 = vmul.f32 %v2945, %v2984
        %v3138 = vmul.f32 %v2946, %v2989
        %v3139 = vmul.f32 %v2947, %v2994
        %v3140 = vmul.f32 %v2948, %v2999
        %v3141 = vmul.f32 %v2949, %v3004
        %v3142 = vmul.f32 %v2950, %v3009
        %v3143 = vmul.f32 %v2951, %v3014
        %v3144 = vmul.f32 %v2952, %v3019
        %v3145 = vmul.f32 %v2953, %v3024
        %v3146 = vmul.f32 %v2954, %v3029
        %v3147 = vmul.f32 %v2955, %v3034
        %v3148 = vmul.f32 %v2956, %v3039
        %v3149 = vmul.f32 %v2957, %v3044
        %v3150 = vmul.f32 %v2958, %v3049
        %v3151 = vmul.f32 %v2959, %v3054
        %v3152 = vmul.f32 %v2960, %v3059
        %v3153 = vmul.f32 %v2961, %v3064
        %v3154 = vmul.f32 %v2962, %v3069
        %v3155 = vmul.f32 %v2963, %v3074
        %v3156 = vmul.f32 %v2964, %v3079
        %v3157 = vmul.f32 %v2965, %v3084
        %v3158 = vmul.f32 %v2966, %v3089
        %v3159 = vmul.f32 %v2967, %v3094
        %v3160 = vmul.f32 %v2968, %v3099
        %v3161 = vmul.f32 %v2969, %v3104
        %v3162 = vmul.f32 %v2970, %v3109
        %v3163 = vmul.f32 %v2971, %v3114
        %v3164 = vmul.f32 %v2972, %v3119
        %v3165 = vmul.f32 %v2973, %v3124
        %v3166 = vmul.f32 %v2974, %v3129
        %v3167 = vmul.f32 %v2975, %v3134
        %v3168 = vadd.f32 %v3136, 0.0
        %v3169 = vadd.f32 %v3137, 0.0
        %v3170 = vadd.f32 %v3138, 0.0
        %v3171 = vadd.f32 %v3139, 0.0
        %v3172 = vadd.f32 %v3140, 0.0
        %v3173 = vadd.f32 %v3141, 0.0
        %v3174 = vadd.f32 %v3142, 0.0
        %v3175 = vadd.f32 %v3143, 0.0
        %v3176 = vadd.f32 %v3144, 0.0
        %v3177 = vadd.f32 %v3145, 0.0
        %v3178 = vadd.f32 %v3146, 0.0
        %v3179 = vadd.f32 %v3147, 0.0
        %v3180 = vadd.f32 %v3148, 0.0
        %v3181 = vadd.f32 %v3149, 0.0
        %v3182 = vadd.f32 %v3150, 0.0
        %v3183 = vadd.f32 %v3151, 0.0
        %v3184 = vadd.f32 %v3152, 0.0
        %v3185 = vadd.f32 %v3153, 0.0
        %v3186 = vadd.f32 %v3154, 0.0
        %v3187 = vadd.f32 %v3155, 0.0
        %v3188 = vadd.f32 %v3156, 0.0
        %v3189 = vadd.f32 %v3157, 0.0
        %v3190 = vadd.f32 %v3158, 0.0
        %v3191 = vadd.f32 %v3159, 0.0
        %v3192 = vadd.f32 %v3160, 0.0
        %v3193 = vadd.f32 %v3161, 0.0
        %v3194 = vadd.f32 %v3162, 0.0
        %v3195 = vadd.f32 %v3163, 0.0
        %v3196 = vadd.f32 %v3164, 0.0
        %v3197 = vadd.f32 %v3165, 0.0
        %v3198 = vadd.f32 %v3166, 0.0
        %v3199 = vadd.f32 %v3167, 0.0
        %v3200 = vld [vmem:[%s8] sm:$0xff]
        %v3201 = vld [vmem:[%s8 + $0x8] sm:$0xff]
        %v3202 = vld [vmem:[%s8 + $0x10] sm:$0xff]
        %v3203 = vld [vmem:[%s8 + $0x18] sm:$0x1]
        %3204 = vst [vmem:[#allocation2 + $0x20] sm:$0xff] %v2944
        %3205 = vst [vmem:[#allocation2 + $0x28] sm:$0xff] %v2945
        %3206 = vst [vmem:[#allocation2 + $0x30] sm:$0xff] %v2946
        %3207 = vst [vmem:[#allocation2 + $0x38] sm:$0xff] %v2947
        %3208 = vst [vmem:[#allocation2 + $0x40] sm:$0xff] %v2948
        %3209 = vst [vmem:[#allocation2 + $0x48] sm:$0xff] %v2949
        %3210 = vst [vmem:[#allocation2 + $0x50] sm:$0xff] %v2950
        %3211 = vst [vmem:[#allocation2 + $0x58] sm:$0xff] %v2951
        %3212 = vst [vmem:[#allocation2 + $0x60] sm:$0xff] %v2952
        %3213 = vst [vmem:[#allocation2 + $0x68] sm:$0xff] %v2953
        %3214 = vst [vmem:[#allocation2 + $0x70] sm:$0xff] %v2954
        %3215 = vst [vmem:[#allocation2 + $0x78] sm:$0xff] %v2955
        %3216 = vst [vmem:[#allocation2 + $0x80] sm:$0xff] %v2956
        %3217 = vst [vmem:[#allocation2 + $0x88] sm:$0xff] %v2957
        %3218 = vst [vmem:[#allocation2 + $0x90] sm:$0xff] %v2958
        %3219 = vst [vmem:[#allocation2 + $0x98] sm:$0xff] %v2959
        %3220 = vst [vmem:[#allocation2 + $0xa0] sm:$0xff] %v2960
        %3221 = vst [vmem:[#allocation2 + $0xa8] sm:$0xff] %v2961
        %3222 = vst [vmem:[#allocation2 + $0xb0] sm:$0xff] %v2962
        %3223 = vst [vmem:[#allocation2 + $0xb8] sm:$0xff] %v2963
        %3224 = vst [vmem:[#allocation2 + $0xc0] sm:$0xff] %v2964
        %3225 = vst [vmem:[#allocation2 + $0xc8] sm:$0xff] %v2965
        %3226 = vst [vmem:[#allocation2 + $0xd0] sm:$0xff] %v2966
        %3227 = vst [vmem:[#allocation2 + $0xd8] sm:$0xff] %v2967
        %3228 = vst [vmem:[#allocation2 + $0xe0] sm:$0xff] %v2968
        %3229 = vst [vmem:[#allocation2 + $0xe8] sm:$0xff] %v2969
        %3230 = vst [vmem:[#allocation2 + $0xf0] sm:$0xff] %v2970
        %3231 = vst [vmem:[#allocation2 + $0xf8] sm:$0xff] %v2971
        %3232 = vst [vmem:[#allocation2 + $0x100] sm:$0xff] %v2972
        %3233 = vst [vmem:[#allocation2 + $0x108] sm:$0xff] %v2973
        %3234 = vst [vmem:[#allocation2 + $0x110] sm:$0xff] %v2974
        %3235 = vst [vmem:[#allocation2 + $0x118] sm:$0xff] %v2975
        %v3236 = vld [vmem:[#allocation2] sm:$0xff]
        %v3237 = vld [vmem:[#allocation2 + $0x8] sm:$0xff]
        %v3238 = vld [vmem:[#allocation2 + $0x10] sm:$0xff]
        %v3239 = vld [vmem:[#allocation2 + $0x18] sm:$0xff]
        %v3240 = vld [vmem:[#allocation2 + $0x20] sm:$0xff]
        %v3241 = vld [vmem:[#allocation2 + $0x28] sm:$0xff]
        %v3242 = vld [vmem:[#allocation2 + $0x30] sm:$0xff]
        %v3243 = vld [vmem:[#allocation2 + $0x38] sm:$0xff]
        %v3244 = vld [vmem:[#allocation2 + $0x40] sm:$0xff]
        %v3245 = vld [vmem:[#allocation2 + $0x48] sm:$0xff]
        %v3246 = vld [vmem:[#allocation2 + $0x50] sm:$0xff]
        %v3247 = vld [vmem:[#allocation2 + $0x58] sm:$0xff]
        %v3248 = vld [vmem:[#allocation2 + $0x60] sm:$0xff]
        %v3249 = vld [vmem:[#allocation2 + $0x68] sm:$0xff]
        %v3250 = vld [vmem:[#allocation2 + $0x70] sm:$0xff]
        %v3251 = vld [vmem:[#allocation2 + $0x78] sm:$0xff]
        %v3252 = vld [vmem:[#allocation2 + $0x80] sm:$0xff]
        %v3253 = vld [vmem:[#allocation2 + $0x88] sm:$0xff]
        %v3254 = vld [vmem:[#allocation2 + $0x90] sm:$0xff]
        %v3255 = vld [vmem:[#allocation2 + $0x98] sm:$0xff]
        %v3256 = vld [vmem:[#allocation2 + $0xa0] sm:$0xff]
        %v3257 = vld [vmem:[#allocation2 + $0xa8] sm:$0xff]
        %v3258 = vld [vmem:[#allocation2 + $0xb0] sm:$0xff]
        %v3259 = vld [vmem:[#allocation2 + $0xb8] sm:$0xff]
        %v3260 = vld [vmem:[#allocation2 + $0xc0] sm:$0xff]
        %v3261 = vld [vmem:[#allocation2 + $0xc8] sm:$0xff]
        %v3262 = vld [vmem:[#allocation2 + $0xd0] sm:$0xff]
        %v3263 = vld [vmem:[#allocation2 + $0xd8] sm:$0xff]
        %v3264 = vld [vmem:[#allocation2 + $0xe0] sm:$0xff]
        %v3265 = vld [vmem:[#allocation2 + $0xe8] sm:$0xff]
        %v3266 = vld [vmem:[#allocation2 + $0xf0] sm:$0xff]
        %v3267 = vld [vmem:[#allocation2 + $0xf8] sm:$0xff]
        %v3268 = vld [vmem:[#allocation2 + $0x100] sm:$0xff]
        %v3269 = vld [vmem:[#allocation2 + $0x108] sm:$0xff]
        %v3270 = vld [vmem:[#allocation2 + $0x110] sm:$0xff]
        %v3271 = vld [vmem:[#allocation2 + $0x118] sm:$0xff]
        %v3272 = vld [vmem:[#allocation2 + $0x120] sm:$0xff]
        %v3273 = vld [vmem:[#allocation2 + $0x128] sm:$0xff]
        %v3274 = vld [vmem:[#allocation2 + $0x130] sm:$0xff]
        %v3275 = vld [vmem:[#allocation2 + $0x138] sm:$0xff]
        %vm3316 = vcmask 1041408
        %v3317 = vrot.slane %v3236, 6
        %v3318 = vrot.slane %v3237, 6
        %v3319 = vsel %vm3316, %v3317, %v3318
        %v3320 = vrot.slane %v3238, 6
        %v3321 = vsel %vm3316, %v3318, %v3320
        %v3322 = vrot.slane %v3239, 6
        %v3323 = vsel %vm3316, %v3320, %v3322
        %v3324 = vrot.slane %v3240, 6
        %v3325 = vsel %vm3316, %v3322, %v3324
        %v3326 = vrot.slane %v3241, 6
        %v3327 = vsel %vm3316, %v3324, %v3326
        %v3328 = vrot.slane %v3242, 6
        %v3329 = vsel %vm3316, %v3326, %v3328
        %v3330 = vrot.slane %v3243, 6
        %v3331 = vsel %vm3316, %v3328, %v3330
        %v3332 = vrot.slane %v3244, 6
        %v3333 = vsel %vm3316, %v3330, %v3332
        %v3334 = vrot.slane %v3245, 6
        %v3335 = vsel %vm3316, %v3332, %v3334
        %v3336 = vrot.slane %v3246, 6
        %v3337 = vsel %vm3316, %v3334, %v3336
        %v3338 = vrot.slane %v3247, 6
        %v3339 = vsel %vm3316, %v3336, %v3338
        %v3340 = vrot.slane %v3248, 6
        %v3341 = vsel %vm3316, %v3338, %v3340
        %v3342 = vrot.slane %v3249, 6
        %v3343 = vsel %vm3316, %v3340, %v3342
        %v3344 = vrot.slane %v3250, 6
        %v3345 = vsel %vm3316, %v3342, %v3344
        %v3346 = vrot.slane %v3251, 6
        %v3347 = vsel %vm3316, %v3344, %v3346
        %v3348 = vrot.slane %v3252, 6
        %v3349 = vsel %vm3316, %v3346, %v3348
        %v3350 = vrot.slane %v3253, 6
        %v3351 = vsel %vm3316, %v3348, %v3350
        %v3352 = vrot.slane %v3254, 6
        %v3353 = vsel %vm3316, %v3350, %v3352
        %v3354 = vrot.slane %v3255, 6
        %v3355 = vsel %vm3316, %v3352, %v3354
        %v3356 = vrot.slane %v3256, 6
        %v3357 = vsel %vm3316, %v3354, %v3356
        %v3358 = vrot.slane %v3257, 6
        %v3359 = vsel %vm3316, %v3356, %v3358
        %v3360 = vrot.slane %v3258, 6
        %v3361 = vsel %vm3316, %v3358, %v3360
        %v3362 = vrot.slane %v3259, 6
        %v3363 = vsel %vm3316, %v3360, %v3362
        %v3364 = vrot.slane %v3260, 6
        %v3365 = vsel %vm3316, %v3362, %v3364
        %v3366 = vrot.slane %v3261, 6
        %v3367 = vsel %vm3316, %v3364, %v3366
        %v3368 = vrot.slane %v3262, 6
        %v3369 = vsel %vm3316, %v3366, %v3368
        %v3370 = vrot.slane %v3263, 6
        %v3371 = vsel %vm3316, %v3368, %v3370
        %v3372 = vrot.slane %v3264, 6
        %v3373 = vsel %vm3316, %v3370, %v3372
        %v3374 = vrot.slane %v3265, 6
        %v3375 = vsel %vm3316, %v3372, %v3374
        %v3376 = vrot.slane %v3266, 6
        %v3377 = vsel %vm3316, %v3374, %v3376
        %v3378 = vrot.slane %v3267, 6
        %v3379 = vsel %vm3316, %v3376, %v3378
        %v3380 = vrot.slane %v3268, 6
        %v3381 = vsel %vm3316, %v3378, %v3380
        %v3382 = vrot.slane %v3269, 6
        %v3383 = vsel %vm3316, %v3380, %v3382
        %v3384 = vrot.slane %v3270, 6
        %v3385 = vsel %vm3316, %v3382, %v3384
        %v3386 = vrot.slane %v3271, 6
        %v3387 = vsel %vm3316, %v3384, %v3386
        %v3388 = vrot.slane %v3272, 6
        %v3389 = vsel %vm3316, %v3386, %v3388
        %v3390 = vrot.slane %v3273, 6
        %v3391 = vsel %vm3316, %v3388, %v3390
        %v3392 = vrot.slane %v3274, 6
        %v3393 = vsel %vm3316, %v3390, %v3392
        %v3394 = vrot.slane %v3275, 6
        %v3395 = vsel %vm3316, %v3392, %v3394
        %v3436 = vsel %vm3316, 0.0, %v3317
        %v3437 = vsel %vm1365, 1, 0
        %v3438 = vsel %vm1366, 1, 0
        %v3439 = vsel %vm1367, 1, 0
        %v3440 = vsel %vm1368, 1, 0
        %v3441 = vsel %vm1369, 1, 0
        %v3442 = vsel %vm1370, 1, 0
        %v3443 = vsel %vm1371, 1, 0
        %v3444 = vsel %vm1372, 1, 0
        %v3445 = vsel %vm1373, 1, 0
        %v3446 = vsel %vm1374, 1, 0
        %v3447 = vsel %vm1375, 1, 0
        %v3448 = vsel %vm1376, 1, 0
        %v3449 = vsel %vm1377, 1, 0
        %v3450 = vsel %vm1378, 1, 0
        %v3451 = vsel %vm1379, 1, 0
        %v3452 = vsel %vm1380, 1, 0
        %v3453 = vsel %vm1381, 1, 0
        %v3454 = vsel %vm1382, 1, 0
        %v3455 = vsel %vm1383, 1, 0
        %v3456 = vsel %vm1384, 1, 0
        %v3457 = vsel %vm1385, 1, 0
        %v3458 = vsel %vm1386, 1, 0
        %v3459 = vsel %vm1387, 1, 0
        %v3460 = vsel %vm1388, 1, 0
        %v3461 = vsel %vm1389, 1, 0
        %v3462 = vsel %vm1390, 1, 0
        %v3463 = vsel %vm1391, 1, 0
        %v3464 = vsel %vm1392, 1, 0
        %v3465 = vsel %vm1393, 1, 0
        %v3466 = vsel %vm1394, 1, 0
        %v3467 = vsel %vm1395, 1, 0
        %v3468 = vsel %vm1396, 1, 0
        %v3469 = vsel %vm1397, 1, 0
        %v3470 = vsel %vm1398, 1, 0
        %v3471 = vsel %vm1399, 1, 0
        %v3472 = vsel %vm1400, 1, 0
        %v3473 = vsel %vm1401, 1, 0
        %v3474 = vsel %vm1402, 1, 0
        %v3475 = vsel %vm1403, 1, 0
        %v3476 = vsel %vm1404, 1, 0
        %vm3477 = vcmp.eq.s32.totalorder %v3437, 1
        %vm3478 = vcmp.eq.s32.totalorder %v3438, 1
        %vm3479 = vcmp.eq.s32.totalorder %v3439, 1
        %vm3480 = vcmp.eq.s32.totalorder %v3440, 1
        %vm3481 = vcmp.eq.s32.totalorder %v3441, 1
        %vm3482 = vcmp.eq.s32.totalorder %v3442, 1
        %vm3483 = vcmp.eq.s32.totalorder %v3443, 1
        %vm3484 = vcmp.eq.s32.totalorder %v3444, 1
        %vm3485 = vcmp.eq.s32.totalorder %v3445, 1
        %vm3486 = vcmp.eq.s32.totalorder %v3446, 1
        %vm3487 = vcmp.eq.s32.totalorder %v3447, 1
        %vm3488 = vcmp.eq.s32.totalorder %v3448, 1
        %vm3489 = vcmp.eq.s32.totalorder %v3449, 1
        %vm3490 = vcmp.eq.s32.totalorder %v3450, 1
        %vm3491 = vcmp.eq.s32.totalorder %v3451, 1
        %vm3492 = vcmp.eq.s32.totalorder %v3452, 1
        %vm3493 = vcmp.eq.s32.totalorder %v3453, 1
        %vm3494 = vcmp.eq.s32.totalorder %v3454, 1
        %vm3495 = vcmp.eq.s32.totalorder %v3455, 1
        %vm3496 = vcmp.eq.s32.totalorder %v3456, 1
        %vm3497 = vcmp.eq.s32.totalorder %v3457, 1
        %vm3498 = vcmp.eq.s32.totalorder %v3458, 1
        %vm3499 = vcmp.eq.s32.totalorder %v3459, 1
        %vm3500 = vcmp.eq.s32.totalorder %v3460, 1
        %vm3501 = vcmp.eq.s32.totalorder %v3461, 1
        %vm3502 = vcmp.eq.s32.totalorder %v3462, 1
        %vm3503 = vcmp.eq.s32.totalorder %v3463, 1
        %vm3504 = vcmp.eq.s32.totalorder %v3464, 1
        %vm3505 = vcmp.eq.s32.totalorder %v3465, 1
        %vm3506 = vcmp.eq.s32.totalorder %v3466, 1
        %vm3507 = vcmp.eq.s32.totalorder %v3467, 1
        %vm3508 = vcmp.eq.s32.totalorder %v3468, 1
        %vm3509 = vcmp.eq.s32.totalorder %v3469, 1
        %vm3510 = vcmp.eq.s32.totalorder %v3470, 1
        %vm3511 = vcmp.eq.s32.totalorder %v3471, 1
        %vm3512 = vcmp.eq.s32.totalorder %v3472, 1
        %vm3513 = vcmp.eq.s32.totalorder %v3473, 1
        %vm3514 = vcmp.eq.s32.totalorder %v3474, 1
        %vm3515 = vcmp.eq.s32.totalorder %v3475, 1
        %vm3516 = vcmp.eq.s32.totalorder %v3476, 1
        %v3517 = vsel %vm3477, %v3436, 0.0
        %v3518 = vsel %vm3478, %v3319, 0.0
        %v3519 = vsel %vm3479, %v3321, 0.0
        %v3520 = vsel %vm3480, %v3323, 0.0
        %v3521 = vsel %vm3481, %v3325, 0.0
        %v3522 = vsel %vm3482, %v3327, 0.0
        %v3523 = vsel %vm3483, %v3329, 0.0
        %v3524 = vsel %vm3484, %v3331, 0.0
        %v3525 = vsel %vm3485, %v3333, 0.0
        %v3526 = vsel %vm3486, %v3335, 0.0
        %v3527 = vsel %vm3487, %v3337, 0.0
        %v3528 = vsel %vm3488, %v3339, 0.0
        %v3529 = vsel %vm3489, %v3341, 0.0
        %v3530 = vsel %vm3490, %v3343, 0.0
        %v3531 = vsel %vm3491, %v3345, 0.0
        %v3532 = vsel %vm3492, %v3347, 0.0
        %v3533 = vsel %vm3493, %v3349, 0.0
        %v3534 = vsel %vm3494, %v3351, 0.0
        %v3535 = vsel %vm3495, %v3353, 0.0
        %v3536 = vsel %vm3496, %v3355, 0.0
        %v3537 = vsel %vm3497, %v3357, 0.0
        %v3538 = vsel %vm3498, %v3359, 0.0
        %v3539 = vsel %vm3499, %v3361, 0.0
        %v3540 = vsel %vm3500, %v3363, 0.0
        %v3541 = vsel %vm3501, %v3365, 0.0
        %v3542 = vsel %vm3502, %v3367, 0.0
        %v3543 = vsel %vm3503, %v3369, 0.0
        %v3544 = vsel %vm3504, %v3371, 0.0
        %v3545 = vsel %vm3505, %v3373, 0.0
        %v3546 = vsel %vm3506, %v3375, 0.0
        %v3547 = vsel %vm3507, %v3377, 0.0
        %v3548 = vsel %vm3508, %v3379, 0.0
        %v3549 = vsel %vm3509, %v3381, 0.0
        %v3550 = vsel %vm3510, %v3383, 0.0
        %v3551 = vsel %vm3511, %v3385, 0.0
        %v3552 = vsel %vm3512, %v3387, 0.0
        %v3553 = vsel %vm3513, %v3389, 0.0
        %v3554 = vsel %vm3514, %v3391, 0.0
        %v3555 = vsel %vm3515, %v3393, 0.0
        %v3556 = vsel %vm3516, %v3395, 0.0
        %v3557 = vperm.slane %v3200, 0
        %v3558 = vmul.f32 %v3517, %v3557
        %v3559 = vmul.f32 %v3518, %v3557
        %v3560 = vmul.f32 %v3519, %v3557
        %v3561 = vmul.f32 %v3520, %v3557
        %v3562 = vmul.f32 %v3521, %v3557
        %v3563 = vmul.f32 %v3522, %v3557
        %v3564 = vmul.f32 %v3523, %v3557
        %v3565 = vmul.f32 %v3524, %v3557
        %v3566 = vmul.f32 %v3525, %v3557
        %v3567 = vmul.f32 %v3526, %v3557
        %v3568 = vmul.f32 %v3527, %v3557
        %v3569 = vmul.f32 %v3528, %v3557
        %v3570 = vmul.f32 %v3529, %v3557
        %v3571 = vmul.f32 %v3530, %v3557
        %v3572 = vmul.f32 %v3531, %v3557
        %v3573 = vmul.f32 %v3532, %v3557
        %v3574 = vmul.f32 %v3533, %v3557
        %v3575 = vmul.f32 %v3534, %v3557
        %v3576 = vmul.f32 %v3535, %v3557
        %v3577 = vmul.f32 %v3536, %v3557
        %v3578 = vmul.f32 %v3537, %v3557
        %v3579 = vmul.f32 %v3538, %v3557
        %v3580 = vmul.f32 %v3539, %v3557
        %v3581 = vmul.f32 %v3540, %v3557
        %v3582 = vmul.f32 %v3541, %v3557
        %v3583 = vmul.f32 %v3542, %v3557
        %v3584 = vmul.f32 %v3543, %v3557
        %v3585 = vmul.f32 %v3544, %v3557
        %v3586 = vmul.f32 %v3545, %v3557
        %v3587 = vmul.f32 %v3546, %v3557
        %v3588 = vmul.f32 %v3547, %v3557
        %v3589 = vmul.f32 %v3548, %v3557
        %v3590 = vadd.f32 %v3558, 0.0
        %v3591 = vadd.f32 %v3559, 0.0
        %v3592 = vadd.f32 %v3560, 0.0
        %v3593 = vadd.f32 %v3561, 0.0
        %v3594 = vadd.f32 %v3562, 0.0
        %v3595 = vadd.f32 %v3563, 0.0
        %v3596 = vadd.f32 %v3564, 0.0
        %v3597 = vadd.f32 %v3565, 0.0
        %v3598 = vadd.f32 %v3566, 0.0
        %v3599 = vadd.f32 %v3567, 0.0
        %v3600 = vadd.f32 %v3568, 0.0
        %v3601 = vadd.f32 %v3569, 0.0
        %v3602 = vadd.f32 %v3570, 0.0
        %v3603 = vadd.f32 %v3571, 0.0
        %v3604 = vadd.f32 %v3572, 0.0
        %v3605 = vadd.f32 %v3573, 0.0
        %v3606 = vadd.f32 %v3574, 0.0
        %v3607 = vadd.f32 %v3575, 0.0
        %v3608 = vadd.f32 %v3576, 0.0
        %v3609 = vadd.f32 %v3577, 0.0
        %v3610 = vadd.f32 %v3578, 0.0
        %v3611 = vadd.f32 %v3579, 0.0
        %v3612 = vadd.f32 %v3580, 0.0
        %v3613 = vadd.f32 %v3581, 0.0
        %v3614 = vadd.f32 %v3582, 0.0
        %v3615 = vadd.f32 %v3583, 0.0
        %v3616 = vadd.f32 %v3584, 0.0
        %v3617 = vadd.f32 %v3585, 0.0
        %v3618 = vadd.f32 %v3586, 0.0
        %v3619 = vadd.f32 %v3587, 0.0
        %v3620 = vadd.f32 %v3588, 0.0
        %v3621 = vadd.f32 %v3589, 0.0
        %v3622 = vperm.slane %v3200, 5
        %v3623 = vmul.f32 %v3519, %v3622
        %v3624 = vmul.f32 %v3520, %v3622
        %v3625 = vmul.f32 %v3521, %v3622
        %v3626 = vmul.f32 %v3522, %v3622
        %v3627 = vmul.f32 %v3523, %v3622
        %v3628 = vmul.f32 %v3524, %v3622
        %v3629 = vmul.f32 %v3525, %v3622
        %v3630 = vmul.f32 %v3526, %v3622
        %v3631 = vmul.f32 %v3527, %v3622
        %v3632 = vmul.f32 %v3528, %v3622
        %v3633 = vmul.f32 %v3529, %v3622
        %v3634 = vmul.f32 %v3530, %v3622
        %v3635 = vmul.f32 %v3531, %v3622
        %v3636 = vmul.f32 %v3532, %v3622
        %v3637 = vmul.f32 %v3533, %v3622
        %v3638 = vmul.f32 %v3534, %v3622
        %v3639 = vmul.f32 %v3535, %v3622
        %v3640 = vmul.f32 %v3536, %v3622
        %v3641 = vmul.f32 %v3537, %v3622
        %v3642 = vmul.f32 %v3538, %v3622
        %v3643 = vmul.f32 %v3539, %v3622
        %v3644 = vmul.f32 %v3540, %v3622
        %v3645 = vmul.f32 %v3541, %v3622
        %v3646 = vmul.f32 %v3542, %v3622
        %v3647 = vmul.f32 %v3543, %v3622
        %v3648 = vmul.f32 %v3544, %v3622
        %v3649 = vmul.f32 %v3545, %v3622
        %v3650 = vmul.f32 %v3546, %v3622
        %v3651 = vmul.f32 %v3547, %v3622
        %v3652 = vmul.f32 %v3548, %v3622
        %v3653 = vmul.f32 %v3549, %v3622
        %v3654 = vmul.f32 %v3550, %v3622
        %v3655 = vadd.f32 %v3590, %v3623
        %v3656 = vadd.f32 %v3591, %v3624
        %v3657 = vadd.f32 %v3592, %v3625
        %v3658 = vadd.f32 %v3593, %v3626
        %v3659 = vadd.f32 %v3594, %v3627
        %v3660 = vadd.f32 %v3595, %v3628
        %v3661 = vadd.f32 %v3596, %v3629
        %v3662 = vadd.f32 %v3597, %v3630
        %v3663 = vadd.f32 %v3598, %v3631
        %v3664 = vadd.f32 %v3599, %v3632
        %v3665 = vadd.f32 %v3600, %v3633
        %v3666 = vadd.f32 %v3601, %v3634
        %v3667 = vadd.f32 %v3602, %v3635
        %v3668 = vadd.f32 %v3603, %v3636
        %v3669 = vadd.f32 %v3604, %v3637
        %v3670 = vadd.f32 %v3605, %v3638
        %v3671 = vadd.f32 %v3606, %v3639
        %v3672 = vadd.f32 %v3607, %v3640
        %v3673 = vadd.f32 %v3608, %v3641
        %v3674 = vadd.f32 %v3609, %v3642
        %v3675 = vadd.f32 %v3610, %v3643
        %v3676 = vadd.f32 %v3611, %v3644
        %v3677 = vadd.f32 %v3612, %v3645
        %v3678 = vadd.f32 %v3613, %v3646
        %v3679 = vadd.f32 %v3614, %v3647
        %v3680 = vadd.f32 %v3615, %v3648
        %v3681 = vadd.f32 %v3616, %v3649
        %v3682 = vadd.f32 %v3617, %v3650
        %v3683 = vadd.f32 %v3618, %v3651
        %v3684 = vadd.f32 %v3619, %v3652
        %v3685 = vadd.f32 %v3620, %v3653
        %v3686 = vadd.f32 %v3621, %v3654
        %v3687 = vperm.slane %v3201, 2
        %v3688 = vmul.f32 %v3521, %v3687
        %v3689 = vmul.f32 %v3522, %v3687
        %v3690 = vmul.f32 %v3523, %v3687
        %v3691 = vmul.f32 %v3524, %v3687
        %v3692 = vmul.f32 %v3525, %v3687
        %v3693 = vmul.f32 %v3526, %v3687
        %v3694 = vmul.f32 %v3527, %v3687
        %v3695 = vmul.f32 %v3528, %v3687
        %v3696 = vmul.f32 %v3529, %v3687
        %v3697 = vmul.f32 %v3530, %v3687
        %v3698 = vmul.f32 %v3531, %v3687
        %v3699 = vmul.f32 %v3532, %v3687
        %v3700 = vmul.f32 %v3533, %v3687
        %v3701 = vmul.f32 %v3534, %v3687
        %v3702 = vmul.f32 %v3535, %v3687
        %v3703 = vmul.f32 %v3536, %v3687
        %v3704 = vmul.f32 %v3537, %v3687
        %v3705 = vmul.f32 %v3538, %v3687
        %v3706 = vmul.f32 %v3539, %v3687
        %v3707 = vmul.f32 %v3540, %v3687
        %v3708 = vmul.f32 %v3541, %v3687
        %v3709 = vmul.f32 %v3542, %v3687
        %v3710 = vmul.f32 %v3543, %v3687
        %v3711 = vmul.f32 %v3544, %v3687
        %v3712 = vmul.f32 %v3545, %v3687
        %v3713 = vmul.f32 %v3546, %v3687
        %v3714 = vmul.f32 %v3547, %v3687
        %v3715 = vmul.f32 %v3548, %v3687
        %v3716 = vmul.f32 %v3549, %v3687
        %v3717 = vmul.f32 %v3550, %v3687
        %v3718 = vmul.f32 %v3551, %v3687
        %v3719 = vmul.f32 %v3552, %v3687
        %v3720 = vadd.f32 %v3655, %v3688
        %v3721 = vadd.f32 %v3656, %v3689
        %v3722 = vadd.f32 %v3657, %v3690
        %v3723 = vadd.f32 %v3658, %v3691
        %v3724 = vadd.f32 %v3659, %v3692
        %v3725 = vadd.f32 %v3660, %v3693
        %v3726 = vadd.f32 %v3661, %v3694
        %v3727 = vadd.f32 %v3662, %v3695
        %v3728 = vadd.f32 %v3663, %v3696
        %v3729 = vadd.f32 %v3664, %v3697
        %v3730 = vadd.f32 %v3665, %v3698
        %v3731 = vadd.f32 %v3666, %v3699
        %v3732 = vadd.f32 %v3667, %v3700
        %v3733 = vadd.f32 %v3668, %v3701
        %v3734 = vadd.f32 %v3669, %v3702
        %v3735 = vadd.f32 %v3670, %v3703
        %v3736 = vadd.f32 %v3671, %v3704
        %v3737 = vadd.f32 %v3672, %v3705
        %v3738 = vadd.f32 %v3673, %v3706
        %v3739 = vadd.f32 %v3674, %v3707
        %v3740 = vadd.f32 %v3675, %v3708
        %v3741 = vadd.f32 %v3676, %v3709
        %v3742 = vadd.f32 %v3677, %v3710
        %v3743 = vadd.f32 %v3678, %v3711
        %v3744 = vadd.f32 %v3679, %v3712
        %v3745 = vadd.f32 %v3680, %v3713
        %v3746 = vadd.f32 %v3681, %v3714
        %v3747 = vadd.f32 %v3682, %v3715
        %v3748 = vadd.f32 %v3683, %v3716
        %v3749 = vadd.f32 %v3684, %v3717
        %v3750 = vadd.f32 %v3685, %v3718
        %v3751 = vadd.f32 %v3686, %v3719
        %v3752 = vperm.slane %v3201, 7
        %v3753 = vmul.f32 %v3523, %v3752
        %v3754 = vmul.f32 %v3524, %v3752
        %v3755 = vmul.f32 %v3525, %v3752
        %v3756 = vmul.f32 %v3526, %v3752
        %v3757 = vmul.f32 %v3527, %v3752
        %v3758 = vmul.f32 %v3528, %v3752
        %v3759 = vmul.f32 %v3529, %v3752
        %v3760 = vmul.f32 %v3530, %v3752
        %v3761 = vmul.f32 %v3531, %v3752
        %v3762 = vmul.f32 %v3532, %v3752
        %v3763 = vmul.f32 %v3533, %v3752
        %v3764 = vmul.f32 %v3534, %v3752
        %v3765 = vmul.f32 %v3535, %v3752
        %v3766 = vmul.f32 %v3536, %v3752
        %v3767 = vmul.f32 %v3537, %v3752
        %v3768 = vmul.f32 %v3538, %v3752
        %v3769 = vmul.f32 %v3539, %v3752
        %v3770 = vmul.f32 %v3540, %v3752
        %v3771 = vmul.f32 %v3541, %v3752
        %v3772 = vmul.f32 %v3542, %v3752
        %v3773 = vmul.f32 %v3543, %v3752
        %v3774 = vmul.f32 %v3544, %v3752
        %v3775 = vmul.f32 %v3545, %v3752
        %v3776 = vmul.f32 %v3546, %v3752
        %v3777 = vmul.f32 %v3547, %v3752
        %v3778 = vmul.f32 %v3548, %v3752
        %v3779 = vmul.f32 %v3549, %v3752
        %v3780 = vmul.f32 %v3550, %v3752
        %v3781 = vmul.f32 %v3551, %v3752
        %v3782 = vmul.f32 %v3552, %v3752
        %v3783 = vmul.f32 %v3553, %v3752
        %v3784 = vmul.f32 %v3554, %v3752
        %v3785 = vadd.f32 %v3720, %v3753
        %v3786 = vadd.f32 %v3721, %v3754
        %v3787 = vadd.f32 %v3722, %v3755
        %v3788 = vadd.f32 %v3723, %v3756
        %v3789 = vadd.f32 %v3724, %v3757
        %v3790 = vadd.f32 %v3725, %v3758
        %v3791 = vadd.f32 %v3726, %v3759
        %v3792 = vadd.f32 %v3727, %v3760
        %v3793 = vadd.f32 %v3728, %v3761
        %v3794 = vadd.f32 %v3729, %v3762
        %v3795 = vadd.f32 %v3730, %v3763
        %v3796 = vadd.f32 %v3731, %v3764
        %v3797 = vadd.f32 %v3732, %v3765
        %v3798 = vadd.f32 %v3733, %v3766
        %v3799 = vadd.f32 %v3734, %v3767
        %v3800 = vadd.f32 %v3735, %v3768
        %v3801 = vadd.f32 %v3736, %v3769
        %v3802 = vadd.f32 %v3737, %v3770
        %v3803 = vadd.f32 %v3738, %v3771
        %v3804 = vadd.f32 %v3739, %v3772
        %v3805 = vadd.f32 %v3740, %v3773
        %v3806 = vadd.f32 %v3741, %v3774
        %v3807 = vadd.f32 %v3742, %v3775
        %v3808 = vadd.f32 %v3743, %v3776
        %v3809 = vadd.f32 %v3744, %v3777
        %v3810 = vadd.f32 %v3745, %v3778
        %v3811 = vadd.f32 %v3746, %v3779
        %v3812 = vadd.f32 %v3747, %v3780
        %v3813 = vadd.f32 %v3748, %v3781
        %v3814 = vadd.f32 %v3749, %v3782
        %v3815 = vadd.f32 %v3750, %v3783
        %v3816 = vadd.f32 %v3751, %v3784
        %v3817 = vperm.slane %v3202, 4
        %v3818 = vmul.f32 %v3525, %v3817
        %v3819 = vmul.f32 %v3526, %v3817
        %v3820 = vmul.f32 %v3527, %v3817
        %v3821 = vmul.f32 %v3528, %v3817
        %v3822 = vmul.f32 %v3529, %v3817
        %v3823 = vmul.f32 %v3530, %v3817
        %v3824 = vmul.f32 %v3531, %v3817
        %v3825 = vmul.f32 %v3532, %v3817
        %v3826 = vmul.f32 %v3533, %v3817
        %v3827 = vmul.f32 %v3534, %v3817
        %v3828 = vmul.f32 %v3535, %v3817
        %v3829 = vmul.f32 %v3536, %v3817
        %v3830 = vmul.f32 %v3537, %v3817
        %v3831 = vmul.f32 %v3538, %v3817
        %v3832 = vmul.f32 %v3539, %v3817
        %v3833 = vmul.f32 %v3540, %v3817
        %v3834 = vmul.f32 %v3541, %v3817
        %v3835 = vmul.f32 %v3542, %v3817
        %v3836 = vmul.f32 %v3543, %v3817
        %v3837 = vmul.f32 %v3544, %v3817
        %v3838 = vmul.f32 %v3545, %v3817
        %v3839 = vmul.f32 %v3546, %v3817
        %v3840 = vmul.f32 %v3547, %v3817
        %v3841 = vmul.f32 %v3548, %v3817
        %v3842 = vmul.f32 %v3549, %v3817
        %v3843 = vmul.f32 %v3550, %v3817
        %v3844 = vmul.f32 %v3551, %v3817
        %v3845 = vmul.f32 %v3552, %v3817
        %v3846 = vmul.f32 %v3553, %v3817
        %v3847 = vmul.f32 %v3554, %v3817
        %v3848 = vmul.f32 %v3555, %v3817
        %v3849 = vmul.f32 %v3556, %v3817
        %v3850 = vadd.f32 %v3785, %v3818
        %v3851 = vadd.f32 %v3786, %v3819
        %v3852 = vadd.f32 %v3787, %v3820
        %v3853 = vadd.f32 %v3788, %v3821
        %v3854 = vadd.f32 %v3789, %v3822
        %v3855 = vadd.f32 %v3790, %v3823
        %v3856 = vadd.f32 %v3791, %v3824
        %v3857 = vadd.f32 %v3792, %v3825
        %v3858 = vadd.f32 %v3793, %v3826
        %v3859 = vadd.f32 %v3794, %v3827
        %v3860 = vadd.f32 %v3795, %v3828
        %v3861 = vadd.f32 %v3796, %v3829
        %v3862 = vadd.f32 %v3797, %v3830
        %v3863 = vadd.f32 %v3798, %v3831
        %v3864 = vadd.f32 %v3799, %v3832
        %v3865 = vadd.f32 %v3800, %v3833
        %v3866 = vadd.f32 %v3801, %v3834
        %v3867 = vadd.f32 %v3802, %v3835
        %v3868 = vadd.f32 %v3803, %v3836
        %v3869 = vadd.f32 %v3804, %v3837
        %v3870 = vadd.f32 %v3805, %v3838
        %v3871 = vadd.f32 %v3806, %v3839
        %v3872 = vadd.f32 %v3807, %v3840
        %v3873 = vadd.f32 %v3808, %v3841
        %v3874 = vadd.f32 %v3809, %v3842
        %v3875 = vadd.f32 %v3810, %v3843
        %v3876 = vadd.f32 %v3811, %v3844
        %v3877 = vadd.f32 %v3812, %v3845
        %v3878 = vadd.f32 %v3813, %v3846
        %v3879 = vadd.f32 %v3814, %v3847
        %v3880 = vadd.f32 %v3815, %v3848
        %v3881 = vadd.f32 %v3816, %v3849
        %v3882 = vadd.f32 %v3850, 0.0
        %v3883 = vadd.f32 %v3851, 0.0
        %v3884 = vadd.f32 %v3852, 0.0
        %v3885 = vadd.f32 %v3853, 0.0
        %v3886 = vadd.f32 %v3854, 0.0
        %v3887 = vadd.f32 %v3855, 0.0
        %v3888 = vadd.f32 %v3856, 0.0
        %v3889 = vadd.f32 %v3857, 0.0
        %v3890 = vadd.f32 %v3858, 0.0
        %v3891 = vadd.f32 %v3859, 0.0
        %v3892 = vadd.f32 %v3860, 0.0
        %v3893 = vadd.f32 %v3861, 0.0
        %v3894 = vadd.f32 %v3862, 0.0
        %v3895 = vadd.f32 %v3863, 0.0
        %v3896 = vadd.f32 %v3864, 0.0
        %v3897 = vadd.f32 %v3865, 0.0
        %v3898 = vadd.f32 %v3866, 0.0
        %v3899 = vadd.f32 %v3867, 0.0
        %v3900 = vadd.f32 %v3868, 0.0
        %v3901 = vadd.f32 %v3869, 0.0
        %v3902 = vadd.f32 %v3870, 0.0
        %v3903 = vadd.f32 %v3871, 0.0
        %v3904 = vadd.f32 %v3872, 0.0
        %v3905 = vadd.f32 %v3873, 0.0
        %v3906 = vadd.f32 %v3874, 0.0
        %v3907 = vadd.f32 %v3875, 0.0
        %v3908 = vadd.f32 %v3876, 0.0
        %v3909 = vadd.f32 %v3877, 0.0
        %v3910 = vadd.f32 %v3878, 0.0
        %v3911 = vadd.f32 %v3879, 0.0
        %v3912 = vadd.f32 %v3880, 0.0
        %v3913 = vadd.f32 %v3881, 0.0
        %v3914 = vrot.slane %v3236, 7
        %v3915 = vrot.slane %v3237, 7
        %v3916 = vsel %vm1554, %v3914, %v3915
        %v3917 = vrot.slane %v3238, 7
        %v3918 = vsel %vm1554, %v3915, %v3917
        %v3919 = vrot.slane %v3239, 7
        %v3920 = vsel %vm1554, %v3917, %v3919
        %v3921 = vrot.slane %v3240, 7
        %v3922 = vsel %vm1554, %v3919, %v3921
        %v3923 = vrot.slane %v3241, 7
        %v3924 = vsel %vm1554, %v3921, %v3923
        %v3925 = vrot.slane %v3242, 7
        %v3926 = vsel %vm1554, %v3923, %v3925
        %v3927 = vrot.slane %v3243, 7
        %v3928 = vsel %vm1554, %v3925, %v3927
        %v3929 = vrot.slane %v3244, 7
        %v3930 = vsel %vm1554, %v3927, %v3929
        %v3931 = vrot.slane %v3245, 7
        %v3932 = vsel %vm1554, %v3929, %v3931
        %v3933 = vrot.slane %v3246, 7
        %v3934 = vsel %vm1554, %v3931, %v3933
        %v3935 = vrot.slane %v3247, 7
        %v3936 = vsel %vm1554, %v3933, %v3935
        %v3937 = vrot.slane %v3248, 7
        %v3938 = vsel %vm1554, %v3935, %v3937
        %v3939 = vrot.slane %v3249, 7
        %v3940 = vsel %vm1554, %v3937, %v3939
        %v3941 = vrot.slane %v3250, 7
        %v3942 = vsel %vm1554, %v3939, %v3941
        %v3943 = vrot.slane %v3251, 7
        %v3944 = vsel %vm1554, %v3941, %v3943
        %v3945 = vrot.slane %v3252, 7
        %v3946 = vsel %vm1554, %v3943, %v3945
        %v3947 = vrot.slane %v3253, 7
        %v3948 = vsel %vm1554, %v3945, %v3947
        %v3949 = vrot.slane %v3254, 7
        %v3950 = vsel %vm1554, %v3947, %v3949
        %v3951 = vrot.slane %v3255, 7
        %v3952 = vsel %vm1554, %v3949, %v3951
        %v3953 = vrot.slane %v3256, 7
        %v3954 = vsel %vm1554, %v3951, %v3953
        %v3955 = vrot.slane %v3257, 7
        %v3956 = vsel %vm1554, %v3953, %v3955
        %v3957 = vrot.slane %v3258, 7
        %v3958 = vsel %vm1554, %v3955, %v3957
        %v3959 = vrot.slane %v3259, 7
        %v3960 = vsel %vm1554, %v3957, %v3959
        %v3961 = vrot.slane %v3260, 7
        %v3962 = vsel %vm1554, %v3959, %v3961
        %v3963 = vrot.slane %v3261, 7
        %v3964 = vsel %vm1554, %v3961, %v3963
        %v3965 = vrot.slane %v3262, 7
        %v3966 = vsel %vm1554, %v3963, %v3965
        %v3967 = vrot.slane %v3263, 7
        %v3968 = vsel %vm1554, %v3965, %v3967
        %v3969 = vrot.slane %v3264, 7
        %v3970 = vsel %vm1554, %v3967, %v3969
        %v3971 = vrot.slane %v3265, 7
        %v3972 = vsel %vm1554, %v3969, %v3971
        %v3973 = vrot.slane %v3266, 7
        %v3974 = vsel %vm1554, %v3971, %v3973
        %v3975 = vrot.slane %v3267, 7
        %v3976 = vsel %vm1554, %v3973, %v3975
        %v3977 = vrot.slane %v3268, 7
        %v3978 = vsel %vm1554, %v3975, %v3977
        %v3979 = vrot.slane %v3269, 7
        %v3980 = vsel %vm1554, %v3977, %v3979
        %v3981 = vrot.slane %v3270, 7
        %v3982 = vsel %vm1554, %v3979, %v3981
        %v3983 = vrot.slane %v3271, 7
        %v3984 = vsel %vm1554, %v3981, %v3983
        %v3985 = vrot.slane %v3272, 7
        %v3986 = vsel %vm1554, %v3983, %v3985
        %v3987 = vrot.slane %v3273, 7
        %v3988 = vsel %vm1554, %v3985, %v3987
        %v3989 = vrot.slane %v3274, 7
        %v3990 = vsel %vm1554, %v3987, %v3989
        %v3991 = vrot.slane %v3275, 7
        %v3992 = vsel %vm1554, %v3989, %v3991
        %v4033 = vsel %vm1554, 0.0, %v3914
        %v4034 = vsel %vm1704, %v4033, 0.0
        %v4035 = vsel %vm1705, %v3916, 0.0
        %v4036 = vsel %vm1706, %v3918, 0.0
        %v4037 = vsel %vm1707, %v3920, 0.0
        %v4038 = vsel %vm1708, %v3922, 0.0
        %v4039 = vsel %vm1709, %v3924, 0.0
        %v4040 = vsel %vm1710, %v3926, 0.0
        %v4041 = vsel %vm1711, %v3928, 0.0
        %v4042 = vsel %vm1712, %v3930, 0.0
        %v4043 = vsel %vm1713, %v3932, 0.0
        %v4044 = vsel %vm1714, %v3934, 0.0
        %v4045 = vsel %vm1715, %v3936, 0.0
        %v4046 = vsel %vm1716, %v3938, 0.0
        %v4047 = vsel %vm1717, %v3940, 0.0
        %v4048 = vsel %vm1718, %v3942, 0.0
        %v4049 = vsel %vm1719, %v3944, 0.0
        %v4050 = vsel %vm1720, %v3946, 0.0
        %v4051 = vsel %vm1721, %v3948, 0.0
        %v4052 = vsel %vm1722, %v3950, 0.0
        %v4053 = vsel %vm1723, %v3952, 0.0
        %v4054 = vsel %vm1724, %v3954, 0.0
        %v4055 = vsel %vm1725, %v3956, 0.0
        %v4056 = vsel %vm1726, %v3958, 0.0
        %v4057 = vsel %vm1727, %v3960, 0.0
        %v4058 = vsel %vm1728, %v3962, 0.0
        %v4059 = vsel %vm1729, %v3964, 0.0
        %v4060 = vsel %vm1730, %v3966, 0.0
        %v4061 = vsel %vm1731, %v3968, 0.0
        %v4062 = vsel %vm1732, %v3970, 0.0
        %v4063 = vsel %vm1733, %v3972, 0.0
        %v4064 = vsel %vm1734, %v3974, 0.0
        %v4065 = vsel %vm1735, %v3976, 0.0
        %v4066 = vsel %vm1736, %v3978, 0.0
        %v4067 = vsel %vm1737, %v3980, 0.0
        %v4068 = vsel %vm1738, %v3982, 0.0
        %v4069 = vsel %vm1739, %v3984, 0.0
        %v4070 = vsel %vm1740, %v3986, 0.0
        %v4071 = vsel %vm1741, %v3988, 0.0
        %v4072 = vsel %vm1742, %v3990, 0.0
        %v4073 = vsel %vm1743, %v3992, 0.0
        %v4074 = vperm.slane %v3200, 1
        %v4075 = vmul.f32 %v4034, %v4074
        %v4076 = vmul.f32 %v4035, %v4074
        %v4077 = vmul.f32 %v4036, %v4074
        %v4078 = vmul.f32 %v4037, %v4074
        %v4079 = vmul.f32 %v4038, %v4074
        %v4080 = vmul.f32 %v4039, %v4074
        %v4081 = vmul.f32 %v4040, %v4074
        %v4082 = vmul.f32 %v4041, %v4074
        %v4083 = vmul.f32 %v4042, %v4074
        %v4084 = vmul.f32 %v4043, %v4074
        %v4085 = vmul.f32 %v4044, %v4074
        %v4086 = vmul.f32 %v4045, %v4074
        %v4087 = vmul.f32 %v4046, %v4074
        %v4088 = vmul.f32 %v4047, %v4074
        %v4089 = vmul.f32 %v4048, %v4074
        %v4090 = vmul.f32 %v4049, %v4074
        %v4091 = vmul.f32 %v4050, %v4074
        %v4092 = vmul.f32 %v4051, %v4074
        %v4093 = vmul.f32 %v4052, %v4074
        %v4094 = vmul.f32 %v4053, %v4074
        %v4095 = vmul.f32 %v4054, %v4074
        %v4096 = vmul.f32 %v4055, %v4074
        %v4097 = vmul.f32 %v4056, %v4074
        %v4098 = vmul.f32 %v4057, %v4074
        %v4099 = vmul.f32 %v4058, %v4074
        %v4100 = vmul.f32 %v4059, %v4074
        %v4101 = vmul.f32 %v4060, %v4074
        %v4102 = vmul.f32 %v4061, %v4074
        %v4103 = vmul.f32 %v4062, %v4074
        %v4104 = vmul.f32 %v4063, %v4074
        %v4105 = vmul.f32 %v4064, %v4074
        %v4106 = vmul.f32 %v4065, %v4074
        %v4107 = vadd.f32 %v4075, 0.0
        %v4108 = vadd.f32 %v4076, 0.0
        %v4109 = vadd.f32 %v4077, 0.0
        %v4110 = vadd.f32 %v4078, 0.0
        %v4111 = vadd.f32 %v4079, 0.0
        %v4112 = vadd.f32 %v4080, 0.0
        %v4113 = vadd.f32 %v4081, 0.0
        %v4114 = vadd.f32 %v4082, 0.0
        %v4115 = vadd.f32 %v4083, 0.0
        %v4116 = vadd.f32 %v4084, 0.0
        %v4117 = vadd.f32 %v4085, 0.0
        %v4118 = vadd.f32 %v4086, 0.0
        %v4119 = vadd.f32 %v4087, 0.0
        %v4120 = vadd.f32 %v4088, 0.0
        %v4121 = vadd.f32 %v4089, 0.0
        %v4122 = vadd.f32 %v4090, 0.0
        %v4123 = vadd.f32 %v4091, 0.0
        %v4124 = vadd.f32 %v4092, 0.0
        %v4125 = vadd.f32 %v4093, 0.0
        %v4126 = vadd.f32 %v4094, 0.0
        %v4127 = vadd.f32 %v4095, 0.0
        %v4128 = vadd.f32 %v4096, 0.0
        %v4129 = vadd.f32 %v4097, 0.0
        %v4130 = vadd.f32 %v4098, 0.0
        %v4131 = vadd.f32 %v4099, 0.0
        %v4132 = vadd.f32 %v4100, 0.0
        %v4133 = vadd.f32 %v4101, 0.0
        %v4134 = vadd.f32 %v4102, 0.0
        %v4135 = vadd.f32 %v4103, 0.0
        %v4136 = vadd.f32 %v4104, 0.0
        %v4137 = vadd.f32 %v4105, 0.0
        %v4138 = vadd.f32 %v4106, 0.0
        %v4139 = vperm.slane %v3200, 6
        %v4140 = vmul.f32 %v4036, %v4139
        %v4141 = vmul.f32 %v4037, %v4139
        %v4142 = vmul.f32 %v4038, %v4139
        %v4143 = vmul.f32 %v4039, %v4139
        %v4144 = vmul.f32 %v4040, %v4139
        %v4145 = vmul.f32 %v4041, %v4139
        %v4146 = vmul.f32 %v4042, %v4139
        %v4147 = vmul.f32 %v4043, %v4139
        %v4148 = vmul.f32 %v4044, %v4139
        %v4149 = vmul.f32 %v4045, %v4139
        %v4150 = vmul.f32 %v4046, %v4139
        %v4151 = vmul.f32 %v4047, %v4139
        %v4152 = vmul.f32 %v4048, %v4139
        %v4153 = vmul.f32 %v4049, %v4139
        %v4154 = vmul.f32 %v4050, %v4139
        %v4155 = vmul.f32 %v4051, %v4139
        %v4156 = vmul.f32 %v4052, %v4139
        %v4157 = vmul.f32 %v4053, %v4139
        %v4158 = vmul.f32 %v4054, %v4139
        %v4159 = vmul.f32 %v4055, %v4139
        %v4160 = vmul.f32 %v4056, %v4139
        %v4161 = vmul.f32 %v4057, %v4139
        %v4162 = vmul.f32 %v4058, %v4139
        %v4163 = vmul.f32 %v4059, %v4139
        %v4164 = vmul.f32 %v4060, %v4139
        %v4165 = vmul.f32 %v4061, %v4139
        %v4166 = vmul.f32 %v4062, %v4139
        %v4167 = vmul.f32 %v4063, %v4139
        %v4168 = vmul.f32 %v4064, %v4139
        %v4169 = vmul.f32 %v4065, %v4139
        %v4170 = vmul.f32 %v4066, %v4139
        %v4171 = vmul.f32 %v4067, %v4139
        %v4172 = vadd.f32 %v4107, %v4140
        %v4173 = vadd.f32 %v4108, %v4141
        %v4174 = vadd.f32 %v4109, %v4142
        %v4175 = vadd.f32 %v4110, %v4143
        %v4176 = vadd.f32 %v4111, %v4144
        %v4177 = vadd.f32 %v4112, %v4145
        %v4178 = vadd.f32 %v4113, %v4146
        %v4179 = vadd.f32 %v4114, %v4147
        %v4180 = vadd.f32 %v4115, %v4148
        %v4181 = vadd.f32 %v4116, %v4149
        %v4182 = vadd.f32 %v4117, %v4150
        %v4183 = vadd.f32 %v4118, %v4151
        %v4184 = vadd.f32 %v4119, %v4152
        %v4185 = vadd.f32 %v4120, %v4153
        %v4186 = vadd.f32 %v4121, %v4154
        %v4187 = vadd.f32 %v4122, %v4155
        %v4188 = vadd.f32 %v4123, %v4156
        %v4189 = vadd.f32 %v4124, %v4157
        %v4190 = vadd.f32 %v4125, %v4158
        %v4191 = vadd.f32 %v4126, %v4159
        %v4192 = vadd.f32 %v4127, %v4160
        %v4193 = vadd.f32 %v4128, %v4161
        %v4194 = vadd.f32 %v4129, %v4162
        %v4195 = vadd.f32 %v4130, %v4163
        %v4196 = vadd.f32 %v4131, %v4164
        %v4197 = vadd.f32 %v4132, %v4165
        %v4198 = vadd.f32 %v4133, %v4166
        %v4199 = vadd.f32 %v4134, %v4167
        %v4200 = vadd.f32 %v4135, %v4168
        %v4201 = vadd.f32 %v4136, %v4169
        %v4202 = vadd.f32 %v4137, %v4170
        %v4203 = vadd.f32 %v4138, %v4171
        %v4204 = vperm.slane %v3201, 3
        %v4205 = vmul.f32 %v4038, %v4204
        %v4206 = vmul.f32 %v4039, %v4204
        %v4207 = vmul.f32 %v4040, %v4204
        %v4208 = vmul.f32 %v4041, %v4204
        %v4209 = vmul.f32 %v4042, %v4204
        %v4210 = vmul.f32 %v4043, %v4204
        %v4211 = vmul.f32 %v4044, %v4204
        %v4212 = vmul.f32 %v4045, %v4204
        %v4213 = vmul.f32 %v4046, %v4204
        %v4214 = vmul.f32 %v4047, %v4204
        %v4215 = vmul.f32 %v4048, %v4204
        %v4216 = vmul.f32 %v4049, %v4204
        %v4217 = vmul.f32 %v4050, %v4204
        %v4218 = vmul.f32 %v4051, %v4204
        %v4219 = vmul.f32 %v4052, %v4204
        %v4220 = vmul.f32 %v4053, %v4204
        %v4221 = vmul.f32 %v4054, %v4204
        %v4222 = vmul.f32 %v4055, %v4204
        %v4223 = vmul.f32 %v4056, %v4204
        %v4224 = vmul.f32 %v4057, %v4204
        %v4225 = vmul.f32 %v4058, %v4204
        %v4226 = vmul.f32 %v4059, %v4204
        %v4227 = vmul.f32 %v4060, %v4204
        %v4228 = vmul.f32 %v4061, %v4204
        %v4229 = vmul.f32 %v4062, %v4204
        %v4230 = vmul.f32 %v4063, %v4204
        %v4231 = vmul.f32 %v4064, %v4204
        %v4232 = vmul.f32 %v4065, %v4204
        %v4233 = vmul.f32 %v4066, %v4204
        %v4234 = vmul.f32 %v4067, %v4204
        %v4235 = vmul.f32 %v4068, %v4204
        %v4236 = vmul.f32 %v4069, %v4204
        %v4237 = vadd.f32 %v4172, %v4205
        %v4238 = vadd.f32 %v4173, %v4206
        %v4239 = vadd.f32 %v4174, %v4207
        %v4240 = vadd.f32 %v4175, %v4208
        %v4241 = vadd.f32 %v4176, %v4209
        %v4242 = vadd.f32 %v4177, %v4210
        %v4243 = vadd.f32 %v4178, %v4211
        %v4244 = vadd.f32 %v4179, %v4212
        %v4245 = vadd.f32 %v4180, %v4213
        %v4246 = vadd.f32 %v4181, %v4214
        %v4247 = vadd.f32 %v4182, %v4215
        %v4248 = vadd.f32 %v4183, %v4216
        %v4249 = vadd.f32 %v4184, %v4217
        %v4250 = vadd.f32 %v4185, %v4218
        %v4251 = vadd.f32 %v4186, %v4219
        %v4252 = vadd.f32 %v4187, %v4220
        %v4253 = vadd.f32 %v4188, %v4221
        %v4254 = vadd.f32 %v4189, %v4222
        %v4255 = vadd.f32 %v4190, %v4223
        %v4256 = vadd.f32 %v4191, %v4224
        %v4257 = vadd.f32 %v4192, %v4225
        %v4258 = vadd.f32 %v4193, %v4226
        %v4259 = vadd.f32 %v4194, %v4227
        %v4260 = vadd.f32 %v4195, %v4228
        %v4261 = vadd.f32 %v4196, %v4229
        %v4262 = vadd.f32 %v4197, %v4230
        %v4263 = vadd.f32 %v4198, %v4231
        %v4264 = vadd.f32 %v4199, %v4232
        %v4265 = vadd.f32 %v4200, %v4233
        %v4266 = vadd.f32 %v4201, %v4234
        %v4267 = vadd.f32 %v4202, %v4235
        %v4268 = vadd.f32 %v4203, %v4236
        %v4269 = vperm.slane %v3202, 0
        %v4270 = vmul.f32 %v4040, %v4269
        %v4271 = vmul.f32 %v4041, %v4269
        %v4272 = vmul.f32 %v4042, %v4269
        %v4273 = vmul.f32 %v4043, %v4269
        %v4274 = vmul.f32 %v4044, %v4269
        %v4275 = vmul.f32 %v4045, %v4269
        %v4276 = vmul.f32 %v4046, %v4269
        %v4277 = vmul.f32 %v4047, %v4269
        %v4278 = vmul.f32 %v4048, %v4269
        %v4279 = vmul.f32 %v4049, %v4269
        %v4280 = vmul.f32 %v4050, %v4269
        %v4281 = vmul.f32 %v4051, %v4269
        %v4282 = vmul.f32 %v4052, %v4269
        %v4283 = vmul.f32 %v4053, %v4269
        %v4284 = vmul.f32 %v4054, %v4269
        %v4285 = vmul.f32 %v4055, %v4269
        %v4286 = vmul.f32 %v4056, %v4269
        %v4287 = vmul.f32 %v4057, %v4269
        %v4288 = vmul.f32 %v4058, %v4269
        %v4289 = vmul.f32 %v4059, %v4269
        %v4290 = vmul.f32 %v4060, %v4269
        %v4291 = vmul.f32 %v4061, %v4269
        %v4292 = vmul.f32 %v4062, %v4269
        %v4293 = vmul.f32 %v4063, %v4269
        %v4294 = vmul.f32 %v4064, %v4269
        %v4295 = vmul.f32 %v4065, %v4269
        %v4296 = vmul.f32 %v4066, %v4269
        %v4297 = vmul.f32 %v4067, %v4269
        %v4298 = vmul.f32 %v4068, %v4269
        %v4299 = vmul.f32 %v4069, %v4269
        %v4300 = vmul.f32 %v4070, %v4269
        %v4301 = vmul.f32 %v4071, %v4269
        %v4302 = vadd.f32 %v4237, %v4270
        %v4303 = vadd.f32 %v4238, %v4271
        %v4304 = vadd.f32 %v4239, %v4272
        %v4305 = vadd.f32 %v4240, %v4273
        %v4306 = vadd.f32 %v4241, %v4274
        %v4307 = vadd.f32 %v4242, %v4275
        %v4308 = vadd.f32 %v4243, %v4276
        %v4309 = vadd.f32 %v4244, %v4277
        %v4310 = vadd.f32 %v4245, %v4278
        %v4311 = vadd.f32 %v4246, %v4279
        %v4312 = vadd.f32 %v4247, %v4280
        %v4313 = vadd.f32 %v4248, %v4281
        %v4314 = vadd.f32 %v4249, %v4282
        %v4315 = vadd.f32 %v4250, %v4283
        %v4316 = vadd.f32 %v4251, %v4284
        %v4317 = vadd.f32 %v4252, %v4285
        %v4318 = vadd.f32 %v4253, %v4286
        %v4319 = vadd.f32 %v4254, %v4287
        %v4320 = vadd.f32 %v4255, %v4288
        %v4321 = vadd.f32 %v4256, %v4289
        %v4322 = vadd.f32 %v4257, %v4290
        %v4323 = vadd.f32 %v4258, %v4291
        %v4324 = vadd.f32 %v4259, %v4292
        %v4325 = vadd.f32 %v4260, %v4293
        %v4326 = vadd.f32 %v4261, %v4294
        %v4327 = vadd.f32 %v4262, %v4295
        %v4328 = vadd.f32 %v4263, %v4296
        %v4329 = vadd.f32 %v4264, %v4297
        %v4330 = vadd.f32 %v4265, %v4298
        %v4331 = vadd.f32 %v4266, %v4299
        %v4332 = vadd.f32 %v4267, %v4300
        %v4333 = vadd.f32 %v4268, %v4301
        %v4334 = vperm.slane %v3202, 5
        %v4335 = vmul.f32 %v4042, %v4334
        %v4336 = vmul.f32 %v4043, %v4334
        %v4337 = vmul.f32 %v4044, %v4334
        %v4338 = vmul.f32 %v4045, %v4334
        %v4339 = vmul.f32 %v4046, %v4334
        %v4340 = vmul.f32 %v4047, %v4334
        %v4341 = vmul.f32 %v4048, %v4334
        %v4342 = vmul.f32 %v4049, %v4334
        %v4343 = vmul.f32 %v4050, %v4334
        %v4344 = vmul.f32 %v4051, %v4334
        %v4345 = vmul.f32 %v4052, %v4334
        %v4346 = vmul.f32 %v4053, %v4334
        %v4347 = vmul.f32 %v4054, %v4334
        %v4348 = vmul.f32 %v4055, %v4334
        %v4349 = vmul.f32 %v4056, %v4334
        %v4350 = vmul.f32 %v4057, %v4334
        %v4351 = vmul.f32 %v4058, %v4334
        %v4352 = vmul.f32 %v4059, %v4334
        %v4353 = vmul.f32 %v4060, %v4334
        %v4354 = vmul.f32 %v4061, %v4334
        %v4355 = vmul.f32 %v4062, %v4334
        %v4356 = vmul.f32 %v4063, %v4334
        %v4357 = vmul.f32 %v4064, %v4334
        %v4358 = vmul.f32 %v4065, %v4334
        %v4359 = vmul.f32 %v4066, %v4334
        %v4360 = vmul.f32 %v4067, %v4334
        %v4361 = vmul.f32 %v4068, %v4334
        %v4362 = vmul.f32 %v4069, %v4334
        %v4363 = vmul.f32 %v4070, %v4334
        %v4364 = vmul.f32 %v4071, %v4334
        %v4365 = vmul.f32 %v4072, %v4334
        %v4366 = vmul.f32 %v4073, %v4334
        %v4367 = vadd.f32 %v4302, %v4335
        %v4368 = vadd.f32 %v4303, %v4336
        %v4369 = vadd.f32 %v4304, %v4337
        %v4370 = vadd.f32 %v4305, %v4338
        %v4371 = vadd.f32 %v4306, %v4339
        %v4372 = vadd.f32 %v4307, %v4340
        %v4373 = vadd.f32 %v4308, %v4341
        %v4374 = vadd.f32 %v4309, %v4342
        %v4375 = vadd.f32 %v4310, %v4343
        %v4376 = vadd.f32 %v4311, %v4344
        %v4377 = vadd.f32 %v4312, %v4345
        %v4378 = vadd.f32 %v4313, %v4346
        %v4379 = vadd.f32 %v4314, %v4347
        %v4380 = vadd.f32 %v4315, %v4348
        %v4381 = vadd.f32 %v4316, %v4349
        %v4382 = vadd.f32 %v4317, %v4350
        %v4383 = vadd.f32 %v4318, %v4351
        %v4384 = vadd.f32 %v4319, %v4352
        %v4385 = vadd.f32 %v4320, %v4353
        %v4386 = vadd.f32 %v4321, %v4354
        %v4387 = vadd.f32 %v4322, %v4355
        %v4388 = vadd.f32 %v4323, %v4356
        %v4389 = vadd.f32 %v4324, %v4357
        %v4390 = vadd.f32 %v4325, %v4358
        %v4391 = vadd.f32 %v4326, %v4359
        %v4392 = vadd.f32 %v4327, %v4360
        %v4393 = vadd.f32 %v4328, %v4361
        %v4394 = vadd.f32 %v4329, %v4362
        %v4395 = vadd.f32 %v4330, %v4363
        %v4396 = vadd.f32 %v4331, %v4364
        %v4397 = vadd.f32 %v4332, %v4365
        %v4398 = vadd.f32 %v4333, %v4366
        %v4399 = vadd.f32 %v3882, %v4367
        %v4400 = vadd.f32 %v3883, %v4368
        %v4401 = vadd.f32 %v3884, %v4369
        %v4402 = vadd.f32 %v3885, %v4370
        %v4403 = vadd.f32 %v3886, %v4371
        %v4404 = vadd.f32 %v3887, %v4372
        %v4405 = vadd.f32 %v3888, %v4373
        %v4406 = vadd.f32 %v3889, %v4374
        %v4407 = vadd.f32 %v3890, %v4375
        %v4408 = vadd.f32 %v3891, %v4376
        %v4409 = vadd.f32 %v3892, %v4377
        %v4410 = vadd.f32 %v3893, %v4378
        %v4411 = vadd.f32 %v3894, %v4379
        %v4412 = vadd.f32 %v3895, %v4380
        %v4413 = vadd.f32 %v3896, %v4381
        %v4414 = vadd.f32 %v3897, %v4382
        %v4415 = vadd.f32 %v3898, %v4383
        %v4416 = vadd.f32 %v3899, %v4384
        %v4417 = vadd.f32 %v3900, %v4385
        %v4418 = vadd.f32 %v3901, %v4386
        %v4419 = vadd.f32 %v3902, %v4387
        %v4420 = vadd.f32 %v3903, %v4388
        %v4421 = vadd.f32 %v3904, %v4389
        %v4422 = vadd.f32 %v3905, %v4390
        %v4423 = vadd.f32 %v3906, %v4391
        %v4424 = vadd.f32 %v3907, %v4392
        %v4425 = vadd.f32 %v3908, %v4393
        %v4426 = vadd.f32 %v3909, %v4394
        %v4427 = vadd.f32 %v3910, %v4395
        %v4428 = vadd.f32 %v3911, %v4396
        %v4429 = vadd.f32 %v3912, %v4397
        %v4430 = vadd.f32 %v3913, %v4398
        %v4431 = vperm.slane %v3200, 2
        %v4432 = vmul.f32 %v3236, %v4431
        %v4433 = vmul.f32 %v3237, %v4431
        %v4434 = vmul.f32 %v3238, %v4431
        %v4435 = vmul.f32 %v3239, %v4431
        %v4436 = vmul.f32 %v3240, %v4431
        %v4437 = vmul.f32 %v3241, %v4431
        %v4438 = vmul.f32 %v3242, %v4431
        %v4439 = vmul.f32 %v3243, %v4431
        %v4440 = vmul.f32 %v3244, %v4431
        %v4441 = vmul.f32 %v3245, %v4431
        %v4442 = vmul.f32 %v3246, %v4431
        %v4443 = vmul.f32 %v3247, %v4431
        %v4444 = vmul.f32 %v3248, %v4431
        %v4445 = vmul.f32 %v3249, %v4431
        %v4446 = vmul.f32 %v3250, %v4431
        %v4447 = vmul.f32 %v3251, %v4431
        %v4448 = vmul.f32 %v3252, %v4431
        %v4449 = vmul.f32 %v3253, %v4431
        %v4450 = vmul.f32 %v3254, %v4431
        %v4451 = vmul.f32 %v3255, %v4431
        %v4452 = vmul.f32 %v3256, %v4431
        %v4453 = vmul.f32 %v3257, %v4431
        %v4454 = vmul.f32 %v3258, %v4431
        %v4455 = vmul.f32 %v3259, %v4431
        %v4456 = vmul.f32 %v3260, %v4431
        %v4457 = vmul.f32 %v3261, %v4431
        %v4458 = vmul.f32 %v3262, %v4431
        %v4459 = vmul.f32 %v3263, %v4431
        %v4460 = vmul.f32 %v3264, %v4431
        %v4461 = vmul.f32 %v3265, %v4431
        %v4462 = vmul.f32 %v3266, %v4431
        %v4463 = vmul.f32 %v3267, %v4431
        %v4464 = vadd.f32 %v4432, 0.0
        %v4465 = vadd.f32 %v4433, 0.0
        %v4466 = vadd.f32 %v4434, 0.0
        %v4467 = vadd.f32 %v4435, 0.0
        %v4468 = vadd.f32 %v4436, 0.0
        %v4469 = vadd.f32 %v4437, 0.0
        %v4470 = vadd.f32 %v4438, 0.0
        %v4471 = vadd.f32 %v4439, 0.0
        %v4472 = vadd.f32 %v4440, 0.0
        %v4473 = vadd.f32 %v4441, 0.0
        %v4474 = vadd.f32 %v4442, 0.0
        %v4475 = vadd.f32 %v4443, 0.0
        %v4476 = vadd.f32 %v4444, 0.0
        %v4477 = vadd.f32 %v4445, 0.0
        %v4478 = vadd.f32 %v4446, 0.0
        %v4479 = vadd.f32 %v4447, 0.0
        %v4480 = vadd.f32 %v4448, 0.0
        %v4481 = vadd.f32 %v4449, 0.0
        %v4482 = vadd.f32 %v4450, 0.0
        %v4483 = vadd.f32 %v4451, 0.0
        %v4484 = vadd.f32 %v4452, 0.0
        %v4485 = vadd.f32 %v4453, 0.0
        %v4486 = vadd.f32 %v4454, 0.0
        %v4487 = vadd.f32 %v4455, 0.0
        %v4488 = vadd.f32 %v4456, 0.0
        %v4489 = vadd.f32 %v4457, 0.0
        %v4490 = vadd.f32 %v4458, 0.0
        %v4491 = vadd.f32 %v4459, 0.0
        %v4492 = vadd.f32 %v4460, 0.0
        %v4493 = vadd.f32 %v4461, 0.0
        %v4494 = vadd.f32 %v4462, 0.0
        %v4495 = vadd.f32 %v4463, 0.0
        %v4496 = vperm.slane %v3200, 7
        %v4497 = vmul.f32 %v3238, %v4496
        %v4498 = vmul.f32 %v3239, %v4496
        %v4499 = vmul.f32 %v3240, %v4496
        %v4500 = vmul.f32 %v3241, %v4496
        %v4501 = vmul.f32 %v3242, %v4496
        %v4502 = vmul.f32 %v3243, %v4496
        %v4503 = vmul.f32 %v3244, %v4496
        %v4504 = vmul.f32 %v3245, %v4496
        %v4505 = vmul.f32 %v3246, %v4496
        %v4506 = vmul.f32 %v3247, %v4496
        %v4507 = vmul.f32 %v3248, %v4496
        %v4508 = vmul.f32 %v3249, %v4496
        %v4509 = vmul.f32 %v3250, %v4496
        %v4510 = vmul.f32 %v3251, %v4496
        %v4511 = vmul.f32 %v3252, %v4496
        %v4512 = vmul.f32 %v3253, %v4496
        %v4513 = vmul.f32 %v3254, %v4496
        %v4514 = vmul.f32 %v3255, %v4496
        %v4515 = vmul.f32 %v3256, %v4496
        %v4516 = vmul.f32 %v3257, %v4496
        %v4517 = vmul.f32 %v3258, %v4496
        %v4518 = vmul.f32 %v3259, %v4496
        %v4519 = vmul.f32 %v3260, %v4496
        %v4520 = vmul.f32 %v3261, %v4496
        %v4521 = vmul.f32 %v3262, %v4496
        %v4522 = vmul.f32 %v3263, %v4496
        %v4523 = vmul.f32 %v3264, %v4496
        %v4524 = vmul.f32 %v3265, %v4496
        %v4525 = vmul.f32 %v3266, %v4496
        %v4526 = vmul.f32 %v3267, %v4496
        %v4527 = vmul.f32 %v3268, %v4496
        %v4528 = vmul.f32 %v3269, %v4496
        %v4529 = vadd.f32 %v4464, %v4497
        %v4530 = vadd.f32 %v4465, %v4498
        %v4531 = vadd.f32 %v4466, %v4499
        %v4532 = vadd.f32 %v4467, %v4500
        %v4533 = vadd.f32 %v4468, %v4501
        %v4534 = vadd.f32 %v4469, %v4502
        %v4535 = vadd.f32 %v4470, %v4503
        %v4536 = vadd.f32 %v4471, %v4504
        %v4537 = vadd.f32 %v4472, %v4505
        %v4538 = vadd.f32 %v4473, %v4506
        %v4539 = vadd.f32 %v4474, %v4507
        %v4540 = vadd.f32 %v4475, %v4508
        %v4541 = vadd.f32 %v4476, %v4509
        %v4542 = vadd.f32 %v4477, %v4510
        %v4543 = vadd.f32 %v4478, %v4511
        %v4544 = vadd.f32 %v4479, %v4512
        %v4545 = vadd.f32 %v4480, %v4513
        %v4546 = vadd.f32 %v4481, %v4514
        %v4547 = vadd.f32 %v4482, %v4515
        %v4548 = vadd.f32 %v4483, %v4516
        %v4549 = vadd.f32 %v4484, %v4517
        %v4550 = vadd.f32 %v4485, %v4518
        %v4551 = vadd.f32 %v4486, %v4519
        %v4552 = vadd.f32 %v4487, %v4520
        %v4553 = vadd.f32 %v4488, %v4521
        %v4554 = vadd.f32 %v4489, %v4522
        %v4555 = vadd.f32 %v4490, %v4523
        %v4556 = vadd.f32 %v4491, %v4524
        %v4557 = vadd.f32 %v4492, %v4525
        %v4558 = vadd.f32 %v4493, %v4526
        %v4559 = vadd.f32 %v4494, %v4527
        %v4560 = vadd.f32 %v4495, %v4528
        %v4561 = vperm.slane %v3201, 4
        %v4562 = vmul.f32 %v3240, %v4561
        %v4563 = vmul.f32 %v3241, %v4561
        %v4564 = vmul.f32 %v3242, %v4561
        %v4565 = vmul.f32 %v3243, %v4561
        %v4566 = vmul.f32 %v3244, %v4561
        %v4567 = vmul.f32 %v3245, %v4561
        %v4568 = vmul.f32 %v3246, %v4561
        %v4569 = vmul.f32 %v3247, %v4561
        %v4570 = vmul.f32 %v3248, %v4561
        %v4571 = vmul.f32 %v3249, %v4561
        %v4572 = vmul.f32 %v3250, %v4561
        %v4573 = vmul.f32 %v3251, %v4561
        %v4574 = vmul.f32 %v3252, %v4561
        %v4575 = vmul.f32 %v3253, %v4561
        %v4576 = vmul.f32 %v3254, %v4561
        %v4577 = vmul.f32 %v3255, %v4561
        %v4578 = vmul.f32 %v3256, %v4561
        %v4579 = vmul.f32 %v3257, %v4561
        %v4580 = vmul.f32 %v3258, %v4561
        %v4581 = vmul.f32 %v3259, %v4561
        %v4582 = vmul.f32 %v3260, %v4561
        %v4583 = vmul.f32 %v3261, %v4561
        %v4584 = vmul.f32 %v3262, %v4561
        %v4585 = vmul.f32 %v3263, %v4561
        %v4586 = vmul.f32 %v3264, %v4561
        %v4587 = vmul.f32 %v3265, %v4561
        %v4588 = vmul.f32 %v3266, %v4561
        %v4589 = vmul.f32 %v3267, %v4561
        %v4590 = vmul.f32 %v3268, %v4561
        %v4591 = vmul.f32 %v3269, %v4561
        %v4592 = vmul.f32 %v3270, %v4561
        %v4593 = vmul.f32 %v3271, %v4561
        %v4594 = vadd.f32 %v4529, %v4562
        %v4595 = vadd.f32 %v4530, %v4563
        %v4596 = vadd.f32 %v4531, %v4564
        %v4597 = vadd.f32 %v4532, %v4565
        %v4598 = vadd.f32 %v4533, %v4566
        %v4599 = vadd.f32 %v4534, %v4567
        %v4600 = vadd.f32 %v4535, %v4568
        %v4601 = vadd.f32 %v4536, %v4569
        %v4602 = vadd.f32 %v4537, %v4570
        %v4603 = vadd.f32 %v4538, %v4571
        %v4604 = vadd.f32 %v4539, %v4572
        %v4605 = vadd.f32 %v4540, %v4573
        %v4606 = vadd.f32 %v4541, %v4574
        %v4607 = vadd.f32 %v4542, %v4575
        %v4608 = vadd.f32 %v4543, %v4576
        %v4609 = vadd.f32 %v4544, %v4577
        %v4610 = vadd.f32 %v4545, %v4578
        %v4611 = vadd.f32 %v4546, %v4579
        %v4612 = vadd.f32 %v4547, %v4580
        %v4613 = vadd.f32 %v4548, %v4581
        %v4614 = vadd.f32 %v4549, %v4582
        %v4615 = vadd.f32 %v4550, %v4583
        %v4616 = vadd.f32 %v4551, %v4584
        %v4617 = vadd.f32 %v4552, %v4585
        %v4618 = vadd.f32 %v4553, %v4586
        %v4619 = vadd.f32 %v4554, %v4587
        %v4620 = vadd.f32 %v4555, %v4588
        %v4621 = vadd.f32 %v4556, %v4589
        %v4622 = vadd.f32 %v4557, %v4590
        %v4623 = vadd.f32 %v4558, %v4591
        %v4624 = vadd.f32 %v4559, %v4592
        %v4625 = vadd.f32 %v4560, %v4593
        %v4626 = vperm.slane %v3202, 1
        %v4627 = vmul.f32 %v3242, %v4626
        %v4628 = vmul.f32 %v3243, %v4626
        %v4629 = vmul.f32 %v3244, %v4626
        %v4630 = vmul.f32 %v3245, %v4626
        %v4631 = vmul.f32 %v3246, %v4626
        %v4632 = vmul.f32 %v3247, %v4626
        %v4633 = vmul.f32 %v3248, %v4626
        %v4634 = vmul.f32 %v3249, %v4626
        %v4635 = vmul.f32 %v3250, %v4626
        %v4636 = vmul.f32 %v3251, %v4626
        %v4637 = vmul.f32 %v3252, %v4626
        %v4638 = vmul.f32 %v3253, %v4626
        %v4639 = vmul.f32 %v3254, %v4626
        %v4640 = vmul.f32 %v3255, %v4626
        %v4641 = vmul.f32 %v3256, %v4626
        %v4642 = vmul.f32 %v3257, %v4626
        %v4643 = vmul.f32 %v3258, %v4626
        %v4644 = vmul.f32 %v3259, %v4626
        %v4645 = vmul.f32 %v3260, %v4626
        %v4646 = vmul.f32 %v3261, %v4626
        %v4647 = vmul.f32 %v3262, %v4626
        %v4648 = vmul.f32 %v3263, %v4626
        %v4649 = vmul.f32 %v3264, %v4626
        %v4650 = vmul.f32 %v3265, %v4626
        %v4651 = vmul.f32 %v3266, %v4626
        %v4652 = vmul.f32 %v3267, %v4626
        %v4653 = vmul.f32 %v3268, %v4626
        %v4654 = vmul.f32 %v3269, %v4626
        %v4655 = vmul.f32 %v3270, %v4626
        %v4656 = vmul.f32 %v3271, %v4626
        %v4657 = vmul.f32 %v3272, %v4626
        %v4658 = vmul.f32 %v3273, %v4626
        %v4659 = vadd.f32 %v4594, %v4627
        %v4660 = vadd.f32 %v4595, %v4628
        %v4661 = vadd.f32 %v4596, %v4629
        %v4662 = vadd.f32 %v4597, %v4630
        %v4663 = vadd.f32 %v4598, %v4631
        %v4664 = vadd.f32 %v4599, %v4632
        %v4665 = vadd.f32 %v4600, %v4633
        %v4666 = vadd.f32 %v4601, %v4634
        %v4667 = vadd.f32 %v4602, %v4635
        %v4668 = vadd.f32 %v4603, %v4636
        %v4669 = vadd.f32 %v4604, %v4637
        %v4670 = vadd.f32 %v4605, %v4638
        %v4671 = vadd.f32 %v4606, %v4639
        %v4672 = vadd.f32 %v4607, %v4640
        %v4673 = vadd.f32 %v4608, %v4641
        %v4674 = vadd.f32 %v4609, %v4642
        %v4675 = vadd.f32 %v4610, %v4643
        %v4676 = vadd.f32 %v4611, %v4644
        %v4677 = vadd.f32 %v4612, %v4645
        %v4678 = vadd.f32 %v4613, %v4646
        %v4679 = vadd.f32 %v4614, %v4647
        %v4680 = vadd.f32 %v4615, %v4648
        %v4681 = vadd.f32 %v4616, %v4649
        %v4682 = vadd.f32 %v4617, %v4650
        %v4683 = vadd.f32 %v4618, %v4651
        %v4684 = vadd.f32 %v4619, %v4652
        %v4685 = vadd.f32 %v4620, %v4653
        %v4686 = vadd.f32 %v4621, %v4654
        %v4687 = vadd.f32 %v4622, %v4655
        %v4688 = vadd.f32 %v4623, %v4656
        %v4689 = vadd.f32 %v4624, %v4657
        %v4690 = vadd.f32 %v4625, %v4658
        %v4691 = vperm.slane %v3202, 6
        %v4692 = vmul.f32 %v3244, %v4691
        %v4693 = vmul.f32 %v3245, %v4691
        %v4694 = vmul.f32 %v3246, %v4691
        %v4695 = vmul.f32 %v3247, %v4691
        %v4696 = vmul.f32 %v3248, %v4691
        %v4697 = vmul.f32 %v3249, %v4691
        %v4698 = vmul.f32 %v3250, %v4691
        %v4699 = vmul.f32 %v3251, %v4691
        %v4700 = vmul.f32 %v3252, %v4691
        %v4701 = vmul.f32 %v3253, %v4691
        %v4702 = vmul.f32 %v3254, %v4691
        %v4703 = vmul.f32 %v3255, %v4691
        %v4704 = vmul.f32 %v3256, %v4691
        %v4705 = vmul.f32 %v3257, %v4691
        %v4706 = vmul.f32 %v3258, %v4691
        %v4707 = vmul.f32 %v3259, %v4691
        %v4708 = vmul.f32 %v3260, %v4691
        %v4709 = vmul.f32 %v3261, %v4691
        %v4710 = vmul.f32 %v3262, %v4691
        %v4711 = vmul.f32 %v3263, %v4691
        %v4712 = vmul.f32 %v3264, %v4691
        %v4713 = vmul.f32 %v3265, %v4691
        %v4714 = vmul.f32 %v3266, %v4691
        %v4715 = vmul.f32 %v3267, %v4691
        %v4716 = vmul.f32 %v3268, %v4691
        %v4717 = vmul.f32 %v3269, %v4691
        %v4718 = vmul.f32 %v3270, %v4691
        %v4719 = vmul.f32 %v3271, %v4691
        %v4720 = vmul.f32 %v3272, %v4691
        %v4721 = vmul.f32 %v3273, %v4691
        %v4722 = vmul.f32 %v3274, %v4691
        %v4723 = vmul.f32 %v3275, %v4691
        %v4724 = vadd.f32 %v4659, %v4692
        %v4725 = vadd.f32 %v4660, %v4693
        %v4726 = vadd.f32 %v4661, %v4694
        %v4727 = vadd.f32 %v4662, %v4695
        %v4728 = vadd.f32 %v4663, %v4696
        %v4729 = vadd.f32 %v4664, %v4697
        %v4730 = vadd.f32 %v4665, %v4698
        %v4731 = vadd.f32 %v4666, %v4699
        %v4732 = vadd.f32 %v4667, %v4700
        %v4733 = vadd.f32 %v4668, %v4701
        %v4734 = vadd.f32 %v4669, %v4702
        %v4735 = vadd.f32 %v4670, %v4703
        %v4736 = vadd.f32 %v4671, %v4704
        %v4737 = vadd.f32 %v4672, %v4705
        %v4738 = vadd.f32 %v4673, %v4706
        %v4739 = vadd.f32 %v4674, %v4707
        %v4740 = vadd.f32 %v4675, %v4708
        %v4741 = vadd.f32 %v4676, %v4709
        %v4742 = vadd.f32 %v4677, %v4710
        %v4743 = vadd.f32 %v4678, %v4711
        %v4744 = vadd.f32 %v4679, %v4712
        %v4745 = vadd.f32 %v4680, %v4713
        %v4746 = vadd.f32 %v4681, %v4714
        %v4747 = vadd.f32 %v4682, %v4715
        %v4748 = vadd.f32 %v4683, %v4716
        %v4749 = vadd.f32 %v4684, %v4717
        %v4750 = vadd.f32 %v4685, %v4718
        %v4751 = vadd.f32 %v4686, %v4719
        %v4752 = vadd.f32 %v4687, %v4720
        %v4753 = vadd.f32 %v4688, %v4721
        %v4754 = vadd.f32 %v4689, %v4722
        %v4755 = vadd.f32 %v4690, %v4723
        %v4756 = vadd.f32 %v4399, %v4724
        %v4757 = vadd.f32 %v4400, %v4725
        %v4758 = vadd.f32 %v4401, %v4726
        %v4759 = vadd.f32 %v4402, %v4727
        %v4760 = vadd.f32 %v4403, %v4728
        %v4761 = vadd.f32 %v4404, %v4729
        %v4762 = vadd.f32 %v4405, %v4730
        %v4763 = vadd.f32 %v4406, %v4731
        %v4764 = vadd.f32 %v4407, %v4732
        %v4765 = vadd.f32 %v4408, %v4733
        %v4766 = vadd.f32 %v4409, %v4734
        %v4767 = vadd.f32 %v4410, %v4735
        %v4768 = vadd.f32 %v4411, %v4736
        %v4769 = vadd.f32 %v4412, %v4737
        %v4770 = vadd.f32 %v4413, %v4738
        %v4771 = vadd.f32 %v4414, %v4739
        %v4772 = vadd.f32 %v4415, %v4740
        %v4773 = vadd.f32 %v4416, %v4741
        %v4774 = vadd.f32 %v4417, %v4742
        %v4775 = vadd.f32 %v4418, %v4743
        %v4776 = vadd.f32 %v4419, %v4744
        %v4777 = vadd.f32 %v4420, %v4745
        %v4778 = vadd.f32 %v4421, %v4746
        %v4779 = vadd.f32 %v4422, %v4747
        %v4780 = vadd.f32 %v4423, %v4748
        %v4781 = vadd.f32 %v4424, %v4749
        %v4782 = vadd.f32 %v4425, %v4750
        %v4783 = vadd.f32 %v4426, %v4751
        %v4784 = vadd.f32 %v4427, %v4752
        %v4785 = vadd.f32 %v4428, %v4753
        %v4786 = vadd.f32 %v4429, %v4754
        %v4787 = vadd.f32 %v4430, %v4755
        %v4788 = vrot.slane %v3236, 1
        %v4789 = vrot.slane %v3237, 1
        %v4790 = vsel %vm2235, %v4788, %v4789
        %v4791 = vrot.slane %v3238, 1
        %v4792 = vsel %vm2235, %v4789, %v4791
        %v4793 = vrot.slane %v3239, 1
        %v4794 = vsel %vm2235, %v4791, %v4793
        %v4795 = vrot.slane %v3240, 1
        %v4796 = vsel %vm2235, %v4793, %v4795
        %v4797 = vrot.slane %v3241, 1
        %v4798 = vsel %vm2235, %v4795, %v4797
        %v4799 = vrot.slane %v3242, 1
        %v4800 = vsel %vm2235, %v4797, %v4799
        %v4801 = vrot.slane %v3243, 1
        %v4802 = vsel %vm2235, %v4799, %v4801
        %v4803 = vrot.slane %v3244, 1
        %v4804 = vsel %vm2235, %v4801, %v4803
        %v4805 = vrot.slane %v3245, 1
        %v4806 = vsel %vm2235, %v4803, %v4805
        %v4807 = vrot.slane %v3246, 1
        %v4808 = vsel %vm2235, %v4805, %v4807
        %v4809 = vrot.slane %v3247, 1
        %v4810 = vsel %vm2235, %v4807, %v4809
        %v4811 = vrot.slane %v3248, 1
        %v4812 = vsel %vm2235, %v4809, %v4811
        %v4813 = vrot.slane %v3249, 1
        %v4814 = vsel %vm2235, %v4811, %v4813
        %v4815 = vrot.slane %v3250, 1
        %v4816 = vsel %vm2235, %v4813, %v4815
        %v4817 = vrot.slane %v3251, 1
        %v4818 = vsel %vm2235, %v4815, %v4817
        %v4819 = vrot.slane %v3252, 1
        %v4820 = vsel %vm2235, %v4817, %v4819
        %v4821 = vrot.slane %v3253, 1
        %v4822 = vsel %vm2235, %v4819, %v4821
        %v4823 = vrot.slane %v3254, 1
        %v4824 = vsel %vm2235, %v4821, %v4823
        %v4825 = vrot.slane %v3255, 1
        %v4826 = vsel %vm2235, %v4823, %v4825
        %v4827 = vrot.slane %v3256, 1
        %v4828 = vsel %vm2235, %v4825, %v4827
        %v4829 = vrot.slane %v3257, 1
        %v4830 = vsel %vm2235, %v4827, %v4829
        %v4831 = vrot.slane %v3258, 1
        %v4832 = vsel %vm2235, %v4829, %v4831
        %v4833 = vrot.slane %v3259, 1
        %v4834 = vsel %vm2235, %v4831, %v4833
        %v4835 = vrot.slane %v3260, 1
        %v4836 = vsel %vm2235, %v4833, %v4835
        %v4837 = vrot.slane %v3261, 1
        %v4838 = vsel %vm2235, %v4835, %v4837
        %v4839 = vrot.slane %v3262, 1
        %v4840 = vsel %vm2235, %v4837, %v4839
        %v4841 = vrot.slane %v3263, 1
        %v4842 = vsel %vm2235, %v4839, %v4841
        %v4843 = vrot.slane %v3264, 1
        %v4844 = vsel %vm2235, %v4841, %v4843
        %v4845 = vrot.slane %v3265, 1
        %v4846 = vsel %vm2235, %v4843, %v4845
        %v4847 = vrot.slane %v3266, 1
        %v4848 = vsel %vm2235, %v4845, %v4847
        %v4849 = vrot.slane %v3267, 1
        %v4850 = vsel %vm2235, %v4847, %v4849
        %v4851 = vrot.slane %v3268, 1
        %v4852 = vsel %vm2235, %v4849, %v4851
        %v4853 = vrot.slane %v3269, 1
        %v4854 = vsel %vm2235, %v4851, %v4853
        %v4855 = vrot.slane %v3270, 1
        %v4856 = vsel %vm2235, %v4853, %v4855
        %v4857 = vrot.slane %v3271, 1
        %v4858 = vsel %vm2235, %v4855, %v4857
        %v4859 = vrot.slane %v3272, 1
        %v4860 = vsel %vm2235, %v4857, %v4859
        %v4861 = vrot.slane %v3273, 1
        %v4862 = vsel %vm2235, %v4859, %v4861
        %v4863 = vrot.slane %v3274, 1
        %v4864 = vsel %vm2235, %v4861, %v4863
        %v4865 = vrot.slane %v3275, 1
        %v4866 = vsel %vm2235, %v4863, %v4865
        %v4907 = vsel %vm2235, %v4865, 0.0
        %v4908 = vsel %vm2385, %v4790, 0.0
        %v4909 = vsel %vm2386, %v4792, 0.0
        %v4910 = vsel %vm2387, %v4794, 0.0
        %v4911 = vsel %vm2388, %v4796, 0.0
        %v4912 = vsel %vm2389, %v4798, 0.0
        %v4913 = vsel %vm2390, %v4800, 0.0
        %v4914 = vsel %vm2391, %v4802, 0.0
        %v4915 = vsel %vm2392, %v4804, 0.0
        %v4916 = vsel %vm2393, %v4806, 0.0
        %v4917 = vsel %vm2394, %v4808, 0.0
        %v4918 = vsel %vm2395, %v4810, 0.0
        %v4919 = vsel %vm2396, %v4812, 0.0
        %v4920 = vsel %vm2397, %v4814, 0.0
        %v4921 = vsel %vm2398, %v4816, 0.0
        %v4922 = vsel %vm2399, %v4818, 0.0
        %v4923 = vsel %vm2400, %v4820, 0.0
        %v4924 = vsel %vm2401, %v4822, 0.0
        %v4925 = vsel %vm2402, %v4824, 0.0
        %v4926 = vsel %vm2403, %v4826, 0.0
        %v4927 = vsel %vm2404, %v4828, 0.0
        %v4928 = vsel %vm2405, %v4830, 0.0
        %v4929 = vsel %vm2406, %v4832, 0.0
        %v4930 = vsel %vm2407, %v4834, 0.0
        %v4931 = vsel %vm2408, %v4836, 0.0
        %v4932 = vsel %vm2409, %v4838, 0.0
        %v4933 = vsel %vm2410, %v4840, 0.0
        %v4934 = vsel %vm2411, %v4842, 0.0
        %v4935 = vsel %vm2412, %v4844, 0.0
        %v4936 = vsel %vm2413, %v4846, 0.0
        %v4937 = vsel %vm2414, %v4848, 0.0
        %v4938 = vsel %vm2415, %v4850, 0.0
        %v4939 = vsel %vm2416, %v4852, 0.0
        %v4940 = vsel %vm2417, %v4854, 0.0
        %v4941 = vsel %vm2418, %v4856, 0.0
        %v4942 = vsel %vm2419, %v4858, 0.0
        %v4943 = vsel %vm2420, %v4860, 0.0
        %v4944 = vsel %vm2421, %v4862, 0.0
        %v4945 = vsel %vm2422, %v4864, 0.0
        %v4946 = vsel %vm2423, %v4866, 0.0
        %v4947 = vsel %vm2424, %v4907, 0.0
        %v4948 = vperm.slane %v3200, 3
        %v4949 = vmul.f32 %v4908, %v4948
        %v4950 = vmul.f32 %v4909, %v4948
        %v4951 = vmul.f32 %v4910, %v4948
        %v4952 = vmul.f32 %v4911, %v4948
        %v4953 = vmul.f32 %v4912, %v4948
        %v4954 = vmul.f32 %v4913, %v4948
        %v4955 = vmul.f32 %v4914, %v4948
        %v4956 = vmul.f32 %v4915, %v4948
        %v4957 = vmul.f32 %v4916, %v4948
        %v4958 = vmul.f32 %v4917, %v4948
        %v4959 = vmul.f32 %v4918, %v4948
        %v4960 = vmul.f32 %v4919, %v4948
        %v4961 = vmul.f32 %v4920, %v4948
        %v4962 = vmul.f32 %v4921, %v4948
        %v4963 = vmul.f32 %v4922, %v4948
        %v4964 = vmul.f32 %v4923, %v4948
        %v4965 = vmul.f32 %v4924, %v4948
        %v4966 = vmul.f32 %v4925, %v4948
        %v4967 = vmul.f32 %v4926, %v4948
        %v4968 = vmul.f32 %v4927, %v4948
        %v4969 = vmul.f32 %v4928, %v4948
        %v4970 = vmul.f32 %v4929, %v4948
        %v4971 = vmul.f32 %v4930, %v4948
        %v4972 = vmul.f32 %v4931, %v4948
        %v4973 = vmul.f32 %v4932, %v4948
        %v4974 = vmul.f32 %v4933, %v4948
        %v4975 = vmul.f32 %v4934, %v4948
        %v4976 = vmul.f32 %v4935, %v4948
        %v4977 = vmul.f32 %v4936, %v4948
        %v4978 = vmul.f32 %v4937, %v4948
        %v4979 = vmul.f32 %v4938, %v4948
        %v4980 = vmul.f32 %v4939, %v4948
        %v4981 = vadd.f32 %v4949, 0.0
        %v4982 = vadd.f32 %v4950, 0.0
        %v4983 = vadd.f32 %v4951, 0.0
        %v4984 = vadd.f32 %v4952, 0.0
        %v4985 = vadd.f32 %v4953, 0.0
        %v4986 = vadd.f32 %v4954, 0.0
        %v4987 = vadd.f32 %v4955, 0.0
        %v4988 = vadd.f32 %v4956, 0.0
        %v4989 = vadd.f32 %v4957, 0.0
        %v4990 = vadd.f32 %v4958, 0.0
        %v4991 = vadd.f32 %v4959, 0.0
        %v4992 = vadd.f32 %v4960, 0.0
        %v4993 = vadd.f32 %v4961, 0.0
        %v4994 = vadd.f32 %v4962, 0.0
        %v4995 = vadd.f32 %v4963, 0.0
        %v4996 = vadd.f32 %v4964, 0.0
        %v4997 = vadd.f32 %v4965, 0.0
        %v4998 = vadd.f32 %v4966, 0.0
        %v4999 = vadd.f32 %v4967, 0.0
        %v5000 = vadd.f32 %v4968, 0.0
        %v5001 = vadd.f32 %v4969, 0.0
        %v5002 = vadd.f32 %v4970, 0.0
        %v5003 = vadd.f32 %v4971, 0.0
        %v5004 = vadd.f32 %v4972, 0.0
        %v5005 = vadd.f32 %v4973, 0.0
        %v5006 = vadd.f32 %v4974, 0.0
        %v5007 = vadd.f32 %v4975, 0.0
        %v5008 = vadd.f32 %v4976, 0.0
        %v5009 = vadd.f32 %v4977, 0.0
        %v5010 = vadd.f32 %v4978, 0.0
        %v5011 = vadd.f32 %v4979, 0.0
        %v5012 = vadd.f32 %v4980, 0.0
        %v5013 = vperm.slane %v3201, 0
        %v5014 = vmul.f32 %v4910, %v5013
        %v5015 = vmul.f32 %v4911, %v5013
        %v5016 = vmul.f32 %v4912, %v5013
        %v5017 = vmul.f32 %v4913, %v5013
        %v5018 = vmul.f32 %v4914, %v5013
        %v5019 = vmul.f32 %v4915, %v5013
        %v5020 = vmul.f32 %v4916, %v5013
        %v5021 = vmul.f32 %v4917, %v5013
        %v5022 = vmul.f32 %v4918, %v5013
        %v5023 = vmul.f32 %v4919, %v5013
        %v5024 = vmul.f32 %v4920, %v5013
        %v5025 = vmul.f32 %v4921, %v5013
        %v5026 = vmul.f32 %v4922, %v5013
        %v5027 = vmul.f32 %v4923, %v5013
        %v5028 = vmul.f32 %v4924, %v5013
        %v5029 = vmul.f32 %v4925, %v5013
        %v5030 = vmul.f32 %v4926, %v5013
        %v5031 = vmul.f32 %v4927, %v5013
        %v5032 = vmul.f32 %v4928, %v5013
        %v5033 = vmul.f32 %v4929, %v5013
        %v5034 = vmul.f32 %v4930, %v5013
        %v5035 = vmul.f32 %v4931, %v5013
        %v5036 = vmul.f32 %v4932, %v5013
        %v5037 = vmul.f32 %v4933, %v5013
        %v5038 = vmul.f32 %v4934, %v5013
        %v5039 = vmul.f32 %v4935, %v5013
        %v5040 = vmul.f32 %v4936, %v5013
        %v5041 = vmul.f32 %v4937, %v5013
        %v5042 = vmul.f32 %v4938, %v5013
        %v5043 = vmul.f32 %v4939, %v5013
        %v5044 = vmul.f32 %v4940, %v5013
        %v5045 = vmul.f32 %v4941, %v5013
        %v5046 = vadd.f32 %v4981, %v5014
        %v5047 = vadd.f32 %v4982, %v5015
        %v5048 = vadd.f32 %v4983, %v5016
        %v5049 = vadd.f32 %v4984, %v5017
        %v5050 = vadd.f32 %v4985, %v5018
        %v5051 = vadd.f32 %v4986, %v5019
        %v5052 = vadd.f32 %v4987, %v5020
        %v5053 = vadd.f32 %v4988, %v5021
        %v5054 = vadd.f32 %v4989, %v5022
        %v5055 = vadd.f32 %v4990, %v5023
        %v5056 = vadd.f32 %v4991, %v5024
        %v5057 = vadd.f32 %v4992, %v5025
        %v5058 = vadd.f32 %v4993, %v5026
        %v5059 = vadd.f32 %v4994, %v5027
        %v5060 = vadd.f32 %v4995, %v5028
        %v5061 = vadd.f32 %v4996, %v5029
        %v5062 = vadd.f32 %v4997, %v5030
        %v5063 = vadd.f32 %v4998, %v5031
        %v5064 = vadd.f32 %v4999, %v5032
        %v5065 = vadd.f32 %v5000, %v5033
        %v5066 = vadd.f32 %v5001, %v5034
        %v5067 = vadd.f32 %v5002, %v5035
        %v5068 = vadd.f32 %v5003, %v5036
        %v5069 = vadd.f32 %v5004, %v5037
        %v5070 = vadd.f32 %v5005, %v5038
        %v5071 = vadd.f32 %v5006, %v5039
        %v5072 = vadd.f32 %v5007, %v5040
        %v5073 = vadd.f32 %v5008, %v5041
        %v5074 = vadd.f32 %v5009, %v5042
        %v5075 = vadd.f32 %v5010, %v5043
        %v5076 = vadd.f32 %v5011, %v5044
        %v5077 = vadd.f32 %v5012, %v5045
        %v5078 = vperm.slane %v3201, 5
        %v5079 = vmul.f32 %v4912, %v5078
        %v5080 = vmul.f32 %v4913, %v5078
        %v5081 = vmul.f32 %v4914, %v5078
        %v5082 = vmul.f32 %v4915, %v5078
        %v5083 = vmul.f32 %v4916, %v5078
        %v5084 = vmul.f32 %v4917, %v5078
        %v5085 = vmul.f32 %v4918, %v5078
        %v5086 = vmul.f32 %v4919, %v5078
        %v5087 = vmul.f32 %v4920, %v5078
        %v5088 = vmul.f32 %v4921, %v5078
        %v5089 = vmul.f32 %v4922, %v5078
        %v5090 = vmul.f32 %v4923, %v5078
        %v5091 = vmul.f32 %v4924, %v5078
        %v5092 = vmul.f32 %v4925, %v5078
        %v5093 = vmul.f32 %v4926, %v5078
        %v5094 = vmul.f32 %v4927, %v5078
        %v5095 = vmul.f32 %v4928, %v5078
        %v5096 = vmul.f32 %v4929, %v5078
        %v5097 = vmul.f32 %v4930, %v5078
        %v5098 = vmul.f32 %v4931, %v5078
        %v5099 = vmul.f32 %v4932, %v5078
        %v5100 = vmul.f32 %v4933, %v5078
        %v5101 = vmul.f32 %v4934, %v5078
        %v5102 = vmul.f32 %v4935, %v5078
        %v5103 = vmul.f32 %v4936, %v5078
        %v5104 = vmul.f32 %v4937, %v5078
        %v5105 = vmul.f32 %v4938, %v5078
        %v5106 = vmul.f32 %v4939, %v5078
        %v5107 = vmul.f32 %v4940, %v5078
        %v5108 = vmul.f32 %v4941, %v5078
        %v5109 = vmul.f32 %v4942, %v5078
        %v5110 = vmul.f32 %v4943, %v5078
        %v5111 = vadd.f32 %v5046, %v5079
        %v5112 = vadd.f32 %v5047, %v5080
        %v5113 = vadd.f32 %v5048, %v5081
        %v5114 = vadd.f32 %v5049, %v5082
        %v5115 = vadd.f32 %v5050, %v5083
        %v5116 = vadd.f32 %v5051, %v5084
        %v5117 = vadd.f32 %v5052, %v5085
        %v5118 = vadd.f32 %v5053, %v5086
        %v5119 = vadd.f32 %v5054, %v5087
        %v5120 = vadd.f32 %v5055, %v5088
        %v5121 = vadd.f32 %v5056, %v5089
        %v5122 = vadd.f32 %v5057, %v5090
        %v5123 = vadd.f32 %v5058, %v5091
        %v5124 = vadd.f32 %v5059, %v5092
        %v5125 = vadd.f32 %v5060, %v5093
        %v5126 = vadd.f32 %v5061, %v5094
        %v5127 = vadd.f32 %v5062, %v5095
        %v5128 = vadd.f32 %v5063, %v5096
        %v5129 = vadd.f32 %v5064, %v5097
        %v5130 = vadd.f32 %v5065, %v5098
        %v5131 = vadd.f32 %v5066, %v5099
        %v5132 = vadd.f32 %v5067, %v5100
        %v5133 = vadd.f32 %v5068, %v5101
        %v5134 = vadd.f32 %v5069, %v5102
        %v5135 = vadd.f32 %v5070, %v5103
        %v5136 = vadd.f32 %v5071, %v5104
        %v5137 = vadd.f32 %v5072, %v5105
        %v5138 = vadd.f32 %v5073, %v5106
        %v5139 = vadd.f32 %v5074, %v5107
        %v5140 = vadd.f32 %v5075, %v5108
        %v5141 = vadd.f32 %v5076, %v5109
        %v5142 = vadd.f32 %v5077, %v5110
        %v5143 = vperm.slane %v3202, 2
        %v5144 = vmul.f32 %v4914, %v5143
        %v5145 = vmul.f32 %v4915, %v5143
        %v5146 = vmul.f32 %v4916, %v5143
        %v5147 = vmul.f32 %v4917, %v5143
        %v5148 = vmul.f32 %v4918, %v5143
        %v5149 = vmul.f32 %v4919, %v5143
        %v5150 = vmul.f32 %v4920, %v5143
        %v5151 = vmul.f32 %v4921, %v5143
        %v5152 = vmul.f32 %v4922, %v5143
        %v5153 = vmul.f32 %v4923, %v5143
        %v5154 = vmul.f32 %v4924, %v5143
        %v5155 = vmul.f32 %v4925, %v5143
        %v5156 = vmul.f32 %v4926, %v5143
        %v5157 = vmul.f32 %v4927, %v5143
        %v5158 = vmul.f32 %v4928, %v5143
        %v5159 = vmul.f32 %v4929, %v5143
        %v5160 = vmul.f32 %v4930, %v5143
        %v5161 = vmul.f32 %v4931, %v5143
        %v5162 = vmul.f32 %v4932, %v5143
        %v5163 = vmul.f32 %v4933, %v5143
        %v5164 = vmul.f32 %v4934, %v5143
        %v5165 = vmul.f32 %v4935, %v5143
        %v5166 = vmul.f32 %v4936, %v5143
        %v5167 = vmul.f32 %v4937, %v5143
        %v5168 = vmul.f32 %v4938, %v5143
        %v5169 = vmul.f32 %v4939, %v5143
        %v5170 = vmul.f32 %v4940, %v5143
        %v5171 = vmul.f32 %v4941, %v5143
        %v5172 = vmul.f32 %v4942, %v5143
        %v5173 = vmul.f32 %v4943, %v5143
        %v5174 = vmul.f32 %v4944, %v5143
        %v5175 = vmul.f32 %v4945, %v5143
        %v5176 = vadd.f32 %v5111, %v5144
        %v5177 = vadd.f32 %v5112, %v5145
        %v5178 = vadd.f32 %v5113, %v5146
        %v5179 = vadd.f32 %v5114, %v5147
        %v5180 = vadd.f32 %v5115, %v5148
        %v5181 = vadd.f32 %v5116, %v5149
        %v5182 = vadd.f32 %v5117, %v5150
        %v5183 = vadd.f32 %v5118, %v5151
        %v5184 = vadd.f32 %v5119, %v5152
        %v5185 = vadd.f32 %v5120, %v5153
        %v5186 = vadd.f32 %v5121, %v5154
        %v5187 = vadd.f32 %v5122, %v5155
        %v5188 = vadd.f32 %v5123, %v5156
        %v5189 = vadd.f32 %v5124, %v5157
        %v5190 = vadd.f32 %v5125, %v5158
        %v5191 = vadd.f32 %v5126, %v5159
        %v5192 = vadd.f32 %v5127, %v5160
        %v5193 = vadd.f32 %v5128, %v5161
        %v5194 = vadd.f32 %v5129, %v5162
        %v5195 = vadd.f32 %v5130, %v5163
        %v5196 = vadd.f32 %v5131, %v5164
        %v5197 = vadd.f32 %v5132, %v5165
        %v5198 = vadd.f32 %v5133, %v5166
        %v5199 = vadd.f32 %v5134, %v5167
        %v5200 = vadd.f32 %v5135, %v5168
        %v5201 = vadd.f32 %v5136, %v5169
        %v5202 = vadd.f32 %v5137, %v5170
        %v5203 = vadd.f32 %v5138, %v5171
        %v5204 = vadd.f32 %v5139, %v5172
        %v5205 = vadd.f32 %v5140, %v5173
        %v5206 = vadd.f32 %v5141, %v5174
        %v5207 = vadd.f32 %v5142, %v5175
        %v5208 = vperm.slane %v3202, 7
        %v5209 = vmul.f32 %v4916, %v5208
        %v5210 = vmul.f32 %v4917, %v5208
        %v5211 = vmul.f32 %v4918, %v5208
        %v5212 = vmul.f32 %v4919, %v5208
        %v5213 = vmul.f32 %v4920, %v5208
        %v5214 = vmul.f32 %v4921, %v5208
        %v5215 = vmul.f32 %v4922, %v5208
        %v5216 = vmul.f32 %v4923, %v5208
        %v5217 = vmul.f32 %v4924, %v5208
        %v5218 = vmul.f32 %v4925, %v5208
        %v5219 = vmul.f32 %v4926, %v5208
        %v5220 = vmul.f32 %v4927, %v5208
        %v5221 = vmul.f32 %v4928, %v5208
        %v5222 = vmul.f32 %v4929, %v5208
        %v5223 = vmul.f32 %v4930, %v5208
        %v5224 = vmul.f32 %v4931, %v5208
        %v5225 = vmul.f32 %v4932, %v5208
        %v5226 = vmul.f32 %v4933, %v5208
        %v5227 = vmul.f32 %v4934, %v5208
        %v5228 = vmul.f32 %v4935, %v5208
        %v5229 = vmul.f32 %v4936, %v5208
        %v5230 = vmul.f32 %v4937, %v5208
        %v5231 = vmul.f32 %v4938, %v5208
        %v5232 = vmul.f32 %v4939, %v5208
        %v5233 = vmul.f32 %v4940, %v5208
        %v5234 = vmul.f32 %v4941, %v5208
        %v5235 = vmul.f32 %v4942, %v5208
        %v5236 = vmul.f32 %v4943, %v5208
        %v5237 = vmul.f32 %v4944, %v5208
        %v5238 = vmul.f32 %v4945, %v5208
        %v5239 = vmul.f32 %v4946, %v5208
        %v5240 = vmul.f32 %v4947, %v5208
        %v5241 = vadd.f32 %v5176, %v5209
        %v5242 = vadd.f32 %v5177, %v5210
        %v5243 = vadd.f32 %v5178, %v5211
        %v5244 = vadd.f32 %v5179, %v5212
        %v5245 = vadd.f32 %v5180, %v5213
        %v5246 = vadd.f32 %v5181, %v5214
        %v5247 = vadd.f32 %v5182, %v5215
        %v5248 = vadd.f32 %v5183, %v5216
        %v5249 = vadd.f32 %v5184, %v5217
        %v5250 = vadd.f32 %v5185, %v5218
        %v5251 = vadd.f32 %v5186, %v5219
        %v5252 = vadd.f32 %v5187, %v5220
        %v5253 = vadd.f32 %v5188, %v5221
        %v5254 = vadd.f32 %v5189, %v5222
        %v5255 = vadd.f32 %v5190, %v5223
        %v5256 = vadd.f32 %v5191, %v5224
        %v5257 = vadd.f32 %v5192, %v5225
        %v5258 = vadd.f32 %v5193, %v5226
        %v5259 = vadd.f32 %v5194, %v5227
        %v5260 = vadd.f32 %v5195, %v5228
        %v5261 = vadd.f32 %v5196, %v5229
        %v5262 = vadd.f32 %v5197, %v5230
        %v5263 = vadd.f32 %v5198, %v5231
        %v5264 = vadd.f32 %v5199, %v5232
        %v5265 = vadd.f32 %v5200, %v5233
        %v5266 = vadd.f32 %v5201, %v5234
        %v5267 = vadd.f32 %v5202, %v5235
        %v5268 = vadd.f32 %v5203, %v5236
        %v5269 = vadd.f32 %v5204, %v5237
        %v5270 = vadd.f32 %v5205, %v5238
        %v5271 = vadd.f32 %v5206, %v5239
        %v5272 = vadd.f32 %v5207, %v5240
        %v5273 = vadd.f32 %v4756, %v5241
        %v5274 = vadd.f32 %v4757, %v5242
        %v5275 = vadd.f32 %v4758, %v5243
        %v5276 = vadd.f32 %v4759, %v5244
        %v5277 = vadd.f32 %v4760, %v5245
        %v5278 = vadd.f32 %v4761, %v5246
        %v5279 = vadd.f32 %v4762, %v5247
        %v5280 = vadd.f32 %v4763, %v5248
        %v5281 = vadd.f32 %v4764, %v5249
        %v5282 = vadd.f32 %v4765, %v5250
        %v5283 = vadd.f32 %v4766, %v5251
        %v5284 = vadd.f32 %v4767, %v5252
        %v5285 = vadd.f32 %v4768, %v5253
        %v5286 = vadd.f32 %v4769, %v5254
        %v5287 = vadd.f32 %v4770, %v5255
        %v5288 = vadd.f32 %v4771, %v5256
        %v5289 = vadd.f32 %v4772, %v5257
        %v5290 = vadd.f32 %v4773, %v5258
        %v5291 = vadd.f32 %v4774, %v5259
        %v5292 = vadd.f32 %v4775, %v5260
        %v5293 = vadd.f32 %v4776, %v5261
        %v5294 = vadd.f32 %v4777, %v5262
        %v5295 = vadd.f32 %v4778, %v5263
        %v5296 = vadd.f32 %v4779, %v5264
        %v5297 = vadd.f32 %v4780, %v5265
        %v5298 = vadd.f32 %v4781, %v5266
        %v5299 = vadd.f32 %v4782, %v5267
        %v5300 = vadd.f32 %v4783, %v5268
        %v5301 = vadd.f32 %v4784, %v5269
        %v5302 = vadd.f32 %v4785, %v5270
        %v5303 = vadd.f32 %v4786, %v5271
        %v5304 = vadd.f32 %v4787, %v5272
        %vm5305 = vcmask 1045504
        %v5306 = vrot.slane %v3236, 2
        %v5307 = vrot.slane %v3237, 2
        %v5308 = vsel %vm5305, %v5306, %v5307
        %v5309 = vrot.slane %v3238, 2
        %v5310 = vsel %vm5305, %v5307, %v5309
        %v5311 = vrot.slane %v3239, 2
        %v5312 = vsel %vm5305, %v5309, %v5311
        %v5313 = vrot.slane %v3240, 2
        %v5314 = vsel %vm5305, %v5311, %v5313
        %v5315 = vrot.slane %v3241, 2
        %v5316 = vsel %vm5305, %v5313, %v5315
        %v5317 = vrot.slane %v3242, 2
        %v5318 = vsel %vm5305, %v5315, %v5317
        %v5319 = vrot.slane %v3243, 2
        %v5320 = vsel %vm5305, %v5317, %v5319
        %v5321 = vrot.slane %v3244, 2
        %v5322 = vsel %vm5305, %v5319, %v5321
        %v5323 = vrot.slane %v3245, 2
        %v5324 = vsel %vm5305, %v5321, %v5323
        %v5325 = vrot.slane %v3246, 2
        %v5326 = vsel %vm5305, %v5323, %v5325
        %v5327 = vrot.slane %v3247, 2
        %v5328 = vsel %vm5305, %v5325, %v5327
        %v5329 = vrot.slane %v3248, 2
        %v5330 = vsel %vm5305, %v5327, %v5329
        %v5331 = vrot.slane %v3249, 2
        %v5332 = vsel %vm5305, %v5329, %v5331
        %v5333 = vrot.slane %v3250, 2
        %v5334 = vsel %vm5305, %v5331, %v5333
        %v5335 = vrot.slane %v3251, 2
        %v5336 = vsel %vm5305, %v5333, %v5335
        %v5337 = vrot.slane %v3252, 2
        %v5338 = vsel %vm5305, %v5335, %v5337
        %v5339 = vrot.slane %v3253, 2
        %v5340 = vsel %vm5305, %v5337, %v5339
        %v5341 = vrot.slane %v3254, 2
        %v5342 = vsel %vm5305, %v5339, %v5341
        %v5343 = vrot.slane %v3255, 2
        %v5344 = vsel %vm5305, %v5341, %v5343
        %v5345 = vrot.slane %v3256, 2
        %v5346 = vsel %vm5305, %v5343, %v5345
        %v5347 = vrot.slane %v3257, 2
        %v5348 = vsel %vm5305, %v5345, %v5347
        %v5349 = vrot.slane %v3258, 2
        %v5350 = vsel %vm5305, %v5347, %v5349
        %v5351 = vrot.slane %v3259, 2
        %v5352 = vsel %vm5305, %v5349, %v5351
        %v5353 = vrot.slane %v3260, 2
        %v5354 = vsel %vm5305, %v5351, %v5353
        %v5355 = vrot.slane %v3261, 2
        %v5356 = vsel %vm5305, %v5353, %v5355
        %v5357 = vrot.slane %v3262, 2
        %v5358 = vsel %vm5305, %v5355, %v5357
        %v5359 = vrot.slane %v3263, 2
        %v5360 = vsel %vm5305, %v5357, %v5359
        %v5361 = vrot.slane %v3264, 2
        %v5362 = vsel %vm5305, %v5359, %v5361
        %v5363 = vrot.slane %v3265, 2
        %v5364 = vsel %vm5305, %v5361, %v5363
        %v5365 = vrot.slane %v3266, 2
        %v5366 = vsel %vm5305, %v5363, %v5365
        %v5367 = vrot.slane %v3267, 2
        %v5368 = vsel %vm5305, %v5365, %v5367
        %v5369 = vrot.slane %v3268, 2
        %v5370 = vsel %vm5305, %v5367, %v5369
        %v5371 = vrot.slane %v3269, 2
        %v5372 = vsel %vm5305, %v5369, %v5371
        %v5373 = vrot.slane %v3270, 2
        %v5374 = vsel %vm5305, %v5371, %v5373
        %v5375 = vrot.slane %v3271, 2
        %v5376 = vsel %vm5305, %v5373, %v5375
        %v5377 = vrot.slane %v3272, 2
        %v5378 = vsel %vm5305, %v5375, %v5377
        %v5379 = vrot.slane %v3273, 2
        %v5380 = vsel %vm5305, %v5377, %v5379
        %v5381 = vrot.slane %v3274, 2
        %v5382 = vsel %vm5305, %v5379, %v5381
        %v5383 = vrot.slane %v3275, 2
        %v5384 = vsel %vm5305, %v5381, %v5383
        %v5425 = vsel %vm5305, %v5383, 0.0
        %v5426 = vsel %vm1405, 1, 0
        %v5427 = vsel %vm1406, 1, 0
        %v5428 = vsel %vm1407, 1, 0
        %v5429 = vsel %vm1408, 1, 0
        %v5430 = vsel %vm1409, 1, 0
        %v5431 = vsel %vm1410, 1, 0
        %v5432 = vsel %vm1411, 1, 0
        %v5433 = vsel %vm1412, 1, 0
        %v5434 = vsel %vm1413, 1, 0
        %v5435 = vsel %vm1414, 1, 0
        %v5436 = vsel %vm1415, 1, 0
        %v5437 = vsel %vm1416, 1, 0
        %v5438 = vsel %vm1417, 1, 0
        %v5439 = vsel %vm1418, 1, 0
        %v5440 = vsel %vm1419, 1, 0
        %v5441 = vsel %vm1420, 1, 0
        %v5442 = vsel %vm1421, 1, 0
        %v5443 = vsel %vm1422, 1, 0
        %v5444 = vsel %vm1423, 1, 0
        %v5445 = vsel %vm1424, 1, 0
        %v5446 = vsel %vm1425, 1, 0
        %v5447 = vsel %vm1426, 1, 0
        %v5448 = vsel %vm1427, 1, 0
        %v5449 = vsel %vm1428, 1, 0
        %v5450 = vsel %vm1429, 1, 0
        %v5451 = vsel %vm1430, 1, 0
        %v5452 = vsel %vm1431, 1, 0
        %v5453 = vsel %vm1432, 1, 0
        %v5454 = vsel %vm1433, 1, 0
        %v5455 = vsel %vm1434, 1, 0
        %v5456 = vsel %vm1435, 1, 0
        %v5457 = vsel %vm1436, 1, 0
        %v5458 = vsel %vm1437, 1, 0
        %v5459 = vsel %vm1438, 1, 0
        %v5460 = vsel %vm1439, 1, 0
        %v5461 = vsel %vm1440, 1, 0
        %v5462 = vsel %vm1441, 1, 0
        %v5463 = vsel %vm1442, 1, 0
        %v5464 = vsel %vm1443, 1, 0
        %v5465 = vsel %vm1444, 1, 0
        %vm5466 = vcmp.eq.s32.totalorder %v5426, 1
        %vm5467 = vcmp.eq.s32.totalorder %v5427, 1
        %vm5468 = vcmp.eq.s32.totalorder %v5428, 1
        %vm5469 = vcmp.eq.s32.totalorder %v5429, 1
        %vm5470 = vcmp.eq.s32.totalorder %v5430, 1
        %vm5471 = vcmp.eq.s32.totalorder %v5431, 1
        %vm5472 = vcmp.eq.s32.totalorder %v5432, 1
        %vm5473 = vcmp.eq.s32.totalorder %v5433, 1
        %vm5474 = vcmp.eq.s32.totalorder %v5434, 1
        %vm5475 = vcmp.eq.s32.totalorder %v5435, 1
        %vm5476 = vcmp.eq.s32.totalorder %v5436, 1
        %vm5477 = vcmp.eq.s32.totalorder %v5437, 1
        %vm5478 = vcmp.eq.s32.totalorder %v5438, 1
        %vm5479 = vcmp.eq.s32.totalorder %v5439, 1
        %vm5480 = vcmp.eq.s32.totalorder %v5440, 1
        %vm5481 = vcmp.eq.s32.totalorder %v5441, 1
        %vm5482 = vcmp.eq.s32.totalorder %v5442, 1
        %vm5483 = vcmp.eq.s32.totalorder %v5443, 1
        %vm5484 = vcmp.eq.s32.totalorder %v5444, 1
        %vm5485 = vcmp.eq.s32.totalorder %v5445, 1
        %vm5486 = vcmp.eq.s32.totalorder %v5446, 1
        %vm5487 = vcmp.eq.s32.totalorder %v5447, 1
        %vm5488 = vcmp.eq.s32.totalorder %v5448, 1
        %vm5489 = vcmp.eq.s32.totalorder %v5449, 1
        %vm5490 = vcmp.eq.s32.totalorder %v5450, 1
        %vm5491 = vcmp.eq.s32.totalorder %v5451, 1
        %vm5492 = vcmp.eq.s32.totalorder %v5452, 1
        %vm5493 = vcmp.eq.s32.totalorder %v5453, 1
        %vm5494 = vcmp.eq.s32.totalorder %v5454, 1
        %vm5495 = vcmp.eq.s32.totalorder %v5455, 1
        %vm5496 = vcmp.eq.s32.totalorder %v5456, 1
        %vm5497 = vcmp.eq.s32.totalorder %v5457, 1
        %vm5498 = vcmp.eq.s32.totalorder %v5458, 1
        %vm5499 = vcmp.eq.s32.totalorder %v5459, 1
        %vm5500 = vcmp.eq.s32.totalorder %v5460, 1
        %vm5501 = vcmp.eq.s32.totalorder %v5461, 1
        %vm5502 = vcmp.eq.s32.totalorder %v5462, 1
        %vm5503 = vcmp.eq.s32.totalorder %v5463, 1
        %vm5504 = vcmp.eq.s32.totalorder %v5464, 1
        %vm5505 = vcmp.eq.s32.totalorder %v5465, 1
        %v5506 = vsel %vm5466, %v5308, 0.0
        %v5507 = vsel %vm5467, %v5310, 0.0
        %v5508 = vsel %vm5468, %v5312, 0.0
        %v5509 = vsel %vm5469, %v5314, 0.0
        %v5510 = vsel %vm5470, %v5316, 0.0
        %v5511 = vsel %vm5471, %v5318, 0.0
        %v5512 = vsel %vm5472, %v5320, 0.0
        %v5513 = vsel %vm5473, %v5322, 0.0
        %v5514 = vsel %vm5474, %v5324, 0.0
        %v5515 = vsel %vm5475, %v5326, 0.0
        %v5516 = vsel %vm5476, %v5328, 0.0
        %v5517 = vsel %vm5477, %v5330, 0.0
        %v5518 = vsel %vm5478, %v5332, 0.0
        %v5519 = vsel %vm5479, %v5334, 0.0
        %v5520 = vsel %vm5480, %v5336, 0.0
        %v5521 = vsel %vm5481, %v5338, 0.0
        %v5522 = vsel %vm5482, %v5340, 0.0
        %v5523 = vsel %vm5483, %v5342, 0.0
        %v5524 = vsel %vm5484, %v5344, 0.0
        %v5525 = vsel %vm5485, %v5346, 0.0
        %v5526 = vsel %vm5486, %v5348, 0.0
        %v5527 = vsel %vm5487, %v5350, 0.0
        %v5528 = vsel %vm5488, %v5352, 0.0
        %v5529 = vsel %vm5489, %v5354, 0.0
        %v5530 = vsel %vm5490, %v5356, 0.0
        %v5531 = vsel %vm5491, %v5358, 0.0
        %v5532 = vsel %vm5492, %v5360, 0.0
        %v5533 = vsel %vm5493, %v5362, 0.0
        %v5534 = vsel %vm5494, %v5364, 0.0
        %v5535 = vsel %vm5495, %v5366, 0.0
        %v5536 = vsel %vm5496, %v5368, 0.0
        %v5537 = vsel %vm5497, %v5370, 0.0
        %v5538 = vsel %vm5498, %v5372, 0.0
        %v5539 = vsel %vm5499, %v5374, 0.0
        %v5540 = vsel %vm5500, %v5376, 0.0
        %v5541 = vsel %vm5501, %v5378, 0.0
        %v5542 = vsel %vm5502, %v5380, 0.0
        %v5543 = vsel %vm5503, %v5382, 0.0
        %v5544 = vsel %vm5504, %v5384, 0.0
        %v5545 = vsel %vm5505, %v5425, 0.0
        %v5546 = vperm.slane %v3200, 4
        %v5547 = vmul.f32 %v5506, %v5546
        %v5548 = vmul.f32 %v5507, %v5546
        %v5549 = vmul.f32 %v5508, %v5546
        %v5550 = vmul.f32 %v5509, %v5546
        %v5551 = vmul.f32 %v5510, %v5546
        %v5552 = vmul.f32 %v5511, %v5546
        %v5553 = vmul.f32 %v5512, %v5546
        %v5554 = vmul.f32 %v5513, %v5546
        %v5555 = vmul.f32 %v5514, %v5546
        %v5556 = vmul.f32 %v5515, %v5546
        %v5557 = vmul.f32 %v5516, %v5546
        %v5558 = vmul.f32 %v5517, %v5546
        %v5559 = vmul.f32 %v5518, %v5546
        %v5560 = vmul.f32 %v5519, %v5546
        %v5561 = vmul.f32 %v5520, %v5546
        %v5562 = vmul.f32 %v5521, %v5546
        %v5563 = vmul.f32 %v5522, %v5546
        %v5564 = vmul.f32 %v5523, %v5546
        %v5565 = vmul.f32 %v5524, %v5546
        %v5566 = vmul.f32 %v5525, %v5546
        %v5567 = vmul.f32 %v5526, %v5546
        %v5568 = vmul.f32 %v5527, %v5546
        %v5569 = vmul.f32 %v5528, %v5546
        %v5570 = vmul.f32 %v5529, %v5546
        %v5571 = vmul.f32 %v5530, %v5546
        %v5572 = vmul.f32 %v5531, %v5546
        %v5573 = vmul.f32 %v5532, %v5546
        %v5574 = vmul.f32 %v5533, %v5546
        %v5575 = vmul.f32 %v5534, %v5546
        %v5576 = vmul.f32 %v5535, %v5546
        %v5577 = vmul.f32 %v5536, %v5546
        %v5578 = vmul.f32 %v5537, %v5546
        %v5579 = vadd.f32 %v5547, 0.0
        %v5580 = vadd.f32 %v5548, 0.0
        %v5581 = vadd.f32 %v5549, 0.0
        %v5582 = vadd.f32 %v5550, 0.0
        %v5583 = vadd.f32 %v5551, 0.0
        %v5584 = vadd.f32 %v5552, 0.0
        %v5585 = vadd.f32 %v5553, 0.0
        %v5586 = vadd.f32 %v5554, 0.0
        %v5587 = vadd.f32 %v5555, 0.0
        %v5588 = vadd.f32 %v5556, 0.0
        %v5589 = vadd.f32 %v5557, 0.0
        %v5590 = vadd.f32 %v5558, 0.0
        %v5591 = vadd.f32 %v5559, 0.0
        %v5592 = vadd.f32 %v5560, 0.0
        %v5593 = vadd.f32 %v5561, 0.0
        %v5594 = vadd.f32 %v5562, 0.0
        %v5595 = vadd.f32 %v5563, 0.0
        %v5596 = vadd.f32 %v5564, 0.0
        %v5597 = vadd.f32 %v5565, 0.0
        %v5598 = vadd.f32 %v5566, 0.0
        %v5599 = vadd.f32 %v5567, 0.0
        %v5600 = vadd.f32 %v5568, 0.0
        %v5601 = vadd.f32 %v5569, 0.0
        %v5602 = vadd.f32 %v5570, 0.0
        %v5603 = vadd.f32 %v5571, 0.0
        %v5604 = vadd.f32 %v5572, 0.0
        %v5605 = vadd.f32 %v5573, 0.0
        %v5606 = vadd.f32 %v5574, 0.0
        %v5607 = vadd.f32 %v5575, 0.0
        %v5608 = vadd.f32 %v5576, 0.0
        %v5609 = vadd.f32 %v5577, 0.0
        %v5610 = vadd.f32 %v5578, 0.0
        %v5611 = vperm.slane %v3201, 1
        %v5612 = vmul.f32 %v5508, %v5611
        %v5613 = vmul.f32 %v5509, %v5611
        %v5614 = vmul.f32 %v5510, %v5611
        %v5615 = vmul.f32 %v5511, %v5611
        %v5616 = vmul.f32 %v5512, %v5611
        %v5617 = vmul.f32 %v5513, %v5611
        %v5618 = vmul.f32 %v5514, %v5611
        %v5619 = vmul.f32 %v5515, %v5611
        %v5620 = vmul.f32 %v5516, %v5611
        %v5621 = vmul.f32 %v5517, %v5611
        %v5622 = vmul.f32 %v5518, %v5611
        %v5623 = vmul.f32 %v5519, %v5611
        %v5624 = vmul.f32 %v5520, %v5611
        %v5625 = vmul.f32 %v5521, %v5611
        %v5626 = vmul.f32 %v5522, %v5611
        %v5627 = vmul.f32 %v5523, %v5611
        %v5628 = vmul.f32 %v5524, %v5611
        %v5629 = vmul.f32 %v5525, %v5611
        %v5630 = vmul.f32 %v5526, %v5611
        %v5631 = vmul.f32 %v5527, %v5611
        %v5632 = vmul.f32 %v5528, %v5611
        %v5633 = vmul.f32 %v5529, %v5611
        %v5634 = vmul.f32 %v5530, %v5611
        %v5635 = vmul.f32 %v5531, %v5611
        %v5636 = vmul.f32 %v5532, %v5611
        %v5637 = vmul.f32 %v5533, %v5611
        %v5638 = vmul.f32 %v5534, %v5611
        %v5639 = vmul.f32 %v5535, %v5611
        %v5640 = vmul.f32 %v5536, %v5611
        %v5641 = vmul.f32 %v5537, %v5611
        %v5642 = vmul.f32 %v5538, %v5611
        %v5643 = vmul.f32 %v5539, %v5611
        %v5644 = vadd.f32 %v5579, %v5612
        %v5645 = vadd.f32 %v5580, %v5613
        %v5646 = vadd.f32 %v5581, %v5614
        %v5647 = vadd.f32 %v5582, %v5615
        %v5648 = vadd.f32 %v5583, %v5616
        %v5649 = vadd.f32 %v5584, %v5617
        %v5650 = vadd.f32 %v5585, %v5618
        %v5651 = vadd.f32 %v5586, %v5619
        %v5652 = vadd.f32 %v5587, %v5620
        %v5653 = vadd.f32 %v5588, %v5621
        %v5654 = vadd.f32 %v5589, %v5622
        %v5655 = vadd.f32 %v5590, %v5623
        %v5656 = vadd.f32 %v5591, %v5624
        %v5657 = vadd.f32 %v5592, %v5625
        %v5658 = vadd.f32 %v5593, %v5626
        %v5659 = vadd.f32 %v5594, %v5627
        %v5660 = vadd.f32 %v5595, %v5628
        %v5661 = vadd.f32 %v5596, %v5629
        %v5662 = vadd.f32 %v5597, %v5630
        %v5663 = vadd.f32 %v5598, %v5631
        %v5664 = vadd.f32 %v5599, %v5632
        %v5665 = vadd.f32 %v5600, %v5633
        %v5666 = vadd.f32 %v5601, %v5634
        %v5667 = vadd.f32 %v5602, %v5635
        %v5668 = vadd.f32 %v5603, %v5636
        %v5669 = vadd.f32 %v5604, %v5637
        %v5670 = vadd.f32 %v5605, %v5638
        %v5671 = vadd.f32 %v5606, %v5639
        %v5672 = vadd.f32 %v5607, %v5640
        %v5673 = vadd.f32 %v5608, %v5641
        %v5674 = vadd.f32 %v5609, %v5642
        %v5675 = vadd.f32 %v5610, %v5643
        %v5676 = vperm.slane %v3201, 6
        %v5677 = vmul.f32 %v5510, %v5676
        %v5678 = vmul.f32 %v5511, %v5676
        %v5679 = vmul.f32 %v5512, %v5676
        %v5680 = vmul.f32 %v5513, %v5676
        %v5681 = vmul.f32 %v5514, %v5676
        %v5682 = vmul.f32 %v5515, %v5676
        %v5683 = vmul.f32 %v5516, %v5676
        %v5684 = vmul.f32 %v5517, %v5676
        %v5685 = vmul.f32 %v5518, %v5676
        %v5686 = vmul.f32 %v5519, %v5676
        %v5687 = vmul.f32 %v5520, %v5676
        %v5688 = vmul.f32 %v5521, %v5676
        %v5689 = vmul.f32 %v5522, %v5676
        %v5690 = vmul.f32 %v5523, %v5676
        %v5691 = vmul.f32 %v5524, %v5676
        %v5692 = vmul.f32 %v5525, %v5676
        %v5693 = vmul.f32 %v5526, %v5676
        %v5694 = vmul.f32 %v5527, %v5676
        %v5695 = vmul.f32 %v5528, %v5676
        %v5696 = vmul.f32 %v5529, %v5676
        %v5697 = vmul.f32 %v5530, %v5676
        %v5698 = vmul.f32 %v5531, %v5676
        %v5699 = vmul.f32 %v5532, %v5676
        %v5700 = vmul.f32 %v5533, %v5676
        %v5701 = vmul.f32 %v5534, %v5676
        %v5702 = vmul.f32 %v5535, %v5676
        %v5703 = vmul.f32 %v5536, %v5676
        %v5704 = vmul.f32 %v5537, %v5676
        %v5705 = vmul.f32 %v5538, %v5676
        %v5706 = vmul.f32 %v5539, %v5676
        %v5707 = vmul.f32 %v5540, %v5676
        %v5708 = vmul.f32 %v5541, %v5676
        %v5709 = vadd.f32 %v5644, %v5677
        %v5710 = vadd.f32 %v5645, %v5678
        %v5711 = vadd.f32 %v5646, %v5679
        %v5712 = vadd.f32 %v5647, %v5680
        %v5713 = vadd.f32 %v5648, %v5681
        %v5714 = vadd.f32 %v5649, %v5682
        %v5715 = vadd.f32 %v5650, %v5683
        %v5716 = vadd.f32 %v5651, %v5684
        %v5717 = vadd.f32 %v5652, %v5685
        %v5718 = vadd.f32 %v5653, %v5686
        %v5719 = vadd.f32 %v5654, %v5687
        %v5720 = vadd.f32 %v5655, %v5688
        %v5721 = vadd.f32 %v5656, %v5689
        %v5722 = vadd.f32 %v5657, %v5690
        %v5723 = vadd.f32 %v5658, %v5691
        %v5724 = vadd.f32 %v5659, %v5692
        %v5725 = vadd.f32 %v5660, %v5693
        %v5726 = vadd.f32 %v5661, %v5694
        %v5727 = vadd.f32 %v5662, %v5695
        %v5728 = vadd.f32 %v5663, %v5696
        %v5729 = vadd.f32 %v5664, %v5697
        %v5730 = vadd.f32 %v5665, %v5698
        %v5731 = vadd.f32 %v5666, %v5699
        %v5732 = vadd.f32 %v5667, %v5700
        %v5733 = vadd.f32 %v5668, %v5701
        %v5734 = vadd.f32 %v5669, %v5702
        %v5735 = vadd.f32 %v5670, %v5703
        %v5736 = vadd.f32 %v5671, %v5704
        %v5737 = vadd.f32 %v5672, %v5705
        %v5738 = vadd.f32 %v5673, %v5706
        %v5739 = vadd.f32 %v5674, %v5707
        %v5740 = vadd.f32 %v5675, %v5708
        %v5741 = vperm.slane %v3202, 3
        %v5742 = vmul.f32 %v5512, %v5741
        %v5743 = vmul.f32 %v5513, %v5741
        %v5744 = vmul.f32 %v5514, %v5741
        %v5745 = vmul.f32 %v5515, %v5741
        %v5746 = vmul.f32 %v5516, %v5741
        %v5747 = vmul.f32 %v5517, %v5741
        %v5748 = vmul.f32 %v5518, %v5741
        %v5749 = vmul.f32 %v5519, %v5741
        %v5750 = vmul.f32 %v5520, %v5741
        %v5751 = vmul.f32 %v5521, %v5741
        %v5752 = vmul.f32 %v5522, %v5741
        %v5753 = vmul.f32 %v5523, %v5741
        %v5754 = vmul.f32 %v5524, %v5741
        %v5755 = vmul.f32 %v5525, %v5741
        %v5756 = vmul.f32 %v5526, %v5741
        %v5757 = vmul.f32 %v5527, %v5741
        %v5758 = vmul.f32 %v5528, %v5741
        %v5759 = vmul.f32 %v5529, %v5741
        %v5760 = vmul.f32 %v5530, %v5741
        %v5761 = vmul.f32 %v5531, %v5741
        %v5762 = vmul.f32 %v5532, %v5741
        %v5763 = vmul.f32 %v5533, %v5741
        %v5764 = vmul.f32 %v5534, %v5741
        %v5765 = vmul.f32 %v5535, %v5741
        %v5766 = vmul.f32 %v5536, %v5741
        %v5767 = vmul.f32 %v5537, %v5741
        %v5768 = vmul.f32 %v5538, %v5741
        %v5769 = vmul.f32 %v5539, %v5741
        %v5770 = vmul.f32 %v5540, %v5741
        %v5771 = vmul.f32 %v5541, %v5741
        %v5772 = vmul.f32 %v5542, %v5741
        %v5773 = vmul.f32 %v5543, %v5741
        %v5774 = vadd.f32 %v5709, %v5742
        %v5775 = vadd.f32 %v5710, %v5743
        %v5776 = vadd.f32 %v5711, %v5744
        %v5777 = vadd.f32 %v5712, %v5745
        %v5778 = vadd.f32 %v5713, %v5746
        %v5779 = vadd.f32 %v5714, %v5747
        %v5780 = vadd.f32 %v5715, %v5748
        %v5781 = vadd.f32 %v5716, %v5749
        %v5782 = vadd.f32 %v5717, %v5750
        %v5783 = vadd.f32 %v5718, %v5751
        %v5784 = vadd.f32 %v5719, %v5752
        %v5785 = vadd.f32 %v5720, %v5753
        %v5786 = vadd.f32 %v5721, %v5754
        %v5787 = vadd.f32 %v5722, %v5755
        %v5788 = vadd.f32 %v5723, %v5756
        %v5789 = vadd.f32 %v5724, %v5757
        %v5790 = vadd.f32 %v5725, %v5758
        %v5791 = vadd.f32 %v5726, %v5759
        %v5792 = vadd.f32 %v5727, %v5760
        %v5793 = vadd.f32 %v5728, %v5761
        %v5794 = vadd.f32 %v5729, %v5762
        %v5795 = vadd.f32 %v5730, %v5763
        %v5796 = vadd.f32 %v5731, %v5764
        %v5797 = vadd.f32 %v5732, %v5765
        %v5798 = vadd.f32 %v5733, %v5766
        %v5799 = vadd.f32 %v5734, %v5767
        %v5800 = vadd.f32 %v5735, %v5768
        %v5801 = vadd.f32 %v5736, %v5769
        %v5802 = vadd.f32 %v5737, %v5770
        %v5803 = vadd.f32 %v5738, %v5771
        %v5804 = vadd.f32 %v5739, %v5772
        %v5805 = vadd.f32 %v5740, %v5773
        %v5806 = vperm.slane %v3203, 0
        %v5807 = vmul.f32 %v5514, %v5806
        %v5808 = vmul.f32 %v5515, %v5806
        %v5809 = vmul.f32 %v5516, %v5806
        %v5810 = vmul.f32 %v5517, %v5806
        %v5811 = vmul.f32 %v5518, %v5806
        %v5812 = vmul.f32 %v5519, %v5806
        %v5813 = vmul.f32 %v5520, %v5806
        %v5814 = vmul.f32 %v5521, %v5806
        %v5815 = vmul.f32 %v5522, %v5806
        %v5816 = vmul.f32 %v5523, %v5806
        %v5817 = vmul.f32 %v5524, %v5806
        %v5818 = vmul.f32 %v5525, %v5806
        %v5819 = vmul.f32 %v5526, %v5806
        %v5820 = vmul.f32 %v5527, %v5806
        %v5821 = vmul.f32 %v5528, %v5806
        %v5822 = vmul.f32 %v5529, %v5806
        %v5823 = vmul.f32 %v5530, %v5806
        %v5824 = vmul.f32 %v5531, %v5806
        %v5825 = vmul.f32 %v5532, %v5806
        %v5826 = vmul.f32 %v5533, %v5806
        %v5827 = vmul.f32 %v5534, %v5806
        %v5828 = vmul.f32 %v5535, %v5806
        %v5829 = vmul.f32 %v5536, %v5806
        %v5830 = vmul.f32 %v5537, %v5806
        %v5831 = vmul.f32 %v5538, %v5806
        %v5832 = vmul.f32 %v5539, %v5806
        %v5833 = vmul.f32 %v5540, %v5806
        %v5834 = vmul.f32 %v5541, %v5806
        %v5835 = vmul.f32 %v5542, %v5806
        %v5836 = vmul.f32 %v5543, %v5806
        %v5837 = vmul.f32 %v5544, %v5806
        %v5838 = vmul.f32 %v5545, %v5806
        %v5839 = vadd.f32 %v5774, %v5807
        %v5840 = vadd.f32 %v5775, %v5808
        %v5841 = vadd.f32 %v5776, %v5809
        %v5842 = vadd.f32 %v5777, %v5810
        %v5843 = vadd.f32 %v5778, %v5811
        %v5844 = vadd.f32 %v5779, %v5812
        %v5845 = vadd.f32 %v5780, %v5813
        %v5846 = vadd.f32 %v5781, %v5814
        %v5847 = vadd.f32 %v5782, %v5815
        %v5848 = vadd.f32 %v5783, %v5816
        %v5849 = vadd.f32 %v5784, %v5817
        %v5850 = vadd.f32 %v5785, %v5818
        %v5851 = vadd.f32 %v5786, %v5819
        %v5852 = vadd.f32 %v5787, %v5820
        %v5853 = vadd.f32 %v5788, %v5821
        %v5854 = vadd.f32 %v5789, %v5822
        %v5855 = vadd.f32 %v5790, %v5823
        %v5856 = vadd.f32 %v5791, %v5824
        %v5857 = vadd.f32 %v5792, %v5825
        %v5858 = vadd.f32 %v5793, %v5826
        %v5859 = vadd.f32 %v5794, %v5827
        %v5860 = vadd.f32 %v5795, %v5828
        %v5861 = vadd.f32 %v5796, %v5829
        %v5862 = vadd.f32 %v5797, %v5830
        %v5863 = vadd.f32 %v5798, %v5831
        %v5864 = vadd.f32 %v5799, %v5832
        %v5865 = vadd.f32 %v5800, %v5833
        %v5866 = vadd.f32 %v5801, %v5834
        %v5867 = vadd.f32 %v5802, %v5835
        %v5868 = vadd.f32 %v5803, %v5836
        %v5869 = vadd.f32 %v5804, %v5837
        %v5870 = vadd.f32 %v5805, %v5838
        %v5871 = vadd.f32 %v5273, %v5839
        %v5872 = vadd.f32 %v5274, %v5840
        %v5873 = vadd.f32 %v5275, %v5841
        %v5874 = vadd.f32 %v5276, %v5842
        %v5875 = vadd.f32 %v5277, %v5843
        %v5876 = vadd.f32 %v5278, %v5844
        %v5877 = vadd.f32 %v5279, %v5845
        %v5878 = vadd.f32 %v5280, %v5846
        %v5879 = vadd.f32 %v5281, %v5847
        %v5880 = vadd.f32 %v5282, %v5848
        %v5881 = vadd.f32 %v5283, %v5849
        %v5882 = vadd.f32 %v5284, %v5850
        %v5883 = vadd.f32 %v5285, %v5851
        %v5884 = vadd.f32 %v5286, %v5852
        %v5885 = vadd.f32 %v5287, %v5853
        %v5886 = vadd.f32 %v5288, %v5854
        %v5887 = vadd.f32 %v5289, %v5855
        %v5888 = vadd.f32 %v5290, %v5856
        %v5889 = vadd.f32 %v5291, %v5857
        %v5890 = vadd.f32 %v5292, %v5858
        %v5891 = vadd.f32 %v5293, %v5859
        %v5892 = vadd.f32 %v5294, %v5860
        %v5893 = vadd.f32 %v5295, %v5861
        %v5894 = vadd.f32 %v5296, %v5862
        %v5895 = vadd.f32 %v5297, %v5863
        %v5896 = vadd.f32 %v5298, %v5864
        %v5897 = vadd.f32 %v5299, %v5865
        %v5898 = vadd.f32 %v5300, %v5866
        %v5899 = vadd.f32 %v5301, %v5867
        %v5900 = vadd.f32 %v5302, %v5868
        %v5901 = vadd.f32 %v5303, %v5869
        %v5902 = vadd.f32 %v5304, %v5870
        %v5903 = vmul.f32 %v5871, 0.5
        %v5904 = vmul.f32 %v5872, 0.5
        %v5905 = vmul.f32 %v5873, 0.5
        %v5906 = vmul.f32 %v5874, 0.5
        %v5907 = vmul.f32 %v5875, 0.5
        %v5908 = vmul.f32 %v5876, 0.5
        %v5909 = vmul.f32 %v5877, 0.5
        %v5910 = vmul.f32 %v5878, 0.5
        %v5911 = vmul.f32 %v5879, 0.5
        %v5912 = vmul.f32 %v5880, 0.5
        %v5913 = vmul.f32 %v5881, 0.5
        %v5914 = vmul.f32 %v5882, 0.5
        %v5915 = vmul.f32 %v5883, 0.5
        %v5916 = vmul.f32 %v5884, 0.5
        %v5917 = vmul.f32 %v5885, 0.5
        %v5918 = vmul.f32 %v5886, 0.5
        %v5919 = vmul.f32 %v5887, 0.5
        %v5920 = vmul.f32 %v5888, 0.5
        %v5921 = vmul.f32 %v5889, 0.5
        %v5922 = vmul.f32 %v5890, 0.5
        %v5923 = vmul.f32 %v5891, 0.5
        %v5924 = vmul.f32 %v5892, 0.5
        %v5925 = vmul.f32 %v5893, 0.5
        %v5926 = vmul.f32 %v5894, 0.5
        %v5927 = vmul.f32 %v5895, 0.5
        %v5928 = vmul.f32 %v5896, 0.5
        %v5929 = vmul.f32 %v5897, 0.5
        %v5930 = vmul.f32 %v5898, 0.5
        %v5931 = vmul.f32 %v5899, 0.5
        %v5932 = vmul.f32 %v5900, 0.5
        %v5933 = vmul.f32 %v5901, 0.5
        %v5934 = vmul.f32 %v5902, 0.5
        %v5935 = vmul.f32 %v5871, 0.044715
        %v5936 = vmul.f32 %v5872, 0.044715
        %v5937 = vmul.f32 %v5873, 0.044715
        %v5938 = vmul.f32 %v5874, 0.044715
        %v5939 = vmul.f32 %v5875, 0.044715
        %v5940 = vmul.f32 %v5876, 0.044715
        %v5941 = vmul.f32 %v5877, 0.044715
        %v5942 = vmul.f32 %v5878, 0.044715
        %v5943 = vmul.f32 %v5879, 0.044715
        %v5944 = vmul.f32 %v5880, 0.044715
        %v5945 = vmul.f32 %v5881, 0.044715
        %v5946 = vmul.f32 %v5882, 0.044715
        %v5947 = vmul.f32 %v5883, 0.044715
        %v5948 = vmul.f32 %v5884, 0.044715
        %v5949 = vmul.f32 %v5885, 0.044715
        %v5950 = vmul.f32 %v5886, 0.044715
        %v5951 = vmul.f32 %v5887, 0.044715
        %v5952 = vmul.f32 %v5888, 0.044715
        %v5953 = vmul.f32 %v5889, 0.044715
        %v5954 = vmul.f32 %v5890, 0.044715
        %v5955 = vmul.f32 %v5891, 0.044715
        %v5956 = vmul.f32 %v5892, 0.044715
        %v5957 = vmul.f32 %v5893, 0.044715
        %v5958 = vmul.f32 %v5894, 0.044715
        %v5959 = vmul.f32 %v5895, 0.044715
        %v5960 = vmul.f32 %v5896, 0.044715
        %v5961 = vmul.f32 %v5897, 0.044715
        %v5962 = vmul.f32 %v5898, 0.044715
        %v5963 = vmul.f32 %v5899, 0.044715
        %v5964 = vmul.f32 %v5900, 0.044715
        %v5965 = vmul.f32 %v5901, 0.044715
        %v5966 = vmul.f32 %v5902, 0.044715
        %v5967 = vmul.f32 %v5935, %v5871
        %v5968 = vmul.f32 %v5936, %v5872
        %v5969 = vmul.f32 %v5937, %v5873
        %v5970 = vmul.f32 %v5938, %v5874
        %v5971 = vmul.f32 %v5939, %v5875
        %v5972 = vmul.f32 %v5940, %v5876
        %v5973 = vmul.f32 %v5941, %v5877
        %v5974 = vmul.f32 %v5942, %v5878
        %v5975 = vmul.f32 %v5943, %v5879
        %v5976 = vmul.f32 %v5944, %v5880
        %v5977 = vmul.f32 %v5945, %v5881
        %v5978 = vmul.f32 %v5946, %v5882
        %v5979 = vmul.f32 %v5947, %v5883
        %v5980 = vmul.f32 %v5948, %v5884
        %v5981 = vmul.f32 %v5949, %v5885
        %v5982 = vmul.f32 %v5950, %v5886
        %v5983 = vmul.f32 %v5951, %v5887
        %v5984 = vmul.f32 %v5952, %v5888
        %v5985 = vmul.f32 %v5953, %v5889
        %v5986 = vmul.f32 %v5954, %v5890
        %v5987 = vmul.f32 %v5955, %v5891
        %v5988 = vmul.f32 %v5956, %v5892
        %v5989 = vmul.f32 %v5957, %v5893
        %v5990 = vmul.f32 %v5958, %v5894
        %v5991 = vmul.f32 %v5959, %v5895
        %v5992 = vmul.f32 %v5960, %v5896
        %v5993 = vmul.f32 %v5961, %v5897
        %v5994 = vmul.f32 %v5962, %v5898
        %v5995 = vmul.f32 %v5963, %v5899
        %v5996 = vmul.f32 %v5964, %v5900
        %v5997 = vmul.f32 %v5965, %v5901
        %v5998 = vmul.f32 %v5966, %v5902
        %v5999 = vmul.f32 %v5967, %v5871
        %v6000 = vmul.f32 %v5968, %v5872
        %v6001 = vmul.f32 %v5969, %v5873
        %v6002 = vmul.f32 %v5970, %v5874
        %v6003 = vmul.f32 %v5971, %v5875
        %v6004 = vmul.f32 %v5972, %v5876
        %v6005 = vmul.f32 %v5973, %v5877
        %v6006 = vmul.f32 %v5974, %v5878
        %v6007 = vmul.f32 %v5975, %v5879
        %v6008 = vmul.f32 %v5976, %v5880
        %v6009 = vmul.f32 %v5977, %v5881
        %v6010 = vmul.f32 %v5978, %v5882
        %v6011 = vmul.f32 %v5979, %v5883
        %v6012 = vmul.f32 %v5980, %v5884
        %v6013 = vmul.f32 %v5981, %v5885
        %v6014 = vmul.f32 %v5982, %v5886
        %v6015 = vmul.f32 %v5983, %v5887
        %v6016 = vmul.f32 %v5984, %v5888
        %v6017 = vmul.f32 %v5985, %v5889
        %v6018 = vmul.f32 %v5986, %v5890
        %v6019 = vmul.f32 %v5987, %v5891
        %v6020 = vmul.f32 %v5988, %v5892
        %v6021 = vmul.f32 %v5989, %v5893
        %v6022 = vmul.f32 %v5990, %v5894
        %v6023 = vmul.f32 %v5991, %v5895
        %v6024 = vmul.f32 %v5992, %v5896
        %v6025 = vmul.f32 %v5993, %v5897
        %v6026 = vmul.f32 %v5994, %v5898
        %v6027 = vmul.f32 %v5995, %v5899
        %v6028 = vmul.f32 %v5996, %v5900
        %v6029 = vmul.f32 %v5997, %v5901
        %v6030 = vmul.f32 %v5998, %v5902
        %v6031 = vadd.f32 %v5871, %v5999
        %v6032 = vadd.f32 %v5872, %v6000
        %v6033 = vadd.f32 %v5873, %v6001
        %v6034 = vadd.f32 %v5874, %v6002
        %v6035 = vadd.f32 %v5875, %v6003
        %v6036 = vadd.f32 %v5876, %v6004
        %v6037 = vadd.f32 %v5877, %v6005
        %v6038 = vadd.f32 %v5878, %v6006
        %v6039 = vadd.f32 %v5879, %v6007
        %v6040 = vadd.f32 %v5880, %v6008
        %v6041 = vadd.f32 %v5881, %v6009
        %v6042 = vadd.f32 %v5882, %v6010
        %v6043 = vadd.f32 %v5883, %v6011
        %v6044 = vadd.f32 %v5884, %v6012
        %v6045 = vadd.f32 %v5885, %v6013
        %v6046 = vadd.f32 %v5886, %v6014
        %v6047 = vadd.f32 %v5887, %v6015
        %v6048 = vadd.f32 %v5888, %v6016
        %v6049 = vadd.f32 %v5889, %v6017
        %v6050 = vadd.f32 %v5890, %v6018
        %v6051 = vadd.f32 %v5891, %v6019
        %v6052 = vadd.f32 %v5892, %v6020
        %v6053 = vadd.f32 %v5893, %v6021
        %v6054 = vadd.f32 %v5894, %v6022
        %v6055 = vadd.f32 %v5895, %v6023
        %v6056 = vadd.f32 %v5896, %v6024
        %v6057 = vadd.f32 %v5897, %v6025
        %v6058 = vadd.f32 %v5898, %v6026
        %v6059 = vadd.f32 %v5899, %v6027
        %v6060 = vadd.f32 %v5900, %v6028
        %v6061 = vadd.f32 %v5901, %v6029
        %v6062 = vadd.f32 %v5902, %v6030
        %v6063 = vmul.f32 %v6031, 0.7978846
        %v6064 = vmul.f32 %v6032, 0.7978846
        %v6065 = vmul.f32 %v6033, 0.7978846
        %v6066 = vmul.f32 %v6034, 0.7978846
        %v6067 = vmul.f32 %v6035, 0.7978846
        %v6068 = vmul.f32 %v6036, 0.7978846
        %v6069 = vmul.f32 %v6037, 0.7978846
        %v6070 = vmul.f32 %v6038, 0.7978846
        %v6071 = vmul.f32 %v6039, 0.7978846
        %v6072 = vmul.f32 %v6040, 0.7978846
        %v6073 = vmul.f32 %v6041, 0.7978846
        %v6074 = vmul.f32 %v6042, 0.7978846
        %v6075 = vmul.f32 %v6043, 0.7978846
        %v6076 = vmul.f32 %v6044, 0.7978846
        %v6077 = vmul.f32 %v6045, 0.7978846
        %v6078 = vmul.f32 %v6046, 0.7978846
        %v6079 = vmul.f32 %v6047, 0.7978846
        %v6080 = vmul.f32 %v6048, 0.7978846
        %v6081 = vmul.f32 %v6049, 0.7978846
        %v6082 = vmul.f32 %v6050, 0.7978846
        %v6083 = vmul.f32 %v6051, 0.7978846
        %v6084 = vmul.f32 %v6052, 0.7978846
        %v6085 = vmul.f32 %v6053, 0.7978846
        %v6086 = vmul.f32 %v6054, 0.7978846
        %v6087 = vmul.f32 %v6055, 0.7978846
        %v6088 = vmul.f32 %v6056, 0.7978846
        %v6089 = vmul.f32 %v6057, 0.7978846
        %v6090 = vmul.f32 %v6058, 0.7978846
        %v6091 = vmul.f32 %v6059, 0.7978846
        %v6092 = vmul.f32 %v6060, 0.7978846
        %v6093 = vmul.f32 %v6061, 0.7978846
        %v6094 = vmul.f32 %v6062, 0.7978846
        %v6095 = vtanh.pop %v6063
        %v6096 = vtanh.pop %v6064
        %v6097 = vtanh.pop %v6065
        %v6098 = vtanh.pop %v6066
        %v6099 = vtanh.pop %v6067
        %v6100 = vtanh.pop %v6068
        %v6101 = vtanh.pop %v6069
        %v6102 = vtanh.pop %v6070
        %v6103 = vtanh.pop %v6071
        %v6104 = vtanh.pop %v6072
        %v6105 = vtanh.pop %v6073
        %v6106 = vtanh.pop %v6074
        %v6107 = vtanh.pop %v6075
        %v6108 = vtanh.pop %v6076
        %v6109 = vtanh.pop %v6077
        %v6110 = vtanh.pop %v6078
        %v6111 = vtanh.pop %v6079
        %v6112 = vtanh.pop %v6080
        %v6113 = vtanh.pop %v6081
        %v6114 = vtanh.pop %v6082
        %v6115 = vtanh.pop %v6083
        %v6116 = vtanh.pop %v6084
        %v6117 = vtanh.pop %v6085
        %v6118 = vtanh.pop %v6086
        %v6119 = vtanh.pop %v6087
        %v6120 = vtanh.pop %v6088
        %v6121 = vtanh.pop %v6089
        %v6122 = vtanh.pop %v6090
        %v6123 = vtanh.pop %v6091
        %v6124 = vtanh.pop %v6092
        %v6125 = vtanh.pop %v6093
        %v6126 = vtanh.pop %v6094
        %v6127 = vadd.f32 %v6095, 1.0
        %v6128 = vadd.f32 %v6096, 1.0
        %v6129 = vadd.f32 %v6097, 1.0
        %v6130 = vadd.f32 %v6098, 1.0
        %v6131 = vadd.f32 %v6099, 1.0
        %v6132 = vadd.f32 %v6100, 1.0
        %v6133 = vadd.f32 %v6101, 1.0
        %v6134 = vadd.f32 %v6102, 1.0
        %v6135 = vadd.f32 %v6103, 1.0
        %v6136 = vadd.f32 %v6104, 1.0
        %v6137 = vadd.f32 %v6105, 1.0
        %v6138 = vadd.f32 %v6106, 1.0
        %v6139 = vadd.f32 %v6107, 1.0
        %v6140 = vadd.f32 %v6108, 1.0
        %v6141 = vadd.f32 %v6109, 1.0
        %v6142 = vadd.f32 %v6110, 1.0
        %v6143 = vadd.f32 %v6111, 1.0
        %v6144 = vadd.f32 %v6112, 1.0
        %v6145 = vadd.f32 %v6113, 1.0
        %v6146 = vadd.f32 %v6114, 1.0
        %v6147 = vadd.f32 %v6115, 1.0
        %v6148 = vadd.f32 %v6116, 1.0
        %v6149 = vadd.f32 %v6117, 1.0
        %v6150 = vadd.f32 %v6118, 1.0
        %v6151 = vadd.f32 %v6119, 1.0
        %v6152 = vadd.f32 %v6120, 1.0
        %v6153 = vadd.f32 %v6121, 1.0
        %v6154 = vadd.f32 %v6122, 1.0
        %v6155 = vadd.f32 %v6123, 1.0
        %v6156 = vadd.f32 %v6124, 1.0
        %v6157 = vadd.f32 %v6125, 1.0
        %v6158 = vadd.f32 %v6126, 1.0
        %v6159 = vmul.f32 %v5903, %v6127
        %v6160 = vmul.f32 %v5904, %v6128
        %v6161 = vmul.f32 %v5905, %v6129
        %v6162 = vmul.f32 %v5906, %v6130
        %v6163 = vmul.f32 %v5907, %v6131
        %v6164 = vmul.f32 %v5908, %v6132
        %v6165 = vmul.f32 %v5909, %v6133
        %v6166 = vmul.f32 %v5910, %v6134
        %v6167 = vmul.f32 %v5911, %v6135
        %v6168 = vmul.f32 %v5912, %v6136
        %v6169 = vmul.f32 %v5913, %v6137
        %v6170 = vmul.f32 %v5914, %v6138
        %v6171 = vmul.f32 %v5915, %v6139
        %v6172 = vmul.f32 %v5916, %v6140
        %v6173 = vmul.f32 %v5917, %v6141
        %v6174 = vmul.f32 %v5918, %v6142
        %v6175 = vmul.f32 %v5919, %v6143
        %v6176 = vmul.f32 %v5920, %v6144
        %v6177 = vmul.f32 %v5921, %v6145
        %v6178 = vmul.f32 %v5922, %v6146
        %v6179 = vmul.f32 %v5923, %v6147
        %v6180 = vmul.f32 %v5924, %v6148
        %v6181 = vmul.f32 %v5925, %v6149
        %v6182 = vmul.f32 %v5926, %v6150
        %v6183 = vmul.f32 %v5927, %v6151
        %v6184 = vmul.f32 %v5928, %v6152
        %v6185 = vmul.f32 %v5929, %v6153
        %v6186 = vmul.f32 %v5930, %v6154
        %v6187 = vmul.f32 %v5931, %v6155
        %v6188 = vmul.f32 %v5932, %v6156
        %v6189 = vmul.f32 %v5933, %v6157
        %v6190 = vmul.f32 %v5934, %v6158
        %6191 = vset.pattern.permute.xlu0 1
        %6192 = vperm.xlu0 %6191, %v645
        %v6193 = vpop.permute.xlu0 %6192
        %6195 = vset.pattern.permute.xlu0 1
        %6196 = vperm.xlu0 %6195, %v647
        %v6197 = vpop.permute.xlu0 %6196
        %6199 = vset.pattern.permute.xlu0 1
        %6200 = vperm.xlu0 %6199, %v650
        %v6201 = vpop.permute.xlu0 %6200
        %6203 = vset.pattern.permute.xlu0 1
        %6204 = vperm.xlu0 %6203, %v652
        %v6205 = vpop.permute.xlu0 %6204
        %6207 = vset.pattern.permute.xlu0 1
        %6208 = vperm.xlu0 %6207, %v655
        %v6209 = vpop.permute.xlu0 %6208
        %6211 = vset.pattern.permute.xlu0 1
        %6212 = vperm.xlu0 %6211, %v657
        %v6213 = vpop.permute.xlu0 %6212
        %6215 = vset.pattern.permute.xlu0 1
        %6216 = vperm.xlu0 %6215, %v660
        %v6217 = vpop.permute.xlu0 %6216
        %6219 = vset.pattern.permute.xlu0 1
        %6220 = vperm.xlu0 %6219, %v662
        %v6221 = vpop.permute.xlu0 %6220
        %6223 = vset.pattern.permute.xlu0 1
        %6224 = vperm.xlu0 %6223, %v665
        %v6225 = vpop.permute.xlu0 %6224
        %6227 = vset.pattern.permute.xlu0 1
        %6228 = vperm.xlu0 %6227, %v667
        %v6229 = vpop.permute.xlu0 %6228
        %6231 = vset.pattern.permute.xlu0 1
        %6232 = vperm.xlu0 %6231, %v670
        %v6233 = vpop.permute.xlu0 %6232
        %6235 = vset.pattern.permute.xlu0 1
        %6236 = vperm.xlu0 %6235, %v672
        %v6237 = vpop.permute.xlu0 %6236
        %6239 = vset.pattern.permute.xlu0 1
        %6240 = vperm.xlu0 %6239, %v675
        %v6241 = vpop.permute.xlu0 %6240
        %6243 = vset.pattern.permute.xlu0 1
        %6244 = vperm.xlu0 %6243, %v677
        %v6245 = vpop.permute.xlu0 %6244
        %6247 = vset.pattern.permute.xlu0 1
        %6248 = vperm.xlu0 %6247, %v680
        %v6249 = vpop.permute.xlu0 %6248
        %6251 = vset.pattern.permute.xlu0 1
        %6252 = vperm.xlu0 %6251, %v682
        %v6253 = vpop.permute.xlu0 %6252
        %6255 = vset.pattern.permute.xlu0 1
        %6256 = vperm.xlu0 %6255, %v685
        %v6257 = vpop.permute.xlu0 %6256
        %6259 = vset.pattern.permute.xlu0 1
        %6260 = vperm.xlu0 %6259, %v687
        %v6261 = vpop.permute.xlu0 %6260
        %6263 = vset.pattern.permute.xlu0 1
        %6264 = vperm.xlu0 %6263, %v690
        %v6265 = vpop.permute.xlu0 %6264
        %6267 = vset.pattern.permute.xlu0 1
        %6268 = vperm.xlu0 %6267, %v692
        %v6269 = vpop.permute.xlu0 %6268
        %6271 = vset.pattern.permute.xlu0 1
        %6272 = vperm.xlu0 %6271, %v695
        %v6273 = vpop.permute.xlu0 %6272
        %6275 = vset.pattern.permute.xlu0 1
        %6276 = vperm.xlu0 %6275, %v697
        %v6277 = vpop.permute.xlu0 %6276
        %6279 = vset.pattern.permute.xlu0 1
        %6280 = vperm.xlu0 %6279, %v700
        %v6281 = vpop.permute.xlu0 %6280
        %6283 = vset.pattern.permute.xlu0 1
        %6284 = vperm.xlu0 %6283, %v702
        %v6285 = vpop.permute.xlu0 %6284
        %6287 = vset.pattern.permute.xlu0 1
        %6288 = vperm.xlu0 %6287, %v705
        %v6289 = vpop.permute.xlu0 %6288
        %6291 = vset.pattern.permute.xlu0 1
        %6292 = vperm.xlu0 %6291, %v707
        %v6293 = vpop.permute.xlu0 %6292
        %6295 = vset.pattern.permute.xlu0 1
        %6296 = vperm.xlu0 %6295, %v710
        %v6297 = vpop.permute.xlu0 %6296
        %6299 = vset.pattern.permute.xlu0 1
        %6300 = vperm.xlu0 %6299, %v712
        %v6301 = vpop.permute.xlu0 %6300
        %6303 = vset.pattern.permute.xlu0 1
        %6304 = vperm.xlu0 %6303, %v715
        %v6305 = vpop.permute.xlu0 %6304
        %6307 = vset.pattern.permute.xlu0 1
        %6308 = vperm.xlu0 %6307, %v717
        %v6309 = vpop.permute.xlu0 %6308
        %6311 = vset.pattern.permute.xlu0 1
        %6312 = vperm.xlu0 %6311, %v720
        %v6313 = vpop.permute.xlu0 %6312
        %6315 = vset.pattern.permute.xlu0 1
        %6316 = vperm.xlu0 %6315, %v722
        %v6317 = vpop.permute.xlu0 %6316
        %v6319 = vmul.f32 %v6159, %v6193
        %v6320 = vmul.f32 %v6160, %v6197
        %v6321 = vmul.f32 %v6161, %v6201
        %v6322 = vmul.f32 %v6162, %v6205
        %v6323 = vmul.f32 %v6163, %v6209
        %v6324 = vmul.f32 %v6164, %v6213
        %v6325 = vmul.f32 %v6165, %v6217
        %v6326 = vmul.f32 %v6166, %v6221
        %v6327 = vmul.f32 %v6167, %v6225
        %v6328 = vmul.f32 %v6168, %v6229
        %v6329 = vmul.f32 %v6169, %v6233
        %v6330 = vmul.f32 %v6170, %v6237
        %v6331 = vmul.f32 %v6171, %v6241
        %v6332 = vmul.f32 %v6172, %v6245
        %v6333 = vmul.f32 %v6173, %v6249
        %v6334 = vmul.f32 %v6174, %v6253
        %v6335 = vmul.f32 %v6175, %v6257
        %v6336 = vmul.f32 %v6176, %v6261
        %v6337 = vmul.f32 %v6177, %v6265
        %v6338 = vmul.f32 %v6178, %v6269
        %v6339 = vmul.f32 %v6179, %v6273
        %v6340 = vmul.f32 %v6180, %v6277
        %v6341 = vmul.f32 %v6181, %v6281
        %v6342 = vmul.f32 %v6182, %v6285
        %v6343 = vmul.f32 %v6183, %v6289
        %v6344 = vmul.f32 %v6184, %v6293
        %v6345 = vmul.f32 %v6185, %v6297
        %v6346 = vmul.f32 %v6186, %v6301
        %v6347 = vmul.f32 %v6187, %v6305
        %v6348 = vmul.f32 %v6188, %v6309
        %v6349 = vmul.f32 %v6189, %v6313
        %v6350 = vmul.f32 %v6190, %v6317
        %v6351 = vadd.f32 %v3168, %v6319
        %v6352 = vadd.f32 %v3169, %v6320
        %v6353 = vadd.f32 %v3170, %v6321
        %v6354 = vadd.f32 %v3171, %v6322
        %v6355 = vadd.f32 %v3172, %v6323
        %v6356 = vadd.f32 %v3173, %v6324
        %v6357 = vadd.f32 %v3174, %v6325
        %v6358 = vadd.f32 %v3175, %v6326
        %v6359 = vadd.f32 %v3176, %v6327
        %v6360 = vadd.f32 %v3177, %v6328
        %v6361 = vadd.f32 %v3178, %v6329
        %v6362 = vadd.f32 %v3179, %v6330
        %v6363 = vadd.f32 %v3180, %v6331
        %v6364 = vadd.f32 %v3181, %v6332
        %v6365 = vadd.f32 %v3182, %v6333
        %v6366 = vadd.f32 %v3183, %v6334
        %v6367 = vadd.f32 %v3184, %v6335
        %v6368 = vadd.f32 %v3185, %v6336
        %v6369 = vadd.f32 %v3186, %v6337
        %v6370 = vadd.f32 %v3187, %v6338
        %v6371 = vadd.f32 %v3188, %v6339
        %v6372 = vadd.f32 %v3189, %v6340
        %v6373 = vadd.f32 %v3190, %v6341
        %v6374 = vadd.f32 %v3191, %v6342
        %v6375 = vadd.f32 %v3192, %v6343
        %v6376 = vadd.f32 %v3193, %v6344
        %v6377 = vadd.f32 %v3194, %v6345
        %v6378 = vadd.f32 %v3195, %v6346
        %v6379 = vadd.f32 %v3196, %v6347
        %v6380 = vadd.f32 %v3197, %v6348
        %v6381 = vadd.f32 %v3198, %v6349
        %v6382 = vadd.f32 %v3199, %v6350
        %v6383 = vadd.f32 %v6159, %v6160
        %v6384 = vadd.f32 %v6383, %v6161
        %v6385 = vadd.f32 %v6384, %v6162
        %v6386 = vadd.f32 %v6385, %v6163
        %v6387 = vadd.f32 %v6386, %v6164
        %v6388 = vadd.f32 %v6387, %v6165
        %v6389 = vadd.f32 %v6388, %v6166
        %v6390 = vadd.f32 %v6389, %v6167
        %v6391 = vadd.f32 %v6390, %v6168
        %v6392 = vadd.f32 %v6391, %v6169
        %v6393 = vadd.f32 %v6392, %v6170
        %v6394 = vadd.f32 %v6393, %v6171
        %v6395 = vadd.f32 %v6394, %v6172
        %v6396 = vadd.f32 %v6395, %v6173
        %v6397 = vadd.f32 %v6396, %v6174
        %v6398 = vadd.f32 %v6397, %v6175
        %v6399 = vadd.f32 %v6398, %v6176
        %v6400 = vadd.f32 %v6399, %v6177
        %v6401 = vadd.f32 %v6400, %v6178
        %v6402 = vadd.f32 %v6401, %v6179
        %v6403 = vadd.f32 %v6402, %v6180
        %v6404 = vadd.f32 %v6403, %v6181
        %v6405 = vadd.f32 %v6404, %v6182
        %v6406 = vadd.f32 %v6405, %v6183
        %v6407 = vadd.f32 %v6406, %v6184
        %v6408 = vadd.f32 %v6407, %v6185
        %v6409 = vadd.f32 %v6408, %v6186
        %v6410 = vadd.f32 %v6409, %v6187
        %v6411 = vadd.f32 %v6410, %v6188
        %v6412 = vadd.f32 %v6411, %v6189
        %v6413 = vadd.f32 %v6412, %v6190
        %v6414 = vrot.slane %v6413, 4
        %v6415 = vadd.f32 %v6413, %v6414
        %v6416 = vrot.slane %v6415, 2
        %v6417 = vadd.f32 %v6415, %v6416
        %v6418 = vrot.slane %v6417, 1
        %v6419 = vadd.f32 %v6417, %v6418
        %v6420 = vrcp.pop 256.0
        %v6421 = vmul.f32 256.0, %v6420
        %v6422 = vsub.f32 1.0, %v6421
        %v6423 = vmul.f32 %v6420, %v6422
        %v6424 = vadd.f32 %v6420, %v6423
        %vm6425 = vweird.f32 %v6420
        %v6426 = vsel %vm6425, %v6420, %v6424
        %v6427 = vmul.f32 %v6419, %v6426
        %v6428 = vmul.f32 %v6427, 0.5
        %v6429 = vmul.f32 %v6427, 0.044715
        %v6430 = vmul.f32 %v6429, %v6427
        %v6431 = vmul.f32 %v6430, %v6427
        %v6432 = vadd.f32 %v6427, %v6431
        %v6433 = vmul.f32 %v6432, 0.7978846
        %v6434 = vtanh.pop %v6433
        %v6435 = vadd.f32 %v6434, 1.0
        %v6436 = vmul.f32 %v6428, %v6435
        %6437 = vset.pattern.permute.xlu0 2
        %6438 = vperm.xlu0 %6437, %v645
        %v6439 = vpop.permute.xlu0 %6438
        %6441 = vset.pattern.permute.xlu0 2
        %6442 = vperm.xlu0 %6441, %v647
        %v6443 = vpop.permute.xlu0 %6442
        %6445 = vset.pattern.permute.xlu0 2
        %6446 = vperm.xlu0 %6445, %v650
        %v6447 = vpop.permute.xlu0 %6446
        %6449 = vset.pattern.permute.xlu0 2
        %6450 = vperm.xlu0 %6449, %v652
        %v6451 = vpop.permute.xlu0 %6450
        %6453 = vset.pattern.permute.xlu0 2
        %6454 = vperm.xlu0 %6453, %v655
        %v6455 = vpop.permute.xlu0 %6454
        %6457 = vset.pattern.permute.xlu0 2
        %6458 = vperm.xlu0 %6457, %v657
        %v6459 = vpop.permute.xlu0 %6458
        %6461 = vset.pattern.permute.xlu0 2
        %6462 = vperm.xlu0 %6461, %v660
        %v6463 = vpop.permute.xlu0 %6462
        %6465 = vset.pattern.permute.xlu0 2
        %6466 = vperm.xlu0 %6465, %v662
        %v6467 = vpop.permute.xlu0 %6466
        %6469 = vset.pattern.permute.xlu0 2
        %6470 = vperm.xlu0 %6469, %v665
        %v6471 = vpop.permute.xlu0 %6470
        %6473 = vset.pattern.permute.xlu0 2
        %6474 = vperm.xlu0 %6473, %v667
        %v6475 = vpop.permute.xlu0 %6474
        %6477 = vset.pattern.permute.xlu0 2
        %6478 = vperm.xlu0 %6477, %v670
        %v6479 = vpop.permute.xlu0 %6478
        %6481 = vset.pattern.permute.xlu0 2
        %6482 = vperm.xlu0 %6481, %v672
        %v6483 = vpop.permute.xlu0 %6482
        %6485 = vset.pattern.permute.xlu0 2
        %6486 = vperm.xlu0 %6485, %v675
        %v6487 = vpop.permute.xlu0 %6486
        %6489 = vset.pattern.permute.xlu0 2
        %6490 = vperm.xlu0 %6489, %v677
        %v6491 = vpop.permute.xlu0 %6490
        %6493 = vset.pattern.permute.xlu0 2
        %6494 = vperm.xlu0 %6493, %v680
        %v6495 = vpop.permute.xlu0 %6494
        %6497 = vset.pattern.permute.xlu0 2
        %6498 = vperm.xlu0 %6497, %v682
        %v6499 = vpop.permute.xlu0 %6498
        %6501 = vset.pattern.permute.xlu0 2
        %6502 = vperm.xlu0 %6501, %v685
        %v6503 = vpop.permute.xlu0 %6502
        %6505 = vset.pattern.permute.xlu0 2
        %6506 = vperm.xlu0 %6505, %v687
        %v6507 = vpop.permute.xlu0 %6506
        %6509 = vset.pattern.permute.xlu0 2
        %6510 = vperm.xlu0 %6509, %v690
        %v6511 = vpop.permute.xlu0 %6510
        %6513 = vset.pattern.permute.xlu0 2
        %6514 = vperm.xlu0 %6513, %v692
        %v6515 = vpop.permute.xlu0 %6514
        %6517 = vset.pattern.permute.xlu0 2
        %6518 = vperm.xlu0 %6517, %v695
        %v6519 = vpop.permute.xlu0 %6518
        %6521 = vset.pattern.permute.xlu0 2
        %6522 = vperm.xlu0 %6521, %v697
        %v6523 = vpop.permute.xlu0 %6522
        %6525 = vset.pattern.permute.xlu0 2
        %6526 = vperm.xlu0 %6525, %v700
        %v6527 = vpop.permute.xlu0 %6526
        %6529 = vset.pattern.permute.xlu0 2
        %6530 = vperm.xlu0 %6529, %v702
        %v6531 = vpop.permute.xlu0 %6530
        %6533 = vset.pattern.permute.xlu0 2
        %6534 = vperm.xlu0 %6533, %v705
        %v6535 = vpop.permute.xlu0 %6534
        %6537 = vset.pattern.permute.xlu0 2
        %6538 = vperm.xlu0 %6537, %v707
        %v6539 = vpop.permute.xlu0 %6538
        %6541 = vset.pattern.permute.xlu0 2
        %6542 = vperm.xlu0 %6541, %v710
        %v6543 = vpop.permute.xlu0 %6542
        %6545 = vset.pattern.permute.xlu0 2
        %6546 = vperm.xlu0 %6545, %v712
        %v6547 = vpop.permute.xlu0 %6546
        %6549 = vset.pattern.permute.xlu0 2
        %6550 = vperm.xlu0 %6549, %v715
        %v6551 = vpop.permute.xlu0 %6550
        %6553 = vset.pattern.permute.xlu0 2
        %6554 = vperm.xlu0 %6553, %v717
        %v6555 = vpop.permute.xlu0 %6554
        %6557 = vset.pattern.permute.xlu0 2
        %6558 = vperm.xlu0 %6557, %v720
        %v6559 = vpop.permute.xlu0 %6558
        %6561 = vset.pattern.permute.xlu0 2
        %6562 = vperm.xlu0 %6561, %v722
        %v6563 = vpop.permute.xlu0 %6562
        %v6565 = vmul.f32 %v6436, %v6439
        %v6566 = vmul.f32 %v6436, %v6443
        %v6567 = vmul.f32 %v6436, %v6447
        %v6568 = vmul.f32 %v6436, %v6451
        %v6569 = vmul.f32 %v6436, %v6455
        %v6570 = vmul.f32 %v6436, %v6459
        %v6571 = vmul.f32 %v6436, %v6463
        %v6572 = vmul.f32 %v6436, %v6467
        %v6573 = vmul.f32 %v6436, %v6471
        %v6574 = vmul.f32 %v6436, %v6475
        %v6575 = vmul.f32 %v6436, %v6479
        %v6576 = vmul.f32 %v6436, %v6483
        %v6577 = vmul.f32 %v6436, %v6487
        %v6578 = vmul.f32 %v6436, %v6491
        %v6579 = vmul.f32 %v6436, %v6495
        %v6580 = vmul.f32 %v6436, %v6499
        %v6581 = vmul.f32 %v6436, %v6503
        %v6582 = vmul.f32 %v6436, %v6507
        %v6583 = vmul.f32 %v6436, %v6511
        %v6584 = vmul.f32 %v6436, %v6515
        %v6585 = vmul.f32 %v6436, %v6519
        %v6586 = vmul.f32 %v6436, %v6523
        %v6587 = vmul.f32 %v6436, %v6527
        %v6588 = vmul.f32 %v6436, %v6531
        %v6589 = vmul.f32 %v6436, %v6535
        %v6590 = vmul.f32 %v6436, %v6539
        %v6591 = vmul.f32 %v6436, %v6543
        %v6592 = vmul.f32 %v6436, %v6547
        %v6593 = vmul.f32 %v6436, %v6551
        %v6594 = vmul.f32 %v6436, %v6555
        %v6595 = vmul.f32 %v6436, %v6559
        %v6596 = vmul.f32 %v6436, %v6563
        %v6597 = vadd.f32 %v6351, %v6565
        %v6598 = vadd.f32 %v6352, %v6566
        %v6599 = vadd.f32 %v6353, %v6567
        %v6600 = vadd.f32 %v6354, %v6568
        %v6601 = vadd.f32 %v6355, %v6569
        %v6602 = vadd.f32 %v6356, %v6570
        %v6603 = vadd.f32 %v6357, %v6571
        %v6604 = vadd.f32 %v6358, %v6572
        %v6605 = vadd.f32 %v6359, %v6573
        %v6606 = vadd.f32 %v6360, %v6574
        %v6607 = vadd.f32 %v6361, %v6575
        %v6608 = vadd.f32 %v6362, %v6576
        %v6609 = vadd.f32 %v6363, %v6577
        %v6610 = vadd.f32 %v6364, %v6578
        %v6611 = vadd.f32 %v6365, %v6579
        %v6612 = vadd.f32 %v6366, %v6580
        %v6613 = vadd.f32 %v6367, %v6581
        %v6614 = vadd.f32 %v6368, %v6582
        %v6615 = vadd.f32 %v6369, %v6583
        %v6616 = vadd.f32 %v6370, %v6584
        %v6617 = vadd.f32 %v6371, %v6585
        %v6618 = vadd.f32 %v6372, %v6586
        %v6619 = vadd.f32 %v6373, %v6587
        %v6620 = vadd.f32 %v6374, %v6588
        %v6621 = vadd.f32 %v6375, %v6589
        %v6622 = vadd.f32 %v6376, %v6590
        %v6623 = vadd.f32 %v6377, %v6591
        %v6624 = vadd.f32 %v6378, %v6592
        %v6625 = vadd.f32 %v6379, %v6593
        %v6626 = vadd.f32 %v6380, %v6594
        %v6627 = vadd.f32 %v6381, %v6595
        %v6628 = vadd.f32 %v6382, %v6596
        %v6629 = vpack.c.bf16 %v6598, %v6597
        %v6630 = vpack.c.bf16 %v6600, %v6599
        %v6631 = vpack.c.bf16 %v6602, %v6601
        %v6632 = vpack.c.bf16 %v6604, %v6603
        %v6633 = vpack.c.bf16 %v6606, %v6605
        %v6634 = vpack.c.bf16 %v6608, %v6607
        %v6635 = vpack.c.bf16 %v6610, %v6609
        %v6636 = vpack.c.bf16 %v6612, %v6611
        %v6637 = vpack.c.bf16 %v6614, %v6613
        %v6638 = vpack.c.bf16 %v6616, %v6615
        %v6639 = vpack.c.bf16 %v6618, %v6617
        %v6640 = vpack.c.bf16 %v6620, %v6619
        %v6641 = vpack.c.bf16 %v6622, %v6621
        %v6642 = vpack.c.bf16 %v6624, %v6623
        %v6643 = vpack.c.bf16 %v6626, %v6625
        %v6644 = vpack.c.bf16 %v6628, %v6627
        %v6645 = vld [vmem:[%s3] sm:$0xf]
        %v6646 = vld [vmem:[%s3 + $0x4] sm:$0xf]
        %v6647 = vld [vmem:[%s3 + $0x8] sm:$0xf]
        %v6648 = vld [vmem:[%s3 + $0xc] sm:$0xf]
        %v6649 = vld [vmem:[%s3 + $0x10] sm:$0xf]
        %v6650 = vld [vmem:[%s3 + $0x14] sm:$0xf]
        %v6651 = vld [vmem:[%s3 + $0x18] sm:$0xf]
        %v6652 = vld [vmem:[%s3 + $0x1c] sm:$0xf]
        %v6653 = vld [vmem:[%s3 + $0x20] sm:$0xf]
        %v6654 = vld [vmem:[%s3 + $0x24] sm:$0xf]
        %v6655 = vld [vmem:[%s3 + $0x28] sm:$0xf]
        %v6656 = vld [vmem:[%s3 + $0x2c] sm:$0xf]
        %v6657 = vld [vmem:[%s3 + $0x30] sm:$0xf]
        %v6658 = vld [vmem:[%s3 + $0x34] sm:$0xf]
        %v6659 = vld [vmem:[%s3 + $0x38] sm:$0xf]
        %v6660 = vld [vmem:[%s3 + $0x3c] sm:$0xf]
        %v6661 = vld [vmem:[%s4] sm:$0x1]
        %v6663 = vperm.slane %v6661, 0
        %v6681 = vunpack.c.l.b16 %v6645
        %v6682 = vunpack.c.l.b16 %v6646
        %v6683 = vunpack.c.l.b16 %v6647
        %v6684 = vunpack.c.l.b16 %v6648
        %v6685 = vunpack.c.l.b16 %v6649
        %v6686 = vunpack.c.l.b16 %v6650
        %v6687 = vunpack.c.l.b16 %v6651
        %v6688 = vunpack.c.l.b16 %v6652
        %v6689 = vunpack.c.l.b16 %v6653
        %v6690 = vunpack.c.l.b16 %v6654
        %v6691 = vunpack.c.l.b16 %v6655
        %v6692 = vunpack.c.l.b16 %v6656
        %v6693 = vunpack.c.l.b16 %v6657
        %v6694 = vunpack.c.l.b16 %v6658
        %v6695 = vunpack.c.l.b16 %v6659
        %v6696 = vunpack.c.l.b16 %v6660
        %v6697 = vpack.c.b16 %v6682, %v6681
        %v6698 = vpack.c.b16 %v6684, %v6683
        %v6699 = vpack.c.b16 %v6686, %v6685
        %v6700 = vpack.c.b16 %v6688, %v6687
        %v6701 = vpack.c.b16 %v6690, %v6689
        %v6702 = vpack.c.b16 %v6692, %v6691
        %v6703 = vpack.c.b16 %v6694, %v6693
        %v6704 = vpack.c.b16 %v6696, %v6695
        %6713 = vmatpush.bf16.msra.mxu0 %v6704
        %6714 = vmatpush.bf16.msra.mxu0 %v6703
        %6715 = vmatpush.bf16.msra.mxu0 %v6702
        %6716 = vmatpush.bf16.msra.mxu0 %v6701
        %6717 = vmatpush.bf16.msra.mxu0 %v6700
        %6718 = vmatpush.bf16.msra.mxu0 %v6699
        %6719 = vmatpush.bf16.msra.mxu0 %v6698
        %6720 = vmatpush.bf16.msra.mxu0 %v6697
        %6721 = vmatmul.bf16.gmra.mxu0 %v6629
        %v6722 = vpop.f32.mrf.mxu0
        %v6723 = vadd.f32 %v6663, %v6722
        %v6724 = vpop.f32.mrf.mxu0
        %v6725 = vadd.f32 %v6663, %v6724
        %6726 = vmatmul.bf16.gmra.mxu0 %v6630
        %v6727 = vpop.f32.mrf.mxu0
        %v6728 = vadd.f32 %v6663, %v6727
        %v6729 = vpop.f32.mrf.mxu0
        %v6730 = vadd.f32 %v6663, %v6729
        %6731 = vmatmul.bf16.gmra.mxu0 %v6631
        %v6732 = vpop.f32.mrf.mxu0
        %v6733 = vadd.f32 %v6663, %v6732
        %v6734 = vpop.f32.mrf.mxu0
        %v6735 = vadd.f32 %v6663, %v6734
        %6736 = vmatmul.bf16.gmra.mxu0 %v6632
        %v6737 = vpop.f32.mrf.mxu0
        %v6738 = vadd.f32 %v6663, %v6737
        %v6739 = vpop.f32.mrf.mxu0
        %v6740 = vadd.f32 %v6663, %v6739
        %6741 = vmatmul.bf16.gmra.mxu0 %v6633
        %v6742 = vpop.f32.mrf.mxu0
        %v6743 = vadd.f32 %v6663, %v6742
        %v6744 = vpop.f32.mrf.mxu0
        %v6745 = vadd.f32 %v6663, %v6744
        %6746 = vmatmul.bf16.gmra.mxu0 %v6634
        %v6747 = vpop.f32.mrf.mxu0
        %v6748 = vadd.f32 %v6663, %v6747
        %v6749 = vpop.f32.mrf.mxu0
        %v6750 = vadd.f32 %v6663, %v6749
        %6751 = vmatmul.bf16.gmra.mxu0 %v6635
        %v6752 = vpop.f32.mrf.mxu0
        %v6753 = vadd.f32 %v6663, %v6752
        %v6754 = vpop.f32.mrf.mxu0
        %v6755 = vadd.f32 %v6663, %v6754
        %6756 = vmatmul.bf16.gmra.mxu0 %v6636
        %v6757 = vpop.f32.mrf.mxu0
        %v6758 = vadd.f32 %v6663, %v6757
        %v6759 = vpop.f32.mrf.mxu0
        %v6760 = vadd.f32 %v6663, %v6759
        %6761 = vmatmul.bf16.gmra.mxu0 %v6637
        %v6762 = vpop.f32.mrf.mxu0
        %v6763 = vadd.f32 %v6663, %v6762
        %v6764 = vpop.f32.mrf.mxu0
        %v6765 = vadd.f32 %v6663, %v6764
        %6766 = vmatmul.bf16.gmra.mxu0 %v6638
        %v6767 = vpop.f32.mrf.mxu0
        %v6768 = vadd.f32 %v6663, %v6767
        %v6769 = vpop.f32.mrf.mxu0
        %v6770 = vadd.f32 %v6663, %v6769
        %6771 = vmatmul.bf16.gmra.mxu0 %v6639
        %v6772 = vpop.f32.mrf.mxu0
        %v6773 = vadd.f32 %v6663, %v6772
        %v6774 = vpop.f32.mrf.mxu0
        %v6775 = vadd.f32 %v6663, %v6774
        %6776 = vmatmul.bf16.gmra.mxu0 %v6640
        %v6777 = vpop.f32.mrf.mxu0
        %v6778 = vadd.f32 %v6663, %v6777
        %v6779 = vpop.f32.mrf.mxu0
        %v6780 = vadd.f32 %v6663, %v6779
        %6781 = vmatmul.bf16.gmra.mxu0 %v6641
        %v6782 = vpop.f32.mrf.mxu0
        %v6783 = vadd.f32 %v6663, %v6782
        %v6784 = vpop.f32.mrf.mxu0
        %v6785 = vadd.f32 %v6663, %v6784
        %6786 = vmatmul.bf16.gmra.mxu0 %v6642
        %v6787 = vpop.f32.mrf.mxu0
        %v6788 = vadd.f32 %v6663, %v6787
        %v6789 = vpop.f32.mrf.mxu0
        %v6790 = vadd.f32 %v6663, %v6789
        %6791 = vmatmul.bf16.gmra.mxu0 %v6643
        %v6792 = vpop.f32.mrf.mxu0
        %v6793 = vadd.f32 %v6663, %v6792
        %v6794 = vpop.f32.mrf.mxu0
        %v6795 = vadd.f32 %v6663, %v6794
        %6796 = vmatmul.bf16.gmra.mxu0 %v6644
        %v6797 = vpop.f32.mrf.mxu0
        %v6798 = vadd.f32 %v6663, %v6797
        %v6799 = vpop.f32.mrf.mxu0
        %v6800 = vadd.f32 %v6663, %v6799
        %6801 = vdwg.mxu0
        %v6802 = vunpack.c.l.bf16 %v724
        %v6803 = vunpack.c.l.bf16 %v725
        %v6804 = vunpack.c.l.bf16 %v726
        %v6805 = vunpack.c.l.bf16 %v727
        %v6806 = vunpack.c.l.bf16 %v728
        %v6807 = vunpack.c.l.bf16 %v729
        %v6808 = vunpack.c.l.bf16 %v730
        %v6809 = vunpack.c.l.bf16 %v731
        %v6810 = vunpack.c.l.bf16 %v732
        %v6811 = vunpack.c.l.bf16 %v733
        %v6812 = vunpack.c.l.bf16 %v734
        %v6813 = vunpack.c.l.bf16 %v735
        %v6814 = vunpack.c.l.bf16 %v736
        %v6815 = vunpack.c.l.bf16 %v737
        %v6816 = vunpack.c.l.bf16 %v738
        %v6817 = vunpack.c.l.bf16 %v739
        %v6818 = vunpack.c.l.bf16 %v740
        %v6819 = vunpack.c.l.bf16 %v741
        %v6820 = vunpack.c.l.bf16 %v742
        %v6821 = vunpack.c.l.bf16 %v743
        %v6822 = vunpack.c.l.bf16 %v744
        %v6823 = vunpack.c.l.bf16 %v745
        %v6824 = vunpack.c.l.bf16 %v746
        %v6825 = vunpack.c.l.bf16 %v747
        %v6826 = vunpack.c.l.bf16 %v748
        %v6827 = vunpack.c.l.bf16 %v749
        %v6828 = vunpack.c.l.bf16 %v750
        %v6829 = vunpack.c.l.bf16 %v751
        %v6830 = vunpack.c.l.bf16 %v752
        %v6831 = vunpack.c.l.bf16 %v753
        %v6832 = vunpack.c.l.bf16 %v754
        %v6833 = vunpack.c.l.bf16 %v755
        %v6834 = vmul.f32 %v6802, %v6723
        %v6835 = vmul.f32 %v6803, %v6725
        %v6836 = vmul.f32 %v6804, %v6728
        %v6837 = vmul.f32 %v6805, %v6730
        %v6838 = vmul.f32 %v6806, %v6733
        %v6839 = vmul.f32 %v6807, %v6735
        %v6840 = vmul.f32 %v6808, %v6738
        %v6841 = vmul.f32 %v6809, %v6740
        %v6842 = vmul.f32 %v6810, %v6743
        %v6843 = vmul.f32 %v6811, %v6745
        %v6844 = vmul.f32 %v6812, %v6748
        %v6845 = vmul.f32 %v6813, %v6750
        %v6846 = vmul.f32 %v6814, %v6753
        %v6847 = vmul.f32 %v6815, %v6755
        %v6848 = vmul.f32 %v6816, %v6758
        %v6849 = vmul.f32 %v6817, %v6760
        %v6850 = vmul.f32 %v6818, %v6763
        %v6851 = vmul.f32 %v6819, %v6765
        %v6852 = vmul.f32 %v6820, %v6768
        %v6853 = vmul.f32 %v6821, %v6770
        %v6854 = vmul.f32 %v6822, %v6773
        %v6855 = vmul.f32 %v6823, %v6775
        %v6856 = vmul.f32 %v6824, %v6778
        %v6857 = vmul.f32 %v6825, %v6780
        %v6858 = vmul.f32 %v6826, %v6783
        %v6859 = vmul.f32 %v6827, %v6785
        %v6860 = vmul.f32 %v6828, %v6788
        %v6861 = vmul.f32 %v6829, %v6790
        %v6862 = vmul.f32 %v6830, %v6793
        %v6863 = vmul.f32 %v6831, %v6795
        %v6864 = vmul.f32 %v6832, %v6798
        %v6865 = vmul.f32 %v6833, %v6800
        %v6866 = vpack.c.bf16 %v6835, %v6834
        %v6867 = vpack.c.bf16 %v6837, %v6836
        %v6868 = vpack.c.bf16 %v6839, %v6838
        %v6869 = vpack.c.bf16 %v6841, %v6840
        %v6870 = vpack.c.bf16 %v6843, %v6842
        %v6871 = vpack.c.bf16 %v6845, %v6844
        %v6872 = vpack.c.bf16 %v6847, %v6846
        %v6873 = vpack.c.bf16 %v6849, %v6848
        %v6874 = vpack.c.bf16 %v6851, %v6850
        %v6875 = vpack.c.bf16 %v6853, %v6852
        %v6876 = vpack.c.bf16 %v6855, %v6854
        %v6877 = vpack.c.bf16 %v6857, %v6856
        %v6878 = vpack.c.bf16 %v6859, %v6858
        %v6879 = vpack.c.bf16 %v6861, %v6860
        %v6880 = vpack.c.bf16 %v6863, %v6862
        %v6881 = vpack.c.bf16 %v6865, %v6864
        %v6882 = vld [vmem:[%s5] sm:$0xf]
        %v6883 = vld [vmem:[%s5 + $0x4] sm:$0xf]
        %v6884 = vld [vmem:[%s5 + $0x8] sm:$0xf]
        %v6885 = vld [vmem:[%s5 + $0xc] sm:$0xf]
        %v6886 = vld [vmem:[%s5 + $0x10] sm:$0xf]
        %v6887 = vld [vmem:[%s5 + $0x14] sm:$0xf]
        %v6888 = vld [vmem:[%s5 + $0x18] sm:$0xf]
        %v6889 = vld [vmem:[%s5 + $0x1c] sm:$0xf]
        %v6890 = vld [vmem:[%s5 + $0x20] sm:$0xf]
        %v6891 = vld [vmem:[%s5 + $0x24] sm:$0xf]
        %v6892 = vld [vmem:[%s5 + $0x28] sm:$0xf]
        %v6893 = vld [vmem:[%s5 + $0x2c] sm:$0xf]
        %v6894 = vld [vmem:[%s5 + $0x30] sm:$0xf]
        %v6895 = vld [vmem:[%s5 + $0x34] sm:$0xf]
        %v6896 = vld [vmem:[%s5 + $0x38] sm:$0xf]
        %v6897 = vld [vmem:[%s5 + $0x3c] sm:$0xf]
        %v6898 = vld [vmem:[%s6] sm:$0x1]
        %v6900 = vperm.slane %v6898, 0
        %v6918 = vunpack.c.l.b16 %v6882
        %v6919 = vunpack.c.l.b16 %v6883
        %v6920 = vunpack.c.l.b16 %v6884
        %v6921 = vunpack.c.l.b16 %v6885
        %v6922 = vunpack.c.l.b16 %v6886
        %v6923 = vunpack.c.l.b16 %v6887
        %v6924 = vunpack.c.l.b16 %v6888
        %v6925 = vunpack.c.l.b16 %v6889
        %v6926 = vunpack.c.l.b16 %v6890
        %v6927 = vunpack.c.l.b16 %v6891
        %v6928 = vunpack.c.l.b16 %v6892
        %v6929 = vunpack.c.l.b16 %v6893
        %v6930 = vunpack.c.l.b16 %v6894
        %v6931 = vunpack.c.l.b16 %v6895
        %v6932 = vunpack.c.l.b16 %v6896
        %v6933 = vunpack.c.l.b16 %v6897
        %v6934 = vpack.c.b16 %v6919, %v6918
        %v6935 = vpack.c.b16 %v6921, %v6920
        %v6936 = vpack.c.b16 %v6923, %v6922
        %v6937 = vpack.c.b16 %v6925, %v6924
        %v6938 = vpack.c.b16 %v6927, %v6926
        %v6939 = vpack.c.b16 %v6929, %v6928
        %v6940 = vpack.c.b16 %v6931, %v6930
        %v6941 = vpack.c.b16 %v6933, %v6932
        %6950 = vmatpush.bf16.msra.mxu0 %v6941
        %6951 = vmatpush.bf16.msra.mxu0 %v6940
        %6952 = vmatpush.bf16.msra.mxu0 %v6939
        %6953 = vmatpush.bf16.msra.mxu0 %v6938
        %6954 = vmatpush.bf16.msra.mxu0 %v6937
        %6955 = vmatpush.bf16.msra.mxu0 %v6936
        %6956 = vmatpush.bf16.msra.mxu0 %v6935
        %6957 = vmatpush.bf16.msra.mxu0 %v6934
        %6958 = vmatmul.bf16.gmra.mxu0 %v6866
        %v6959 = vpop.f32.mrf.mxu0
        %v6960 = vadd.f32 %v6900, %v6959
        %v6961 = vpop.f32.mrf.mxu0
        %v6962 = vadd.f32 %v6900, %v6961
        %6963 = vmatmul.bf16.gmra.mxu0 %v6867
        %v6964 = vpop.f32.mrf.mxu0
        %v6965 = vadd.f32 %v6900, %v6964
        %v6966 = vpop.f32.mrf.mxu0
        %v6967 = vadd.f32 %v6900, %v6966
        %6968 = vmatmul.bf16.gmra.mxu0 %v6868
        %v6969 = vpop.f32.mrf.mxu0
        %v6970 = vadd.f32 %v6900, %v6969
        %v6971 = vpop.f32.mrf.mxu0
        %v6972 = vadd.f32 %v6900, %v6971
        %6973 = vmatmul.bf16.gmra.mxu0 %v6869
        %v6974 = vpop.f32.mrf.mxu0
        %v6975 = vadd.f32 %v6900, %v6974
        %v6976 = vpop.f32.mrf.mxu0
        %v6977 = vadd.f32 %v6900, %v6976
        %6978 = vmatmul.bf16.gmra.mxu0 %v6870
        %v6979 = vpop.f32.mrf.mxu0
        %v6980 = vadd.f32 %v6900, %v6979
        %v6981 = vpop.f32.mrf.mxu0
        %v6982 = vadd.f32 %v6900, %v6981
        %6983 = vmatmul.bf16.gmra.mxu0 %v6871
        %v6984 = vpop.f32.mrf.mxu0
        %v6985 = vadd.f32 %v6900, %v6984
        %v6986 = vpop.f32.mrf.mxu0
        %v6987 = vadd.f32 %v6900, %v6986
        %6988 = vmatmul.bf16.gmra.mxu0 %v6872
        %v6989 = vpop.f32.mrf.mxu0
        %v6990 = vadd.f32 %v6900, %v6989
        %v6991 = vpop.f32.mrf.mxu0
        %v6992 = vadd.f32 %v6900, %v6991
        %6993 = vmatmul.bf16.gmra.mxu0 %v6873
        %v6994 = vpop.f32.mrf.mxu0
        %v6995 = vadd.f32 %v6900, %v6994
        %v6996 = vpop.f32.mrf.mxu0
        %v6997 = vadd.f32 %v6900, %v6996
        %6998 = vmatmul.bf16.gmra.mxu0 %v6874
        %v6999 = vpop.f32.mrf.mxu0
        %v7000 = vadd.f32 %v6900, %v6999
        %v7001 = vpop.f32.mrf.mxu0
        %v7002 = vadd.f32 %v6900, %v7001
        %7003 = vmatmul.bf16.gmra.mxu0 %v6875
        %v7004 = vpop.f32.mrf.mxu0
        %v7005 = vadd.f32 %v6900, %v7004
        %v7006 = vpop.f32.mrf.mxu0
        %v7007 = vadd.f32 %v6900, %v7006
        %7008 = vmatmul.bf16.gmra.mxu0 %v6876
        %v7009 = vpop.f32.mrf.mxu0
        %v7010 = vadd.f32 %v6900, %v7009
        %v7011 = vpop.f32.mrf.mxu0
        %v7012 = vadd.f32 %v6900, %v7011
        %7013 = vmatmul.bf16.gmra.mxu0 %v6877
        %v7014 = vpop.f32.mrf.mxu0
        %v7015 = vadd.f32 %v6900, %v7014
        %v7016 = vpop.f32.mrf.mxu0
        %v7017 = vadd.f32 %v6900, %v7016
        %7018 = vmatmul.bf16.gmra.mxu0 %v6878
        %v7019 = vpop.f32.mrf.mxu0
        %v7020 = vadd.f32 %v6900, %v7019
        %v7021 = vpop.f32.mrf.mxu0
        %v7022 = vadd.f32 %v6900, %v7021
        %7023 = vmatmul.bf16.gmra.mxu0 %v6879
        %v7024 = vpop.f32.mrf.mxu0
        %v7025 = vadd.f32 %v6900, %v7024
        %v7026 = vpop.f32.mrf.mxu0
        %v7027 = vadd.f32 %v6900, %v7026
        %7028 = vmatmul.bf16.gmra.mxu0 %v6880
        %v7029 = vpop.f32.mrf.mxu0
        %v7030 = vadd.f32 %v6900, %v7029
        %v7031 = vpop.f32.mrf.mxu0
        %v7032 = vadd.f32 %v6900, %v7031
        %7033 = vmatmul.bf16.gmra.mxu0 %v6881
        %v7034 = vpop.f32.mrf.mxu0
        %v7035 = vadd.f32 %v6900, %v7034
        %v7036 = vpop.f32.mrf.mxu0
        %v7037 = vadd.f32 %v6900, %v7036
        %7038 = vdwg.mxu0
        %7039 = vst [vmem:[%s325] sm:$0xff] %v6960
        %7040 = vst [vmem:[%s325 + $0x8] sm:$0xff] %v6962
        %7041 = vst [vmem:[%s325 + $0x10] sm:$0xff] %v6965
        %7042 = vst [vmem:[%s325 + $0x18] sm:$0xff] %v6967
        %7043 = vst [vmem:[%s325 + $0x20] sm:$0xff] %v6970
        %7044 = vst [vmem:[%s325 + $0x28] sm:$0xff] %v6972
        %7045 = vst [vmem:[%s325 + $0x30] sm:$0xff] %v6975
        %7046 = vst [vmem:[%s325 + $0x38] sm:$0xff] %v6977
        %7047 = vst [vmem:[%s325 + $0x40] sm:$0xff] %v6980
        %7048 = vst [vmem:[%s325 + $0x48] sm:$0xff] %v6982
        %7049 = vst [vmem:[%s325 + $0x50] sm:$0xff] %v6985
        %7050 = vst [vmem:[%s325 + $0x58] sm:$0xff] %v6987
        %7051 = vst [vmem:[%s325 + $0x60] sm:$0xff] %v6990
        %7052 = vst [vmem:[%s325 + $0x68] sm:$0xff] %v6992
        %7053 = vst [vmem:[%s325 + $0x70] sm:$0xff] %v6995
        %7054 = vst [vmem:[%s325 + $0x78] sm:$0xff] %v6997
        %7055 = vst [vmem:[%s325 + $0x80] sm:$0xff] %v7000
        %7056 = vst [vmem:[%s325 + $0x88] sm:$0xff] %v7002
        %7057 = vst [vmem:[%s325 + $0x90] sm:$0xff] %v7005
        %7058 = vst [vmem:[%s325 + $0x98] sm:$0xff] %v7007
        %7059 = vst [vmem:[%s325 + $0xa0] sm:$0xff] %v7010
        %7060 = vst [vmem:[%s325 + $0xa8] sm:$0xff] %v7012
        %7061 = vst [vmem:[%s325 + $0xb0] sm:$0xff] %v7015
        %7062 = vst [vmem:[%s325 + $0xb8] sm:$0xff] %v7017
        %7063 = vst [vmem:[%s325 + $0xc0] sm:$0xff] %v7020
        %7064 = vst [vmem:[%s325 + $0xc8] sm:$0xff] %v7022
        %7065 = vst [vmem:[%s325 + $0xd0] sm:$0xff] %v7025
        %7066 = vst [vmem:[%s325 + $0xd8] sm:$0xff] %v7027
        %7067 = vst [vmem:[%s325 + $0xe0] sm:$0xff] %v7030
        %7068 = vst [vmem:[%s325 + $0xe8] sm:$0xff] %v7032
        %7069 = vst [vmem:[%s325 + $0xf0] sm:$0xff] %v7035
        %7070 = vst [vmem:[%s325 + $0xf8] sm:$0xff] %v7037
        %s7071 = sand.u32 %s225, 1
        %s7072 = scalar_lea.sflag [#allocation4], %s7071
        %s7073 = sand.u32 %s225, 1
        %s7074 = smul.addr %s7073, 256
        %s7075 = scalar_lea.vmem [#allocation3], %s7074
        // Predicated region
        $region57: #{tpu_custom_call.1} parent=55 // pred_check
          %p7076 = pneg %p235
        $region58: #{tpu_custom_call.1} parent=55 // pred_check_branch
          %7078 = sbr.rel (%p7076) target = $region60
        $region59: #{tpu_custom_call.1} parent=55 // pred_region
          %7080 = vsyncadd %s7072, 0
          %s7081 = smul.addr %s23, 32
          %s7082 = smul.addr %s7081, 8
          %s7083 = scalar_lea.hbm %s9, %s7082
          %s7084 = sshll.u32 %s7075, 4
          %s7085 = int_to_ptr.vmem [resolvable:$true] %s7084
          %s7086 = sshll.u32 %s7083, 4
          %s7087 = int_to_ptr.hbm [resolvable:$true] %s7086
          %7092 = dma.vmem_to_hbm [thread:$0]  %s7085, 4096, %s7087, %s7072, 128, 128, 8
        $region60: #{tpu_custom_call.1} parent=55 // pred_fallthru
          _
      $region56: #{tpu_custom_call.1} parent=5 // pred_fallthru
        _
      %p7093 = scmp.le.s32.totalorder 2, %s18
      // Predicated region
      $region61: #{tpu_custom_call.1} parent=5 // pred_check
        %p7094 = pneg %p7093
      $region62: #{tpu_custom_call.1} parent=5 // pred_check_branch
        %7096 = sbr.rel (%p7094) target = $region64
      $region63: #{tpu_custom_call.1} parent=5 // pred_region
        %s7097 = ssub.s32 %s18, 2
        // Predicated region
        $region65: #{tpu_custom_call.1} parent=63 // pred_check
          %p7098 = pneg %p241
        $region66: #{tpu_custom_call.1} parent=63 // pred_check_branch
          %7100 = sbr.rel (%p7098) target = $region68
        $region67: #{tpu_custom_call.1} parent=63 // pred_region
          %s7101 = sand.u32 %s226, 1
          %s7102 = scalar_lea.sflag [#allocation4], %s7101
          %s7103 = sand.u32 %s226, 1
          %s7104 = smul.addr %s7103, 256
          %s7105 = scalar_lea.vmem [#allocation3], %s7104
          %7107 = dma.done %s7102, 4096
        $region68: #{tpu_custom_call.1} parent=63 // pred_fallthru
          _
      $region64: #{tpu_custom_call.1} parent=5 // pred_fallthru
        _
    $region6: #{tpu_custom_call.1} parent=1 // loop_footer
      %s22 = sadd.s32 1, %s18
    $region7: #{tpu_custom_call.1} parent=1 // loop_footer_branch
      %17 = sbr.rel target = $region3
    $region8: #{tpu_custom_call.1} parent=1 // loop_exit
      _
    %7108 = vsyncpa [#allocation4], 1
    %s7109 = scalar_lea.sflag [#allocation4], 1
    %7110 = vsyncpa %s7109, 1

</llo_original>
